<compile_context>
chip_gen: v7x
topology: tpu7x:2x2x1
jax: 0.10.0
libtpu: 0.0.40
codegen_flags: <defaults>
</compile_context>

<pallas_src>
import jax
import jax.numpy as jnp
from jax.experimental import pallas as pl
from jax.experimental.pallas import tpu as pltpu

C_IN = 1408          # backbone feature channels
C_OUT = 32           # 1x1 conv output channels
HW = 64              # 8 x 8 spatial positions
D_IN = C_OUT * HW    # 2048 flattened features
D_HID = 512
D_OUT = 512
BN_EPS = 1e-5


# ----------------------------------------------------------------------------
# Trace-time parameter folding.
# ----------------------------------------------------------------------------
def _fold_conv_bn(p):
    """Fold BN(1408) -> Conv2d(1408,32,1) -> BN(32) into one (32,1408) W, (32,) b."""
    s1 = p["bn1_gamma"] * jax.lax.rsqrt(p["bn1_var"] + BN_EPS)
    t1 = p["bn1_beta"] - p["bn1_mean"] * s1
    s2 = p["bn2_gamma"] * jax.lax.rsqrt(p["bn2_var"] + BN_EPS)
    t2 = p["bn2_beta"] - p["bn2_mean"] * s2
    w = p["conv_w"] * s1[None, :] * s2[:, None]                      # (32, 1408)
    b = (p["conv_w"] @ t1 + p["conv_b"]) * s2 + t2                   # (32,)
    return w, b


def _prep_kernel_params(p):
    w, b = _fold_conv_bn(p)
    wc = jnp.transpose(w).astype(jnp.bfloat16)                       # (1408, 32)
    bc = b.astype(jnp.float32).reshape(1, C_OUT)                     # (1, 32)

    # The kernel flattens pixel-major (index p*32 + c); PyTorch flattens channel-
    # major (c*64 + p).  Fold that permutation into the ResBlock weight rows.
    def pixmajor(wmat):                                              # (2048, D) -> (2048, D)
        return (wmat.reshape(C_OUT, HW, -1)
                .transpose(1, 0, 2)
                .reshape(D_IN, -1))

    # fc1 and projection shortcut computed by one matmul: W12 = [W1p | Wscp].
    w12 = jnp.concatenate([pixmajor(p["res_w1"]), pixmajor(p["res_wsc"])],
                          axis=1).astype(jnp.bfloat16)               # (2048, 1024)
    b12 = jnp.concatenate([p["res_b1"], p["res_bsc"]]).astype(
        jnp.float32).reshape(1, D_HID + D_OUT)                       # (1, 1024)
    w2 = p["res_w2"].astype(jnp.bfloat16)                            # (512, 512)
    b2 = p["res_b2"].astype(jnp.float32).reshape(1, D_OUT)           # (1, 512)
    return wc, bc, w12, b12, w2, b2


# ----------------------------------------------------------------------------
# Fused kernel: (BN -> 1x1 conv -> BN -> Flatten -> ELU) -> ResBlock.
#   x block   : (TB*64, 1408) bf16   rows ordered (pixel, image) within the tile
#   wc        : (1408, 32)    bf16   folded conv weight (VMEM-resident)
#   w12       : (2048, 1024)  bf16   [fc1 | proj] with flatten permutation folded
#   w2        : (512, 512)    bf16
#   out block : (TB, 512)     f32
# ----------------------------------------------------------------------------
def _img_encoder_kernel(x_ref, wc_ref, bc_ref, w12_ref, b12_ref, w2_ref, b2_ref,
                        o_ref, conv_ref, flat_ref):
    tb = o_ref.shape[0]

    # 1) Folded conv head: one lane-dense matmul over all (pixel, image) rows.
    z = jnp.dot(x_ref[...], wc_ref[...], preferred_element_type=jnp.float32)
    z = z + bc_ref[...]                                              # (tb*64, 32) f32

    # ELU(alpha=1).  Negative branch is an exact expm1: with t = tanh(x/2),
    # exp(x) - 1 == 2t / (1 - t); well conditioned for x <= 0 and avoids the
    # exp(x)-1 cancellation flagged for PyTorch parity.
    zn = jnp.minimum(z, 0.0)
    t = jnp.tanh(0.5 * zn)
    em1 = (t + t) / (1.0 - t)
    conv_ref[...] = jnp.where(z > 0, z, em1)

    # 2) nn.Flatten: gather each image's 64 pixel rows into one 2048-wide row.
    #    Row order inside the tile is (pixel, image), so each pixel's rows are a
    #    contiguous, sublane-aligned slice; w1/wsc rows were permuted to match.
    for p_idx in range(HW):
        flat_ref[:, p_idx * C_OUT:(p_idx + 1) * C_OUT] = (
            conv_ref[pl.ds(p_idx * tb, tb), :])

    flat = flat_ref[...].astype(jnp.bfloat16)                        # (tb, 2048)

    # 3) ResBlock: fc1 + projection shortcut in one matmul, then fc2, skip, ReLU.
    hp = jnp.dot(flat, w12_ref[...], preferred_element_type=jnp.float32) + b12_ref[...]
    h = jnp.maximum(hp[:, :D_HID], 0.0)
    sc = hp[:, D_HID:]
    y = jnp.dot(h.astype(jnp.bfloat16), w2_ref[...],
                preferred_element_type=jnp.float32)
    o_ref[...] = jnp.maximum(y + b2_ref[...] + sc, 0.0)


# ----------------------------------------------------------------------------
# Wrapper: pad + NHWC re-lay + bf16 cast (one fused XLA prologue), then the
# single fused pallas_call.  `feature` is the backbone output (B, 1408, 8, 8).
# ----------------------------------------------------------------------------
@jax.jit
def img_encoder_pallas(feature, params):
    B = feature.shape[0]
    wc, bc, w12, b12, w2, b2 = _prep_kernel_params(params)

    Bp = ((B + 7) // 8) * 8
    TB = 32 if Bp % 32 == 0 else (16 if Bp % 16 == 0 else 8)
    n_tiles = Bp // TB

    # (B, 1408, 8, 8) -> rows of (pixel, image) per batch tile, lane dim = 1408.
    x = feature.reshape(B, C_IN, HW)
    if Bp != B:
        x = jnp.pad(x, ((0, Bp - B), (0, 0), (0, 0)))
    x = x.reshape(n_tiles, TB, C_IN, HW)
    x = jnp.transpose(x, (0, 3, 1, 2))                               # (tiles, 64, TB, 1408)
    x = x.reshape(Bp * HW, C_IN).astype(jnp.bfloat16)

    out = pl.pallas_call(
        _img_encoder_kernel,
        out_shape=jax.ShapeDtypeStruct((Bp, D_OUT), jnp.float32),
        grid=(n_tiles,),
        in_specs=[
            pl.BlockSpec((TB * HW, C_IN), lambda i: (i, 0)),         # activations
            pl.BlockSpec((C_IN, C_OUT), lambda i: (0, 0)),           # weights: constant
            pl.BlockSpec((1, C_OUT), lambda i: (0, 0)),              #   index_map ->
            pl.BlockSpec((D_IN, D_HID + D_OUT), lambda i: (0, 0)),   #   VMEM-resident
            pl.BlockSpec((1, D_HID + D_OUT), lambda i: (0, 0)),
            pl.BlockSpec((D_HID, D_OUT), lambda i: (0, 0)),
            pl.BlockSpec((1, D_OUT), lambda i: (0, 0)),
        ],
        out_specs=pl.BlockSpec((TB, D_OUT), lambda i: (i, 0)),
        scratch_shapes=[
            pltpu.VMEM((TB * HW, C_OUT), jnp.float32),               # conv/ELU output
            pltpu.VMEM((TB, D_IN), jnp.float32),                     # flattened activation
        ],
        compiler_params=pltpu.CompilerParams(
            dimension_semantics=("parallel",), vmem_limit_bytes=32 << 20),
    )(x, wc, bc, w12, b12, w2, b2)

    return out[:B]


# ----------------------------------------------------------------------------
# Deterministic synthetic parameters (Linear weights stored as (in, out)).
# ----------------------------------------------------------------------------
def init_params(key):
    ks = jax.random.split(key, 16)
    p = {}
    p["bn1_gamma"] = 1.0 + 0.1 * jax.random.normal(ks[0], (C_IN,), jnp.float32)
    p["bn1_beta"] = 0.05 * jax.random.normal(ks[1], (C_IN,), jnp.float32)
    p["bn1_mean"] = 0.1 * jax.random.normal(ks[2], (C_IN,), jnp.float32)
    p["bn1_var"] = 1.0 + 0.1 * jax.random.uniform(ks[3], (C_IN,), jnp.float32)
    p["conv_w"] = jax.random.normal(ks[4], (C_OUT, C_IN), jnp.float32) / jnp.sqrt(C_IN)
    p["conv_b"] = 0.01 * jax.random.normal(ks[5], (C_OUT,), jnp.float32)
    p["bn2_gamma"] = 1.0 + 0.1 * jax.random.normal(ks[6], (C_OUT,), jnp.float32)
    p["bn2_beta"] = 0.05 * jax.random.normal(ks[7], (C_OUT,), jnp.float32)
    p["bn2_mean"] = 0.1 * jax.random.normal(ks[8], (C_OUT,), jnp.float32)
    p["bn2_var"] = 1.0 + 0.1 * jax.random.uniform(ks[9], (C_OUT,), jnp.float32)
    p["res_w1"] = jax.random.normal(ks[10], (D_IN, D_HID), jnp.float32) / jnp.sqrt(D_IN)
    p["res_b1"] = 0.01 * jax.random.normal(ks[11], (D_HID,), jnp.float32)
    p["res_w2"] = jax.random.normal(ks[12], (D_HID, D_OUT), jnp.float32) / jnp.sqrt(D_HID)
    p["res_b2"] = 0.01 * jax.random.normal(ks[13], (D_OUT,), jnp.float32)
    p["res_wsc"] = jax.random.normal(ks[14], (D_IN, D_OUT), jnp.float32) / jnp.sqrt(D_IN)
    p["res_bsc"] = 0.01 * jax.random.normal(ks[15], (D_OUT,), jnp.float32)
    return p


# ----------------------------------------------------------------------------
# Pure-JAX reference in the canonical (PyTorch) order: channel-major flatten,
# un-permuted ResBlock weights, exact expm1 ELU.  Uses the same bf16 weight /
# activation truncation points as the kernel so the comparison isolates the
# Pallas lowering *and* validates the trace-time flatten permutation.
# ----------------------------------------------------------------------------
@jax.jit
def reference_jax(feature, params):
    B = feature.shape[0]
    w, b = _fold_conv_bn(params)
    wf = w.astype(jnp.bfloat16)                                      # (32, 1408)
    x = feature.reshape(B, C_IN, HW).astype(jnp.bfloat16)
    conv = jnp.einsum("oc,bcp->bop", wf, x,
                      preferred_element_type=jnp.float32) + b[None, :, None]
    conv = jnp.where(conv > 0, conv, jnp.expm1(conv))                # ELU
    flat = conv.reshape(B, D_IN).astype(jnp.bfloat16)                # torch flatten order
    w1 = params["res_w1"].astype(jnp.bfloat16)
    wsc = params["res_wsc"].astype(jnp.bfloat16)
    w2 = params["res_w2"].astype(jnp.bfloat16)
    h = jnp.maximum(jnp.dot(flat, w1, preferred_element_type=jnp.float32)
                    + params["res_b1"], 0.0)
    sc = jnp.dot(flat, wsc, preferred_element_type=jnp.float32) + params["res_bsc"]
    y = jnp.dot(h.astype(jnp.bfloat16), w2,
                preferred_element_type=jnp.float32) + params["res_b2"]
    return jnp.maximum(y + sc, 0.0)


if __name__ == "__main__":
    key = jax.random.PRNGKey(0)
    k_feat, k_par = jax.random.split(key)

    B = 2
    # Stand-in for EfficientNet-b2 extract_features output (256x256 RGB input).
    feature = jax.random.normal(k_feat, (B, C_IN, 8, 8), jnp.float32)
    params = init_params(k_par)

    out = img_encoder_pallas(feature, params)
    out = jax.block_until_ready(out)

    ref = reference_jax(feature, params)
    assert out.shape == (B, D_OUT)
    assert jnp.allclose(out, ref, atol=5e-3, rtol=5e-3), (
        float(jnp.max(jnp.abs(out - ref))))

    print("KERNEL_OK")
</pallas_src>

<mosaic_0001>
module attributes {stable_mosaic.version = 11 : i64} {
  func.func @_img_encoder_kernel(%arg0: i32, %arg1: memref<512x1408xbf16, #tpu.memory_space<vmem>>, %arg2: memref<1408x32xbf16, #tpu.memory_space<vmem>>, %arg3: memref<1x32xf32, #tpu.memory_space<vmem>>, %arg4: memref<2048x1024xbf16, #tpu.memory_space<vmem>>, %arg5: memref<1x1024xf32, #tpu.memory_space<vmem>>, %arg6: memref<512x512xbf16, #tpu.memory_space<vmem>>, %arg7: memref<1x512xf32, #tpu.memory_space<vmem>>, %arg8: memref<8x512xf32, #tpu.memory_space<vmem>>, %arg9: memref<512x32xf32, #tpu.memory_space<vmem>>, %arg10: memref<8x2048xf32, #tpu.memory_space<vmem>>) attributes {dimension_semantics = [#tpu.dimension_semantics<parallel>], iteration_bounds = array<i64: 1>, scalar_prefetch = 0 : i64, scratch_operands = 2 : i64, tpu.core_type = #tpu.core_type<tc>, window_params = [{transform_indices = @transform_0, window_bounds = array<i64: 512, 1408>}, {pipeline_mode = #tpu.pipeline_mode<synchronous>, transform_indices = @transform_1, window_bounds = array<i64: 1408, 32>}, {pipeline_mode = #tpu.pipeline_mode<synchronous>, transform_indices = @transform_2, window_bounds = array<i64: 1, 32>}, {pipeline_mode = #tpu.pipeline_mode<synchronous>, transform_indices = @transform_3, window_bounds = array<i64: 2048, 1024>}, {pipeline_mode = #tpu.pipeline_mode<synchronous>, transform_indices = @transform_4, window_bounds = array<i64: 1, 1024>}, {pipeline_mode = #tpu.pipeline_mode<synchronous>, transform_indices = @transform_5, window_bounds = array<i64: 512, 512>}, {pipeline_mode = #tpu.pipeline_mode<synchronous>, transform_indices = @transform_6, window_bounds = array<i64: 1, 512>}, {transform_indices = @transform_7, window_bounds = array<i64: 8, 512>}]} {
    %c0 = arith.constant 0 : index
    %c0_0 = arith.constant 0 : index
    %0 = vector.load %arg1[%c0, %c0_0] : memref<512x1408xbf16, #tpu.memory_space<vmem>>, vector<512x1408xbf16>
    %c0_1 = arith.constant 0 : index
    %c0_2 = arith.constant 0 : index
    %1 = vector.load %arg2[%c0_1, %c0_2] : memref<1408x32xbf16, #tpu.memory_space<vmem>>, vector<1408x32xbf16>
    %cst = arith.constant dense<0.000000e+00> : vector<512x32xf32>
    %2 = tpu.matmul %0, %1, %cst {dimension_numbers = #tpu.dot_dimension_numbers<[1], [0], [0], [1], [0, 0, 1, 1], [], []>} : vector<512x1408xbf16>, vector<1408x32xbf16>, vector<512x32xf32> -> vector<512x32xf32>
    %c0_3 = arith.constant 0 : index
    %c0_4 = arith.constant 0 : index
    %3 = vector.load %arg3[%c0_3, %c0_4] : memref<1x32xf32, #tpu.memory_space<vmem>>, vector<1x32xf32>
    %4 = vector.broadcast %3 : vector<1x32xf32> to vector<512x32xf32>
    %5 = arith.addf %2, %4 : vector<512x32xf32>
    %cst_5 = arith.constant 0.000000e+00 : f32
    %6 = vector.broadcast %cst_5 : f32 to vector<512x32xf32>
    %7 = arith.minimumf %5, %6 : vector<512x32xf32>
    %cst_6 = arith.constant 5.000000e-01 : f32
    %8 = vector.broadcast %cst_6 : f32 to vector<512x32xf32>
    %9 = arith.mulf %8, %7 : vector<512x32xf32>
    %10 = math.tanh %9 : vector<512x32xf32>
    %11 = arith.addf %10, %10 : vector<512x32xf32>
    %cst_7 = arith.constant 1.000000e+00 : f32
    %12 = vector.broadcast %cst_7 : f32 to vector<512x32xf32>
    %13 = arith.subf %12, %10 : vector<512x32xf32>
    %14 = arith.divf %11, %13 : vector<512x32xf32>
    %cst_8 = arith.constant 0.000000e+00 : f32
    %15 = vector.broadcast %cst_8 : f32 to vector<512x32xf32>
    %16 = arith.cmpf ogt, %5, %15 : vector<512x32xf32>
    %17 = arith.select %16, %5, %14 : vector<512x32xi1>, vector<512x32xf32>
    %c0_9 = arith.constant 0 : index
    %c0_10 = arith.constant 0 : index
    %18 = vector.load %arg9[%c0_9, %c0_10] : memref<512x32xf32, #tpu.memory_space<vmem>>, vector<512x32xf32>
    tpu.vector_store %arg9[%c0_9, %c0_10], %17 {strides = array<i32>} : memref<512x32xf32, #tpu.memory_space<vmem>>, vector<512x32xf32>,
    %c0_11 = arith.constant 0 : index
    %c0_12 = arith.constant 0 : index
    %19 = vector.load %arg9[%c0_11, %c0_12] : memref<512x32xf32, #tpu.memory_space<vmem>>, vector<8x32xf32>
    %c0_13 = arith.constant 0 : index
    %c0_14 = arith.constant 0 : index
    %20 = vector.load %arg10[%c0_13, %c0_14] : memref<8x2048xf32, #tpu.memory_space<vmem>>, vector<8x32xf32>
    tpu.vector_store %arg10[%c0_13, %c0_14], %19 {strides = array<i32>} : memref<8x2048xf32, #tpu.memory_space<vmem>>, vector<8x32xf32>,
    %c8 = arith.constant 8 : index
    %c0_15 = arith.constant 0 : index
    %21 = vector.load %arg9[%c8, %c0_15] : memref<512x32xf32, #tpu.memory_space<vmem>>, vector<8x32xf32>
    %c0_16 = arith.constant 0 : index
    %c32 = arith.constant 32 : index
    %22 = vector.load %arg10[%c0_16, %c32] : memref<8x2048xf32, #tpu.memory_space<vmem>>, vector<8x32xf32>
    tpu.vector_store %arg10[%c0_16, %c32], %21 {strides = array<i32>} : memref<8x2048xf32, #tpu.memory_space<vmem>>, vector<8x32xf32>,
    %c16 = arith.constant 16 : index
    %c0_17 = arith.constant 0 : index
    %23 = vector.load %arg9[%c16, %c0_17] : memref<512x32xf32, #tpu.memory_space<vmem>>, vector<8x32xf32>
    %c0_18 = arith.constant 0 : index
    %c64 = arith.constant 64 : index
    %24 = vector.load %arg10[%c0_18, %c64] : memref<8x2048xf32, #tpu.memory_space<vmem>>, vector<8x32xf32>
    tpu.vector_store %arg10[%c0_18, %c64], %23 {strides = array<i32>} : memref<8x2048xf32, #tpu.memory_space<vmem>>, vector<8x32xf32>,
    %c24 = arith.constant 24 : index
    %c0_19 = arith.constant 0 : index
    %25 = vector.load %arg9[%c24, %c0_19] : memref<512x32xf32, #tpu.memory_space<vmem>>, vector<8x32xf32>
    %c0_20 = arith.constant 0 : index
    %c96 = arith.constant 96 : index
    %26 = vector.load %arg10[%c0_20, %c96] : memref<8x2048xf32, #tpu.memory_space<vmem>>, vector<8x32xf32>
    tpu.vector_store %arg10[%c0_20, %c96], %25 {strides = array<i32>} : memref<8x2048xf32, #tpu.memory_space<vmem>>, vector<8x32xf32>,
    %c32_21 = arith.constant 32 : index
    %c0_22 = arith.constant 0 : index
    %27 = vector.load %arg9[%c32_21, %c0_22] : memref<512x32xf32, #tpu.memory_space<vmem>>, vector<8x32xf32>
    %c0_23 = arith.constant 0 : index
    %c128 = arith.constant 128 : index
    %28 = vector.load %arg10[%c0_23, %c128] : memref<8x2048xf32, #tpu.memory_space<vmem>>, vector<8x32xf32>
    tpu.vector_store %arg10[%c0_23, %c128], %27 {strides = array<i32>} : memref<8x2048xf32, #tpu.memory_space<vmem>>, vector<8x32xf32>,
    %c40 = arith.constant 40 : index
    %c0_24 = arith.constant 0 : index
    %29 = vector.load %arg9[%c40, %c0_24] : memref<512x32xf32, #tpu.memory_space<vmem>>, vector<8x32xf32>
    %c0_25 = arith.constant 0 : index
    %c160 = arith.constant 160 : index
    %30 = vector.load %arg10[%c0_25, %c160] : memref<8x2048xf32, #tpu.memory_space<vmem>>, vector<8x32xf32>
    tpu.vector_store %arg10[%c0_25, %c160], %29 {strides = array<i32>} : memref<8x2048xf32, #tpu.memory_space<vmem>>, vector<8x32xf32>,
    %c48 = arith.constant 48 : index
    %c0_26 = arith.constant 0 : index
    %31 = vector.load %arg9[%c48, %c0_26] : memref<512x32xf32, #tpu.memory_space<vmem>>, vector<8x32xf32>
    %c0_27 = arith.constant 0 : index
    %c192 = arith.constant 192 : index
    %32 = vector.load %arg10[%c0_27, %c192] : memref<8x2048xf32, #tpu.memory_space<vmem>>, vector<8x32xf32>
    tpu.vector_store %arg10[%c0_27, %c192], %31 {strides = array<i32>} : memref<8x2048xf32, #tpu.memory_space<vmem>>, vector<8x32xf32>,
    %c56 = arith.constant 56 : index
    %c0_28 = arith.constant 0 : index
    %33 = vector.load %arg9[%c56, %c0_28] : memref<512x32xf32, #tpu.memory_space<vmem>>, vector<8x32xf32>
    %c0_29 = arith.constant 0 : index
    %c224 = arith.constant 224 : index
    %34 = vector.load %arg10[%c0_29, %c224] : memref<8x2048xf32, #tpu.memory_space<vmem>>, vector<8x32xf32>
    tpu.vector_store %arg10[%c0_29, %c224], %33 {strides = array<i32>} : memref<8x2048xf32, #tpu.memory_space<vmem>>, vector<8x32xf32>,
    %c64_30 = arith.constant 64 : index
    %c0_31 = arith.constant 0 : index
    %35 = vector.load %arg9[%c64_30, %c0_31] : memref<512x32xf32, #tpu.memory_space<vmem>>, vector<8x32xf32>
    %c0_32 = arith.constant 0 : index
    %c256 = arith.constant 256 : index
    %36 = vector.load %arg10[%c0_32, %c256] : memref<8x2048xf32, #tpu.memory_space<vmem>>, vector<8x32xf32>
    tpu.vector_store %arg10[%c0_32, %c256], %35 {strides = array<i32>} : memref<8x2048xf32, #tpu.memory_space<vmem>>, vector<8x32xf32>,
    %c72 = arith.constant 72 : index
    %c0_33 = arith.constant 0 : index
    %37 = vector.load %arg9[%c72, %c0_33] : memref<512x32xf32, #tpu.memory_space<vmem>>, vector<8x32xf32>
    %c0_34 = arith.constant 0 : index
    %c288 = arith.constant 288 : index
    %38 = vector.load %arg10[%c0_34, %c288] : memref<8x2048xf32, #tpu.memory_space<vmem>>, vector<8x32xf32>
    tpu.vector_store %arg10[%c0_34, %c288], %37 {strides = array<i32>} : memref<8x2048xf32, #tpu.memory_space<vmem>>, vector<8x32xf32>,
    %c80 = arith.constant 80 : index
    %c0_35 = arith.constant 0 : index
    %39 = vector.load %arg9[%c80, %c0_35] : memref<512x32xf32, #tpu.memory_space<vmem>>, vector<8x32xf32>
    %c0_36 = arith.constant 0 : index
    %c320 = arith.constant 320 : index
    %40 = vector.load %arg10[%c0_36, %c320] : memref<8x2048xf32, #tpu.memory_space<vmem>>, vector<8x32xf32>
    tpu.vector_store %arg10[%c0_36, %c320], %39 {strides = array<i32>} : memref<8x2048xf32, #tpu.memory_space<vmem>>, vector<8x32xf32>,
    %c88 = arith.constant 88 : index
    %c0_37 = arith.constant 0 : index
    %41 = vector.load %arg9[%c88, %c0_37] : memref<512x32xf32, #tpu.memory_space<vmem>>, vector<8x32xf32>
    %c0_38 = arith.constant 0 : index
    %c352 = arith.constant 352 : index
    %42 = vector.load %arg10[%c0_38, %c352] : memref<8x2048xf32, #tpu.memory_space<vmem>>, vector<8x32xf32>
    tpu.vector_store %arg10[%c0_38, %c352], %41 {strides = array<i32>} : memref<8x2048xf32, #tpu.memory_space<vmem>>, vector<8x32xf32>,
    %c96_39 = arith.constant 96 : index
    %c0_40 = arith.constant 0 : index
    %43 = vector.load %arg9[%c96_39, %c0_40] : memref<512x32xf32, #tpu.memory_space<vmem>>, vector<8x32xf32>
    %c0_41 = arith.constant 0 : index
    %c384 = arith.constant 384 : index
    %44 = vector.load %arg10[%c0_41, %c384] : memref<8x2048xf32, #tpu.memory_space<vmem>>, vector<8x32xf32>
    tpu.vector_store %arg10[%c0_41, %c384], %43 {strides = array<i32>} : memref<8x2048xf32, #tpu.memory_space<vmem>>, vector<8x32xf32>,
    %c104 = arith.constant 104 : index
    %c0_42 = arith.constant 0 : index
    %45 = vector.load %arg9[%c104, %c0_42] : memref<512x32xf32, #tpu.memory_space<vmem>>, vector<8x32xf32>
    %c0_43 = arith.constant 0 : index
    %c416 = arith.constant 416 : index
    %46 = vector.load %arg10[%c0_43, %c416] : memref<8x2048xf32, #tpu.memory_space<vmem>>, vector<8x32xf32>
    tpu.vector_store %arg10[%c0_43, %c416], %45 {strides = array<i32>} : memref<8x2048xf32, #tpu.memory_space<vmem>>, vector<8x32xf32>,
    %c112 = arith.constant 112 : index
    %c0_44 = arith.constant 0 : index
    %47 = vector.load %arg9[%c112, %c0_44] : memref<512x32xf32, #tpu.memory_space<vmem>>, vector<8x32xf32>
    %c0_45 = arith.constant 0 : index
    %c448 = arith.constant 448 : index
    %48 = vector.load %arg10[%c0_45, %c448] : memref<8x2048xf32, #tpu.memory_space<vmem>>, vector<8x32xf32>
    tpu.vector_store %arg10[%c0_45, %c448], %47 {strides = array<i32>} : memref<8x2048xf32, #tpu.memory_space<vmem>>, vector<8x32xf32>,
    %c120 = arith.constant 120 : index
    %c0_46 = arith.constant 0 : index
    %49 = vector.load %arg9[%c120, %c0_46] : memref<512x32xf32, #tpu.memory_space<vmem>>, vector<8x32xf32>
    %c0_47 = arith.constant 0 : index
    %c480 = arith.constant 480 : index
    %50 = vector.load %arg10[%c0_47, %c480] : memref<8x2048xf32, #tpu.memory_space<vmem>>, vector<8x32xf32>
    tpu.vector_store %arg10[%c0_47, %c480], %49 {strides = array<i32>} : memref<8x2048xf32, #tpu.memory_space<vmem>>, vector<8x32xf32>,
    %c128_48 = arith.constant 128 : index
    %c0_49 = arith.constant 0 : index
    %51 = vector.load %arg9[%c128_48, %c0_49] : memref<512x32xf32, #tpu.memory_space<vmem>>, vector<8x32xf32>
    %c0_50 = arith.constant 0 : index
    %c512 = arith.constant 512 : index
    %52 = vector.load %arg10[%c0_50, %c512] : memref<8x2048xf32, #tpu.memory_space<vmem>>, vector<8x32xf32>
    tpu.vector_store %arg10[%c0_50, %c512], %51 {strides = array<i32>} : memref<8x2048xf32, #tpu.memory_space<vmem>>, vector<8x32xf32>,
    %c136 = arith.constant 136 : index
    %c0_51 = arith.constant 0 : index
    %53 = vector.load %arg9[%c136, %c0_51] : memref<512x32xf32, #tpu.memory_space<vmem>>, vector<8x32xf32>
    %c0_52 = arith.constant 0 : index
    %c544 = arith.constant 544 : index
    %54 = vector.load %arg10[%c0_52, %c544] : memref<8x2048xf32, #tpu.memory_space<vmem>>, vector<8x32xf32>
    tpu.vector_store %arg10[%c0_52, %c544], %53 {strides = array<i32>} : memref<8x2048xf32, #tpu.memory_space<vmem>>, vector<8x32xf32>,
    %c144 = arith.constant 144 : index
    %c0_53 = arith.constant 0 : index
    %55 = vector.load %arg9[%c144, %c0_53] : memref<512x32xf32, #tpu.memory_space<vmem>>, vector<8x32xf32>
    %c0_54 = arith.constant 0 : index
    %c576 = arith.constant 576 : index
    %56 = vector.load %arg10[%c0_54, %c576] : memref<8x2048xf32, #tpu.memory_space<vmem>>, vector<8x32xf32>
    tpu.vector_store %arg10[%c0_54, %c576], %55 {strides = array<i32>} : memref<8x2048xf32, #tpu.memory_space<vmem>>, vector<8x32xf32>,
    %c152 = arith.constant 152 : index
    %c0_55 = arith.constant 0 : index
    %57 = vector.load %arg9[%c152, %c0_55] : memref<512x32xf32, #tpu.memory_space<vmem>>, vector<8x32xf32>
    %c0_56 = arith.constant 0 : index
    %c608 = arith.constant 608 : index
    %58 = vector.load %arg10[%c0_56, %c608] : memref<8x2048xf32, #tpu.memory_space<vmem>>, vector<8x32xf32>
    tpu.vector_store %arg10[%c0_56, %c608], %57 {strides = array<i32>} : memref<8x2048xf32, #tpu.memory_space<vmem>>, vector<8x32xf32>,
    %c160_57 = arith.constant 160 : index
    %c0_58 = arith.constant 0 : index
    %59 = vector.load %arg9[%c160_57, %c0_58] : memref<512x32xf32, #tpu.memory_space<vmem>>, vector<8x32xf32>
    %c0_59 = arith.constant 0 : index
    %c640 = arith.constant 640 : index
    %60 = vector.load %arg10[%c0_59, %c640] : memref<8x2048xf32, #tpu.memory_space<vmem>>, vector<8x32xf32>
    tpu.vector_store %arg10[%c0_59, %c640], %59 {strides = array<i32>} : memref<8x2048xf32, #tpu.memory_space<vmem>>, vector<8x32xf32>,
    %c168 = arith.constant 168 : index
    %c0_60 = arith.constant 0 : index
    %61 = vector.load %arg9[%c168, %c0_60] : memref<512x32xf32, #tpu.memory_space<vmem>>, vector<8x32xf32>
    %c0_61 = arith.constant 0 : index
    %c672 = arith.constant 672 : index
    %62 = vector.load %arg10[%c0_61, %c672] : memref<8x2048xf32, #tpu.memory_space<vmem>>, vector<8x32xf32>
    tpu.vector_store %arg10[%c0_61, %c672], %61 {strides = array<i32>} : memref<8x2048xf32, #tpu.memory_space<vmem>>, vector<8x32xf32>,
    %c176 = arith.constant 176 : index
    %c0_62 = arith.constant 0 : index
    %63 = vector.load %arg9[%c176, %c0_62] : memref<512x32xf32, #tpu.memory_space<vmem>>, vector<8x32xf32>
    %c0_63 = arith.constant 0 : index
    %c704 = arith.constant 704 : index
    %64 = vector.load %arg10[%c0_63, %c704] : memref<8x2048xf32, #tpu.memory_space<vmem>>, vector<8x32xf32>
    tpu.vector_store %arg10[%c0_63, %c704], %63 {strides = array<i32>} : memref<8x2048xf32, #tpu.memory_space<vmem>>, vector<8x32xf32>,
    %c184 = arith.constant 184 : index
    %c0_64 = arith.constant 0 : index
    %65 = vector.load %arg9[%c184, %c0_64] : memref<512x32xf32, #tpu.memory_space<vmem>>, vector<8x32xf32>
    %c0_65 = arith.constant 0 : index
    %c736 = arith.constant 736 : index
    %66 = vector.load %arg10[%c0_65, %c736] : memref<8x2048xf32, #tpu.memory_space<vmem>>, vector<8x32xf32>
    tpu.vector_store %arg10[%c0_65, %c736], %65 {strides = array<i32>} : memref<8x2048xf32, #tpu.memory_space<vmem>>, vector<8x32xf32>,
    %c192_66 = arith.constant 192 : index
    %c0_67 = arith.constant 0 : index
    %67 = vector.load %arg9[%c192_66, %c0_67] : memref<512x32xf32, #tpu.memory_space<vmem>>, vector<8x32xf32>
    %c0_68 = arith.constant 0 : index
    %c768 = arith.constant 768 : index
    %68 = vector.load %arg10[%c0_68, %c768] : memref<8x2048xf32, #tpu.memory_space<vmem>>, vector<8x32xf32>
    tpu.vector_store %arg10[%c0_68, %c768], %67 {strides = array<i32>} : memref<8x2048xf32, #tpu.memory_space<vmem>>, vector<8x32xf32>,
    %c200 = arith.constant 200 : index
    %c0_69 = arith.constant 0 : index
    %69 = vector.load %arg9[%c200, %c0_69] : memref<512x32xf32, #tpu.memory_space<vmem>>, vector<8x32xf32>
    %c0_70 = arith.constant 0 : index
    %c800 = arith.constant 800 : index
    %70 = vector.load %arg10[%c0_70, %c800] : memref<8x2048xf32, #tpu.memory_space<vmem>>, vector<8x32xf32>
    tpu.vector_store %arg10[%c0_70, %c800], %69 {strides = array<i32>} : memref<8x2048xf32, #tpu.memory_space<vmem>>, vector<8x32xf32>,
    %c208 = arith.constant 208 : index
    %c0_71 = arith.constant 0 : index
    %71 = vector.load %arg9[%c208, %c0_71] : memref<512x32xf32, #tpu.memory_space<vmem>>, vector<8x32xf32>
    %c0_72 = arith.constant 0 : index
    %c832 = arith.constant 832 : index
    %72 = vector.load %arg10[%c0_72, %c832] : memref<8x2048xf32, #tpu.memory_space<vmem>>, vector<8x32xf32>
    tpu.vector_store %arg10[%c0_72, %c832], %71 {strides = array<i32>} : memref<8x2048xf32, #tpu.memory_space<vmem>>, vector<8x32xf32>,
    %c216 = arith.constant 216 : index
    %c0_73 = arith.constant 0 : index
    %73 = vector.load %arg9[%c216, %c0_73] : memref<512x32xf32, #tpu.memory_space<vmem>>, vector<8x32xf32>
    %c0_74 = arith.constant 0 : index
    %c864 = arith.constant 864 : index
    %74 = vector.load %arg10[%c0_74, %c864] : memref<8x2048xf32, #tpu.memory_space<vmem>>, vector<8x32xf32>
    tpu.vector_store %arg10[%c0_74, %c864], %73 {strides = array<i32>} : memref<8x2048xf32, #tpu.memory_space<vmem>>, vector<8x32xf32>,
    %c224_75 = arith.constant 224 : index
    %c0_76 = arith.constant 0 : index
    %75 = vector.load %arg9[%c224_75, %c0_76] : memref<512x32xf32, #tpu.memory_space<vmem>>, vector<8x32xf32>
    %c0_77 = arith.constant 0 : index
    %c896 = arith.constant 896 : index
    %76 = vector.load %arg10[%c0_77, %c896] : memref<8x2048xf32, #tpu.memory_space<vmem>>, vector<8x32xf32>
    tpu.vector_store %arg10[%c0_77, %c896], %75 {strides = array<i32>} : memref<8x2048xf32, #tpu.memory_space<vmem>>, vector<8x32xf32>,
    %c232 = arith.constant 232 : index
    %c0_78 = arith.constant 0 : index
    %77 = vector.load %arg9[%c232, %c0_78] : memref<512x32xf32, #tpu.memory_space<vmem>>, vector<8x32xf32>
    %c0_79 = arith.constant 0 : index
    %c928 = arith.constant 928 : index
    %78 = vector.load %arg10[%c0_79, %c928] : memref<8x2048xf32, #tpu.memory_space<vmem>>, vector<8x32xf32>
    tpu.vector_store %arg10[%c0_79, %c928], %77 {strides = array<i32>} : memref<8x2048xf32, #tpu.memory_space<vmem>>, vector<8x32xf32>,
    %c240 = arith.constant 240 : index
    %c0_80 = arith.constant 0 : index
    %79 = vector.load %arg9[%c240, %c0_80] : memref<512x32xf32, #tpu.memory_space<vmem>>, vector<8x32xf32>
    %c0_81 = arith.constant 0 : index
    %c960 = arith.constant 960 : index
    %80 = vector.load %arg10[%c0_81, %c960] : memref<8x2048xf32, #tpu.memory_space<vmem>>, vector<8x32xf32>
    tpu.vector_store %arg10[%c0_81, %c960], %79 {strides = array<i32>} : memref<8x2048xf32, #tpu.memory_space<vmem>>, vector<8x32xf32>,
    %c248 = arith.constant 248 : index
    %c0_82 = arith.constant 0 : index
    %81 = vector.load %arg9[%c248, %c0_82] : memref<512x32xf32, #tpu.memory_space<vmem>>, vector<8x32xf32>
    %c0_83 = arith.constant 0 : index
    %c992 = arith.constant 992 : index
    %82 = vector.load %arg10[%c0_83, %c992] : memref<8x2048xf32, #tpu.memory_space<vmem>>, vector<8x32xf32>
    tpu.vector_store %arg10[%c0_83, %c992], %81 {strides = array<i32>} : memref<8x2048xf32, #tpu.memory_space<vmem>>, vector<8x32xf32>,
    %c256_84 = arith.constant 256 : index
    %c0_85 = arith.constant 0 : index
    %83 = vector.load %arg9[%c256_84, %c0_85] : memref<512x32xf32, #tpu.memory_space<vmem>>, vector<8x32xf32>
    %c0_86 = arith.constant 0 : index
    %c1024 = arith.constant 1024 : index
    %84 = vector.load %arg10[%c0_86, %c1024] : memref<8x2048xf32, #tpu.memory_space<vmem>>, vector<8x32xf32>
    tpu.vector_store %arg10[%c0_86, %c1024], %83 {strides = array<i32>} : memref<8x2048xf32, #tpu.memory_space<vmem>>, vector<8x32xf32>,
    %c264 = arith.constant 264 : index
    %c0_87 = arith.constant 0 : index
    %85 = vector.load %arg9[%c264, %c0_87] : memref<512x32xf32, #tpu.memory_space<vmem>>, vector<8x32xf32>
    %c0_88 = arith.constant 0 : index
    %c1056 = arith.constant 1056 : index
    %86 = vector.load %arg10[%c0_88, %c1056] : memref<8x2048xf32, #tpu.memory_space<vmem>>, vector<8x32xf32>
    tpu.vector_store %arg10[%c0_88, %c1056], %85 {strides = array<i32>} : memref<8x2048xf32, #tpu.memory_space<vmem>>, vector<8x32xf32>,
    %c272 = arith.constant 272 : index
    %c0_89 = arith.constant 0 : index
    %87 = vector.load %arg9[%c272, %c0_89] : memref<512x32xf32, #tpu.memory_space<vmem>>, vector<8x32xf32>
    %c0_90 = arith.constant 0 : index
    %c1088 = arith.constant 1088 : index
    %88 = vector.load %arg10[%c0_90, %c1088] : memref<8x2048xf32, #tpu.memory_space<vmem>>, vector<8x32xf32>
    tpu.vector_store %arg10[%c0_90, %c1088], %87 {strides = array<i32>} : memref<8x2048xf32, #tpu.memory_space<vmem>>, vector<8x32xf32>,
    %c280 = arith.constant 280 : index
    %c0_91 = arith.constant 0 : index
    %89 = vector.load %arg9[%c280, %c0_91] : memref<512x32xf32, #tpu.memory_space<vmem>>, vector<8x32xf32>
    %c0_92 = arith.constant 0 : index
    %c1120 = arith.constant 1120 : index
    %90 = vector.load %arg10[%c0_92, %c1120] : memref<8x2048xf32, #tpu.memory_space<vmem>>, vector<8x32xf32>
    tpu.vector_store %arg10[%c0_92, %c1120], %89 {strides = array<i32>} : memref<8x2048xf32, #tpu.memory_space<vmem>>, vector<8x32xf32>,
    %c288_93 = arith.constant 288 : index
    %c0_94 = arith.constant 0 : index
    %91 = vector.load %arg9[%c288_93, %c0_94] : memref<512x32xf32, #tpu.memory_space<vmem>>, vector<8x32xf32>
    %c0_95 = arith.constant 0 : index
    %c1152 = arith.constant 1152 : index
    %92 = vector.load %arg10[%c0_95, %c1152] : memref<8x2048xf32, #tpu.memory_space<vmem>>, vector<8x32xf32>
    tpu.vector_store %arg10[%c0_95, %c1152], %91 {strides = array<i32>} : memref<8x2048xf32, #tpu.memory_space<vmem>>, vector<8x32xf32>,
    %c296 = arith.constant 296 : index
    %c0_96 = arith.constant 0 : index
    %93 = vector.load %arg9[%c296, %c0_96] : memref<512x32xf32, #tpu.memory_space<vmem>>, vector<8x32xf32>
    %c0_97 = arith.constant 0 : index
    %c1184 = arith.constant 1184 : index
    %94 = vector.load %arg10[%c0_97, %c1184] : memref<8x2048xf32, #tpu.memory_space<vmem>>, vector<8x32xf32>
    tpu.vector_store %arg10[%c0_97, %c1184], %93 {strides = array<i32>} : memref<8x2048xf32, #tpu.memory_space<vmem>>, vector<8x32xf32>,
    %c304 = arith.constant 304 : index
    %c0_98 = arith.constant 0 : index
    %95 = vector.load %arg9[%c304, %c0_98] : memref<512x32xf32, #tpu.memory_space<vmem>>, vector<8x32xf32>
    %c0_99 = arith.constant 0 : index
    %c1216 = arith.constant 1216 : index
    %96 = vector.load %arg10[%c0_99, %c1216] : memref<8x2048xf32, #tpu.memory_space<vmem>>, vector<8x32xf32>
    tpu.vector_store %arg10[%c0_99, %c1216], %95 {strides = array<i32>} : memref<8x2048xf32, #tpu.memory_space<vmem>>, vector<8x32xf32>,
    %c312 = arith.constant 312 : index
    %c0_100 = arith.constant 0 : index
    %97 = vector.load %arg9[%c312, %c0_100] : memref<512x32xf32, #tpu.memory_space<vmem>>, vector<8x32xf32>
    %c0_101 = arith.constant 0 : index
    %c1248 = arith.constant 1248 : index
    %98 = vector.load %arg10[%c0_101, %c1248] : memref<8x2048xf32, #tpu.memory_space<vmem>>, vector<8x32xf32>
    tpu.vector_store %arg10[%c0_101, %c1248], %97 {strides = array<i32>} : memref<8x2048xf32, #tpu.memory_space<vmem>>, vector<8x32xf32>,
    %c320_102 = arith.constant 320 : index
    %c0_103 = arith.constant 0 : index
    %99 = vector.load %arg9[%c320_102, %c0_103] : memref<512x32xf32, #tpu.memory_space<vmem>>, vector<8x32xf32>
    %c0_104 = arith.constant 0 : index
    %c1280 = arith.constant 1280 : index
    %100 = vector.load %arg10[%c0_104, %c1280] : memref<8x2048xf32, #tpu.memory_space<vmem>>, vector<8x32xf32>
    tpu.vector_store %arg10[%c0_104, %c1280], %99 {strides = array<i32>} : memref<8x2048xf32, #tpu.memory_space<vmem>>, vector<8x32xf32>,
    %c328 = arith.constant 328 : index
    %c0_105 = arith.constant 0 : index
    %101 = vector.load %arg9[%c328, %c0_105] : memref<512x32xf32, #tpu.memory_space<vmem>>, vector<8x32xf32>
    %c0_106 = arith.constant 0 : index
    %c1312 = arith.constant 1312 : index
    %102 = vector.load %arg10[%c0_106, %c1312] : memref<8x2048xf32, #tpu.memory_space<vmem>>, vector<8x32xf32>
    tpu.vector_store %arg10[%c0_106, %c1312], %101 {strides = array<i32>} : memref<8x2048xf32, #tpu.memory_space<vmem>>, vector<8x32xf32>,
    %c336 = arith.constant 336 : index
    %c0_107 = arith.constant 0 : index
    %103 = vector.load %arg9[%c336, %c0_107] : memref<512x32xf32, #tpu.memory_space<vmem>>, vector<8x32xf32>
    %c0_108 = arith.constant 0 : index
    %c1344 = arith.constant 1344 : index
    %104 = vector.load %arg10[%c0_108, %c1344] : memref<8x2048xf32, #tpu.memory_space<vmem>>, vector<8x32xf32>
    tpu.vector_store %arg10[%c0_108, %c1344], %103 {strides = array<i32>} : memref<8x2048xf32, #tpu.memory_space<vmem>>, vector<8x32xf32>,
    %c344 = arith.constant 344 : index
    %c0_109 = arith.constant 0 : index
    %105 = vector.load %arg9[%c344, %c0_109] : memref<512x32xf32, #tpu.memory_space<vmem>>, vector<8x32xf32>
    %c0_110 = arith.constant 0 : index
    %c1376 = arith.constant 1376 : index
    %106 = vector.load %arg10[%c0_110, %c1376] : memref<8x2048xf32, #tpu.memory_space<vmem>>, vector<8x32xf32>
    tpu.vector_store %arg10[%c0_110, %c1376], %105 {strides = array<i32>} : memref<8x2048xf32, #tpu.memory_space<vmem>>, vector<8x32xf32>,
    %c352_111 = arith.constant 352 : index
    %c0_112 = arith.constant 0 : index
    %107 = vector.load %arg9[%c352_111, %c0_112] : memref<512x32xf32, #tpu.memory_space<vmem>>, vector<8x32xf32>
    %c0_113 = arith.constant 0 : index
    %c1408 = arith.constant 1408 : index
    %108 = vector.load %arg10[%c0_113, %c1408] : memref<8x2048xf32, #tpu.memory_space<vmem>>, vector<8x32xf32>
    tpu.vector_store %arg10[%c0_113, %c1408], %107 {strides = array<i32>} : memref<8x2048xf32, #tpu.memory_space<vmem>>, vector<8x32xf32>,
    %c360 = arith.constant 360 : index
    %c0_114 = arith.constant 0 : index
    %109 = vector.load %arg9[%c360, %c0_114] : memref<512x32xf32, #tpu.memory_space<vmem>>, vector<8x32xf32>
    %c0_115 = arith.constant 0 : index
    %c1440 = arith.constant 1440 : index
    %110 = vector.load %arg10[%c0_115, %c1440] : memref<8x2048xf32, #tpu.memory_space<vmem>>, vector<8x32xf32>
    tpu.vector_store %arg10[%c0_115, %c1440], %109 {strides = array<i32>} : memref<8x2048xf32, #tpu.memory_space<vmem>>, vector<8x32xf32>,
    %c368 = arith.constant 368 : index
    %c0_116 = arith.constant 0 : index
    %111 = vector.load %arg9[%c368, %c0_116] : memref<512x32xf32, #tpu.memory_space<vmem>>, vector<8x32xf32>
    %c0_117 = arith.constant 0 : index
    %c1472 = arith.constant 1472 : index
    %112 = vector.load %arg10[%c0_117, %c1472] : memref<8x2048xf32, #tpu.memory_space<vmem>>, vector<8x32xf32>
    tpu.vector_store %arg10[%c0_117, %c1472], %111 {strides = array<i32>} : memref<8x2048xf32, #tpu.memory_space<vmem>>, vector<8x32xf32>,
    %c376 = arith.constant 376 : index
    %c0_118 = arith.constant 0 : index
    %113 = vector.load %arg9[%c376, %c0_118] : memref<512x32xf32, #tpu.memory_space<vmem>>, vector<8x32xf32>
    %c0_119 = arith.constant 0 : index
    %c1504 = arith.constant 1504 : index
    %114 = vector.load %arg10[%c0_119, %c1504] : memref<8x2048xf32, #tpu.memory_space<vmem>>, vector<8x32xf32>
    tpu.vector_store %arg10[%c0_119, %c1504], %113 {strides = array<i32>} : memref<8x2048xf32, #tpu.memory_space<vmem>>, vector<8x32xf32>,
    %c384_120 = arith.constant 384 : index
    %c0_121 = arith.constant 0 : index
    %115 = vector.load %arg9[%c384_120, %c0_121] : memref<512x32xf32, #tpu.memory_space<vmem>>, vector<8x32xf32>
    %c0_122 = arith.constant 0 : index
    %c1536 = arith.constant 1536 : index
    %116 = vector.load %arg10[%c0_122, %c1536] : memref<8x2048xf32, #tpu.memory_space<vmem>>, vector<8x32xf32>
    tpu.vector_store %arg10[%c0_122, %c1536], %115 {strides = array<i32>} : memref<8x2048xf32, #tpu.memory_space<vmem>>, vector<8x32xf32>,
    %c392 = arith.constant 392 : index
    %c0_123 = arith.constant 0 : index
    %117 = vector.load %arg9[%c392, %c0_123] : memref<512x32xf32, #tpu.memory_space<vmem>>, vector<8x32xf32>
    %c0_124 = arith.constant 0 : index
    %c1568 = arith.constant 1568 : index
    %118 = vector.load %arg10[%c0_124, %c1568] : memref<8x2048xf32, #tpu.memory_space<vmem>>, vector<8x32xf32>
    tpu.vector_store %arg10[%c0_124, %c1568], %117 {strides = array<i32>} : memref<8x2048xf32, #tpu.memory_space<vmem>>, vector<8x32xf32>,
    %c400 = arith.constant 400 : index
    %c0_125 = arith.constant 0 : index
    %119 = vector.load %arg9[%c400, %c0_125] : memref<512x32xf32, #tpu.memory_space<vmem>>, vector<8x32xf32>
    %c0_126 = arith.constant 0 : index
    %c1600 = arith.constant 1600 : index
    %120 = vector.load %arg10[%c0_126, %c1600] : memref<8x2048xf32, #tpu.memory_space<vmem>>, vector<8x32xf32>
    tpu.vector_store %arg10[%c0_126, %c1600], %119 {strides = array<i32>} : memref<8x2048xf32, #tpu.memory_space<vmem>>, vector<8x32xf32>,
    %c408 = arith.constant 408 : index
    %c0_127 = arith.constant 0 : index
    %121 = vector.load %arg9[%c408, %c0_127] : memref<512x32xf32, #tpu.memory_space<vmem>>, vector<8x32xf32>
    %c0_128 = arith.constant 0 : index
    %c1632 = arith.constant 1632 : index
    %122 = vector.load %arg10[%c0_128, %c1632] : memref<8x2048xf32, #tpu.memory_space<vmem>>, vector<8x32xf32>
    tpu.vector_store %arg10[%c0_128, %c1632], %121 {strides = array<i32>} : memref<8x2048xf32, #tpu.memory_space<vmem>>, vector<8x32xf32>,
    %c416_129 = arith.constant 416 : index
    %c0_130 = arith.constant 0 : index
    %123 = vector.load %arg9[%c416_129, %c0_130] : memref<512x32xf32, #tpu.memory_space<vmem>>, vector<8x32xf32>
    %c0_131 = arith.constant 0 : index
    %c1664 = arith.constant 1664 : index
    %124 = vector.load %arg10[%c0_131, %c1664] : memref<8x2048xf32, #tpu.memory_space<vmem>>, vector<8x32xf32>
    tpu.vector_store %arg10[%c0_131, %c1664], %123 {strides = array<i32>} : memref<8x2048xf32, #tpu.memory_space<vmem>>, vector<8x32xf32>,
    %c424 = arith.constant 424 : index
    %c0_132 = arith.constant 0 : index
    %125 = vector.load %arg9[%c424, %c0_132] : memref<512x32xf32, #tpu.memory_space<vmem>>, vector<8x32xf32>
    %c0_133 = arith.constant 0 : index
    %c1696 = arith.constant 1696 : index
    %126 = vector.load %arg10[%c0_133, %c1696] : memref<8x2048xf32, #tpu.memory_space<vmem>>, vector<8x32xf32>
    tpu.vector_store %arg10[%c0_133, %c1696], %125 {strides = array<i32>} : memref<8x2048xf32, #tpu.memory_space<vmem>>, vector<8x32xf32>,
    %c432 = arith.constant 432 : index
    %c0_134 = arith.constant 0 : index
    %127 = vector.load %arg9[%c432, %c0_134] : memref<512x32xf32, #tpu.memory_space<vmem>>, vector<8x32xf32>
    %c0_135 = arith.constant 0 : index
    %c1728 = arith.constant 1728 : index
    %128 = vector.load %arg10[%c0_135, %c1728] : memref<8x2048xf32, #tpu.memory_space<vmem>>, vector<8x32xf32>
    tpu.vector_store %arg10[%c0_135, %c1728], %127 {strides = array<i32>} : memref<8x2048xf32, #tpu.memory_space<vmem>>, vector<8x32xf32>,
    %c440 = arith.constant 440 : index
    %c0_136 = arith.constant 0 : index
    %129 = vector.load %arg9[%c440, %c0_136] : memref<512x32xf32, #tpu.memory_space<vmem>>, vector<8x32xf32>
    %c0_137 = arith.constant 0 : index
    %c1760 = arith.constant 1760 : index
    %130 = vector.load %arg10[%c0_137, %c1760] : memref<8x2048xf32, #tpu.memory_space<vmem>>, vector<8x32xf32>
    tpu.vector_store %arg10[%c0_137, %c1760], %129 {strides = array<i32>} : memref<8x2048xf32, #tpu.memory_space<vmem>>, vector<8x32xf32>,
    %c448_138 = arith.constant 448 : index
    %c0_139 = arith.constant 0 : index
    %131 = vector.load %arg9[%c448_138, %c0_139] : memref<512x32xf32, #tpu.memory_space<vmem>>, vector<8x32xf32>
    %c0_140 = arith.constant 0 : index
    %c1792 = arith.constant 1792 : index
    %132 = vector.load %arg10[%c0_140, %c1792] : memref<8x2048xf32, #tpu.memory_space<vmem>>, vector<8x32xf32>
    tpu.vector_store %arg10[%c0_140, %c1792], %131 {strides = array<i32>} : memref<8x2048xf32, #tpu.memory_space<vmem>>, vector<8x32xf32>,
    %c456 = arith.constant 456 : index
    %c0_141 = arith.constant 0 : index
    %133 = vector.load %arg9[%c456, %c0_141] : memref<512x32xf32, #tpu.memory_space<vmem>>, vector<8x32xf32>
    %c0_142 = arith.constant 0 : index
    %c1824 = arith.constant 1824 : index
    %134 = vector.load %arg10[%c0_142, %c1824] : memref<8x2048xf32, #tpu.memory_space<vmem>>, vector<8x32xf32>
    tpu.vector_store %arg10[%c0_142, %c1824], %133 {strides = array<i32>} : memref<8x2048xf32, #tpu.memory_space<vmem>>, vector<8x32xf32>,
    %c464 = arith.constant 464 : index
    %c0_143 = arith.constant 0 : index
    %135 = vector.load %arg9[%c464, %c0_143] : memref<512x32xf32, #tpu.memory_space<vmem>>, vector<8x32xf32>
    %c0_144 = arith.constant 0 : index
    %c1856 = arith.constant 1856 : index
    %136 = vector.load %arg10[%c0_144, %c1856] : memref<8x2048xf32, #tpu.memory_space<vmem>>, vector<8x32xf32>
    tpu.vector_store %arg10[%c0_144, %c1856], %135 {strides = array<i32>} : memref<8x2048xf32, #tpu.memory_space<vmem>>, vector<8x32xf32>,
    %c472 = arith.constant 472 : index
    %c0_145 = arith.constant 0 : index
    %137 = vector.load %arg9[%c472, %c0_145] : memref<512x32xf32, #tpu.memory_space<vmem>>, vector<8x32xf32>
    %c0_146 = arith.constant 0 : index
    %c1888 = arith.constant 1888 : index
    %138 = vector.load %arg10[%c0_146, %c1888] : memref<8x2048xf32, #tpu.memory_space<vmem>>, vector<8x32xf32>
    tpu.vector_store %arg10[%c0_146, %c1888], %137 {strides = array<i32>} : memref<8x2048xf32, #tpu.memory_space<vmem>>, vector<8x32xf32>,
    %c480_147 = arith.constant 480 : index
    %c0_148 = arith.constant 0 : index
    %139 = vector.load %arg9[%c480_147, %c0_148] : memref<512x32xf32, #tpu.memory_space<vmem>>, vector<8x32xf32>
    %c0_149 = arith.constant 0 : index
    %c1920 = arith.constant 1920 : index
    %140 = vector.load %arg10[%c0_149, %c1920] : memref<8x2048xf32, #tpu.memory_space<vmem>>, vector<8x32xf32>
    tpu.vector_store %arg10[%c0_149, %c1920], %139 {strides = array<i32>} : memref<8x2048xf32, #tpu.memory_space<vmem>>, vector<8x32xf32>,
    %c488 = arith.constant 488 : index
    %c0_150 = arith.constant 0 : index
    %141 = vector.load %arg9[%c488, %c0_150] : memref<512x32xf32, #tpu.memory_space<vmem>>, vector<8x32xf32>
    %c0_151 = arith.constant 0 : index
    %c1952 = arith.constant 1952 : index
    %142 = vector.load %arg10[%c0_151, %c1952] : memref<8x2048xf32, #tpu.memory_space<vmem>>, vector<8x32xf32>
    tpu.vector_store %arg10[%c0_151, %c1952], %141 {strides = array<i32>} : memref<8x2048xf32, #tpu.memory_space<vmem>>, vector<8x32xf32>,
    %c496 = arith.constant 496 : index
    %c0_152 = arith.constant 0 : index
    %143 = vector.load %arg9[%c496, %c0_152] : memref<512x32xf32, #tpu.memory_space<vmem>>, vector<8x32xf32>
    %c0_153 = arith.constant 0 : index
    %c1984 = arith.constant 1984 : index
    %144 = vector.load %arg10[%c0_153, %c1984] : memref<8x2048xf32, #tpu.memory_space<vmem>>, vector<8x32xf32>
    tpu.vector_store %arg10[%c0_153, %c1984], %143 {strides = array<i32>} : memref<8x2048xf32, #tpu.memory_space<vmem>>, vector<8x32xf32>,
    %c504 = arith.constant 504 : index
    %c0_154 = arith.constant 0 : index
    %145 = vector.load %arg9[%c504, %c0_154] : memref<512x32xf32, #tpu.memory_space<vmem>>, vector<8x32xf32>
    %c0_155 = arith.constant 0 : index
    %c2016 = arith.constant 2016 : index
    %146 = vector.load %arg10[%c0_155, %c2016] : memref<8x2048xf32, #tpu.memory_space<vmem>>, vector<8x32xf32>
    tpu.vector_store %arg10[%c0_155, %c2016], %145 {strides = array<i32>} : memref<8x2048xf32, #tpu.memory_space<vmem>>, vector<8x32xf32>,
    %c0_156 = arith.constant 0 : index
    %c0_157 = arith.constant 0 : index
    %147 = vector.load %arg10[%c0_156, %c0_157] : memref<8x2048xf32, #tpu.memory_space<vmem>>, vector<8x2048xf32>
    %148 = arith.truncf %147 : vector<8x2048xf32> to vector<8x2048xbf16>
    %c0_158 = arith.constant 0 : index
    %c0_159 = arith.constant 0 : index
    %149 = vector.load %arg4[%c0_158, %c0_159] : memref<2048x1024xbf16, #tpu.memory_space<vmem>>, vector<2048x1024xbf16>
    %cst_160 = arith.constant dense<0.000000e+00> : vector<8x1024xf32>
    %150 = tpu.matmul %148, %149, %cst_160 {dimension_numbers = #tpu.dot_dimension_numbers<[1], [0], [0], [1], [0, 0, 1, 1], [], []>} : vector<8x2048xbf16>, vector<2048x1024xbf16>, vector<8x1024xf32> -> vector<8x1024xf32>
    %c0_161 = arith.constant 0 : index
    %c0_162 = arith.constant 0 : index
    %151 = vector.load %arg5[%c0_161, %c0_162] : memref<1x1024xf32, #tpu.memory_space<vmem>>, vector<1x1024xf32>
    %152 = vector.broadcast %151 : vector<1x1024xf32> to vector<8x1024xf32>
    %153 = arith.addf %150, %152 : vector<8x1024xf32>
    %154 = vector.extract_strided_slice %153 {offsets = [0, 0], sizes = [8, 512], strides = [1, 1]} : vector<8x1024xf32> to vector<8x512xf32>
    %cst_163 = arith.constant 0.000000e+00 : f32
    %155 = vector.broadcast %cst_163 : f32 to vector<8x512xf32>
    %156 = arith.maximumf %154, %155 : vector<8x512xf32>
    %157 = vector.extract_strided_slice %153 {offsets = [0, 512], sizes = [8, 512], strides = [1, 1]} : vector<8x1024xf32> to vector<8x512xf32>
    %158 = arith.truncf %156 : vector<8x512xf32> to vector<8x512xbf16>
    %c0_164 = arith.constant 0 : index
    %c0_165 = arith.constant 0 : index
    %159 = vector.load %arg6[%c0_164, %c0_165] : memref<512x512xbf16, #tpu.memory_space<vmem>>, vector<512x512xbf16>
    %cst_166 = arith.constant dense<0.000000e+00> : vector<8x512xf32>
    %160 = tpu.matmul %158, %159, %cst_166 {dimension_numbers = #tpu.dot_dimension_numbers<[1], [0], [0], [1], [0, 0, 1, 1], [], []>} : vector<8x512xbf16>, vector<512x512xbf16>, vector<8x512xf32> -> vector<8x512xf32>
    %c0_167 = arith.constant 0 : index
    %c0_168 = arith.constant 0 : index
    %161 = vector.load %arg7[%c0_167, %c0_168] : memref<1x512xf32, #tpu.memory_space<vmem>>, vector<1x512xf32>
    %162 = vector.broadcast %161 : vector<1x512xf32> to vector<8x512xf32>
    %163 = arith.addf %160, %162 : vector<8x512xf32>
    %164 = arith.addf %163, %157 : vector<8x512xf32>
    %cst_169 = arith.constant 0.000000e+00 : f32
    %165 = vector.broadcast %cst_169 : f32 to vector<8x512xf32>
    %166 = arith.maximumf %164, %165 : vector<8x512xf32>
    %c0_170 = arith.constant 0 : index
    %c0_171 = arith.constant 0 : index
    %167 = vector.load %arg8[%c0_170, %c0_171] : memref<8x512xf32, #tpu.memory_space<vmem>>, vector<8x512xf32>
    tpu.vector_store %arg8[%c0_170, %c0_171], %166 {strides = array<i32>} : memref<8x512xf32, #tpu.memory_space<vmem>>, vector<8x512xf32>,
    return
  }
  func.func @transform_0(%arg0: i32) -> (i32, i32) {
    %c0_i32 = arith.constant 0 : i32
    %c0_i32_0 = arith.constant 0 : i32
    return %arg0, %c0_i32 : i32, i32
  }
  func.func @transform_1(%arg0: i32) -> (i32, i32) {
    %c0_i32 = arith.constant 0 : i32
    %c0_i32_0 = arith.constant 0 : i32
    %c0_i32_1 = arith.constant 0 : i32
    return %c0_i32, %c0_i32_0 : i32, i32
  }
  func.func @transform_2(%arg0: i32) -> (i32, i32) {
    %c0_i32 = arith.constant 0 : i32
    %c0_i32_0 = arith.constant 0 : i32
    %c0_i32_1 = arith.constant 0 : i32
    return %c0_i32, %c0_i32_0 : i32, i32
  }
  func.func @transform_3(%arg0: i32) -> (i32, i32) {
    %c0_i32 = arith.constant 0 : i32
    %c0_i32_0 = arith.constant 0 : i32
    %c0_i32_1 = arith.constant 0 : i32
    return %c0_i32, %c0_i32_0 : i32, i32
  }
  func.func @transform_4(%arg0: i32) -> (i32, i32) {
    %c0_i32 = arith.constant 0 : i32
    %c0_i32_0 = arith.constant 0 : i32
    %c0_i32_1 = arith.constant 0 : i32
    return %c0_i32, %c0_i32_0 : i32, i32
  }
  func.func @transform_5(%arg0: i32) -> (i32, i32) {
    %c0_i32 = arith.constant 0 : i32
    %c0_i32_0 = arith.constant 0 : i32
    %c0_i32_1 = arith.constant 0 : i32
    return %c0_i32, %c0_i32_0 : i32, i32
  }
  func.func @transform_6(%arg0: i32) -> (i32, i32) {
    %c0_i32 = arith.constant 0 : i32
    %c0_i32_0 = arith.constant 0 : i32
    %c0_i32_1 = arith.constant 0 : i32
    return %c0_i32, %c0_i32_0 : i32, i32
  }
  func.func @transform_7(%arg0: i32) -> (i32, i32) {
    %c0_i32 = arith.constant 0 : i32
    %c0_i32_0 = arith.constant 0 : i32
    return %arg0, %c0_i32 : i32, i32
  }
}

</mosaic_0001>

<llo_original>
// kernel: img_encoder_pallas.1
$region0: #{img_encoder_pallas.1}
  #allocation0 [shape = 'u32[]', space=smem, size = 0x4, offset = 0x4, fixed_abs, tag = 'smem constant byte address 0x4 - core index']
  #allocation1 [shape = 'u32[144,128]{1,0:T(1,128)}', space=vmem, size = 0x12000, scoped, tag = 'internal scratch']
  #allocation2 [shape = 'f32[512,32]{1,0:T(8,128)}', space=vmem, size = 0x40000, scoped, tag = 'scratch operand']
  #allocation3 [shape = 'f32[8,2048]{1,0:T(8,128)}', space=vmem, size = 0x10000, scoped, tag = 'scratch operand']
  %s0 = inlined_call_operand.vmem [shape: bf16[512,1408], index: 0, kind: input, shape index: {}]
  %s1 = inlined_call_operand.vmem [shape: bf16[1408,32], index: 1, kind: input, shape index: {}]
  %s2 = inlined_call_operand.vmem [shape: f32[1,32], index: 2, kind: input, shape index: {}]
  %s3 = inlined_call_operand.vmem [shape: bf16[2048,1024], index: 3, kind: input, shape index: {}]
  %s4 = inlined_call_operand.vmem [shape: f32[1,1024], index: 4, kind: input, shape index: {}]
  %s5 = inlined_call_operand.vmem [shape: bf16[512,512], index: 5, kind: input, shape index: {}]
  %s6 = inlined_call_operand.vmem [shape: f32[1,512], index: 6, kind: input, shape index: {}]
  %s7 = inlined_call_operand.vmem [shape: f32[8,512], index: 7, kind: output, shape index: {}]
  %s8 = sld [smem:[#allocation0]]
  $region38: #{img_encoder_pallas.1} parent=0
    _
  %s10 = ssub.s32 1, %s8
  %s11 = scalar_select 0, %s10, %s8
  // Predicated region
  $region2: #{img_encoder_pallas.1} parent=0 // pred_check
    _
  $region3: #{img_encoder_pallas.1} parent=0 // pred_check_branch
    %13 = sbr.rel (0) target = $region5
  $region4: #{img_encoder_pallas.1} parent=0 // pred_region
    _
  $region5: #{img_encoder_pallas.1} parent=0 // pred_fallthru
    _
  // Predicated region
  $region6: #{img_encoder_pallas.1} parent=0 // pred_check
    _
  $region7: #{img_encoder_pallas.1} parent=0 // pred_check_branch
    %15 = sbr.rel (0) target = $region9
  $region8: #{img_encoder_pallas.1} parent=0 // pred_region
    _
  $region9: #{img_encoder_pallas.1} parent=0 // pred_fallthru
    _
  // Predicated region
  $region10: #{img_encoder_pallas.1} parent=0 // pred_check
    _
  $region11: #{img_encoder_pallas.1} parent=0 // pred_check_branch
    %17 = sbr.rel (0) target = $region13
  $region12: #{img_encoder_pallas.1} parent=0 // pred_region
    _
  $region13: #{img_encoder_pallas.1} parent=0 // pred_fallthru
    _
  // Predicated region
  $region14: #{img_encoder_pallas.1} parent=0 // pred_check
    _
  $region15: #{img_encoder_pallas.1} parent=0 // pred_check_branch
    %19 = sbr.rel (0) target = $region17
  $region16: #{img_encoder_pallas.1} parent=0 // pred_region
    _
  $region17: #{img_encoder_pallas.1} parent=0 // pred_fallthru
    _
  // Predicated region
  $region18: #{img_encoder_pallas.1} parent=0 // pred_check
    _
  $region19: #{img_encoder_pallas.1} parent=0 // pred_check_branch
    %21 = sbr.rel (0) target = $region21
  $region20: #{img_encoder_pallas.1} parent=0 // pred_region
    _
  $region21: #{img_encoder_pallas.1} parent=0 // pred_fallthru
    _
  // Predicated region
  $region22: #{img_encoder_pallas.1} parent=0 // pred_check
    _
  $region23: #{img_encoder_pallas.1} parent=0 // pred_check_branch
    %23 = sbr.rel (0) target = $region25
  $region24: #{img_encoder_pallas.1} parent=0 // pred_region
    _
  $region25: #{img_encoder_pallas.1} parent=0 // pred_fallthru
    _
  // Predicated region
  $region26: #{img_encoder_pallas.1} parent=0 // pred_check
    _
  $region27: #{img_encoder_pallas.1} parent=0 // pred_check_branch
    %25 = sbr.rel (0) target = $region29
  $region28: #{img_encoder_pallas.1} parent=0 // pred_region
    _
  $region29: #{img_encoder_pallas.1} parent=0 // pred_fallthru
    _
  %v27 = vld [vmem:[%s0] sm:$0xff]
  %v28 = vld [vmem:[%s0 + $0x8] sm:$0xff]
  %v29 = vld [vmem:[%s0 + $0x10] sm:$0xff]
  %v30 = vld [vmem:[%s0 + $0x18] sm:$0xff]
  %v31 = vld [vmem:[%s0 + $0x20] sm:$0xff]
  %v32 = vld [vmem:[%s0 + $0x28] sm:$0xf]
  %v33 = vld [vmem:[%s0 + $0x2c] sm:$0xff]
  %v34 = vld [vmem:[%s0 + $0x34] sm:$0xff]
  %v35 = vld [vmem:[%s0 + $0x3c] sm:$0xff]
  %v36 = vld [vmem:[%s0 + $0x44] sm:$0xff]
  %v37 = vld [vmem:[%s0 + $0x4c] sm:$0xff]
  %v38 = vld [vmem:[%s0 + $0x54] sm:$0xf]
  %v39 = vld [vmem:[%s0 + $0x58] sm:$0xff]
  %v40 = vld [vmem:[%s0 + $0x60] sm:$0xff]
  %v41 = vld [vmem:[%s0 + $0x68] sm:$0xff]
  %v42 = vld [vmem:[%s0 + $0x70] sm:$0xff]
  %v43 = vld [vmem:[%s0 + $0x78] sm:$0xff]
  %v44 = vld [vmem:[%s0 + $0x80] sm:$0xf]
  %v45 = vld [vmem:[%s0 + $0x84] sm:$0xff]
  %v46 = vld [vmem:[%s0 + $0x8c] sm:$0xff]
  %v47 = vld [vmem:[%s0 + $0x94] sm:$0xff]
  %v48 = vld [vmem:[%s0 + $0x9c] sm:$0xff]
  %v49 = vld [vmem:[%s0 + $0xa4] sm:$0xff]
  %v50 = vld [vmem:[%s0 + $0xac] sm:$0xf]
  %v51 = vld [vmem:[%s0 + $0xb0] sm:$0xff]
  %v52 = vld [vmem:[%s0 + $0xb8] sm:$0xff]
  %v53 = vld [vmem:[%s0 + $0xc0] sm:$0xff]
  %v54 = vld [vmem:[%s0 + $0xc8] sm:$0xff]
  %v55 = vld [vmem:[%s0 + $0xd0] sm:$0xff]
  %v56 = vld [vmem:[%s0 + $0xd8] sm:$0xf]
  %v57 = vld [vmem:[%s0 + $0xdc] sm:$0xff]
  %v58 = vld [vmem:[%s0 + $0xe4] sm:$0xff]
  %v59 = vld [vmem:[%s0 + $0xec] sm:$0xff]
  %v60 = vld [vmem:[%s0 + $0xf4] sm:$0xff]
  %v61 = vld [vmem:[%s0 + $0xfc] sm:$0xff]
  %v62 = vld [vmem:[%s0 + $0x104] sm:$0xf]
  %v63 = vld [vmem:[%s0 + $0x108] sm:$0xff]
  %v64 = vld [vmem:[%s0 + $0x110] sm:$0xff]
  %v65 = vld [vmem:[%s0 + $0x118] sm:$0xff]
  %v66 = vld [vmem:[%s0 + $0x120] sm:$0xff]
  %v67 = vld [vmem:[%s0 + $0x128] sm:$0xff]
  %v68 = vld [vmem:[%s0 + $0x130] sm:$0xf]
  %v69 = vld [vmem:[%s0 + $0x134] sm:$0xff]
  %v70 = vld [vmem:[%s0 + $0x13c] sm:$0xff]
  %v71 = vld [vmem:[%s0 + $0x144] sm:$0xff]
  %v72 = vld [vmem:[%s0 + $0x14c] sm:$0xff]
  %v73 = vld [vmem:[%s0 + $0x154] sm:$0xff]
  %v74 = vld [vmem:[%s0 + $0x15c] sm:$0xf]
  %v75 = vld [vmem:[%s0 + $0x160] sm:$0xff]
  %v76 = vld [vmem:[%s0 + $0x168] sm:$0xff]
  %v77 = vld [vmem:[%s0 + $0x170] sm:$0xff]
  %v78 = vld [vmem:[%s0 + $0x178] sm:$0xff]
  %v79 = vld [vmem:[%s0 + $0x180] sm:$0xff]
  %v80 = vld [vmem:[%s0 + $0x188] sm:$0xf]
  %v81 = vld [vmem:[%s0 + $0x18c] sm:$0xff]
  %v82 = vld [vmem:[%s0 + $0x194] sm:$0xff]
  %v83 = vld [vmem:[%s0 + $0x19c] sm:$0xff]
  %v84 = vld [vmem:[%s0 + $0x1a4] sm:$0xff]
  %v85 = vld [vmem:[%s0 + $0x1ac] sm:$0xff]
  %v86 = vld [vmem:[%s0 + $0x1b4] sm:$0xf]
  %v87 = vld [vmem:[%s0 + $0x1b8] sm:$0xff]
  %v88 = vld [vmem:[%s0 + $0x1c0] sm:$0xff]
  %v89 = vld [vmem:[%s0 + $0x1c8] sm:$0xff]
  %v90 = vld [vmem:[%s0 + $0x1d0] sm:$0xff]
  %v91 = vld [vmem:[%s0 + $0x1d8] sm:$0xff]
  %v92 = vld [vmem:[%s0 + $0x1e0] sm:$0xf]
  %v93 = vld [vmem:[%s0 + $0x1e4] sm:$0xff]
  %v94 = vld [vmem:[%s0 + $0x1ec] sm:$0xff]
  %v95 = vld [vmem:[%s0 + $0x1f4] sm:$0xff]
  %v96 = vld [vmem:[%s0 + $0x1fc] sm:$0xff]
  %v97 = vld [vmem:[%s0 + $0x204] sm:$0xff]
  %v98 = vld [vmem:[%s0 + $0x20c] sm:$0xf]
  %v99 = vld [vmem:[%s0 + $0x210] sm:$0xff]
  %v100 = vld [vmem:[%s0 + $0x218] sm:$0xff]
  %v101 = vld [vmem:[%s0 + $0x220] sm:$0xff]
  %v102 = vld [vmem:[%s0 + $0x228] sm:$0xff]
  %v103 = vld [vmem:[%s0 + $0x230] sm:$0xff]
  %v104 = vld [vmem:[%s0 + $0x238] sm:$0xf]
  %v105 = vld [vmem:[%s0 + $0x23c] sm:$0xff]
  %v106 = vld [vmem:[%s0 + $0x244] sm:$0xff]
  %v107 = vld [vmem:[%s0 + $0x24c] sm:$0xff]
  %v108 = vld [vmem:[%s0 + $0x254] sm:$0xff]
  %v109 = vld [vmem:[%s0 + $0x25c] sm:$0xff]
  %v110 = vld [vmem:[%s0 + $0x264] sm:$0xf]
  %v111 = vld [vmem:[%s0 + $0x268] sm:$0xff]
  %v112 = vld [vmem:[%s0 + $0x270] sm:$0xff]
  %v113 = vld [vmem:[%s0 + $0x278] sm:$0xff]
  %v114 = vld [vmem:[%s0 + $0x280] sm:$0xff]
  %v115 = vld [vmem:[%s0 + $0x288] sm:$0xff]
  %v116 = vld [vmem:[%s0 + $0x290] sm:$0xf]
  %v117 = vld [vmem:[%s0 + $0x294] sm:$0xff]
  %v118 = vld [vmem:[%s0 + $0x29c] sm:$0xff]
  %v119 = vld [vmem:[%s0 + $0x2a4] sm:$0xff]
  %v120 = vld [vmem:[%s0 + $0x2ac] sm:$0xff]
  %v121 = vld [vmem:[%s0 + $0x2b4] sm:$0xff]
  %v122 = vld [vmem:[%s0 + $0x2bc] sm:$0xf]
  %v123 = vld [vmem:[%s0 + $0x2c0] sm:$0xff]
  %v124 = vld [vmem:[%s0 + $0x2c8] sm:$0xff]
  %v125 = vld [vmem:[%s0 + $0x2d0] sm:$0xff]
  %v126 = vld [vmem:[%s0 + $0x2d8] sm:$0xff]
  %v127 = vld [vmem:[%s0 + $0x2e0] sm:$0xff]
  %v128 = vld [vmem:[%s0 + $0x2e8] sm:$0xf]
  %v129 = vld [vmem:[%s0 + $0x2ec] sm:$0xff]
  %v130 = vld [vmem:[%s0 + $0x2f4] sm:$0xff]
  %v131 = vld [vmem:[%s0 + $0x2fc] sm:$0xff]
  %v132 = vld [vmem:[%s0 + $0x304] sm:$0xff]
  %v133 = vld [vmem:[%s0 + $0x30c] sm:$0xff]
  %v134 = vld [vmem:[%s0 + $0x314] sm:$0xf]
  %v135 = vld [vmem:[%s0 + $0x318] sm:$0xff]
  %v136 = vld [vmem:[%s0 + $0x320] sm:$0xff]
  %v137 = vld [vmem:[%s0 + $0x328] sm:$0xff]
  %v138 = vld [vmem:[%s0 + $0x330] sm:$0xff]
  %v139 = vld [vmem:[%s0 + $0x338] sm:$0xff]
  %v140 = vld [vmem:[%s0 + $0x340] sm:$0xf]
  %v141 = vld [vmem:[%s0 + $0x344] sm:$0xff]
  %v142 = vld [vmem:[%s0 + $0x34c] sm:$0xff]
  %v143 = vld [vmem:[%s0 + $0x354] sm:$0xff]
  %v144 = vld [vmem:[%s0 + $0x35c] sm:$0xff]
  %v145 = vld [vmem:[%s0 + $0x364] sm:$0xff]
  %v146 = vld [vmem:[%s0 + $0x36c] sm:$0xf]
  %v147 = vld [vmem:[%s0 + $0x370] sm:$0xff]
  %v148 = vld [vmem:[%s0 + $0x378] sm:$0xff]
  %v149 = vld [vmem:[%s0 + $0x380] sm:$0xff]
  %v150 = vld [vmem:[%s0 + $0x388] sm:$0xff]
  %v151 = vld [vmem:[%s0 + $0x390] sm:$0xff]
  %v152 = vld [vmem:[%s0 + $0x398] sm:$0xf]
  %v153 = vld [vmem:[%s0 + $0x39c] sm:$0xff]
  %v154 = vld [vmem:[%s0 + $0x3a4] sm:$0xff]
  %v155 = vld [vmem:[%s0 + $0x3ac] sm:$0xff]
  %v156 = vld [vmem:[%s0 + $0x3b4] sm:$0xff]
  %v157 = vld [vmem:[%s0 + $0x3bc] sm:$0xff]
  %v158 = vld [vmem:[%s0 + $0x3c4] sm:$0xf]
  %v159 = vld [vmem:[%s0 + $0x3c8] sm:$0xff]
  %v160 = vld [vmem:[%s0 + $0x3d0] sm:$0xff]
  %v161 = vld [vmem:[%s0 + $0x3d8] sm:$0xff]
  %v162 = vld [vmem:[%s0 + $0x3e0] sm:$0xff]
  %v163 = vld [vmem:[%s0 + $0x3e8] sm:$0xff]
  %v164 = vld [vmem:[%s0 + $0x3f0] sm:$0xf]
  %v165 = vld [vmem:[%s0 + $0x3f4] sm:$0xff]
  %v166 = vld [vmem:[%s0 + $0x3fc] sm:$0xff]
  %v167 = vld [vmem:[%s0 + $0x404] sm:$0xff]
  %v168 = vld [vmem:[%s0 + $0x40c] sm:$0xff]
  %v169 = vld [vmem:[%s0 + $0x414] sm:$0xff]
  %v170 = vld [vmem:[%s0 + $0x41c] sm:$0xf]
  %v171 = vld [vmem:[%s0 + $0x420] sm:$0xff]
  %v172 = vld [vmem:[%s0 + $0x428] sm:$0xff]
  %v173 = vld [vmem:[%s0 + $0x430] sm:$0xff]
  %v174 = vld [vmem:[%s0 + $0x438] sm:$0xff]
  %v175 = vld [vmem:[%s0 + $0x440] sm:$0xff]
  %v176 = vld [vmem:[%s0 + $0x448] sm:$0xf]
  %v177 = vld [vmem:[%s0 + $0x44c] sm:$0xff]
  %v178 = vld [vmem:[%s0 + $0x454] sm:$0xff]
  %v179 = vld [vmem:[%s0 + $0x45c] sm:$0xff]
  %v180 = vld [vmem:[%s0 + $0x464] sm:$0xff]
  %v181 = vld [vmem:[%s0 + $0x46c] sm:$0xff]
  %v182 = vld [vmem:[%s0 + $0x474] sm:$0xf]
  %v183 = vld [vmem:[%s0 + $0x478] sm:$0xff]
  %v184 = vld [vmem:[%s0 + $0x480] sm:$0xff]
  %v185 = vld [vmem:[%s0 + $0x488] sm:$0xff]
  %v186 = vld [vmem:[%s0 + $0x490] sm:$0xff]
  %v187 = vld [vmem:[%s0 + $0x498] sm:$0xff]
  %v188 = vld [vmem:[%s0 + $0x4a0] sm:$0xf]
  %v189 = vld [vmem:[%s0 + $0x4a4] sm:$0xff]
  %v190 = vld [vmem:[%s0 + $0x4ac] sm:$0xff]
  %v191 = vld [vmem:[%s0 + $0x4b4] sm:$0xff]
  %v192 = vld [vmem:[%s0 + $0x4bc] sm:$0xff]
  %v193 = vld [vmem:[%s0 + $0x4c4] sm:$0xff]
  %v194 = vld [vmem:[%s0 + $0x4cc] sm:$0xf]
  %v195 = vld [vmem:[%s0 + $0x4d0] sm:$0xff]
  %v196 = vld [vmem:[%s0 + $0x4d8] sm:$0xff]
  %v197 = vld [vmem:[%s0 + $0x4e0] sm:$0xff]
  %v198 = vld [vmem:[%s0 + $0x4e8] sm:$0xff]
  %v199 = vld [vmem:[%s0 + $0x4f0] sm:$0xff]
  %v200 = vld [vmem:[%s0 + $0x4f8] sm:$0xf]
  %v201 = vld [vmem:[%s0 + $0x4fc] sm:$0xff]
  %v202 = vld [vmem:[%s0 + $0x504] sm:$0xff]
  %v203 = vld [vmem:[%s0 + $0x50c] sm:$0xff]
  %v204 = vld [vmem:[%s0 + $0x514] sm:$0xff]
  %v205 = vld [vmem:[%s0 + $0x51c] sm:$0xff]
  %v206 = vld [vmem:[%s0 + $0x524] sm:$0xf]
  %v207 = vld [vmem:[%s0 + $0x528] sm:$0xff]
  %v208 = vld [vmem:[%s0 + $0x530] sm:$0xff]
  %v209 = vld [vmem:[%s0 + $0x538] sm:$0xff]
  %v210 = vld [vmem:[%s0 + $0x540] sm:$0xff]
  %v211 = vld [vmem:[%s0 + $0x548] sm:$0xff]
  %v212 = vld [vmem:[%s0 + $0x550] sm:$0xf]
  %v213 = vld [vmem:[%s0 + $0x554] sm:$0xff]
  %v214 = vld [vmem:[%s0 + $0x55c] sm:$0xff]
  %v215 = vld [vmem:[%s0 + $0x564] sm:$0xff]
  %v216 = vld [vmem:[%s0 + $0x56c] sm:$0xff]
  %v217 = vld [vmem:[%s0 + $0x574] sm:$0xff]
  %v218 = vld [vmem:[%s0 + $0x57c] sm:$0xf]
  %v219 = vld [vmem:[%s0 + $0x580] sm:$0xff]
  %v220 = vld [vmem:[%s0 + $0x588] sm:$0xff]
  %v221 = vld [vmem:[%s0 + $0x590] sm:$0xff]
  %v222 = vld [vmem:[%s0 + $0x598] sm:$0xff]
  %v223 = vld [vmem:[%s0 + $0x5a0] sm:$0xff]
  %v224 = vld [vmem:[%s0 + $0x5a8] sm:$0xf]
  %v225 = vld [vmem:[%s0 + $0x5ac] sm:$0xff]
  %v226 = vld [vmem:[%s0 + $0x5b4] sm:$0xff]
  %v227 = vld [vmem:[%s0 + $0x5bc] sm:$0xff]
  %v228 = vld [vmem:[%s0 + $0x5c4] sm:$0xff]
  %v229 = vld [vmem:[%s0 + $0x5cc] sm:$0xff]
  %v230 = vld [vmem:[%s0 + $0x5d4] sm:$0xf]
  %v231 = vld [vmem:[%s0 + $0x5d8] sm:$0xff]
  %v232 = vld [vmem:[%s0 + $0x5e0] sm:$0xff]
  %v233 = vld [vmem:[%s0 + $0x5e8] sm:$0xff]
  %v234 = vld [vmem:[%s0 + $0x5f0] sm:$0xff]
  %v235 = vld [vmem:[%s0 + $0x5f8] sm:$0xff]
  %v236 = vld [vmem:[%s0 + $0x600] sm:$0xf]
  %v237 = vld [vmem:[%s0 + $0x604] sm:$0xff]
  %v238 = vld [vmem:[%s0 + $0x60c] sm:$0xff]
  %v239 = vld [vmem:[%s0 + $0x614] sm:$0xff]
  %v240 = vld [vmem:[%s0 + $0x61c] sm:$0xff]
  %v241 = vld [vmem:[%s0 + $0x624] sm:$0xff]
  %v242 = vld [vmem:[%s0 + $0x62c] sm:$0xf]
  %v243 = vld [vmem:[%s0 + $0x630] sm:$0xff]
  %v244 = vld [vmem:[%s0 + $0x638] sm:$0xff]
  %v245 = vld [vmem:[%s0 + $0x640] sm:$0xff]
  %v246 = vld [vmem:[%s0 + $0x648] sm:$0xff]
  %v247 = vld [vmem:[%s0 + $0x650] sm:$0xff]
  %v248 = vld [vmem:[%s0 + $0x658] sm:$0xf]
  %v249 = vld [vmem:[%s0 + $0x65c] sm:$0xff]
  %v250 = vld [vmem:[%s0 + $0x664] sm:$0xff]
  %v251 = vld [vmem:[%s0 + $0x66c] sm:$0xff]
  %v252 = vld [vmem:[%s0 + $0x674] sm:$0xff]
  %v253 = vld [vmem:[%s0 + $0x67c] sm:$0xff]
  %v254 = vld [vmem:[%s0 + $0x684] sm:$0xf]
  %v255 = vld [vmem:[%s0 + $0x688] sm:$0xff]
  %v256 = vld [vmem:[%s0 + $0x690] sm:$0xff]
  %v257 = vld [vmem:[%s0 + $0x698] sm:$0xff]
  %v258 = vld [vmem:[%s0 + $0x6a0] sm:$0xff]
  %v259 = vld [vmem:[%s0 + $0x6a8] sm:$0xff]
  %v260 = vld [vmem:[%s0 + $0x6b0] sm:$0xf]
  %v261 = vld [vmem:[%s0 + $0x6b4] sm:$0xff]
  %v262 = vld [vmem:[%s0 + $0x6bc] sm:$0xff]
  %v263 = vld [vmem:[%s0 + $0x6c4] sm:$0xff]
  %v264 = vld [vmem:[%s0 + $0x6cc] sm:$0xff]
  %v265 = vld [vmem:[%s0 + $0x6d4] sm:$0xff]
  %v266 = vld [vmem:[%s0 + $0x6dc] sm:$0xf]
  %v267 = vld [vmem:[%s0 + $0x6e0] sm:$0xff]
  %v268 = vld [vmem:[%s0 + $0x6e8] sm:$0xff]
  %v269 = vld [vmem:[%s0 + $0x6f0] sm:$0xff]
  %v270 = vld [vmem:[%s0 + $0x6f8] sm:$0xff]
  %v271 = vld [vmem:[%s0 + $0x700] sm:$0xff]
  %v272 = vld [vmem:[%s0 + $0x708] sm:$0xf]
  %v273 = vld [vmem:[%s0 + $0x70c] sm:$0xff]
  %v274 = vld [vmem:[%s0 + $0x714] sm:$0xff]
  %v275 = vld [vmem:[%s0 + $0x71c] sm:$0xff]
  %v276 = vld [vmem:[%s0 + $0x724] sm:$0xff]
  %v277 = vld [vmem:[%s0 + $0x72c] sm:$0xff]
  %v278 = vld [vmem:[%s0 + $0x734] sm:$0xf]
  %v279 = vld [vmem:[%s0 + $0x738] sm:$0xff]
  %v280 = vld [vmem:[%s0 + $0x740] sm:$0xff]
  %v281 = vld [vmem:[%s0 + $0x748] sm:$0xff]
  %v282 = vld [vmem:[%s0 + $0x750] sm:$0xff]
  %v283 = vld [vmem:[%s0 + $0x758] sm:$0xff]
  %v284 = vld [vmem:[%s0 + $0x760] sm:$0xf]
  %v285 = vld [vmem:[%s0 + $0x764] sm:$0xff]
  %v286 = vld [vmem:[%s0 + $0x76c] sm:$0xff]
  %v287 = vld [vmem:[%s0 + $0x774] sm:$0xff]
  %v288 = vld [vmem:[%s0 + $0x77c] sm:$0xff]
  %v289 = vld [vmem:[%s0 + $0x784] sm:$0xff]
  %v290 = vld [vmem:[%s0 + $0x78c] sm:$0xf]
  %v291 = vld [vmem:[%s0 + $0x790] sm:$0xff]
  %v292 = vld [vmem:[%s0 + $0x798] sm:$0xff]
  %v293 = vld [vmem:[%s0 + $0x7a0] sm:$0xff]
  %v294 = vld [vmem:[%s0 + $0x7a8] sm:$0xff]
  %v295 = vld [vmem:[%s0 + $0x7b0] sm:$0xff]
  %v296 = vld [vmem:[%s0 + $0x7b8] sm:$0xf]
  %v297 = vld [vmem:[%s0 + $0x7bc] sm:$0xff]
  %v298 = vld [vmem:[%s0 + $0x7c4] sm:$0xff]
  %v299 = vld [vmem:[%s0 + $0x7cc] sm:$0xff]
  %v300 = vld [vmem:[%s0 + $0x7d4] sm:$0xff]
  %v301 = vld [vmem:[%s0 + $0x7dc] sm:$0xff]
  %v302 = vld [vmem:[%s0 + $0x7e4] sm:$0xf]
  %v303 = vld [vmem:[%s0 + $0x7e8] sm:$0xff]
  %v304 = vld [vmem:[%s0 + $0x7f0] sm:$0xff]
  %v305 = vld [vmem:[%s0 + $0x7f8] sm:$0xff]
  %v306 = vld [vmem:[%s0 + $0x800] sm:$0xff]
  %v307 = vld [vmem:[%s0 + $0x808] sm:$0xff]
  %v308 = vld [vmem:[%s0 + $0x810] sm:$0xf]
  %v309 = vld [vmem:[%s0 + $0x814] sm:$0xff]
  %v310 = vld [vmem:[%s0 + $0x81c] sm:$0xff]
  %v311 = vld [vmem:[%s0 + $0x824] sm:$0xff]
  %v312 = vld [vmem:[%s0 + $0x82c] sm:$0xff]
  %v313 = vld [vmem:[%s0 + $0x834] sm:$0xff]
  %v314 = vld [vmem:[%s0 + $0x83c] sm:$0xf]
  %v315 = vld [vmem:[%s0 + $0x840] sm:$0xff]
  %v316 = vld [vmem:[%s0 + $0x848] sm:$0xff]
  %v317 = vld [vmem:[%s0 + $0x850] sm:$0xff]
  %v318 = vld [vmem:[%s0 + $0x858] sm:$0xff]
  %v319 = vld [vmem:[%s0 + $0x860] sm:$0xff]
  %v320 = vld [vmem:[%s0 + $0x868] sm:$0xf]
  %v321 = vld [vmem:[%s0 + $0x86c] sm:$0xff]
  %v322 = vld [vmem:[%s0 + $0x874] sm:$0xff]
  %v323 = vld [vmem:[%s0 + $0x87c] sm:$0xff]
  %v324 = vld [vmem:[%s0 + $0x884] sm:$0xff]
  %v325 = vld [vmem:[%s0 + $0x88c] sm:$0xff]
  %v326 = vld [vmem:[%s0 + $0x894] sm:$0xf]
  %v327 = vld [vmem:[%s0 + $0x898] sm:$0xff]
  %v328 = vld [vmem:[%s0 + $0x8a0] sm:$0xff]
  %v329 = vld [vmem:[%s0 + $0x8a8] sm:$0xff]
  %v330 = vld [vmem:[%s0 + $0x8b0] sm:$0xff]
  %v331 = vld [vmem:[%s0 + $0x8b8] sm:$0xff]
  %v332 = vld [vmem:[%s0 + $0x8c0] sm:$0xf]
  %v333 = vld [vmem:[%s0 + $0x8c4] sm:$0xff]
  %v334 = vld [vmem:[%s0 + $0x8cc] sm:$0xff]
  %v335 = vld [vmem:[%s0 + $0x8d4] sm:$0xff]
  %v336 = vld [vmem:[%s0 + $0x8dc] sm:$0xff]
  %v337 = vld [vmem:[%s0 + $0x8e4] sm:$0xff]
  %v338 = vld [vmem:[%s0 + $0x8ec] sm:$0xf]
  %v339 = vld [vmem:[%s0 + $0x8f0] sm:$0xff]
  %v340 = vld [vmem:[%s0 + $0x8f8] sm:$0xff]
  %v341 = vld [vmem:[%s0 + $0x900] sm:$0xff]
  %v342 = vld [vmem:[%s0 + $0x908] sm:$0xff]
  %v343 = vld [vmem:[%s0 + $0x910] sm:$0xff]
  %v344 = vld [vmem:[%s0 + $0x918] sm:$0xf]
  %v345 = vld [vmem:[%s0 + $0x91c] sm:$0xff]
  %v346 = vld [vmem:[%s0 + $0x924] sm:$0xff]
  %v347 = vld [vmem:[%s0 + $0x92c] sm:$0xff]
  %v348 = vld [vmem:[%s0 + $0x934] sm:$0xff]
  %v349 = vld [vmem:[%s0 + $0x93c] sm:$0xff]
  %v350 = vld [vmem:[%s0 + $0x944] sm:$0xf]
  %v351 = vld [vmem:[%s0 + $0x948] sm:$0xff]
  %v352 = vld [vmem:[%s0 + $0x950] sm:$0xff]
  %v353 = vld [vmem:[%s0 + $0x958] sm:$0xff]
  %v354 = vld [vmem:[%s0 + $0x960] sm:$0xff]
  %v355 = vld [vmem:[%s0 + $0x968] sm:$0xff]
  %v356 = vld [vmem:[%s0 + $0x970] sm:$0xf]
  %v357 = vld [vmem:[%s0 + $0x974] sm:$0xff]
  %v358 = vld [vmem:[%s0 + $0x97c] sm:$0xff]
  %v359 = vld [vmem:[%s0 + $0x984] sm:$0xff]
  %v360 = vld [vmem:[%s0 + $0x98c] sm:$0xff]
  %v361 = vld [vmem:[%s0 + $0x994] sm:$0xff]
  %v362 = vld [vmem:[%s0 + $0x99c] sm:$0xf]
  %v363 = vld [vmem:[%s0 + $0x9a0] sm:$0xff]
  %v364 = vld [vmem:[%s0 + $0x9a8] sm:$0xff]
  %v365 = vld [vmem:[%s0 + $0x9b0] sm:$0xff]
  %v366 = vld [vmem:[%s0 + $0x9b8] sm:$0xff]
  %v367 = vld [vmem:[%s0 + $0x9c0] sm:$0xff]
  %v368 = vld [vmem:[%s0 + $0x9c8] sm:$0xf]
  %v369 = vld [vmem:[%s0 + $0x9cc] sm:$0xff]
  %v370 = vld [vmem:[%s0 + $0x9d4] sm:$0xff]
  %v371 = vld [vmem:[%s0 + $0x9dc] sm:$0xff]
  %v372 = vld [vmem:[%s0 + $0x9e4] sm:$0xff]
  %v373 = vld [vmem:[%s0 + $0x9ec] sm:$0xff]
  %v374 = vld [vmem:[%s0 + $0x9f4] sm:$0xf]
  %v375 = vld [vmem:[%s0 + $0x9f8] sm:$0xff]
  %v376 = vld [vmem:[%s0 + $0xa00] sm:$0xff]
  %v377 = vld [vmem:[%s0 + $0xa08] sm:$0xff]
  %v378 = vld [vmem:[%s0 + $0xa10] sm:$0xff]
  %v379 = vld [vmem:[%s0 + $0xa18] sm:$0xff]
  %v380 = vld [vmem:[%s0 + $0xa20] sm:$0xf]
  %v381 = vld [vmem:[%s0 + $0xa24] sm:$0xff]
  %v382 = vld [vmem:[%s0 + $0xa2c] sm:$0xff]
  %v383 = vld [vmem:[%s0 + $0xa34] sm:$0xff]
  %v384 = vld [vmem:[%s0 + $0xa3c] sm:$0xff]
  %v385 = vld [vmem:[%s0 + $0xa44] sm:$0xff]
  %v386 = vld [vmem:[%s0 + $0xa4c] sm:$0xf]
  %v387 = vld [vmem:[%s0 + $0xa50] sm:$0xff]
  %v388 = vld [vmem:[%s0 + $0xa58] sm:$0xff]
  %v389 = vld [vmem:[%s0 + $0xa60] sm:$0xff]
  %v390 = vld [vmem:[%s0 + $0xa68] sm:$0xff]
  %v391 = vld [vmem:[%s0 + $0xa70] sm:$0xff]
  %v392 = vld [vmem:[%s0 + $0xa78] sm:$0xf]
  %v393 = vld [vmem:[%s0 + $0xa7c] sm:$0xff]
  %v394 = vld [vmem:[%s0 + $0xa84] sm:$0xff]
  %v395 = vld [vmem:[%s0 + $0xa8c] sm:$0xff]
  %v396 = vld [vmem:[%s0 + $0xa94] sm:$0xff]
  %v397 = vld [vmem:[%s0 + $0xa9c] sm:$0xff]
  %v398 = vld [vmem:[%s0 + $0xaa4] sm:$0xf]
  %v399 = vld [vmem:[%s0 + $0xaa8] sm:$0xff]
  %v400 = vld [vmem:[%s0 + $0xab0] sm:$0xff]
  %v401 = vld [vmem:[%s0 + $0xab8] sm:$0xff]
  %v402 = vld [vmem:[%s0 + $0xac0] sm:$0xff]
  %v403 = vld [vmem:[%s0 + $0xac8] sm:$0xff]
  %v404 = vld [vmem:[%s0 + $0xad0] sm:$0xf]
  %v405 = vld [vmem:[%s0 + $0xad4] sm:$0xff]
  %v406 = vld [vmem:[%s0 + $0xadc] sm:$0xff]
  %v407 = vld [vmem:[%s0 + $0xae4] sm:$0xff]
  %v408 = vld [vmem:[%s0 + $0xaec] sm:$0xff]
  %v409 = vld [vmem:[%s0 + $0xaf4] sm:$0xff]
  %v410 = vld [vmem:[%s0 + $0xafc] sm:$0xf]
  %v411 = vld [vmem:[%s1] sm:$0xf]
  %v412 = vld [vmem:[%s1 + $0x4] sm:$0xf]
  %v413 = vld [vmem:[%s1 + $0x8] sm:$0xf]
  %v414 = vld [vmem:[%s1 + $0xc] sm:$0xf]
  %v415 = vld [vmem:[%s1 + $0x10] sm:$0xf]
  %v416 = vld [vmem:[%s1 + $0x14] sm:$0xf]
  %v417 = vld [vmem:[%s1 + $0x18] sm:$0xf]
  %v418 = vld [vmem:[%s1 + $0x1c] sm:$0xf]
  %v419 = vld [vmem:[%s1 + $0x20] sm:$0xf]
  %v420 = vld [vmem:[%s1 + $0x24] sm:$0xf]
  %v421 = vld [vmem:[%s1 + $0x28] sm:$0xf]
  %v422 = vld [vmem:[%s1 + $0x2c] sm:$0xf]
  %v423 = vld [vmem:[%s1 + $0x30] sm:$0xf]
  %v424 = vld [vmem:[%s1 + $0x34] sm:$0xf]
  %v425 = vld [vmem:[%s1 + $0x38] sm:$0xf]
  %v426 = vld [vmem:[%s1 + $0x3c] sm:$0xf]
  %v427 = vld [vmem:[%s1 + $0x40] sm:$0xf]
  %v428 = vld [vmem:[%s1 + $0x44] sm:$0xf]
  %v429 = vld [vmem:[%s1 + $0x48] sm:$0xf]
  %v430 = vld [vmem:[%s1 + $0x4c] sm:$0xf]
  %v431 = vld [vmem:[%s1 + $0x50] sm:$0xf]
  %v432 = vld [vmem:[%s1 + $0x54] sm:$0xf]
  %v433 = vld [vmem:[%s1 + $0x58] sm:$0xf]
  %v434 = vld [vmem:[%s1 + $0x5c] sm:$0xf]
  %v435 = vld [vmem:[%s1 + $0x60] sm:$0xf]
  %v436 = vld [vmem:[%s1 + $0x64] sm:$0xf]
  %v437 = vld [vmem:[%s1 + $0x68] sm:$0xf]
  %v438 = vld [vmem:[%s1 + $0x6c] sm:$0xf]
  %v439 = vld [vmem:[%s1 + $0x70] sm:$0xf]
  %v440 = vld [vmem:[%s1 + $0x74] sm:$0xf]
  %v441 = vld [vmem:[%s1 + $0x78] sm:$0xf]
  %v442 = vld [vmem:[%s1 + $0x7c] sm:$0xf]
  %v443 = vld [vmem:[%s1 + $0x80] sm:$0xf]
  %v444 = vld [vmem:[%s1 + $0x84] sm:$0xf]
  %v445 = vld [vmem:[%s1 + $0x88] sm:$0xf]
  %v446 = vld [vmem:[%s1 + $0x8c] sm:$0xf]
  %v447 = vld [vmem:[%s1 + $0x90] sm:$0xf]
  %v448 = vld [vmem:[%s1 + $0x94] sm:$0xf]
  %v449 = vld [vmem:[%s1 + $0x98] sm:$0xf]
  %v450 = vld [vmem:[%s1 + $0x9c] sm:$0xf]
  %v451 = vld [vmem:[%s1 + $0xa0] sm:$0xf]
  %v452 = vld [vmem:[%s1 + $0xa4] sm:$0xf]
  %v453 = vld [vmem:[%s1 + $0xa8] sm:$0xf]
  %v454 = vld [vmem:[%s1 + $0xac] sm:$0xf]
  %v455 = vld [vmem:[%s1 + $0xb0] sm:$0xf]
  %v456 = vld [vmem:[%s1 + $0xb4] sm:$0xf]
  %v457 = vld [vmem:[%s1 + $0xb8] sm:$0xf]
  %v458 = vld [vmem:[%s1 + $0xbc] sm:$0xf]
  %v459 = vld [vmem:[%s1 + $0xc0] sm:$0xf]
  %v460 = vld [vmem:[%s1 + $0xc4] sm:$0xf]
  %v461 = vld [vmem:[%s1 + $0xc8] sm:$0xf]
  %v462 = vld [vmem:[%s1 + $0xcc] sm:$0xf]
  %v463 = vld [vmem:[%s1 + $0xd0] sm:$0xf]
  %v464 = vld [vmem:[%s1 + $0xd4] sm:$0xf]
  %v465 = vld [vmem:[%s1 + $0xd8] sm:$0xf]
  %v466 = vld [vmem:[%s1 + $0xdc] sm:$0xf]
  %v467 = vld [vmem:[%s1 + $0xe0] sm:$0xf]
  %v468 = vld [vmem:[%s1 + $0xe4] sm:$0xf]
  %v469 = vld [vmem:[%s1 + $0xe8] sm:$0xf]
  %v470 = vld [vmem:[%s1 + $0xec] sm:$0xf]
  %v471 = vld [vmem:[%s1 + $0xf0] sm:$0xf]
  %v472 = vld [vmem:[%s1 + $0xf4] sm:$0xf]
  %v473 = vld [vmem:[%s1 + $0xf8] sm:$0xf]
  %v474 = vld [vmem:[%s1 + $0xfc] sm:$0xf]
  %v475 = vld [vmem:[%s1 + $0x100] sm:$0xf]
  %v476 = vld [vmem:[%s1 + $0x104] sm:$0xf]
  %v477 = vld [vmem:[%s1 + $0x108] sm:$0xf]
  %v478 = vld [vmem:[%s1 + $0x10c] sm:$0xf]
  %v479 = vld [vmem:[%s1 + $0x110] sm:$0xf]
  %v480 = vld [vmem:[%s1 + $0x114] sm:$0xf]
  %v481 = vld [vmem:[%s1 + $0x118] sm:$0xf]
  %v482 = vld [vmem:[%s1 + $0x11c] sm:$0xf]
  %v483 = vld [vmem:[%s1 + $0x120] sm:$0xf]
  %v484 = vld [vmem:[%s1 + $0x124] sm:$0xf]
  %v485 = vld [vmem:[%s1 + $0x128] sm:$0xf]
  %v486 = vld [vmem:[%s1 + $0x12c] sm:$0xf]
  %v487 = vld [vmem:[%s1 + $0x130] sm:$0xf]
  %v488 = vld [vmem:[%s1 + $0x134] sm:$0xf]
  %v489 = vld [vmem:[%s1 + $0x138] sm:$0xf]
  %v490 = vld [vmem:[%s1 + $0x13c] sm:$0xf]
  %v491 = vld [vmem:[%s1 + $0x140] sm:$0xf]
  %v492 = vld [vmem:[%s1 + $0x144] sm:$0xf]
  %v493 = vld [vmem:[%s1 + $0x148] sm:$0xf]
  %v494 = vld [vmem:[%s1 + $0x14c] sm:$0xf]
  %v495 = vld [vmem:[%s1 + $0x150] sm:$0xf]
  %v496 = vld [vmem:[%s1 + $0x154] sm:$0xf]
  %v497 = vld [vmem:[%s1 + $0x158] sm:$0xf]
  %v498 = vld [vmem:[%s1 + $0x15c] sm:$0xf]
  %v499 = vld [vmem:[%s1 + $0x160] sm:$0xf]
  %v500 = vld [vmem:[%s1 + $0x164] sm:$0xf]
  %v501 = vld [vmem:[%s1 + $0x168] sm:$0xf]
  %v502 = vld [vmem:[%s1 + $0x16c] sm:$0xf]
  %v503 = vld [vmem:[%s1 + $0x170] sm:$0xf]
  %v504 = vld [vmem:[%s1 + $0x174] sm:$0xf]
  %v505 = vld [vmem:[%s1 + $0x178] sm:$0xf]
  %v506 = vld [vmem:[%s1 + $0x17c] sm:$0xf]
  %v507 = vld [vmem:[%s1 + $0x180] sm:$0xf]
  %v508 = vld [vmem:[%s1 + $0x184] sm:$0xf]
  %v509 = vld [vmem:[%s1 + $0x188] sm:$0xf]
  %v510 = vld [vmem:[%s1 + $0x18c] sm:$0xf]
  %v511 = vld [vmem:[%s1 + $0x190] sm:$0xf]
  %v512 = vld [vmem:[%s1 + $0x194] sm:$0xf]
  %v513 = vld [vmem:[%s1 + $0x198] sm:$0xf]
  %v514 = vld [vmem:[%s1 + $0x19c] sm:$0xf]
  %v515 = vld [vmem:[%s1 + $0x1a0] sm:$0xf]
  %v516 = vld [vmem:[%s1 + $0x1a4] sm:$0xf]
  %v517 = vld [vmem:[%s1 + $0x1a8] sm:$0xf]
  %v518 = vld [vmem:[%s1 + $0x1ac] sm:$0xf]
  %v519 = vld [vmem:[%s1 + $0x1b0] sm:$0xf]
  %v520 = vld [vmem:[%s1 + $0x1b4] sm:$0xf]
  %v521 = vld [vmem:[%s1 + $0x1b8] sm:$0xf]
  %v522 = vld [vmem:[%s1 + $0x1bc] sm:$0xf]
  %v523 = vld [vmem:[%s1 + $0x1c0] sm:$0xf]
  %v524 = vld [vmem:[%s1 + $0x1c4] sm:$0xf]
  %v525 = vld [vmem:[%s1 + $0x1c8] sm:$0xf]
  %v526 = vld [vmem:[%s1 + $0x1cc] sm:$0xf]
  %v527 = vld [vmem:[%s1 + $0x1d0] sm:$0xf]
  %v528 = vld [vmem:[%s1 + $0x1d4] sm:$0xf]
  %v529 = vld [vmem:[%s1 + $0x1d8] sm:$0xf]
  %v530 = vld [vmem:[%s1 + $0x1dc] sm:$0xf]
  %v531 = vld [vmem:[%s1 + $0x1e0] sm:$0xf]
  %v532 = vld [vmem:[%s1 + $0x1e4] sm:$0xf]
  %v533 = vld [vmem:[%s1 + $0x1e8] sm:$0xf]
  %v534 = vld [vmem:[%s1 + $0x1ec] sm:$0xf]
  %v535 = vld [vmem:[%s1 + $0x1f0] sm:$0xf]
  %v536 = vld [vmem:[%s1 + $0x1f4] sm:$0xf]
  %v537 = vld [vmem:[%s1 + $0x1f8] sm:$0xf]
  %v538 = vld [vmem:[%s1 + $0x1fc] sm:$0xf]
  %v539 = vld [vmem:[%s1 + $0x200] sm:$0xf]
  %v540 = vld [vmem:[%s1 + $0x204] sm:$0xf]
  %v541 = vld [vmem:[%s1 + $0x208] sm:$0xf]
  %v542 = vld [vmem:[%s1 + $0x20c] sm:$0xf]
  %v543 = vld [vmem:[%s1 + $0x210] sm:$0xf]
  %v544 = vld [vmem:[%s1 + $0x214] sm:$0xf]
  %v545 = vld [vmem:[%s1 + $0x218] sm:$0xf]
  %v546 = vld [vmem:[%s1 + $0x21c] sm:$0xf]
  %v547 = vld [vmem:[%s1 + $0x220] sm:$0xf]
  %v548 = vld [vmem:[%s1 + $0x224] sm:$0xf]
  %v549 = vld [vmem:[%s1 + $0x228] sm:$0xf]
  %v550 = vld [vmem:[%s1 + $0x22c] sm:$0xf]
  %v551 = vld [vmem:[%s1 + $0x230] sm:$0xf]
  %v552 = vld [vmem:[%s1 + $0x234] sm:$0xf]
  %v553 = vld [vmem:[%s1 + $0x238] sm:$0xf]
  %v554 = vld [vmem:[%s1 + $0x23c] sm:$0xf]
  %v555 = vld [vmem:[%s1 + $0x240] sm:$0xf]
  %v556 = vld [vmem:[%s1 + $0x244] sm:$0xf]
  %v557 = vld [vmem:[%s1 + $0x248] sm:$0xf]
  %v558 = vld [vmem:[%s1 + $0x24c] sm:$0xf]
  %v559 = vld [vmem:[%s1 + $0x250] sm:$0xf]
  %v560 = vld [vmem:[%s1 + $0x254] sm:$0xf]
  %v561 = vld [vmem:[%s1 + $0x258] sm:$0xf]
  %v562 = vld [vmem:[%s1 + $0x25c] sm:$0xf]
  %v563 = vld [vmem:[%s1 + $0x260] sm:$0xf]
  %v564 = vld [vmem:[%s1 + $0x264] sm:$0xf]
  %v565 = vld [vmem:[%s1 + $0x268] sm:$0xf]
  %v566 = vld [vmem:[%s1 + $0x26c] sm:$0xf]
  %v567 = vld [vmem:[%s1 + $0x270] sm:$0xf]
  %v568 = vld [vmem:[%s1 + $0x274] sm:$0xf]
  %v569 = vld [vmem:[%s1 + $0x278] sm:$0xf]
  %v570 = vld [vmem:[%s1 + $0x27c] sm:$0xf]
  %v571 = vld [vmem:[%s1 + $0x280] sm:$0xf]
  %v572 = vld [vmem:[%s1 + $0x284] sm:$0xf]
  %v573 = vld [vmem:[%s1 + $0x288] sm:$0xf]
  %v574 = vld [vmem:[%s1 + $0x28c] sm:$0xf]
  %v575 = vld [vmem:[%s1 + $0x290] sm:$0xf]
  %v576 = vld [vmem:[%s1 + $0x294] sm:$0xf]
  %v577 = vld [vmem:[%s1 + $0x298] sm:$0xf]
  %v578 = vld [vmem:[%s1 + $0x29c] sm:$0xf]
  %v579 = vld [vmem:[%s1 + $0x2a0] sm:$0xf]
  %v580 = vld [vmem:[%s1 + $0x2a4] sm:$0xf]
  %v581 = vld [vmem:[%s1 + $0x2a8] sm:$0xf]
  %v582 = vld [vmem:[%s1 + $0x2ac] sm:$0xf]
  %v583 = vld [vmem:[%s1 + $0x2b0] sm:$0xf]
  %v584 = vld [vmem:[%s1 + $0x2b4] sm:$0xf]
  %v585 = vld [vmem:[%s1 + $0x2b8] sm:$0xf]
  %v586 = vld [vmem:[%s1 + $0x2bc] sm:$0xf]
  %v587 = vld [vmem:[%s2] sm:$0x1]
  %v589 = vlaneseq
  %v590 = vshrl.u32 %v589, 7
  %v591 = vsub.s32 0, %v590
  %v592 = vrot.slane %v587, %v591
  %v978 = vunpack.c.l.b16 %v27
  %v979 = vunpack.c.h.b16 %v27
  %v980 = vunpack.c.l.b16 %v28
  %v981 = vunpack.c.h.b16 %v28
  %v982 = vunpack.c.l.b16 %v29
  %v983 = vunpack.c.h.b16 %v29
  %v984 = vunpack.c.l.b16 %v30
  %v985 = vunpack.c.h.b16 %v30
  %v986 = vunpack.c.l.b16 %v31
  %v987 = vunpack.c.h.b16 %v31
  %v988 = vunpack.c.l.b16 %v32
  %v989 = vunpack.c.l.b16 %v33
  %v990 = vunpack.c.h.b16 %v33
  %v991 = vunpack.c.l.b16 %v34
  %v992 = vunpack.c.h.b16 %v34
  %v993 = vunpack.c.l.b16 %v35
  %v994 = vunpack.c.h.b16 %v35
  %v995 = vunpack.c.l.b16 %v36
  %v996 = vunpack.c.h.b16 %v36
  %v997 = vunpack.c.l.b16 %v37
  %v998 = vunpack.c.h.b16 %v37
  %v999 = vunpack.c.l.b16 %v38
  %v1000 = vunpack.c.l.b16 %v39
  %v1001 = vunpack.c.h.b16 %v39
  %v1002 = vunpack.c.l.b16 %v40
  %v1003 = vunpack.c.h.b16 %v40
  %v1004 = vunpack.c.l.b16 %v41
  %v1005 = vunpack.c.h.b16 %v41
  %v1006 = vunpack.c.l.b16 %v42
  %v1007 = vunpack.c.h.b16 %v42
  %v1008 = vunpack.c.l.b16 %v43
  %v1009 = vunpack.c.h.b16 %v43
  %v1010 = vunpack.c.l.b16 %v44
  %v1011 = vunpack.c.l.b16 %v45
  %v1012 = vunpack.c.h.b16 %v45
  %v1013 = vunpack.c.l.b16 %v46
  %v1014 = vunpack.c.h.b16 %v46
  %v1015 = vunpack.c.l.b16 %v47
  %v1016 = vunpack.c.h.b16 %v47
  %v1017 = vunpack.c.l.b16 %v48
  %v1018 = vunpack.c.h.b16 %v48
  %v1019 = vunpack.c.l.b16 %v49
  %v1020 = vunpack.c.h.b16 %v49
  %v1021 = vunpack.c.l.b16 %v50
  %v1022 = vunpack.c.l.b16 %v51
  %v1023 = vunpack.c.h.b16 %v51
  %v1024 = vunpack.c.l.b16 %v52
  %v1025 = vunpack.c.h.b16 %v52
  %v1026 = vunpack.c.l.b16 %v53
  %v1027 = vunpack.c.h.b16 %v53
  %v1028 = vunpack.c.l.b16 %v54
  %v1029 = vunpack.c.h.b16 %v54
  %v1030 = vunpack.c.l.b16 %v55
  %v1031 = vunpack.c.h.b16 %v55
  %v1032 = vunpack.c.l.b16 %v56
  %v1033 = vunpack.c.l.b16 %v57
  %v1034 = vunpack.c.h.b16 %v57
  %v1035 = vunpack.c.l.b16 %v58
  %v1036 = vunpack.c.h.b16 %v58
  %v1037 = vunpack.c.l.b16 %v59
  %v1038 = vunpack.c.h.b16 %v59
  %v1039 = vunpack.c.l.b16 %v60
  %v1040 = vunpack.c.h.b16 %v60
  %v1041 = vunpack.c.l.b16 %v61
  %v1042 = vunpack.c.h.b16 %v61
  %v1043 = vunpack.c.l.b16 %v62
  %v1044 = vunpack.c.l.b16 %v63
  %v1045 = vunpack.c.h.b16 %v63
  %v1046 = vunpack.c.l.b16 %v64
  %v1047 = vunpack.c.h.b16 %v64
  %v1048 = vunpack.c.l.b16 %v65
  %v1049 = vunpack.c.h.b16 %v65
  %v1050 = vunpack.c.l.b16 %v66
  %v1051 = vunpack.c.h.b16 %v66
  %v1052 = vunpack.c.l.b16 %v67
  %v1053 = vunpack.c.h.b16 %v67
  %v1054 = vunpack.c.l.b16 %v68
  %v1055 = vunpack.c.l.b16 %v69
  %v1056 = vunpack.c.h.b16 %v69
  %v1057 = vunpack.c.l.b16 %v70
  %v1058 = vunpack.c.h.b16 %v70
  %v1059 = vunpack.c.l.b16 %v71
  %v1060 = vunpack.c.h.b16 %v71
  %v1061 = vunpack.c.l.b16 %v72
  %v1062 = vunpack.c.h.b16 %v72
  %v1063 = vunpack.c.l.b16 %v73
  %v1064 = vunpack.c.h.b16 %v73
  %v1065 = vunpack.c.l.b16 %v74
  %v1066 = vunpack.c.l.b16 %v75
  %v1067 = vunpack.c.h.b16 %v75
  %v1068 = vunpack.c.l.b16 %v76
  %v1069 = vunpack.c.h.b16 %v76
  %v1070 = vunpack.c.l.b16 %v77
  %v1071 = vunpack.c.h.b16 %v77
  %v1072 = vunpack.c.l.b16 %v78
  %v1073 = vunpack.c.h.b16 %v78
  %v1074 = vunpack.c.l.b16 %v79
  %v1075 = vunpack.c.h.b16 %v79
  %v1076 = vunpack.c.l.b16 %v80
  %v1077 = vunpack.c.l.b16 %v81
  %v1078 = vunpack.c.h.b16 %v81
  %v1079 = vunpack.c.l.b16 %v82
  %v1080 = vunpack.c.h.b16 %v82
  %v1081 = vunpack.c.l.b16 %v83
  %v1082 = vunpack.c.h.b16 %v83
  %v1083 = vunpack.c.l.b16 %v84
  %v1084 = vunpack.c.h.b16 %v84
  %v1085 = vunpack.c.l.b16 %v85
  %v1086 = vunpack.c.h.b16 %v85
  %v1087 = vunpack.c.l.b16 %v86
  %v1088 = vunpack.c.l.b16 %v87
  %v1089 = vunpack.c.h.b16 %v87
  %v1090 = vunpack.c.l.b16 %v88
  %v1091 = vunpack.c.h.b16 %v88
  %v1092 = vunpack.c.l.b16 %v89
  %v1093 = vunpack.c.h.b16 %v89
  %v1094 = vunpack.c.l.b16 %v90
  %v1095 = vunpack.c.h.b16 %v90
  %v1096 = vunpack.c.l.b16 %v91
  %v1097 = vunpack.c.h.b16 %v91
  %v1098 = vunpack.c.l.b16 %v92
  %v1099 = vunpack.c.l.b16 %v93
  %v1100 = vunpack.c.h.b16 %v93
  %v1101 = vunpack.c.l.b16 %v94
  %v1102 = vunpack.c.h.b16 %v94
  %v1103 = vunpack.c.l.b16 %v95
  %v1104 = vunpack.c.h.b16 %v95
  %v1105 = vunpack.c.l.b16 %v96
  %v1106 = vunpack.c.h.b16 %v96
  %v1107 = vunpack.c.l.b16 %v97
  %v1108 = vunpack.c.h.b16 %v97
  %v1109 = vunpack.c.l.b16 %v98
  %v1110 = vunpack.c.l.b16 %v99
  %v1111 = vunpack.c.h.b16 %v99
  %v1112 = vunpack.c.l.b16 %v100
  %v1113 = vunpack.c.h.b16 %v100
  %v1114 = vunpack.c.l.b16 %v101
  %v1115 = vunpack.c.h.b16 %v101
  %v1116 = vunpack.c.l.b16 %v102
  %v1117 = vunpack.c.h.b16 %v102
  %v1118 = vunpack.c.l.b16 %v103
  %v1119 = vunpack.c.h.b16 %v103
  %v1120 = vunpack.c.l.b16 %v104
  %v1121 = vunpack.c.l.b16 %v105
  %v1122 = vunpack.c.h.b16 %v105
  %v1123 = vunpack.c.l.b16 %v106
  %v1124 = vunpack.c.h.b16 %v106
  %v1125 = vunpack.c.l.b16 %v107
  %v1126 = vunpack.c.h.b16 %v107
  %v1127 = vunpack.c.l.b16 %v108
  %v1128 = vunpack.c.h.b16 %v108
  %v1129 = vunpack.c.l.b16 %v109
  %v1130 = vunpack.c.h.b16 %v109
  %v1131 = vunpack.c.l.b16 %v110
  %v1132 = vunpack.c.l.b16 %v111
  %v1133 = vunpack.c.h.b16 %v111
  %v1134 = vunpack.c.l.b16 %v112
  %v1135 = vunpack.c.h.b16 %v112
  %v1136 = vunpack.c.l.b16 %v113
  %v1137 = vunpack.c.h.b16 %v113
  %v1138 = vunpack.c.l.b16 %v114
  %v1139 = vunpack.c.h.b16 %v114
  %v1140 = vunpack.c.l.b16 %v115
  %v1141 = vunpack.c.h.b16 %v115
  %v1142 = vunpack.c.l.b16 %v116
  %v1143 = vunpack.c.l.b16 %v117
  %v1144 = vunpack.c.h.b16 %v117
  %v1145 = vunpack.c.l.b16 %v118
  %v1146 = vunpack.c.h.b16 %v118
  %v1147 = vunpack.c.l.b16 %v119
  %v1148 = vunpack.c.h.b16 %v119
  %v1149 = vunpack.c.l.b16 %v120
  %v1150 = vunpack.c.h.b16 %v120
  %v1151 = vunpack.c.l.b16 %v121
  %v1152 = vunpack.c.h.b16 %v121
  %v1153 = vunpack.c.l.b16 %v122
  %v1154 = vunpack.c.l.b16 %v123
  %v1155 = vunpack.c.h.b16 %v123
  %v1156 = vunpack.c.l.b16 %v124
  %v1157 = vunpack.c.h.b16 %v124
  %v1158 = vunpack.c.l.b16 %v125
  %v1159 = vunpack.c.h.b16 %v125
  %v1160 = vunpack.c.l.b16 %v126
  %v1161 = vunpack.c.h.b16 %v126
  %v1162 = vunpack.c.l.b16 %v127
  %v1163 = vunpack.c.h.b16 %v127
  %v1164 = vunpack.c.l.b16 %v128
  %v1165 = vunpack.c.l.b16 %v129
  %v1166 = vunpack.c.h.b16 %v129
  %v1167 = vunpack.c.l.b16 %v130
  %v1168 = vunpack.c.h.b16 %v130
  %v1169 = vunpack.c.l.b16 %v131
  %v1170 = vunpack.c.h.b16 %v131
  %v1171 = vunpack.c.l.b16 %v132
  %v1172 = vunpack.c.h.b16 %v132
  %v1173 = vunpack.c.l.b16 %v133
  %v1174 = vunpack.c.h.b16 %v133
  %v1175 = vunpack.c.l.b16 %v134
  %v1176 = vunpack.c.l.b16 %v135
  %v1177 = vunpack.c.h.b16 %v135
  %v1178 = vunpack.c.l.b16 %v136
  %v1179 = vunpack.c.h.b16 %v136
  %v1180 = vunpack.c.l.b16 %v137
  %v1181 = vunpack.c.h.b16 %v137
  %v1182 = vunpack.c.l.b16 %v138
  %v1183 = vunpack.c.h.b16 %v138
  %v1184 = vunpack.c.l.b16 %v139
  %v1185 = vunpack.c.h.b16 %v139
  %v1186 = vunpack.c.l.b16 %v140
  %v1187 = vunpack.c.l.b16 %v141
  %v1188 = vunpack.c.h.b16 %v141
  %v1189 = vunpack.c.l.b16 %v142
  %v1190 = vunpack.c.h.b16 %v142
  %v1191 = vunpack.c.l.b16 %v143
  %v1192 = vunpack.c.h.b16 %v143
  %v1193 = vunpack.c.l.b16 %v144
  %v1194 = vunpack.c.h.b16 %v144
  %v1195 = vunpack.c.l.b16 %v145
  %v1196 = vunpack.c.h.b16 %v145
  %v1197 = vunpack.c.l.b16 %v146
  %v1198 = vunpack.c.l.b16 %v147
  %v1199 = vunpack.c.h.b16 %v147
  %v1200 = vunpack.c.l.b16 %v148
  %v1201 = vunpack.c.h.b16 %v148
  %v1202 = vunpack.c.l.b16 %v149
  %v1203 = vunpack.c.h.b16 %v149
  %v1204 = vunpack.c.l.b16 %v150
  %v1205 = vunpack.c.h.b16 %v150
  %v1206 = vunpack.c.l.b16 %v151
  %v1207 = vunpack.c.h.b16 %v151
  %v1208 = vunpack.c.l.b16 %v152
  %v1209 = vunpack.c.l.b16 %v153
  %v1210 = vunpack.c.h.b16 %v153
  %v1211 = vunpack.c.l.b16 %v154
  %v1212 = vunpack.c.h.b16 %v154
  %v1213 = vunpack.c.l.b16 %v155
  %v1214 = vunpack.c.h.b16 %v155
  %v1215 = vunpack.c.l.b16 %v156
  %v1216 = vunpack.c.h.b16 %v156
  %v1217 = vunpack.c.l.b16 %v157
  %v1218 = vunpack.c.h.b16 %v157
  %v1219 = vunpack.c.l.b16 %v158
  %v1220 = vunpack.c.l.b16 %v159
  %v1221 = vunpack.c.h.b16 %v159
  %v1222 = vunpack.c.l.b16 %v160
  %v1223 = vunpack.c.h.b16 %v160
  %v1224 = vunpack.c.l.b16 %v161
  %v1225 = vunpack.c.h.b16 %v161
  %v1226 = vunpack.c.l.b16 %v162
  %v1227 = vunpack.c.h.b16 %v162
  %v1228 = vunpack.c.l.b16 %v163
  %v1229 = vunpack.c.h.b16 %v163
  %v1230 = vunpack.c.l.b16 %v164
  %v1231 = vunpack.c.l.b16 %v165
  %v1232 = vunpack.c.h.b16 %v165
  %v1233 = vunpack.c.l.b16 %v166
  %v1234 = vunpack.c.h.b16 %v166
  %v1235 = vunpack.c.l.b16 %v167
  %v1236 = vunpack.c.h.b16 %v167
  %v1237 = vunpack.c.l.b16 %v168
  %v1238 = vunpack.c.h.b16 %v168
  %v1239 = vunpack.c.l.b16 %v169
  %v1240 = vunpack.c.h.b16 %v169
  %v1241 = vunpack.c.l.b16 %v170
  %v1242 = vunpack.c.l.b16 %v171
  %v1243 = vunpack.c.h.b16 %v171
  %v1244 = vunpack.c.l.b16 %v172
  %v1245 = vunpack.c.h.b16 %v172
  %v1246 = vunpack.c.l.b16 %v173
  %v1247 = vunpack.c.h.b16 %v173
  %v1248 = vunpack.c.l.b16 %v174
  %v1249 = vunpack.c.h.b16 %v174
  %v1250 = vunpack.c.l.b16 %v175
  %v1251 = vunpack.c.h.b16 %v175
  %v1252 = vunpack.c.l.b16 %v176
  %v1253 = vunpack.c.l.b16 %v177
  %v1254 = vunpack.c.h.b16 %v177
  %v1255 = vunpack.c.l.b16 %v178
  %v1256 = vunpack.c.h.b16 %v178
  %v1257 = vunpack.c.l.b16 %v179
  %v1258 = vunpack.c.h.b16 %v179
  %v1259 = vunpack.c.l.b16 %v180
  %v1260 = vunpack.c.h.b16 %v180
  %v1261 = vunpack.c.l.b16 %v181
  %v1262 = vunpack.c.h.b16 %v181
  %v1263 = vunpack.c.l.b16 %v182
  %v1264 = vunpack.c.l.b16 %v183
  %v1265 = vunpack.c.h.b16 %v183
  %v1266 = vunpack.c.l.b16 %v184
  %v1267 = vunpack.c.h.b16 %v184
  %v1268 = vunpack.c.l.b16 %v185
  %v1269 = vunpack.c.h.b16 %v185
  %v1270 = vunpack.c.l.b16 %v186
  %v1271 = vunpack.c.h.b16 %v186
  %v1272 = vunpack.c.l.b16 %v187
  %v1273 = vunpack.c.h.b16 %v187
  %v1274 = vunpack.c.l.b16 %v188
  %v1275 = vunpack.c.l.b16 %v189
  %v1276 = vunpack.c.h.b16 %v189
  %v1277 = vunpack.c.l.b16 %v190
  %v1278 = vunpack.c.h.b16 %v190
  %v1279 = vunpack.c.l.b16 %v191
  %v1280 = vunpack.c.h.b16 %v191
  %v1281 = vunpack.c.l.b16 %v192
  %v1282 = vunpack.c.h.b16 %v192
  %v1283 = vunpack.c.l.b16 %v193
  %v1284 = vunpack.c.h.b16 %v193
  %v1285 = vunpack.c.l.b16 %v194
  %v1286 = vunpack.c.l.b16 %v195
  %v1287 = vunpack.c.h.b16 %v195
  %v1288 = vunpack.c.l.b16 %v196
  %v1289 = vunpack.c.h.b16 %v196
  %v1290 = vunpack.c.l.b16 %v197
  %v1291 = vunpack.c.h.b16 %v197
  %v1292 = vunpack.c.l.b16 %v198
  %v1293 = vunpack.c.h.b16 %v198
  %v1294 = vunpack.c.l.b16 %v199
  %v1295 = vunpack.c.h.b16 %v199
  %v1296 = vunpack.c.l.b16 %v200
  %v1297 = vunpack.c.l.b16 %v201
  %v1298 = vunpack.c.h.b16 %v201
  %v1299 = vunpack.c.l.b16 %v202
  %v1300 = vunpack.c.h.b16 %v202
  %v1301 = vunpack.c.l.b16 %v203
  %v1302 = vunpack.c.h.b16 %v203
  %v1303 = vunpack.c.l.b16 %v204
  %v1304 = vunpack.c.h.b16 %v204
  %v1305 = vunpack.c.l.b16 %v205
  %v1306 = vunpack.c.h.b16 %v205
  %v1307 = vunpack.c.l.b16 %v206
  %v1308 = vunpack.c.l.b16 %v207
  %v1309 = vunpack.c.h.b16 %v207
  %v1310 = vunpack.c.l.b16 %v208
  %v1311 = vunpack.c.h.b16 %v208
  %v1312 = vunpack.c.l.b16 %v209
  %v1313 = vunpack.c.h.b16 %v209
  %v1314 = vunpack.c.l.b16 %v210
  %v1315 = vunpack.c.h.b16 %v210
  %v1316 = vunpack.c.l.b16 %v211
  %v1317 = vunpack.c.h.b16 %v211
  %v1318 = vunpack.c.l.b16 %v212
  %v1319 = vunpack.c.l.b16 %v213
  %v1320 = vunpack.c.h.b16 %v213
  %v1321 = vunpack.c.l.b16 %v214
  %v1322 = vunpack.c.h.b16 %v214
  %v1323 = vunpack.c.l.b16 %v215
  %v1324 = vunpack.c.h.b16 %v215
  %v1325 = vunpack.c.l.b16 %v216
  %v1326 = vunpack.c.h.b16 %v216
  %v1327 = vunpack.c.l.b16 %v217
  %v1328 = vunpack.c.h.b16 %v217
  %v1329 = vunpack.c.l.b16 %v218
  %v1330 = vunpack.c.l.b16 %v219
  %v1331 = vunpack.c.h.b16 %v219
  %v1332 = vunpack.c.l.b16 %v220
  %v1333 = vunpack.c.h.b16 %v220
  %v1334 = vunpack.c.l.b16 %v221
  %v1335 = vunpack.c.h.b16 %v221
  %v1336 = vunpack.c.l.b16 %v222
  %v1337 = vunpack.c.h.b16 %v222
  %v1338 = vunpack.c.l.b16 %v223
  %v1339 = vunpack.c.h.b16 %v223
  %v1340 = vunpack.c.l.b16 %v224
  %v1341 = vunpack.c.l.b16 %v225
  %v1342 = vunpack.c.h.b16 %v225
  %v1343 = vunpack.c.l.b16 %v226
  %v1344 = vunpack.c.h.b16 %v226
  %v1345 = vunpack.c.l.b16 %v227
  %v1346 = vunpack.c.h.b16 %v227
  %v1347 = vunpack.c.l.b16 %v228
  %v1348 = vunpack.c.h.b16 %v228
  %v1349 = vunpack.c.l.b16 %v229
  %v1350 = vunpack.c.h.b16 %v229
  %v1351 = vunpack.c.l.b16 %v230
  %v1352 = vunpack.c.l.b16 %v231
  %v1353 = vunpack.c.h.b16 %v231
  %v1354 = vunpack.c.l.b16 %v232
  %v1355 = vunpack.c.h.b16 %v232
  %v1356 = vunpack.c.l.b16 %v233
  %v1357 = vunpack.c.h.b16 %v233
  %v1358 = vunpack.c.l.b16 %v234
  %v1359 = vunpack.c.h.b16 %v234
  %v1360 = vunpack.c.l.b16 %v235
  %v1361 = vunpack.c.h.b16 %v235
  %v1362 = vunpack.c.l.b16 %v236
  %v1363 = vunpack.c.l.b16 %v237
  %v1364 = vunpack.c.h.b16 %v237
  %v1365 = vunpack.c.l.b16 %v238
  %v1366 = vunpack.c.h.b16 %v238
  %v1367 = vunpack.c.l.b16 %v239
  %v1368 = vunpack.c.h.b16 %v239
  %v1369 = vunpack.c.l.b16 %v240
  %v1370 = vunpack.c.h.b16 %v240
  %v1371 = vunpack.c.l.b16 %v241
  %v1372 = vunpack.c.h.b16 %v241
  %v1373 = vunpack.c.l.b16 %v242
  %v1374 = vunpack.c.l.b16 %v243
  %v1375 = vunpack.c.h.b16 %v243
  %v1376 = vunpack.c.l.b16 %v244
  %v1377 = vunpack.c.h.b16 %v244
  %v1378 = vunpack.c.l.b16 %v245
  %v1379 = vunpack.c.h.b16 %v245
  %v1380 = vunpack.c.l.b16 %v246
  %v1381 = vunpack.c.h.b16 %v246
  %v1382 = vunpack.c.l.b16 %v247
  %v1383 = vunpack.c.h.b16 %v247
  %v1384 = vunpack.c.l.b16 %v248
  %v1385 = vunpack.c.l.b16 %v249
  %v1386 = vunpack.c.h.b16 %v249
  %v1387 = vunpack.c.l.b16 %v250
  %v1388 = vunpack.c.h.b16 %v250
  %v1389 = vunpack.c.l.b16 %v251
  %v1390 = vunpack.c.h.b16 %v251
  %v1391 = vunpack.c.l.b16 %v252
  %v1392 = vunpack.c.h.b16 %v252
  %v1393 = vunpack.c.l.b16 %v253
  %v1394 = vunpack.c.h.b16 %v253
  %v1395 = vunpack.c.l.b16 %v254
  %v1396 = vunpack.c.l.b16 %v255
  %v1397 = vunpack.c.h.b16 %v255
  %v1398 = vunpack.c.l.b16 %v256
  %v1399 = vunpack.c.h.b16 %v256
  %v1400 = vunpack.c.l.b16 %v257
  %v1401 = vunpack.c.h.b16 %v257
  %v1402 = vunpack.c.l.b16 %v258
  %v1403 = vunpack.c.h.b16 %v258
  %v1404 = vunpack.c.l.b16 %v259
  %v1405 = vunpack.c.h.b16 %v259
  %v1406 = vunpack.c.l.b16 %v260
  %v1407 = vunpack.c.l.b16 %v261
  %v1408 = vunpack.c.h.b16 %v261
  %v1409 = vunpack.c.l.b16 %v262
  %v1410 = vunpack.c.h.b16 %v262
  %v1411 = vunpack.c.l.b16 %v263
  %v1412 = vunpack.c.h.b16 %v263
  %v1413 = vunpack.c.l.b16 %v264
  %v1414 = vunpack.c.h.b16 %v264
  %v1415 = vunpack.c.l.b16 %v265
  %v1416 = vunpack.c.h.b16 %v265
  %v1417 = vunpack.c.l.b16 %v266
  %v1418 = vunpack.c.l.b16 %v267
  %v1419 = vunpack.c.h.b16 %v267
  %v1420 = vunpack.c.l.b16 %v268
  %v1421 = vunpack.c.h.b16 %v268
  %v1422 = vunpack.c.l.b16 %v269
  %v1423 = vunpack.c.h.b16 %v269
  %v1424 = vunpack.c.l.b16 %v270
  %v1425 = vunpack.c.h.b16 %v270
  %v1426 = vunpack.c.l.b16 %v271
  %v1427 = vunpack.c.h.b16 %v271
  %v1428 = vunpack.c.l.b16 %v272
  %v1429 = vunpack.c.l.b16 %v273
  %v1430 = vunpack.c.h.b16 %v273
  %v1431 = vunpack.c.l.b16 %v274
  %v1432 = vunpack.c.h.b16 %v274
  %v1433 = vunpack.c.l.b16 %v275
  %v1434 = vunpack.c.h.b16 %v275
  %v1435 = vunpack.c.l.b16 %v276
  %v1436 = vunpack.c.h.b16 %v276
  %v1437 = vunpack.c.l.b16 %v277
  %v1438 = vunpack.c.h.b16 %v277
  %v1439 = vunpack.c.l.b16 %v278
  %v1440 = vunpack.c.l.b16 %v279
  %v1441 = vunpack.c.h.b16 %v279
  %v1442 = vunpack.c.l.b16 %v280
  %v1443 = vunpack.c.h.b16 %v280
  %v1444 = vunpack.c.l.b16 %v281
  %v1445 = vunpack.c.h.b16 %v281
  %v1446 = vunpack.c.l.b16 %v282
  %v1447 = vunpack.c.h.b16 %v282
  %v1448 = vunpack.c.l.b16 %v283
  %v1449 = vunpack.c.h.b16 %v283
  %v1450 = vunpack.c.l.b16 %v284
  %v1451 = vunpack.c.l.b16 %v285
  %v1452 = vunpack.c.h.b16 %v285
  %v1453 = vunpack.c.l.b16 %v286
  %v1454 = vunpack.c.h.b16 %v286
  %v1455 = vunpack.c.l.b16 %v287
  %v1456 = vunpack.c.h.b16 %v287
  %v1457 = vunpack.c.l.b16 %v288
  %v1458 = vunpack.c.h.b16 %v288
  %v1459 = vunpack.c.l.b16 %v289
  %v1460 = vunpack.c.h.b16 %v289
  %v1461 = vunpack.c.l.b16 %v290
  %v1462 = vunpack.c.l.b16 %v291
  %v1463 = vunpack.c.h.b16 %v291
  %v1464 = vunpack.c.l.b16 %v292
  %v1465 = vunpack.c.h.b16 %v292
  %v1466 = vunpack.c.l.b16 %v293
  %v1467 = vunpack.c.h.b16 %v293
  %v1468 = vunpack.c.l.b16 %v294
  %v1469 = vunpack.c.h.b16 %v294
  %v1470 = vunpack.c.l.b16 %v295
  %v1471 = vunpack.c.h.b16 %v295
  %v1472 = vunpack.c.l.b16 %v296
  %v1473 = vunpack.c.l.b16 %v297
  %v1474 = vunpack.c.h.b16 %v297
  %v1475 = vunpack.c.l.b16 %v298
  %v1476 = vunpack.c.h.b16 %v298
  %v1477 = vunpack.c.l.b16 %v299
  %v1478 = vunpack.c.h.b16 %v299
  %v1479 = vunpack.c.l.b16 %v300
  %v1480 = vunpack.c.h.b16 %v300
  %v1481 = vunpack.c.l.b16 %v301
  %v1482 = vunpack.c.h.b16 %v301
  %v1483 = vunpack.c.l.b16 %v302
  %v1484 = vunpack.c.l.b16 %v303
  %v1485 = vunpack.c.h.b16 %v303
  %v1486 = vunpack.c.l.b16 %v304
  %v1487 = vunpack.c.h.b16 %v304
  %v1488 = vunpack.c.l.b16 %v305
  %v1489 = vunpack.c.h.b16 %v305
  %v1490 = vunpack.c.l.b16 %v306
  %v1491 = vunpack.c.h.b16 %v306
  %v1492 = vunpack.c.l.b16 %v307
  %v1493 = vunpack.c.h.b16 %v307
  %v1494 = vunpack.c.l.b16 %v308
  %v1495 = vunpack.c.l.b16 %v309
  %v1496 = vunpack.c.h.b16 %v309
  %v1497 = vunpack.c.l.b16 %v310
  %v1498 = vunpack.c.h.b16 %v310
  %v1499 = vunpack.c.l.b16 %v311
  %v1500 = vunpack.c.h.b16 %v311
  %v1501 = vunpack.c.l.b16 %v312
  %v1502 = vunpack.c.h.b16 %v312
  %v1503 = vunpack.c.l.b16 %v313
  %v1504 = vunpack.c.h.b16 %v313
  %v1505 = vunpack.c.l.b16 %v314
  %v1506 = vunpack.c.l.b16 %v315
  %v1507 = vunpack.c.h.b16 %v315
  %v1508 = vunpack.c.l.b16 %v316
  %v1509 = vunpack.c.h.b16 %v316
  %v1510 = vunpack.c.l.b16 %v317
  %v1511 = vunpack.c.h.b16 %v317
  %v1512 = vunpack.c.l.b16 %v318
  %v1513 = vunpack.c.h.b16 %v318
  %v1514 = vunpack.c.l.b16 %v319
  %v1515 = vunpack.c.h.b16 %v319
  %v1516 = vunpack.c.l.b16 %v320
  %v1517 = vunpack.c.l.b16 %v321
  %v1518 = vunpack.c.h.b16 %v321
  %v1519 = vunpack.c.l.b16 %v322
  %v1520 = vunpack.c.h.b16 %v322
  %v1521 = vunpack.c.l.b16 %v323
  %v1522 = vunpack.c.h.b16 %v323
  %v1523 = vunpack.c.l.b16 %v324
  %v1524 = vunpack.c.h.b16 %v324
  %v1525 = vunpack.c.l.b16 %v325
  %v1526 = vunpack.c.h.b16 %v325
  %v1527 = vunpack.c.l.b16 %v326
  %v1528 = vunpack.c.l.b16 %v327
  %v1529 = vunpack.c.h.b16 %v327
  %v1530 = vunpack.c.l.b16 %v328
  %v1531 = vunpack.c.h.b16 %v328
  %v1532 = vunpack.c.l.b16 %v329
  %v1533 = vunpack.c.h.b16 %v329
  %v1534 = vunpack.c.l.b16 %v330
  %v1535 = vunpack.c.h.b16 %v330
  %v1536 = vunpack.c.l.b16 %v331
  %v1537 = vunpack.c.h.b16 %v331
  %v1538 = vunpack.c.l.b16 %v332
  %v1539 = vunpack.c.l.b16 %v333
  %v1540 = vunpack.c.h.b16 %v333
  %v1541 = vunpack.c.l.b16 %v334
  %v1542 = vunpack.c.h.b16 %v334
  %v1543 = vunpack.c.l.b16 %v335
  %v1544 = vunpack.c.h.b16 %v335
  %v1545 = vunpack.c.l.b16 %v336
  %v1546 = vunpack.c.h.b16 %v336
  %v1547 = vunpack.c.l.b16 %v337
  %v1548 = vunpack.c.h.b16 %v337
  %v1549 = vunpack.c.l.b16 %v338
  %v1550 = vunpack.c.l.b16 %v339
  %v1551 = vunpack.c.h.b16 %v339
  %v1552 = vunpack.c.l.b16 %v340
  %v1553 = vunpack.c.h.b16 %v340
  %v1554 = vunpack.c.l.b16 %v341
  %v1555 = vunpack.c.h.b16 %v341
  %v1556 = vunpack.c.l.b16 %v342
  %v1557 = vunpack.c.h.b16 %v342
  %v1558 = vunpack.c.l.b16 %v343
  %v1559 = vunpack.c.h.b16 %v343
  %v1560 = vunpack.c.l.b16 %v344
  %v1561 = vunpack.c.l.b16 %v345
  %v1562 = vunpack.c.h.b16 %v345
  %v1563 = vunpack.c.l.b16 %v346
  %v1564 = vunpack.c.h.b16 %v346
  %v1565 = vunpack.c.l.b16 %v347
  %v1566 = vunpack.c.h.b16 %v347
  %v1567 = vunpack.c.l.b16 %v348
  %v1568 = vunpack.c.h.b16 %v348
  %v1569 = vunpack.c.l.b16 %v349
  %v1570 = vunpack.c.h.b16 %v349
  %v1571 = vunpack.c.l.b16 %v350
  %v1572 = vunpack.c.l.b16 %v351
  %v1573 = vunpack.c.h.b16 %v351
  %v1574 = vunpack.c.l.b16 %v352
  %v1575 = vunpack.c.h.b16 %v352
  %v1576 = vunpack.c.l.b16 %v353
  %v1577 = vunpack.c.h.b16 %v353
  %v1578 = vunpack.c.l.b16 %v354
  %v1579 = vunpack.c.h.b16 %v354
  %v1580 = vunpack.c.l.b16 %v355
  %v1581 = vunpack.c.h.b16 %v355
  %v1582 = vunpack.c.l.b16 %v356
  %v1583 = vunpack.c.l.b16 %v357
  %v1584 = vunpack.c.h.b16 %v357
  %v1585 = vunpack.c.l.b16 %v358
  %v1586 = vunpack.c.h.b16 %v358
  %v1587 = vunpack.c.l.b16 %v359
  %v1588 = vunpack.c.h.b16 %v359
  %v1589 = vunpack.c.l.b16 %v360
  %v1590 = vunpack.c.h.b16 %v360
  %v1591 = vunpack.c.l.b16 %v361
  %v1592 = vunpack.c.h.b16 %v361
  %v1593 = vunpack.c.l.b16 %v362
  %v1594 = vunpack.c.l.b16 %v363
  %v1595 = vunpack.c.h.b16 %v363
  %v1596 = vunpack.c.l.b16 %v364
  %v1597 = vunpack.c.h.b16 %v364
  %v1598 = vunpack.c.l.b16 %v365
  %v1599 = vunpack.c.h.b16 %v365
  %v1600 = vunpack.c.l.b16 %v366
  %v1601 = vunpack.c.h.b16 %v366
  %v1602 = vunpack.c.l.b16 %v367
  %v1603 = vunpack.c.h.b16 %v367
  %v1604 = vunpack.c.l.b16 %v368
  %v1605 = vunpack.c.l.b16 %v369
  %v1606 = vunpack.c.h.b16 %v369
  %v1607 = vunpack.c.l.b16 %v370
  %v1608 = vunpack.c.h.b16 %v370
  %v1609 = vunpack.c.l.b16 %v371
  %v1610 = vunpack.c.h.b16 %v371
  %v1611 = vunpack.c.l.b16 %v372
  %v1612 = vunpack.c.h.b16 %v372
  %v1613 = vunpack.c.l.b16 %v373
  %v1614 = vunpack.c.h.b16 %v373
  %v1615 = vunpack.c.l.b16 %v374
  %v1616 = vunpack.c.l.b16 %v375
  %v1617 = vunpack.c.h.b16 %v375
  %v1618 = vunpack.c.l.b16 %v376
  %v1619 = vunpack.c.h.b16 %v376
  %v1620 = vunpack.c.l.b16 %v377
  %v1621 = vunpack.c.h.b16 %v377
  %v1622 = vunpack.c.l.b16 %v378
  %v1623 = vunpack.c.h.b16 %v378
  %v1624 = vunpack.c.l.b16 %v379
  %v1625 = vunpack.c.h.b16 %v379
  %v1626 = vunpack.c.l.b16 %v380
  %v1627 = vunpack.c.l.b16 %v381
  %v1628 = vunpack.c.h.b16 %v381
  %v1629 = vunpack.c.l.b16 %v382
  %v1630 = vunpack.c.h.b16 %v382
  %v1631 = vunpack.c.l.b16 %v383
  %v1632 = vunpack.c.h.b16 %v383
  %v1633 = vunpack.c.l.b16 %v384
  %v1634 = vunpack.c.h.b16 %v384
  %v1635 = vunpack.c.l.b16 %v385
  %v1636 = vunpack.c.h.b16 %v385
  %v1637 = vunpack.c.l.b16 %v386
  %v1638 = vunpack.c.l.b16 %v387
  %v1639 = vunpack.c.h.b16 %v387
  %v1640 = vunpack.c.l.b16 %v388
  %v1641 = vunpack.c.h.b16 %v388
  %v1642 = vunpack.c.l.b16 %v389
  %v1643 = vunpack.c.h.b16 %v389
  %v1644 = vunpack.c.l.b16 %v390
  %v1645 = vunpack.c.h.b16 %v390
  %v1646 = vunpack.c.l.b16 %v391
  %v1647 = vunpack.c.h.b16 %v391
  %v1648 = vunpack.c.l.b16 %v392
  %v1649 = vunpack.c.l.b16 %v393
  %v1650 = vunpack.c.h.b16 %v393
  %v1651 = vunpack.c.l.b16 %v394
  %v1652 = vunpack.c.h.b16 %v394
  %v1653 = vunpack.c.l.b16 %v395
  %v1654 = vunpack.c.h.b16 %v395
  %v1655 = vunpack.c.l.b16 %v396
  %v1656 = vunpack.c.h.b16 %v396
  %v1657 = vunpack.c.l.b16 %v397
  %v1658 = vunpack.c.h.b16 %v397
  %v1659 = vunpack.c.l.b16 %v398
  %v1660 = vunpack.c.l.b16 %v399
  %v1661 = vunpack.c.h.b16 %v399
  %v1662 = vunpack.c.l.b16 %v400
  %v1663 = vunpack.c.h.b16 %v400
  %v1664 = vunpack.c.l.b16 %v401
  %v1665 = vunpack.c.h.b16 %v401
  %v1666 = vunpack.c.l.b16 %v402
  %v1667 = vunpack.c.h.b16 %v402
  %v1668 = vunpack.c.l.b16 %v403
  %v1669 = vunpack.c.h.b16 %v403
  %v1670 = vunpack.c.l.b16 %v404
  %v1671 = vunpack.c.l.b16 %v405
  %v1672 = vunpack.c.h.b16 %v405
  %v1673 = vunpack.c.l.b16 %v406
  %v1674 = vunpack.c.h.b16 %v406
  %v1675 = vunpack.c.l.b16 %v407
  %v1676 = vunpack.c.h.b16 %v407
  %v1677 = vunpack.c.l.b16 %v408
  %v1678 = vunpack.c.h.b16 %v408
  %v1679 = vunpack.c.l.b16 %v409
  %v1680 = vunpack.c.h.b16 %v409
  %v1681 = vunpack.c.l.b16 %v410
  %v1682 = vpack.c.b16 %v989, %v978
  %v1683 = vpack.c.b16 %v990, %v979
  %v1684 = vpack.c.b16 %v991, %v980
  %v1685 = vpack.c.b16 %v992, %v981
  %v1686 = vpack.c.b16 %v993, %v982
  %v1687 = vpack.c.b16 %v994, %v983
  %v1688 = vpack.c.b16 %v995, %v984
  %v1689 = vpack.c.b16 %v996, %v985
  %v1690 = vpack.c.b16 %v997, %v986
  %v1691 = vpack.c.b16 %v998, %v987
  %v1692 = vpack.c.b16 %v999, %v988
  %v1693 = vpack.c.b16 %v1011, %v1000
  %v1694 = vpack.c.b16 %v1012, %v1001
  %v1695 = vpack.c.b16 %v1013, %v1002
  %v1696 = vpack.c.b16 %v1014, %v1003
  %v1697 = vpack.c.b16 %v1015, %v1004
  %v1698 = vpack.c.b16 %v1016, %v1005
  %v1699 = vpack.c.b16 %v1017, %v1006
  %v1700 = vpack.c.b16 %v1018, %v1007
  %v1701 = vpack.c.b16 %v1019, %v1008
  %v1702 = vpack.c.b16 %v1020, %v1009
  %v1703 = vpack.c.b16 %v1021, %v1010
  %v1704 = vpack.c.b16 %v1033, %v1022
  %v1705 = vpack.c.b16 %v1034, %v1023
  %v1706 = vpack.c.b16 %v1035, %v1024
  %v1707 = vpack.c.b16 %v1036, %v1025
  %v1708 = vpack.c.b16 %v1037, %v1026
  %v1709 = vpack.c.b16 %v1038, %v1027
  %v1710 = vpack.c.b16 %v1039, %v1028
  %v1711 = vpack.c.b16 %v1040, %v1029
  %v1712 = vpack.c.b16 %v1041, %v1030
  %v1713 = vpack.c.b16 %v1042, %v1031
  %v1714 = vpack.c.b16 %v1043, %v1032
  %v1715 = vpack.c.b16 %v1055, %v1044
  %v1716 = vpack.c.b16 %v1056, %v1045
  %v1717 = vpack.c.b16 %v1057, %v1046
  %v1718 = vpack.c.b16 %v1058, %v1047
  %v1719 = vpack.c.b16 %v1059, %v1048
  %v1720 = vpack.c.b16 %v1060, %v1049
  %v1721 = vpack.c.b16 %v1061, %v1050
  %v1722 = vpack.c.b16 %v1062, %v1051
  %v1723 = vpack.c.b16 %v1063, %v1052
  %v1724 = vpack.c.b16 %v1064, %v1053
  %v1725 = vpack.c.b16 %v1065, %v1054
  %v1726 = vpack.c.b16 %v1077, %v1066
  %v1727 = vpack.c.b16 %v1078, %v1067
  %v1728 = vpack.c.b16 %v1079, %v1068
  %v1729 = vpack.c.b16 %v1080, %v1069
  %v1730 = vpack.c.b16 %v1081, %v1070
  %v1731 = vpack.c.b16 %v1082, %v1071
  %v1732 = vpack.c.b16 %v1083, %v1072
  %v1733 = vpack.c.b16 %v1084, %v1073
  %v1734 = vpack.c.b16 %v1085, %v1074
  %v1735 = vpack.c.b16 %v1086, %v1075
  %v1736 = vpack.c.b16 %v1087, %v1076
  %v1737 = vpack.c.b16 %v1099, %v1088
  %v1738 = vpack.c.b16 %v1100, %v1089
  %v1739 = vpack.c.b16 %v1101, %v1090
  %v1740 = vpack.c.b16 %v1102, %v1091
  %v1741 = vpack.c.b16 %v1103, %v1092
  %v1742 = vpack.c.b16 %v1104, %v1093
  %v1743 = vpack.c.b16 %v1105, %v1094
  %v1744 = vpack.c.b16 %v1106, %v1095
  %v1745 = vpack.c.b16 %v1107, %v1096
  %v1746 = vpack.c.b16 %v1108, %v1097
  %v1747 = vpack.c.b16 %v1109, %v1098
  %v1748 = vpack.c.b16 %v1121, %v1110
  %v1749 = vpack.c.b16 %v1122, %v1111
  %v1750 = vpack.c.b16 %v1123, %v1112
  %v1751 = vpack.c.b16 %v1124, %v1113
  %v1752 = vpack.c.b16 %v1125, %v1114
  %v1753 = vpack.c.b16 %v1126, %v1115
  %v1754 = vpack.c.b16 %v1127, %v1116
  %v1755 = vpack.c.b16 %v1128, %v1117
  %v1756 = vpack.c.b16 %v1129, %v1118
  %v1757 = vpack.c.b16 %v1130, %v1119
  %v1758 = vpack.c.b16 %v1131, %v1120
  %v1759 = vpack.c.b16 %v1143, %v1132
  %v1760 = vpack.c.b16 %v1144, %v1133
  %v1761 = vpack.c.b16 %v1145, %v1134
  %v1762 = vpack.c.b16 %v1146, %v1135
  %v1763 = vpack.c.b16 %v1147, %v1136
  %v1764 = vpack.c.b16 %v1148, %v1137
  %v1765 = vpack.c.b16 %v1149, %v1138
  %v1766 = vpack.c.b16 %v1150, %v1139
  %v1767 = vpack.c.b16 %v1151, %v1140
  %v1768 = vpack.c.b16 %v1152, %v1141
  %v1769 = vpack.c.b16 %v1153, %v1142
  %v1770 = vpack.c.b16 %v1165, %v1154
  %v1771 = vpack.c.b16 %v1166, %v1155
  %v1772 = vpack.c.b16 %v1167, %v1156
  %v1773 = vpack.c.b16 %v1168, %v1157
  %v1774 = vpack.c.b16 %v1169, %v1158
  %v1775 = vpack.c.b16 %v1170, %v1159
  %v1776 = vpack.c.b16 %v1171, %v1160
  %v1777 = vpack.c.b16 %v1172, %v1161
  %v1778 = vpack.c.b16 %v1173, %v1162
  %v1779 = vpack.c.b16 %v1174, %v1163
  %v1780 = vpack.c.b16 %v1175, %v1164
  %v1781 = vpack.c.b16 %v1187, %v1176
  %v1782 = vpack.c.b16 %v1188, %v1177
  %v1783 = vpack.c.b16 %v1189, %v1178
  %v1784 = vpack.c.b16 %v1190, %v1179
  %v1785 = vpack.c.b16 %v1191, %v1180
  %v1786 = vpack.c.b16 %v1192, %v1181
  %v1787 = vpack.c.b16 %v1193, %v1182
  %v1788 = vpack.c.b16 %v1194, %v1183
  %v1789 = vpack.c.b16 %v1195, %v1184
  %v1790 = vpack.c.b16 %v1196, %v1185
  %v1791 = vpack.c.b16 %v1197, %v1186
  %v1792 = vpack.c.b16 %v1209, %v1198
  %v1793 = vpack.c.b16 %v1210, %v1199
  %v1794 = vpack.c.b16 %v1211, %v1200
  %v1795 = vpack.c.b16 %v1212, %v1201
  %v1796 = vpack.c.b16 %v1213, %v1202
  %v1797 = vpack.c.b16 %v1214, %v1203
  %v1798 = vpack.c.b16 %v1215, %v1204
  %v1799 = vpack.c.b16 %v1216, %v1205
  %v1800 = vpack.c.b16 %v1217, %v1206
  %v1801 = vpack.c.b16 %v1218, %v1207
  %v1802 = vpack.c.b16 %v1219, %v1208
  %v1803 = vpack.c.b16 %v1231, %v1220
  %v1804 = vpack.c.b16 %v1232, %v1221
  %v1805 = vpack.c.b16 %v1233, %v1222
  %v1806 = vpack.c.b16 %v1234, %v1223
  %v1807 = vpack.c.b16 %v1235, %v1224
  %v1808 = vpack.c.b16 %v1236, %v1225
  %v1809 = vpack.c.b16 %v1237, %v1226
  %v1810 = vpack.c.b16 %v1238, %v1227
  %v1811 = vpack.c.b16 %v1239, %v1228
  %v1812 = vpack.c.b16 %v1240, %v1229
  %v1813 = vpack.c.b16 %v1241, %v1230
  %v1814 = vpack.c.b16 %v1253, %v1242
  %v1815 = vpack.c.b16 %v1254, %v1243
  %v1816 = vpack.c.b16 %v1255, %v1244
  %v1817 = vpack.c.b16 %v1256, %v1245
  %v1818 = vpack.c.b16 %v1257, %v1246
  %v1819 = vpack.c.b16 %v1258, %v1247
  %v1820 = vpack.c.b16 %v1259, %v1248
  %v1821 = vpack.c.b16 %v1260, %v1249
  %v1822 = vpack.c.b16 %v1261, %v1250
  %v1823 = vpack.c.b16 %v1262, %v1251
  %v1824 = vpack.c.b16 %v1263, %v1252
  %v1825 = vpack.c.b16 %v1275, %v1264
  %v1826 = vpack.c.b16 %v1276, %v1265
  %v1827 = vpack.c.b16 %v1277, %v1266
  %v1828 = vpack.c.b16 %v1278, %v1267
  %v1829 = vpack.c.b16 %v1279, %v1268
  %v1830 = vpack.c.b16 %v1280, %v1269
  %v1831 = vpack.c.b16 %v1281, %v1270
  %v1832 = vpack.c.b16 %v1282, %v1271
  %v1833 = vpack.c.b16 %v1283, %v1272
  %v1834 = vpack.c.b16 %v1284, %v1273
  %v1835 = vpack.c.b16 %v1285, %v1274
  %v1836 = vpack.c.b16 %v1297, %v1286
  %v1837 = vpack.c.b16 %v1298, %v1287
  %v1838 = vpack.c.b16 %v1299, %v1288
  %v1839 = vpack.c.b16 %v1300, %v1289
  %v1840 = vpack.c.b16 %v1301, %v1290
  %v1841 = vpack.c.b16 %v1302, %v1291
  %v1842 = vpack.c.b16 %v1303, %v1292
  %v1843 = vpack.c.b16 %v1304, %v1293
  %v1844 = vpack.c.b16 %v1305, %v1294
  %v1845 = vpack.c.b16 %v1306, %v1295
  %v1846 = vpack.c.b16 %v1307, %v1296
  %v1847 = vpack.c.b16 %v1319, %v1308
  %v1848 = vpack.c.b16 %v1320, %v1309
  %v1849 = vpack.c.b16 %v1321, %v1310
  %v1850 = vpack.c.b16 %v1322, %v1311
  %v1851 = vpack.c.b16 %v1323, %v1312
  %v1852 = vpack.c.b16 %v1324, %v1313
  %v1853 = vpack.c.b16 %v1325, %v1314
  %v1854 = vpack.c.b16 %v1326, %v1315
  %v1855 = vpack.c.b16 %v1327, %v1316
  %v1856 = vpack.c.b16 %v1328, %v1317
  %v1857 = vpack.c.b16 %v1329, %v1318
  %v1858 = vpack.c.b16 %v1341, %v1330
  %v1859 = vpack.c.b16 %v1342, %v1331
  %v1860 = vpack.c.b16 %v1343, %v1332
  %v1861 = vpack.c.b16 %v1344, %v1333
  %v1862 = vpack.c.b16 %v1345, %v1334
  %v1863 = vpack.c.b16 %v1346, %v1335
  %v1864 = vpack.c.b16 %v1347, %v1336
  %v1865 = vpack.c.b16 %v1348, %v1337
  %v1866 = vpack.c.b16 %v1349, %v1338
  %v1867 = vpack.c.b16 %v1350, %v1339
  %v1868 = vpack.c.b16 %v1351, %v1340
  %v1869 = vpack.c.b16 %v1363, %v1352
  %v1870 = vpack.c.b16 %v1364, %v1353
  %v1871 = vpack.c.b16 %v1365, %v1354
  %v1872 = vpack.c.b16 %v1366, %v1355
  %v1873 = vpack.c.b16 %v1367, %v1356
  %v1874 = vpack.c.b16 %v1368, %v1357
  %v1875 = vpack.c.b16 %v1369, %v1358
  %v1876 = vpack.c.b16 %v1370, %v1359
  %v1877 = vpack.c.b16 %v1371, %v1360
  %v1878 = vpack.c.b16 %v1372, %v1361
  %v1879 = vpack.c.b16 %v1373, %v1362
  %v1880 = vpack.c.b16 %v1385, %v1374
  %v1881 = vpack.c.b16 %v1386, %v1375
  %v1882 = vpack.c.b16 %v1387, %v1376
  %v1883 = vpack.c.b16 %v1388, %v1377
  %v1884 = vpack.c.b16 %v1389, %v1378
  %v1885 = vpack.c.b16 %v1390, %v1379
  %v1886 = vpack.c.b16 %v1391, %v1380
  %v1887 = vpack.c.b16 %v1392, %v1381
  %v1888 = vpack.c.b16 %v1393, %v1382
  %v1889 = vpack.c.b16 %v1394, %v1383
  %v1890 = vpack.c.b16 %v1395, %v1384
  %v1891 = vpack.c.b16 %v1407, %v1396
  %v1892 = vpack.c.b16 %v1408, %v1397
  %v1893 = vpack.c.b16 %v1409, %v1398
  %v1894 = vpack.c.b16 %v1410, %v1399
  %v1895 = vpack.c.b16 %v1411, %v1400
  %v1896 = vpack.c.b16 %v1412, %v1401
  %v1897 = vpack.c.b16 %v1413, %v1402
  %v1898 = vpack.c.b16 %v1414, %v1403
  %v1899 = vpack.c.b16 %v1415, %v1404
  %v1900 = vpack.c.b16 %v1416, %v1405
  %v1901 = vpack.c.b16 %v1417, %v1406
  %v1902 = vpack.c.b16 %v1429, %v1418
  %v1903 = vpack.c.b16 %v1430, %v1419
  %v1904 = vpack.c.b16 %v1431, %v1420
  %v1905 = vpack.c.b16 %v1432, %v1421
  %v1906 = vpack.c.b16 %v1433, %v1422
  %v1907 = vpack.c.b16 %v1434, %v1423
  %v1908 = vpack.c.b16 %v1435, %v1424
  %v1909 = vpack.c.b16 %v1436, %v1425
  %v1910 = vpack.c.b16 %v1437, %v1426
  %v1911 = vpack.c.b16 %v1438, %v1427
  %v1912 = vpack.c.b16 %v1439, %v1428
  %v1913 = vpack.c.b16 %v1451, %v1440
  %v1914 = vpack.c.b16 %v1452, %v1441
  %v1915 = vpack.c.b16 %v1453, %v1442
  %v1916 = vpack.c.b16 %v1454, %v1443
  %v1917 = vpack.c.b16 %v1455, %v1444
  %v1918 = vpack.c.b16 %v1456, %v1445
  %v1919 = vpack.c.b16 %v1457, %v1446
  %v1920 = vpack.c.b16 %v1458, %v1447
  %v1921 = vpack.c.b16 %v1459, %v1448
  %v1922 = vpack.c.b16 %v1460, %v1449
  %v1923 = vpack.c.b16 %v1461, %v1450
  %v1924 = vpack.c.b16 %v1473, %v1462
  %v1925 = vpack.c.b16 %v1474, %v1463
  %v1926 = vpack.c.b16 %v1475, %v1464
  %v1927 = vpack.c.b16 %v1476, %v1465
  %v1928 = vpack.c.b16 %v1477, %v1466
  %v1929 = vpack.c.b16 %v1478, %v1467
  %v1930 = vpack.c.b16 %v1479, %v1468
  %v1931 = vpack.c.b16 %v1480, %v1469
  %v1932 = vpack.c.b16 %v1481, %v1470
  %v1933 = vpack.c.b16 %v1482, %v1471
  %v1934 = vpack.c.b16 %v1483, %v1472
  %v1935 = vpack.c.b16 %v1495, %v1484
  %v1936 = vpack.c.b16 %v1496, %v1485
  %v1937 = vpack.c.b16 %v1497, %v1486
  %v1938 = vpack.c.b16 %v1498, %v1487
  %v1939 = vpack.c.b16 %v1499, %v1488
  %v1940 = vpack.c.b16 %v1500, %v1489
  %v1941 = vpack.c.b16 %v1501, %v1490
  %v1942 = vpack.c.b16 %v1502, %v1491
  %v1943 = vpack.c.b16 %v1503, %v1492
  %v1944 = vpack.c.b16 %v1504, %v1493
  %v1945 = vpack.c.b16 %v1505, %v1494
  %v1946 = vpack.c.b16 %v1517, %v1506
  %v1947 = vpack.c.b16 %v1518, %v1507
  %v1948 = vpack.c.b16 %v1519, %v1508
  %v1949 = vpack.c.b16 %v1520, %v1509
  %v1950 = vpack.c.b16 %v1521, %v1510
  %v1951 = vpack.c.b16 %v1522, %v1511
  %v1952 = vpack.c.b16 %v1523, %v1512
  %v1953 = vpack.c.b16 %v1524, %v1513
  %v1954 = vpack.c.b16 %v1525, %v1514
  %v1955 = vpack.c.b16 %v1526, %v1515
  %v1956 = vpack.c.b16 %v1527, %v1516
  %v1957 = vpack.c.b16 %v1539, %v1528
  %v1958 = vpack.c.b16 %v1540, %v1529
  %v1959 = vpack.c.b16 %v1541, %v1530
  %v1960 = vpack.c.b16 %v1542, %v1531
  %v1961 = vpack.c.b16 %v1543, %v1532
  %v1962 = vpack.c.b16 %v1544, %v1533
  %v1963 = vpack.c.b16 %v1545, %v1534
  %v1964 = vpack.c.b16 %v1546, %v1535
  %v1965 = vpack.c.b16 %v1547, %v1536
  %v1966 = vpack.c.b16 %v1548, %v1537
  %v1967 = vpack.c.b16 %v1549, %v1538
  %v1968 = vpack.c.b16 %v1561, %v1550
  %v1969 = vpack.c.b16 %v1562, %v1551
  %v1970 = vpack.c.b16 %v1563, %v1552
  %v1971 = vpack.c.b16 %v1564, %v1553
  %v1972 = vpack.c.b16 %v1565, %v1554
  %v1973 = vpack.c.b16 %v1566, %v1555
  %v1974 = vpack.c.b16 %v1567, %v1556
  %v1975 = vpack.c.b16 %v1568, %v1557
  %v1976 = vpack.c.b16 %v1569, %v1558
  %v1977 = vpack.c.b16 %v1570, %v1559
  %v1978 = vpack.c.b16 %v1571, %v1560
  %v1979 = vpack.c.b16 %v1583, %v1572
  %v1980 = vpack.c.b16 %v1584, %v1573
  %v1981 = vpack.c.b16 %v1585, %v1574
  %v1982 = vpack.c.b16 %v1586, %v1575
  %v1983 = vpack.c.b16 %v1587, %v1576
  %v1984 = vpack.c.b16 %v1588, %v1577
  %v1985 = vpack.c.b16 %v1589, %v1578
  %v1986 = vpack.c.b16 %v1590, %v1579
  %v1987 = vpack.c.b16 %v1591, %v1580
  %v1988 = vpack.c.b16 %v1592, %v1581
  %v1989 = vpack.c.b16 %v1593, %v1582
  %v1990 = vpack.c.b16 %v1605, %v1594
  %v1991 = vpack.c.b16 %v1606, %v1595
  %v1992 = vpack.c.b16 %v1607, %v1596
  %v1993 = vpack.c.b16 %v1608, %v1597
  %v1994 = vpack.c.b16 %v1609, %v1598
  %v1995 = vpack.c.b16 %v1610, %v1599
  %v1996 = vpack.c.b16 %v1611, %v1600
  %v1997 = vpack.c.b16 %v1612, %v1601
  %v1998 = vpack.c.b16 %v1613, %v1602
  %v1999 = vpack.c.b16 %v1614, %v1603
  %v2000 = vpack.c.b16 %v1615, %v1604
  %v2001 = vpack.c.b16 %v1627, %v1616
  %v2002 = vpack.c.b16 %v1628, %v1617
  %v2003 = vpack.c.b16 %v1629, %v1618
  %v2004 = vpack.c.b16 %v1630, %v1619
  %v2005 = vpack.c.b16 %v1631, %v1620
  %v2006 = vpack.c.b16 %v1632, %v1621
  %v2007 = vpack.c.b16 %v1633, %v1622
  %v2008 = vpack.c.b16 %v1634, %v1623
  %v2009 = vpack.c.b16 %v1635, %v1624
  %v2010 = vpack.c.b16 %v1636, %v1625
  %v2011 = vpack.c.b16 %v1637, %v1626
  %v2012 = vpack.c.b16 %v1649, %v1638
  %v2013 = vpack.c.b16 %v1650, %v1639
  %v2014 = vpack.c.b16 %v1651, %v1640
  %v2015 = vpack.c.b16 %v1652, %v1641
  %v2016 = vpack.c.b16 %v1653, %v1642
  %v2017 = vpack.c.b16 %v1654, %v1643
  %v2018 = vpack.c.b16 %v1655, %v1644
  %v2019 = vpack.c.b16 %v1656, %v1645
  %v2020 = vpack.c.b16 %v1657, %v1646
  %v2021 = vpack.c.b16 %v1658, %v1647
  %v2022 = vpack.c.b16 %v1659, %v1648
  %v2023 = vpack.c.b16 %v1671, %v1660
  %v2024 = vpack.c.b16 %v1672, %v1661
  %v2025 = vpack.c.b16 %v1673, %v1662
  %v2026 = vpack.c.b16 %v1674, %v1663
  %v2027 = vpack.c.b16 %v1675, %v1664
  %v2028 = vpack.c.b16 %v1676, %v1665
  %v2029 = vpack.c.b16 %v1677, %v1666
  %v2030 = vpack.c.b16 %v1678, %v1667
  %v2031 = vpack.c.b16 %v1679, %v1668
  %v2032 = vpack.c.b16 %v1680, %v1669
  %v2033 = vpack.c.b16 %v1681, %v1670
  %v2562 = vunpack.c.l.b16 %v411
  %v2563 = vunpack.c.l.b16 %v412
  %v2564 = vunpack.c.l.b16 %v413
  %v2565 = vunpack.c.l.b16 %v414
  %v2566 = vunpack.c.l.b16 %v415
  %v2567 = vunpack.c.l.b16 %v416
  %v2568 = vunpack.c.l.b16 %v417
  %v2569 = vunpack.c.l.b16 %v418
  %v2570 = vunpack.c.l.b16 %v419
  %v2571 = vunpack.c.l.b16 %v420
  %v2572 = vunpack.c.l.b16 %v421
  %v2573 = vunpack.c.l.b16 %v422
  %v2574 = vunpack.c.l.b16 %v423
  %v2575 = vunpack.c.l.b16 %v424
  %v2576 = vunpack.c.l.b16 %v425
  %v2577 = vunpack.c.l.b16 %v426
  %v2578 = vunpack.c.l.b16 %v427
  %v2579 = vunpack.c.l.b16 %v428
  %v2580 = vunpack.c.l.b16 %v429
  %v2581 = vunpack.c.l.b16 %v430
  %v2582 = vunpack.c.l.b16 %v431
  %v2583 = vunpack.c.l.b16 %v432
  %v2584 = vunpack.c.l.b16 %v433
  %v2585 = vunpack.c.l.b16 %v434
  %v2586 = vunpack.c.l.b16 %v435
  %v2587 = vunpack.c.l.b16 %v436
  %v2588 = vunpack.c.l.b16 %v437
  %v2589 = vunpack.c.l.b16 %v438
  %v2590 = vunpack.c.l.b16 %v439
  %v2591 = vunpack.c.l.b16 %v440
  %v2592 = vunpack.c.l.b16 %v441
  %v2593 = vunpack.c.l.b16 %v442
  %v2594 = vunpack.c.l.b16 %v443
  %v2595 = vunpack.c.l.b16 %v444
  %v2596 = vunpack.c.l.b16 %v445
  %v2597 = vunpack.c.l.b16 %v446
  %v2598 = vunpack.c.l.b16 %v447
  %v2599 = vunpack.c.l.b16 %v448
  %v2600 = vunpack.c.l.b16 %v449
  %v2601 = vunpack.c.l.b16 %v450
  %v2602 = vunpack.c.l.b16 %v451
  %v2603 = vunpack.c.l.b16 %v452
  %v2604 = vunpack.c.l.b16 %v453
  %v2605 = vunpack.c.l.b16 %v454
  %v2606 = vunpack.c.l.b16 %v455
  %v2607 = vunpack.c.l.b16 %v456
  %v2608 = vunpack.c.l.b16 %v457
  %v2609 = vunpack.c.l.b16 %v458
  %v2610 = vunpack.c.l.b16 %v459
  %v2611 = vunpack.c.l.b16 %v460
  %v2612 = vunpack.c.l.b16 %v461
  %v2613 = vunpack.c.l.b16 %v462
  %v2614 = vunpack.c.l.b16 %v463
  %v2615 = vunpack.c.l.b16 %v464
  %v2616 = vunpack.c.l.b16 %v465
  %v2617 = vunpack.c.l.b16 %v466
  %v2618 = vunpack.c.l.b16 %v467
  %v2619 = vunpack.c.l.b16 %v468
  %v2620 = vunpack.c.l.b16 %v469
  %v2621 = vunpack.c.l.b16 %v470
  %v2622 = vunpack.c.l.b16 %v471
  %v2623 = vunpack.c.l.b16 %v472
  %v2624 = vunpack.c.l.b16 %v473
  %v2625 = vunpack.c.l.b16 %v474
  %v2626 = vunpack.c.l.b16 %v475
  %v2627 = vunpack.c.l.b16 %v476
  %v2628 = vunpack.c.l.b16 %v477
  %v2629 = vunpack.c.l.b16 %v478
  %v2630 = vunpack.c.l.b16 %v479
  %v2631 = vunpack.c.l.b16 %v480
  %v2632 = vunpack.c.l.b16 %v481
  %v2633 = vunpack.c.l.b16 %v482
  %v2634 = vunpack.c.l.b16 %v483
  %v2635 = vunpack.c.l.b16 %v484
  %v2636 = vunpack.c.l.b16 %v485
  %v2637 = vunpack.c.l.b16 %v486
  %v2638 = vunpack.c.l.b16 %v487
  %v2639 = vunpack.c.l.b16 %v488
  %v2640 = vunpack.c.l.b16 %v489
  %v2641 = vunpack.c.l.b16 %v490
  %v2642 = vunpack.c.l.b16 %v491
  %v2643 = vunpack.c.l.b16 %v492
  %v2644 = vunpack.c.l.b16 %v493
  %v2645 = vunpack.c.l.b16 %v494
  %v2646 = vunpack.c.l.b16 %v495
  %v2647 = vunpack.c.l.b16 %v496
  %v2648 = vunpack.c.l.b16 %v497
  %v2649 = vunpack.c.l.b16 %v498
  %v2650 = vunpack.c.l.b16 %v499
  %v2651 = vunpack.c.l.b16 %v500
  %v2652 = vunpack.c.l.b16 %v501
  %v2653 = vunpack.c.l.b16 %v502
  %v2654 = vunpack.c.l.b16 %v503
  %v2655 = vunpack.c.l.b16 %v504
  %v2656 = vunpack.c.l.b16 %v505
  %v2657 = vunpack.c.l.b16 %v506
  %v2658 = vunpack.c.l.b16 %v507
  %v2659 = vunpack.c.l.b16 %v508
  %v2660 = vunpack.c.l.b16 %v509
  %v2661 = vunpack.c.l.b16 %v510
  %v2662 = vunpack.c.l.b16 %v511
  %v2663 = vunpack.c.l.b16 %v512
  %v2664 = vunpack.c.l.b16 %v513
  %v2665 = vunpack.c.l.b16 %v514
  %v2666 = vunpack.c.l.b16 %v515
  %v2667 = vunpack.c.l.b16 %v516
  %v2668 = vunpack.c.l.b16 %v517
  %v2669 = vunpack.c.l.b16 %v518
  %v2670 = vunpack.c.l.b16 %v519
  %v2671 = vunpack.c.l.b16 %v520
  %v2672 = vunpack.c.l.b16 %v521
  %v2673 = vunpack.c.l.b16 %v522
  %v2674 = vunpack.c.l.b16 %v523
  %v2675 = vunpack.c.l.b16 %v524
  %v2676 = vunpack.c.l.b16 %v525
  %v2677 = vunpack.c.l.b16 %v526
  %v2678 = vunpack.c.l.b16 %v527
  %v2679 = vunpack.c.l.b16 %v528
  %v2680 = vunpack.c.l.b16 %v529
  %v2681 = vunpack.c.l.b16 %v530
  %v2682 = vunpack.c.l.b16 %v531
  %v2683 = vunpack.c.l.b16 %v532
  %v2684 = vunpack.c.l.b16 %v533
  %v2685 = vunpack.c.l.b16 %v534
  %v2686 = vunpack.c.l.b16 %v535
  %v2687 = vunpack.c.l.b16 %v536
  %v2688 = vunpack.c.l.b16 %v537
  %v2689 = vunpack.c.l.b16 %v538
  %v2690 = vunpack.c.l.b16 %v539
  %v2691 = vunpack.c.l.b16 %v540
  %v2692 = vunpack.c.l.b16 %v541
  %v2693 = vunpack.c.l.b16 %v542
  %v2694 = vunpack.c.l.b16 %v543
  %v2695 = vunpack.c.l.b16 %v544
  %v2696 = vunpack.c.l.b16 %v545
  %v2697 = vunpack.c.l.b16 %v546
  %v2698 = vunpack.c.l.b16 %v547
  %v2699 = vunpack.c.l.b16 %v548
  %v2700 = vunpack.c.l.b16 %v549
  %v2701 = vunpack.c.l.b16 %v550
  %v2702 = vunpack.c.l.b16 %v551
  %v2703 = vunpack.c.l.b16 %v552
  %v2704 = vunpack.c.l.b16 %v553
  %v2705 = vunpack.c.l.b16 %v554
  %v2706 = vunpack.c.l.b16 %v555
  %v2707 = vunpack.c.l.b16 %v556
  %v2708 = vunpack.c.l.b16 %v557
  %v2709 = vunpack.c.l.b16 %v558
  %v2710 = vunpack.c.l.b16 %v559
  %v2711 = vunpack.c.l.b16 %v560
  %v2712 = vunpack.c.l.b16 %v561
  %v2713 = vunpack.c.l.b16 %v562
  %v2714 = vunpack.c.l.b16 %v563
  %v2715 = vunpack.c.l.b16 %v564
  %v2716 = vunpack.c.l.b16 %v565
  %v2717 = vunpack.c.l.b16 %v566
  %v2718 = vunpack.c.l.b16 %v567
  %v2719 = vunpack.c.l.b16 %v568
  %v2720 = vunpack.c.l.b16 %v569
  %v2721 = vunpack.c.l.b16 %v570
  %v2722 = vunpack.c.l.b16 %v571
  %v2723 = vunpack.c.l.b16 %v572
  %v2724 = vunpack.c.l.b16 %v573
  %v2725 = vunpack.c.l.b16 %v574
  %v2726 = vunpack.c.l.b16 %v575
  %v2727 = vunpack.c.l.b16 %v576
  %v2728 = vunpack.c.l.b16 %v577
  %v2729 = vunpack.c.l.b16 %v578
  %v2730 = vunpack.c.l.b16 %v579
  %v2731 = vunpack.c.l.b16 %v580
  %v2732 = vunpack.c.l.b16 %v581
  %v2733 = vunpack.c.l.b16 %v582
  %v2734 = vunpack.c.l.b16 %v583
  %v2735 = vunpack.c.l.b16 %v584
  %v2736 = vunpack.c.l.b16 %v585
  %v2737 = vunpack.c.l.b16 %v586
  %v2738 = vpack.c.b16 %v2563, %v2562
  %v2739 = vpack.c.b16 %v2565, %v2564
  %v2740 = vpack.c.b16 %v2567, %v2566
  %v2741 = vpack.c.b16 %v2569, %v2568
  %v2742 = vpack.c.b16 %v2571, %v2570
  %v2743 = vpack.c.b16 %v2573, %v2572
  %v2744 = vpack.c.b16 %v2575, %v2574
  %v2745 = vpack.c.b16 %v2577, %v2576
  %v2746 = vpack.c.b16 %v2579, %v2578
  %v2747 = vpack.c.b16 %v2581, %v2580
  %v2748 = vpack.c.b16 %v2583, %v2582
  %v2749 = vpack.c.b16 %v2585, %v2584
  %v2750 = vpack.c.b16 %v2587, %v2586
  %v2751 = vpack.c.b16 %v2589, %v2588
  %v2752 = vpack.c.b16 %v2591, %v2590
  %v2753 = vpack.c.b16 %v2593, %v2592
  %v2754 = vpack.c.b16 %v2595, %v2594
  %v2755 = vpack.c.b16 %v2597, %v2596
  %v2756 = vpack.c.b16 %v2599, %v2598
  %v2757 = vpack.c.b16 %v2601, %v2600
  %v2758 = vpack.c.b16 %v2603, %v2602
  %v2759 = vpack.c.b16 %v2605, %v2604
  %v2760 = vpack.c.b16 %v2607, %v2606
  %v2761 = vpack.c.b16 %v2609, %v2608
  %v2762 = vpack.c.b16 %v2611, %v2610
  %v2763 = vpack.c.b16 %v2613, %v2612
  %v2764 = vpack.c.b16 %v2615, %v2614
  %v2765 = vpack.c.b16 %v2617, %v2616
  %v2766 = vpack.c.b16 %v2619, %v2618
  %v2767 = vpack.c.b16 %v2621, %v2620
  %v2768 = vpack.c.b16 %v2623, %v2622
  %v2769 = vpack.c.b16 %v2625, %v2624
  %v2770 = vpack.c.b16 %v2627, %v2626
  %v2771 = vpack.c.b16 %v2629, %v2628
  %v2772 = vpack.c.b16 %v2631, %v2630
  %v2773 = vpack.c.b16 %v2633, %v2632
  %v2774 = vpack.c.b16 %v2635, %v2634
  %v2775 = vpack.c.b16 %v2637, %v2636
  %v2776 = vpack.c.b16 %v2639, %v2638
  %v2777 = vpack.c.b16 %v2641, %v2640
  %v2778 = vpack.c.b16 %v2643, %v2642
  %v2779 = vpack.c.b16 %v2645, %v2644
  %v2780 = vpack.c.b16 %v2647, %v2646
  %v2781 = vpack.c.b16 %v2649, %v2648
  %v2782 = vpack.c.b16 %v2651, %v2650
  %v2783 = vpack.c.b16 %v2653, %v2652
  %v2784 = vpack.c.b16 %v2655, %v2654
  %v2785 = vpack.c.b16 %v2657, %v2656
  %v2786 = vpack.c.b16 %v2659, %v2658
  %v2787 = vpack.c.b16 %v2661, %v2660
  %v2788 = vpack.c.b16 %v2663, %v2662
  %v2789 = vpack.c.b16 %v2665, %v2664
  %v2790 = vpack.c.b16 %v2667, %v2666
  %v2791 = vpack.c.b16 %v2669, %v2668
  %v2792 = vpack.c.b16 %v2671, %v2670
  %v2793 = vpack.c.b16 %v2673, %v2672
  %v2794 = vpack.c.b16 %v2675, %v2674
  %v2795 = vpack.c.b16 %v2677, %v2676
  %v2796 = vpack.c.b16 %v2679, %v2678
  %v2797 = vpack.c.b16 %v2681, %v2680
  %v2798 = vpack.c.b16 %v2683, %v2682
  %v2799 = vpack.c.b16 %v2685, %v2684
  %v2800 = vpack.c.b16 %v2687, %v2686
  %v2801 = vpack.c.b16 %v2689, %v2688
  %v2802 = vpack.c.b16 %v2691, %v2690
  %v2803 = vpack.c.b16 %v2693, %v2692
  %v2804 = vpack.c.b16 %v2695, %v2694
  %v2805 = vpack.c.b16 %v2697, %v2696
  %v2806 = vpack.c.b16 %v2699, %v2698
  %v2807 = vpack.c.b16 %v2701, %v2700
  %v2808 = vpack.c.b16 %v2703, %v2702
  %v2809 = vpack.c.b16 %v2705, %v2704
  %v2810 = vpack.c.b16 %v2707, %v2706
  %v2811 = vpack.c.b16 %v2709, %v2708
  %v2812 = vpack.c.b16 %v2711, %v2710
  %v2813 = vpack.c.b16 %v2713, %v2712
  %v2814 = vpack.c.b16 %v2715, %v2714
  %v2815 = vpack.c.b16 %v2717, %v2716
  %v2816 = vpack.c.b16 %v2719, %v2718
  %v2817 = vpack.c.b16 %v2721, %v2720
  %v2818 = vpack.c.b16 %v2723, %v2722
  %v2819 = vpack.c.b16 %v2725, %v2724
  %v2820 = vpack.c.b16 %v2727, %v2726
  %v2821 = vpack.c.b16 %v2729, %v2728
  %v2822 = vpack.c.b16 %v2731, %v2730
  %v2823 = vpack.c.b16 %v2733, %v2732
  %v2824 = vpack.c.b16 %v2735, %v2734
  %v2825 = vpack.c.b16 %v2737, %v2736
  %2914 = vmatprep.subr.bf16.mxu0 0
  %2915 = vmatpush1.bf16.msra.mxu0 %v2738
  %2916 = vmatprep.subr.bf16.mxu0 0
  %2917 = vmatpush1.bf16.msra.mxu0 %v2739
  %2918 = vmatprep.subr.bf16.mxu0 0
  %2919 = vmatpush1.bf16.msra.mxu0 %v2740
  %2920 = vmatprep.subr.bf16.mxu0 0
  %2921 = vmatpush1.bf16.msra.mxu0 %v2741
  %2922 = vmatprep.subr.bf16.mxu0 0
  %2923 = vmatpush1.bf16.msra.mxu0 %v2742
  %2924 = vmatprep.subr.bf16.mxu0 0
  %2925 = vmatpush1.bf16.msra.mxu0 %v2743
  %2926 = vmatprep.subr.bf16.mxu0 0
  %2927 = vmatpush1.bf16.msra.mxu0 %v2744
  %2928 = vmatprep.subr.bf16.mxu0 0
  %2929 = vmatpush1.bf16.msra.mxu0 %v2745
  %2930 = vmatprep.subr.bf16.mxu0 0
  %2931 = vmatpush1.bf16.msra.mxu0 %v2746
  %2932 = vmatprep.subr.bf16.mxu0 0
  %2933 = vmatpush1.bf16.msra.mxu0 %v2747
  %2934 = vmatprep.subr.bf16.mxu0 0
  %2935 = vmatpush1.bf16.msra.mxu0 %v2748
  %2936 = vmatprep.subr.bf16.mxu0 0
  %2937 = vmatpush1.bf16.msra.mxu0 %v2749
  %2938 = vmatprep.subr.bf16.mxu0 0
  %2939 = vmatpush1.bf16.msra.mxu0 %v2750
  %2940 = vmatprep.subr.bf16.mxu0 0
  %2941 = vmatpush1.bf16.msra.mxu0 %v2751
  %2942 = vmatprep.subr.bf16.mxu0 0
  %2943 = vmatpush1.bf16.msra.mxu0 %v2752
  %2944 = vmatprep.subr.bf16.mxu0 0
  %2945 = vmatpush1.bf16.msra.mxu0 %v2753
  %2946 = vmatprep.mubr.bf16.mxu0 %v1683
  %2947 = vmatmul.mubr.bf16.gmra.mrb[0].mxu0 %v1682
  %v2948 = vpop.f32.mrb[0].mxu0
  %v2949 = vadd.f32 %v592, %v2948
  %v2950 = vpop.f32.mrb[0].mxu0
  %v2951 = vpop.f32.mrb[0].mxu0
  %v2952 = vadd.f32 %v592, %v2951
  %v2953 = vpop.f32.mrb[0].mxu0
  %2954 = vmatprep.mubr.bf16.mxu0 %v1694
  %2955 = vmatmul.mubr.bf16.gmra.mrb[0].mxu0 %v1693
  %v2956 = vpop.f32.mrb[0].mxu0
  %v2957 = vadd.f32 %v592, %v2956
  %v2958 = vpop.f32.mrb[0].mxu0
  %v2959 = vpop.f32.mrb[0].mxu0
  %v2960 = vadd.f32 %v592, %v2959
  %v2961 = vpop.f32.mrb[0].mxu0
  %2962 = vmatprep.mubr.bf16.mxu0 %v1705
  %2963 = vmatmul.mubr.bf16.gmra.mrb[0].mxu0 %v1704
  %v2964 = vpop.f32.mrb[0].mxu0
  %v2965 = vadd.f32 %v592, %v2964
  %v2966 = vpop.f32.mrb[0].mxu0
  %v2967 = vpop.f32.mrb[0].mxu0
  %v2968 = vadd.f32 %v592, %v2967
  %v2969 = vpop.f32.mrb[0].mxu0
  %2970 = vmatprep.mubr.bf16.mxu0 %v1716
  %2971 = vmatmul.mubr.bf16.gmra.mrb[0].mxu0 %v1715
  %v2972 = vpop.f32.mrb[0].mxu0
  %v2973 = vadd.f32 %v592, %v2972
  %v2974 = vpop.f32.mrb[0].mxu0
  %v2975 = vpop.f32.mrb[0].mxu0
  %v2976 = vadd.f32 %v592, %v2975
  %v2977 = vpop.f32.mrb[0].mxu0
  %2978 = vmatprep.mubr.bf16.mxu0 %v1727
  %2979 = vmatmul.mubr.bf16.gmra.mrb[0].mxu0 %v1726
  %v2980 = vpop.f32.mrb[0].mxu0
  %v2981 = vadd.f32 %v592, %v2980
  %v2982 = vpop.f32.mrb[0].mxu0
  %v2983 = vpop.f32.mrb[0].mxu0
  %v2984 = vadd.f32 %v592, %v2983
  %v2985 = vpop.f32.mrb[0].mxu0
  %2986 = vmatprep.mubr.bf16.mxu0 %v1738
  %2987 = vmatmul.mubr.bf16.gmra.mrb[0].mxu0 %v1737
  %v2988 = vpop.f32.mrb[0].mxu0
  %v2989 = vadd.f32 %v592, %v2988
  %v2990 = vpop.f32.mrb[0].mxu0
  %v2991 = vpop.f32.mrb[0].mxu0
  %v2992 = vadd.f32 %v592, %v2991
  %v2993 = vpop.f32.mrb[0].mxu0
  %2994 = vmatprep.mubr.bf16.mxu0 %v1749
  %2995 = vmatmul.mubr.bf16.gmra.mrb[0].mxu0 %v1748
  %v2996 = vpop.f32.mrb[0].mxu0
  %v2997 = vadd.f32 %v592, %v2996
  %v2998 = vpop.f32.mrb[0].mxu0
  %v2999 = vpop.f32.mrb[0].mxu0
  %v3000 = vadd.f32 %v592, %v2999
  %v3001 = vpop.f32.mrb[0].mxu0
  %3002 = vmatprep.mubr.bf16.mxu0 %v1760
  %3003 = vmatmul.mubr.bf16.gmra.mrb[0].mxu0 %v1759
  %v3004 = vpop.f32.mrb[0].mxu0
  %v3005 = vadd.f32 %v592, %v3004
  %v3006 = vpop.f32.mrb[0].mxu0
  %v3007 = vpop.f32.mrb[0].mxu0
  %v3008 = vadd.f32 %v592, %v3007
  %v3009 = vpop.f32.mrb[0].mxu0
  %3010 = vmatprep.mubr.bf16.mxu0 %v1771
  %3011 = vmatmul.mubr.bf16.gmra.mrb[0].mxu0 %v1770
  %v3012 = vpop.f32.mrb[0].mxu0
  %v3013 = vadd.f32 %v592, %v3012
  %v3014 = vpop.f32.mrb[0].mxu0
  %v3015 = vpop.f32.mrb[0].mxu0
  %v3016 = vadd.f32 %v592, %v3015
  %v3017 = vpop.f32.mrb[0].mxu0
  %3018 = vmatprep.mubr.bf16.mxu0 %v1782
  %3019 = vmatmul.mubr.bf16.gmra.mrb[0].mxu0 %v1781
  %v3020 = vpop.f32.mrb[0].mxu0
  %v3021 = vadd.f32 %v592, %v3020
  %v3022 = vpop.f32.mrb[0].mxu0
  %v3023 = vpop.f32.mrb[0].mxu0
  %v3024 = vadd.f32 %v592, %v3023
  %v3025 = vpop.f32.mrb[0].mxu0
  %3026 = vmatprep.mubr.bf16.mxu0 %v1793
  %3027 = vmatmul.mubr.bf16.gmra.mrb[0].mxu0 %v1792
  %v3028 = vpop.f32.mrb[0].mxu0
  %v3029 = vadd.f32 %v592, %v3028
  %v3030 = vpop.f32.mrb[0].mxu0
  %v3031 = vpop.f32.mrb[0].mxu0
  %v3032 = vadd.f32 %v592, %v3031
  %v3033 = vpop.f32.mrb[0].mxu0
  %3034 = vmatprep.mubr.bf16.mxu0 %v1804
  %3035 = vmatmul.mubr.bf16.gmra.mrb[0].mxu0 %v1803
  %v3036 = vpop.f32.mrb[0].mxu0
  %v3037 = vadd.f32 %v592, %v3036
  %v3038 = vpop.f32.mrb[0].mxu0
  %v3039 = vpop.f32.mrb[0].mxu0
  %v3040 = vadd.f32 %v592, %v3039
  %v3041 = vpop.f32.mrb[0].mxu0
  %3042 = vmatprep.mubr.bf16.mxu0 %v1815
  %3043 = vmatmul.mubr.bf16.gmra.mrb[0].mxu0 %v1814
  %v3044 = vpop.f32.mrb[0].mxu0
  %v3045 = vadd.f32 %v592, %v3044
  %v3046 = vpop.f32.mrb[0].mxu0
  %v3047 = vpop.f32.mrb[0].mxu0
  %v3048 = vadd.f32 %v592, %v3047
  %v3049 = vpop.f32.mrb[0].mxu0
  %3050 = vmatprep.mubr.bf16.mxu0 %v1826
  %3051 = vmatmul.mubr.bf16.gmra.mrb[0].mxu0 %v1825
  %v3052 = vpop.f32.mrb[0].mxu0
  %v3053 = vadd.f32 %v592, %v3052
  %v3054 = vpop.f32.mrb[0].mxu0
  %v3055 = vpop.f32.mrb[0].mxu0
  %v3056 = vadd.f32 %v592, %v3055
  %v3057 = vpop.f32.mrb[0].mxu0
  %3058 = vmatprep.mubr.bf16.mxu0 %v1837
  %3059 = vmatmul.mubr.bf16.gmra.mrb[0].mxu0 %v1836
  %v3060 = vpop.f32.mrb[0].mxu0
  %v3061 = vadd.f32 %v592, %v3060
  %v3062 = vpop.f32.mrb[0].mxu0
  %v3063 = vpop.f32.mrb[0].mxu0
  %v3064 = vadd.f32 %v592, %v3063
  %v3065 = vpop.f32.mrb[0].mxu0
  %3066 = vmatprep.mubr.bf16.mxu0 %v1848
  %3067 = vmatmul.mubr.bf16.gmra.mrb[0].mxu0 %v1847
  %v3068 = vpop.f32.mrb[0].mxu0
  %v3069 = vadd.f32 %v592, %v3068
  %v3070 = vpop.f32.mrb[0].mxu0
  %v3071 = vpop.f32.mrb[0].mxu0
  %v3072 = vadd.f32 %v592, %v3071
  %v3073 = vpop.f32.mrb[0].mxu0
  %3074 = vmatprep.mubr.bf16.mxu0 %v1859
  %3075 = vmatmul.mubr.bf16.gmra.mrb[0].mxu0 %v1858
  %v3076 = vpop.f32.mrb[0].mxu0
  %v3077 = vadd.f32 %v592, %v3076
  %v3078 = vpop.f32.mrb[0].mxu0
  %v3079 = vpop.f32.mrb[0].mxu0
  %v3080 = vadd.f32 %v592, %v3079
  %v3081 = vpop.f32.mrb[0].mxu0
  %3082 = vmatprep.mubr.bf16.mxu0 %v1870
  %3083 = vmatmul.mubr.bf16.gmra.mrb[0].mxu0 %v1869
  %v3084 = vpop.f32.mrb[0].mxu0
  %v3085 = vadd.f32 %v592, %v3084
  %v3086 = vpop.f32.mrb[0].mxu0
  %v3087 = vpop.f32.mrb[0].mxu0
  %v3088 = vadd.f32 %v592, %v3087
  %v3089 = vpop.f32.mrb[0].mxu0
  %3090 = vmatprep.mubr.bf16.mxu0 %v1881
  %3091 = vmatmul.mubr.bf16.gmra.mrb[0].mxu0 %v1880
  %v3092 = vpop.f32.mrb[0].mxu0
  %v3093 = vadd.f32 %v592, %v3092
  %v3094 = vpop.f32.mrb[0].mxu0
  %v3095 = vpop.f32.mrb[0].mxu0
  %v3096 = vadd.f32 %v592, %v3095
  %v3097 = vpop.f32.mrb[0].mxu0
  %3098 = vmatprep.mubr.bf16.mxu0 %v1892
  %3099 = vmatmul.mubr.bf16.gmra.mrb[0].mxu0 %v1891
  %v3100 = vpop.f32.mrb[0].mxu0
  %v3101 = vadd.f32 %v592, %v3100
  %v3102 = vpop.f32.mrb[0].mxu0
  %v3103 = vpop.f32.mrb[0].mxu0
  %v3104 = vadd.f32 %v592, %v3103
  %v3105 = vpop.f32.mrb[0].mxu0
  %3106 = vmatprep.mubr.bf16.mxu0 %v1903
  %3107 = vmatmul.mubr.bf16.gmra.mrb[0].mxu0 %v1902
  %v3108 = vpop.f32.mrb[0].mxu0
  %v3109 = vadd.f32 %v592, %v3108
  %v3110 = vpop.f32.mrb[0].mxu0
  %v3111 = vpop.f32.mrb[0].mxu0
  %v3112 = vadd.f32 %v592, %v3111
  %v3113 = vpop.f32.mrb[0].mxu0
  %3114 = vmatprep.mubr.bf16.mxu0 %v1914
  %3115 = vmatmul.mubr.bf16.gmra.mrb[0].mxu0 %v1913
  %v3116 = vpop.f32.mrb[0].mxu0
  %v3117 = vadd.f32 %v592, %v3116
  %v3118 = vpop.f32.mrb[0].mxu0
  %v3119 = vpop.f32.mrb[0].mxu0
  %v3120 = vadd.f32 %v592, %v3119
  %v3121 = vpop.f32.mrb[0].mxu0
  %3122 = vmatprep.mubr.bf16.mxu0 %v1925
  %3123 = vmatmul.mubr.bf16.gmra.mrb[0].mxu0 %v1924
  %v3124 = vpop.f32.mrb[0].mxu0
  %v3125 = vadd.f32 %v592, %v3124
  %v3126 = vpop.f32.mrb[0].mxu0
  %v3127 = vpop.f32.mrb[0].mxu0
  %v3128 = vadd.f32 %v592, %v3127
  %v3129 = vpop.f32.mrb[0].mxu0
  %3130 = vmatprep.mubr.bf16.mxu0 %v1936
  %3131 = vmatmul.mubr.bf16.gmra.mrb[0].mxu0 %v1935
  %v3132 = vpop.f32.mrb[0].mxu0
  %v3133 = vadd.f32 %v592, %v3132
  %v3134 = vpop.f32.mrb[0].mxu0
  %v3135 = vpop.f32.mrb[0].mxu0
  %v3136 = vadd.f32 %v592, %v3135
  %v3137 = vpop.f32.mrb[0].mxu0
  %3138 = vmatprep.mubr.bf16.mxu0 %v1947
  %3139 = vmatmul.mubr.bf16.gmra.mrb[0].mxu0 %v1946
  %v3140 = vpop.f32.mrb[0].mxu0
  %v3141 = vadd.f32 %v592, %v3140
  %v3142 = vpop.f32.mrb[0].mxu0
  %v3143 = vpop.f32.mrb[0].mxu0
  %v3144 = vadd.f32 %v592, %v3143
  %v3145 = vpop.f32.mrb[0].mxu0
  %3146 = vmatprep.mubr.bf16.mxu0 %v1958
  %3147 = vmatmul.mubr.bf16.gmra.mrb[0].mxu0 %v1957
  %v3148 = vpop.f32.mrb[0].mxu0
  %v3149 = vadd.f32 %v592, %v3148
  %v3150 = vpop.f32.mrb[0].mxu0
  %v3151 = vpop.f32.mrb[0].mxu0
  %v3152 = vadd.f32 %v592, %v3151
  %v3153 = vpop.f32.mrb[0].mxu0
  %3154 = vmatprep.mubr.bf16.mxu0 %v1969
  %3155 = vmatmul.mubr.bf16.gmra.mrb[0].mxu0 %v1968
  %v3156 = vpop.f32.mrb[0].mxu0
  %v3157 = vadd.f32 %v592, %v3156
  %v3158 = vpop.f32.mrb[0].mxu0
  %v3159 = vpop.f32.mrb[0].mxu0
  %v3160 = vadd.f32 %v592, %v3159
  %v3161 = vpop.f32.mrb[0].mxu0
  %3162 = vmatprep.mubr.bf16.mxu0 %v1980
  %3163 = vmatmul.mubr.bf16.gmra.mrb[0].mxu0 %v1979
  %v3164 = vpop.f32.mrb[0].mxu0
  %v3165 = vadd.f32 %v592, %v3164
  %v3166 = vpop.f32.mrb[0].mxu0
  %v3167 = vpop.f32.mrb[0].mxu0
  %v3168 = vadd.f32 %v592, %v3167
  %v3169 = vpop.f32.mrb[0].mxu0
  %3170 = vmatprep.mubr.bf16.mxu0 %v1991
  %3171 = vmatmul.mubr.bf16.gmra.mrb[0].mxu0 %v1990
  %v3172 = vpop.f32.mrb[0].mxu0
  %v3173 = vadd.f32 %v592, %v3172
  %v3174 = vpop.f32.mrb[0].mxu0
  %v3175 = vpop.f32.mrb[0].mxu0
  %v3176 = vadd.f32 %v592, %v3175
  %v3177 = vpop.f32.mrb[0].mxu0
  %3178 = vmatprep.mubr.bf16.mxu0 %v2002
  %3179 = vmatmul.mubr.bf16.gmra.mrb[0].mxu0 %v2001
  %v3180 = vpop.f32.mrb[0].mxu0
  %v3181 = vadd.f32 %v592, %v3180
  %v3182 = vpop.f32.mrb[0].mxu0
  %v3183 = vpop.f32.mrb[0].mxu0
  %v3184 = vadd.f32 %v592, %v3183
  %v3185 = vpop.f32.mrb[0].mxu0
  %3186 = vmatprep.mubr.bf16.mxu0 %v2013
  %3187 = vmatmul.mubr.bf16.gmra.mrb[0].mxu0 %v2012
  %v3188 = vpop.f32.mrb[0].mxu0
  %v3189 = vadd.f32 %v592, %v3188
  %v3190 = vpop.f32.mrb[0].mxu0
  %v3191 = vpop.f32.mrb[0].mxu0
  %v3192 = vadd.f32 %v592, %v3191
  %v3193 = vpop.f32.mrb[0].mxu0
  %3194 = vmatprep.mubr.bf16.mxu0 %v2024
  %3195 = vmatmul.mubr.bf16.gmra.mrb[0].mxu0 %v2023
  %v3196 = vpop.f32.mrb[0].mxu0
  %v3197 = vadd.f32 %v592, %v3196
  %v3198 = vpop.f32.mrb[0].mxu0
  %v3199 = vpop.f32.mrb[0].mxu0
  %v3200 = vadd.f32 %v592, %v3199
  %v3201 = vpop.f32.mrb[0].mxu0
  %3202 = vdwg.mxu0
  %3203 = vmatprep.subr.bf16.mxu0 0
  %3204 = vmatpush1.bf16.msra.mxu0 %v2754
  %3205 = vmatprep.subr.bf16.mxu0 0
  %3206 = vmatpush1.bf16.msra.mxu0 %v2755
  %3207 = vmatprep.subr.bf16.mxu0 0
  %3208 = vmatpush1.bf16.msra.mxu0 %v2756
  %3209 = vmatprep.subr.bf16.mxu0 0
  %3210 = vmatpush1.bf16.msra.mxu0 %v2757
  %3211 = vmatprep.subr.bf16.mxu0 0
  %3212 = vmatpush1.bf16.msra.mxu0 %v2758
  %3213 = vmatprep.subr.bf16.mxu0 0
  %3214 = vmatpush1.bf16.msra.mxu0 %v2759
  %3215 = vmatprep.subr.bf16.mxu0 0
  %3216 = vmatpush1.bf16.msra.mxu0 %v2760
  %3217 = vmatprep.subr.bf16.mxu0 0
  %3218 = vmatpush1.bf16.msra.mxu0 %v2761
  %3219 = vmatprep.subr.bf16.mxu0 0
  %3220 = vmatpush1.bf16.msra.mxu0 %v2762
  %3221 = vmatprep.subr.bf16.mxu0 0
  %3222 = vmatpush1.bf16.msra.mxu0 %v2763
  %3223 = vmatprep.subr.bf16.mxu0 0
  %3224 = vmatpush1.bf16.msra.mxu0 %v2764
  %3225 = vmatprep.subr.bf16.mxu0 0
  %3226 = vmatpush1.bf16.msra.mxu0 %v2765
  %3227 = vmatprep.subr.bf16.mxu0 0
  %3228 = vmatpush1.bf16.msra.mxu0 %v2766
  %3229 = vmatprep.subr.bf16.mxu0 0
  %3230 = vmatpush1.bf16.msra.mxu0 %v2767
  %3231 = vmatprep.subr.bf16.mxu0 0
  %3232 = vmatpush1.bf16.msra.mxu0 %v2768
  %3233 = vmatprep.subr.bf16.mxu0 0
  %3234 = vmatpush1.bf16.msra.mxu0 %v2769
  %3235 = vmatprep.mubr.bf16.mxu0 %v1685
  %3236 = vmatmul.mubr.bf16.gmra.mrb[0].mxu0 %v1684
  %v3237 = vpop.f32.mrb[0].mxu0
  %v3238 = vadd.f32 %v2949, %v3237
  %v3239 = vpop.f32.mrb[0].mxu0
  %v3240 = vpop.f32.mrb[0].mxu0
  %v3241 = vadd.f32 %v2952, %v3240
  %v3242 = vpop.f32.mrb[0].mxu0
  %3243 = vmatprep.mubr.bf16.mxu0 %v1696
  %3244 = vmatmul.mubr.bf16.gmra.mrb[0].mxu0 %v1695
  %v3245 = vpop.f32.mrb[0].mxu0
  %v3246 = vadd.f32 %v2957, %v3245
  %v3247 = vpop.f32.mrb[0].mxu0
  %v3248 = vpop.f32.mrb[0].mxu0
  %v3249 = vadd.f32 %v2960, %v3248
  %v3250 = vpop.f32.mrb[0].mxu0
  %3251 = vmatprep.mubr.bf16.mxu0 %v1707
  %3252 = vmatmul.mubr.bf16.gmra.mrb[0].mxu0 %v1706
  %v3253 = vpop.f32.mrb[0].mxu0
  %v3254 = vadd.f32 %v2965, %v3253
  %v3255 = vpop.f32.mrb[0].mxu0
  %v3256 = vpop.f32.mrb[0].mxu0
  %v3257 = vadd.f32 %v2968, %v3256
  %v3258 = vpop.f32.mrb[0].mxu0
  %3259 = vmatprep.mubr.bf16.mxu0 %v1718
  %3260 = vmatmul.mubr.bf16.gmra.mrb[0].mxu0 %v1717
  %v3261 = vpop.f32.mrb[0].mxu0
  %v3262 = vadd.f32 %v2973, %v3261
  %v3263 = vpop.f32.mrb[0].mxu0
  %v3264 = vpop.f32.mrb[0].mxu0
  %v3265 = vadd.f32 %v2976, %v3264
  %v3266 = vpop.f32.mrb[0].mxu0
  %3267 = vmatprep.mubr.bf16.mxu0 %v1729
  %3268 = vmatmul.mubr.bf16.gmra.mrb[0].mxu0 %v1728
  %v3269 = vpop.f32.mrb[0].mxu0
  %v3270 = vadd.f32 %v2981, %v3269
  %v3271 = vpop.f32.mrb[0].mxu0
  %v3272 = vpop.f32.mrb[0].mxu0
  %v3273 = vadd.f32 %v2984, %v3272
  %v3274 = vpop.f32.mrb[0].mxu0
  %3275 = vmatprep.mubr.bf16.mxu0 %v1740
  %3276 = vmatmul.mubr.bf16.gmra.mrb[0].mxu0 %v1739
  %v3277 = vpop.f32.mrb[0].mxu0
  %v3278 = vadd.f32 %v2989, %v3277
  %v3279 = vpop.f32.mrb[0].mxu0
  %v3280 = vpop.f32.mrb[0].mxu0
  %v3281 = vadd.f32 %v2992, %v3280
  %v3282 = vpop.f32.mrb[0].mxu0
  %3283 = vmatprep.mubr.bf16.mxu0 %v1751
  %3284 = vmatmul.mubr.bf16.gmra.mrb[0].mxu0 %v1750
  %v3285 = vpop.f32.mrb[0].mxu0
  %v3286 = vadd.f32 %v2997, %v3285
  %v3287 = vpop.f32.mrb[0].mxu0
  %v3288 = vpop.f32.mrb[0].mxu0
  %v3289 = vadd.f32 %v3000, %v3288
  %v3290 = vpop.f32.mrb[0].mxu0
  %3291 = vmatprep.mubr.bf16.mxu0 %v1762
  %3292 = vmatmul.mubr.bf16.gmra.mrb[0].mxu0 %v1761
  %v3293 = vpop.f32.mrb[0].mxu0
  %v3294 = vadd.f32 %v3005, %v3293
  %v3295 = vpop.f32.mrb[0].mxu0
  %v3296 = vpop.f32.mrb[0].mxu0
  %v3297 = vadd.f32 %v3008, %v3296
  %v3298 = vpop.f32.mrb[0].mxu0
  %3299 = vmatprep.mubr.bf16.mxu0 %v1773
  %3300 = vmatmul.mubr.bf16.gmra.mrb[0].mxu0 %v1772
  %v3301 = vpop.f32.mrb[0].mxu0
  %v3302 = vadd.f32 %v3013, %v3301
  %v3303 = vpop.f32.mrb[0].mxu0
  %v3304 = vpop.f32.mrb[0].mxu0
  %v3305 = vadd.f32 %v3016, %v3304
  %v3306 = vpop.f32.mrb[0].mxu0
  %3307 = vmatprep.mubr.bf16.mxu0 %v1784
  %3308 = vmatmul.mubr.bf16.gmra.mrb[0].mxu0 %v1783
  %v3309 = vpop.f32.mrb[0].mxu0
  %v3310 = vadd.f32 %v3021, %v3309
  %v3311 = vpop.f32.mrb[0].mxu0
  %v3312 = vpop.f32.mrb[0].mxu0
  %v3313 = vadd.f32 %v3024, %v3312
  %v3314 = vpop.f32.mrb[0].mxu0
  %3315 = vmatprep.mubr.bf16.mxu0 %v1795
  %3316 = vmatmul.mubr.bf16.gmra.mrb[0].mxu0 %v1794
  %v3317 = vpop.f32.mrb[0].mxu0
  %v3318 = vadd.f32 %v3029, %v3317
  %v3319 = vpop.f32.mrb[0].mxu0
  %v3320 = vpop.f32.mrb[0].mxu0
  %v3321 = vadd.f32 %v3032, %v3320
  %v3322 = vpop.f32.mrb[0].mxu0
  %3323 = vmatprep.mubr.bf16.mxu0 %v1806
  %3324 = vmatmul.mubr.bf16.gmra.mrb[0].mxu0 %v1805
  %v3325 = vpop.f32.mrb[0].mxu0
  %v3326 = vadd.f32 %v3037, %v3325
  %v3327 = vpop.f32.mrb[0].mxu0
  %v3328 = vpop.f32.mrb[0].mxu0
  %v3329 = vadd.f32 %v3040, %v3328
  %v3330 = vpop.f32.mrb[0].mxu0
  %3331 = vmatprep.mubr.bf16.mxu0 %v1817
  %3332 = vmatmul.mubr.bf16.gmra.mrb[0].mxu0 %v1816
  %v3333 = vpop.f32.mrb[0].mxu0
  %v3334 = vadd.f32 %v3045, %v3333
  %v3335 = vpop.f32.mrb[0].mxu0
  %v3336 = vpop.f32.mrb[0].mxu0
  %v3337 = vadd.f32 %v3048, %v3336
  %v3338 = vpop.f32.mrb[0].mxu0
  %3339 = vmatprep.mubr.bf16.mxu0 %v1828
  %3340 = vmatmul.mubr.bf16.gmra.mrb[0].mxu0 %v1827
  %v3341 = vpop.f32.mrb[0].mxu0
  %v3342 = vadd.f32 %v3053, %v3341
  %v3343 = vpop.f32.mrb[0].mxu0
  %v3344 = vpop.f32.mrb[0].mxu0
  %v3345 = vadd.f32 %v3056, %v3344
  %v3346 = vpop.f32.mrb[0].mxu0
  %3347 = vmatprep.mubr.bf16.mxu0 %v1839
  %3348 = vmatmul.mubr.bf16.gmra.mrb[0].mxu0 %v1838
  %v3349 = vpop.f32.mrb[0].mxu0
  %v3350 = vadd.f32 %v3061, %v3349
  %v3351 = vpop.f32.mrb[0].mxu0
  %v3352 = vpop.f32.mrb[0].mxu0
  %v3353 = vadd.f32 %v3064, %v3352
  %v3354 = vpop.f32.mrb[0].mxu0
  %3355 = vmatprep.mubr.bf16.mxu0 %v1850
  %3356 = vmatmul.mubr.bf16.gmra.mrb[0].mxu0 %v1849
  %v3357 = vpop.f32.mrb[0].mxu0
  %v3358 = vadd.f32 %v3069, %v3357
  %v3359 = vpop.f32.mrb[0].mxu0
  %v3360 = vpop.f32.mrb[0].mxu0
  %v3361 = vadd.f32 %v3072, %v3360
  %v3362 = vpop.f32.mrb[0].mxu0
  %3363 = vmatprep.mubr.bf16.mxu0 %v1861
  %3364 = vmatmul.mubr.bf16.gmra.mrb[0].mxu0 %v1860
  %v3365 = vpop.f32.mrb[0].mxu0
  %v3366 = vadd.f32 %v3077, %v3365
  %v3367 = vpop.f32.mrb[0].mxu0
  %v3368 = vpop.f32.mrb[0].mxu0
  %v3369 = vadd.f32 %v3080, %v3368
  %v3370 = vpop.f32.mrb[0].mxu0
  %3371 = vmatprep.mubr.bf16.mxu0 %v1872
  %3372 = vmatmul.mubr.bf16.gmra.mrb[0].mxu0 %v1871
  %v3373 = vpop.f32.mrb[0].mxu0
  %v3374 = vadd.f32 %v3085, %v3373
  %v3375 = vpop.f32.mrb[0].mxu0
  %v3376 = vpop.f32.mrb[0].mxu0
  %v3377 = vadd.f32 %v3088, %v3376
  %v3378 = vpop.f32.mrb[0].mxu0
  %3379 = vmatprep.mubr.bf16.mxu0 %v1883
  %3380 = vmatmul.mubr.bf16.gmra.mrb[0].mxu0 %v1882
  %v3381 = vpop.f32.mrb[0].mxu0
  %v3382 = vadd.f32 %v3093, %v3381
  %v3383 = vpop.f32.mrb[0].mxu0
  %v3384 = vpop.f32.mrb[0].mxu0
  %v3385 = vadd.f32 %v3096, %v3384
  %v3386 = vpop.f32.mrb[0].mxu0
  %3387 = vmatprep.mubr.bf16.mxu0 %v1894
  %3388 = vmatmul.mubr.bf16.gmra.mrb[0].mxu0 %v1893
  %v3389 = vpop.f32.mrb[0].mxu0
  %v3390 = vadd.f32 %v3101, %v3389
  %v3391 = vpop.f32.mrb[0].mxu0
  %v3392 = vpop.f32.mrb[0].mxu0
  %v3393 = vadd.f32 %v3104, %v3392
  %v3394 = vpop.f32.mrb[0].mxu0
  %3395 = vmatprep.mubr.bf16.mxu0 %v1905
  %3396 = vmatmul.mubr.bf16.gmra.mrb[0].mxu0 %v1904
  %v3397 = vpop.f32.mrb[0].mxu0
  %v3398 = vadd.f32 %v3109, %v3397
  %v3399 = vpop.f32.mrb[0].mxu0
  %v3400 = vpop.f32.mrb[0].mxu0
  %v3401 = vadd.f32 %v3112, %v3400
  %v3402 = vpop.f32.mrb[0].mxu0
  %3403 = vmatprep.mubr.bf16.mxu0 %v1916
  %3404 = vmatmul.mubr.bf16.gmra.mrb[0].mxu0 %v1915
  %v3405 = vpop.f32.mrb[0].mxu0
  %v3406 = vadd.f32 %v3117, %v3405
  %v3407 = vpop.f32.mrb[0].mxu0
  %v3408 = vpop.f32.mrb[0].mxu0
  %v3409 = vadd.f32 %v3120, %v3408
  %v3410 = vpop.f32.mrb[0].mxu0
  %3411 = vmatprep.mubr.bf16.mxu0 %v1927
  %3412 = vmatmul.mubr.bf16.gmra.mrb[0].mxu0 %v1926
  %v3413 = vpop.f32.mrb[0].mxu0
  %v3414 = vadd.f32 %v3125, %v3413
  %v3415 = vpop.f32.mrb[0].mxu0
  %v3416 = vpop.f32.mrb[0].mxu0
  %v3417 = vadd.f32 %v3128, %v3416
  %v3418 = vpop.f32.mrb[0].mxu0
  %3419 = vmatprep.mubr.bf16.mxu0 %v1938
  %3420 = vmatmul.mubr.bf16.gmra.mrb[0].mxu0 %v1937
  %v3421 = vpop.f32.mrb[0].mxu0
  %v3422 = vadd.f32 %v3133, %v3421
  %v3423 = vpop.f32.mrb[0].mxu0
  %v3424 = vpop.f32.mrb[0].mxu0
  %v3425 = vadd.f32 %v3136, %v3424
  %v3426 = vpop.f32.mrb[0].mxu0
  %3427 = vmatprep.mubr.bf16.mxu0 %v1949
  %3428 = vmatmul.mubr.bf16.gmra.mrb[0].mxu0 %v1948
  %v3429 = vpop.f32.mrb[0].mxu0
  %v3430 = vadd.f32 %v3141, %v3429
  %v3431 = vpop.f32.mrb[0].mxu0
  %v3432 = vpop.f32.mrb[0].mxu0
  %v3433 = vadd.f32 %v3144, %v3432
  %v3434 = vpop.f32.mrb[0].mxu0
  %3435 = vmatprep.mubr.bf16.mxu0 %v1960
  %3436 = vmatmul.mubr.bf16.gmra.mrb[0].mxu0 %v1959
  %v3437 = vpop.f32.mrb[0].mxu0
  %v3438 = vadd.f32 %v3149, %v3437
  %v3439 = vpop.f32.mrb[0].mxu0
  %v3440 = vpop.f32.mrb[0].mxu0
  %v3441 = vadd.f32 %v3152, %v3440
  %v3442 = vpop.f32.mrb[0].mxu0
  %3443 = vmatprep.mubr.bf16.mxu0 %v1971
  %3444 = vmatmul.mubr.bf16.gmra.mrb[0].mxu0 %v1970
  %v3445 = vpop.f32.mrb[0].mxu0
  %v3446 = vadd.f32 %v3157, %v3445
  %v3447 = vpop.f32.mrb[0].mxu0
  %v3448 = vpop.f32.mrb[0].mxu0
  %v3449 = vadd.f32 %v3160, %v3448
  %v3450 = vpop.f32.mrb[0].mxu0
  %3451 = vmatprep.mubr.bf16.mxu0 %v1982
  %3452 = vmatmul.mubr.bf16.gmra.mrb[0].mxu0 %v1981
  %v3453 = vpop.f32.mrb[0].mxu0
  %v3454 = vadd.f32 %v3165, %v3453
  %v3455 = vpop.f32.mrb[0].mxu0
  %v3456 = vpop.f32.mrb[0].mxu0
  %v3457 = vadd.f32 %v3168, %v3456
  %v3458 = vpop.f32.mrb[0].mxu0
  %3459 = vmatprep.mubr.bf16.mxu0 %v1993
  %3460 = vmatmul.mubr.bf16.gmra.mrb[0].mxu0 %v1992
  %v3461 = vpop.f32.mrb[0].mxu0
  %v3462 = vadd.f32 %v3173, %v3461
  %v3463 = vpop.f32.mrb[0].mxu0
  %v3464 = vpop.f32.mrb[0].mxu0
  %v3465 = vadd.f32 %v3176, %v3464
  %v3466 = vpop.f32.mrb[0].mxu0
  %3467 = vmatprep.mubr.bf16.mxu0 %v2004
  %3468 = vmatmul.mubr.bf16.gmra.mrb[0].mxu0 %v2003
  %v3469 = vpop.f32.mrb[0].mxu0
  %v3470 = vadd.f32 %v3181, %v3469
  %v3471 = vpop.f32.mrb[0].mxu0
  %v3472 = vpop.f32.mrb[0].mxu0
  %v3473 = vadd.f32 %v3184, %v3472
  %v3474 = vpop.f32.mrb[0].mxu0
  %3475 = vmatprep.mubr.bf16.mxu0 %v2015
  %3476 = vmatmul.mubr.bf16.gmra.mrb[0].mxu0 %v2014
  %v3477 = vpop.f32.mrb[0].mxu0
  %v3478 = vadd.f32 %v3189, %v3477
  %v3479 = vpop.f32.mrb[0].mxu0
  %v3480 = vpop.f32.mrb[0].mxu0
  %v3481 = vadd.f32 %v3192, %v3480
  %v3482 = vpop.f32.mrb[0].mxu0
  %3483 = vmatprep.mubr.bf16.mxu0 %v2026
  %3484 = vmatmul.mubr.bf16.gmra.mrb[0].mxu0 %v2025
  %v3485 = vpop.f32.mrb[0].mxu0
  %v3486 = vadd.f32 %v3197, %v3485
  %v3487 = vpop.f32.mrb[0].mxu0
  %v3488 = vpop.f32.mrb[0].mxu0
  %v3489 = vadd.f32 %v3200, %v3488
  %v3490 = vpop.f32.mrb[0].mxu0
  %3491 = vdwg.mxu0
  %3492 = vmatprep.subr.bf16.mxu0 0
  %3493 = vmatpush1.bf16.msra.mxu0 %v2770
  %3494 = vmatprep.subr.bf16.mxu0 0
  %3495 = vmatpush1.bf16.msra.mxu0 %v2771
  %3496 = vmatprep.subr.bf16.mxu0 0
  %3497 = vmatpush1.bf16.msra.mxu0 %v2772
  %3498 = vmatprep.subr.bf16.mxu0 0
  %3499 = vmatpush1.bf16.msra.mxu0 %v2773
  %3500 = vmatprep.subr.bf16.mxu0 0
  %3501 = vmatpush1.bf16.msra.mxu0 %v2774
  %3502 = vmatprep.subr.bf16.mxu0 0
  %3503 = vmatpush1.bf16.msra.mxu0 %v2775
  %3504 = vmatprep.subr.bf16.mxu0 0
  %3505 = vmatpush1.bf16.msra.mxu0 %v2776
  %3506 = vmatprep.subr.bf16.mxu0 0
  %3507 = vmatpush1.bf16.msra.mxu0 %v2777
  %3508 = vmatprep.subr.bf16.mxu0 0
  %3509 = vmatpush1.bf16.msra.mxu0 %v2778
  %3510 = vmatprep.subr.bf16.mxu0 0
  %3511 = vmatpush1.bf16.msra.mxu0 %v2779
  %3512 = vmatprep.subr.bf16.mxu0 0
  %3513 = vmatpush1.bf16.msra.mxu0 %v2780
  %3514 = vmatprep.subr.bf16.mxu0 0
  %3515 = vmatpush1.bf16.msra.mxu0 %v2781
  %3516 = vmatprep.subr.bf16.mxu0 0
  %3517 = vmatpush1.bf16.msra.mxu0 %v2782
  %3518 = vmatprep.subr.bf16.mxu0 0
  %3519 = vmatpush1.bf16.msra.mxu0 %v2783
  %3520 = vmatprep.subr.bf16.mxu0 0
  %3521 = vmatpush1.bf16.msra.mxu0 %v2784
  %3522 = vmatprep.subr.bf16.mxu0 0
  %3523 = vmatpush1.bf16.msra.mxu0 %v2785
  %3524 = vmatprep.mubr.bf16.mxu0 %v1687
  %3525 = vmatmul.mubr.bf16.gmra.mrb[0].mxu0 %v1686
  %v3526 = vpop.f32.mrb[0].mxu0
  %v3527 = vadd.f32 %v3238, %v3526
  %v3528 = vpop.f32.mrb[0].mxu0
  %v3529 = vpop.f32.mrb[0].mxu0
  %v3530 = vadd.f32 %v3241, %v3529
  %v3531 = vpop.f32.mrb[0].mxu0
  %3532 = vmatprep.mubr.bf16.mxu0 %v1698
  %3533 = vmatmul.mubr.bf16.gmra.mrb[0].mxu0 %v1697
  %v3534 = vpop.f32.mrb[0].mxu0
  %v3535 = vadd.f32 %v3246, %v3534
  %v3536 = vpop.f32.mrb[0].mxu0
  %v3537 = vpop.f32.mrb[0].mxu0
  %v3538 = vadd.f32 %v3249, %v3537
  %v3539 = vpop.f32.mrb[0].mxu0
  %3540 = vmatprep.mubr.bf16.mxu0 %v1709
  %3541 = vmatmul.mubr.bf16.gmra.mrb[0].mxu0 %v1708
  %v3542 = vpop.f32.mrb[0].mxu0
  %v3543 = vadd.f32 %v3254, %v3542
  %v3544 = vpop.f32.mrb[0].mxu0
  %v3545 = vpop.f32.mrb[0].mxu0
  %v3546 = vadd.f32 %v3257, %v3545
  %v3547 = vpop.f32.mrb[0].mxu0
  %3548 = vmatprep.mubr.bf16.mxu0 %v1720
  %3549 = vmatmul.mubr.bf16.gmra.mrb[0].mxu0 %v1719
  %v3550 = vpop.f32.mrb[0].mxu0
  %v3551 = vadd.f32 %v3262, %v3550
  %v3552 = vpop.f32.mrb[0].mxu0
  %v3553 = vpop.f32.mrb[0].mxu0
  %v3554 = vadd.f32 %v3265, %v3553
  %v3555 = vpop.f32.mrb[0].mxu0
  %3556 = vmatprep.mubr.bf16.mxu0 %v1731
  %3557 = vmatmul.mubr.bf16.gmra.mrb[0].mxu0 %v1730
  %v3558 = vpop.f32.mrb[0].mxu0
  %v3559 = vadd.f32 %v3270, %v3558
  %v3560 = vpop.f32.mrb[0].mxu0
  %v3561 = vpop.f32.mrb[0].mxu0
  %v3562 = vadd.f32 %v3273, %v3561
  %v3563 = vpop.f32.mrb[0].mxu0
  %3564 = vmatprep.mubr.bf16.mxu0 %v1742
  %3565 = vmatmul.mubr.bf16.gmra.mrb[0].mxu0 %v1741
  %v3566 = vpop.f32.mrb[0].mxu0
  %v3567 = vadd.f32 %v3278, %v3566
  %v3568 = vpop.f32.mrb[0].mxu0
  %v3569 = vpop.f32.mrb[0].mxu0
  %v3570 = vadd.f32 %v3281, %v3569
  %v3571 = vpop.f32.mrb[0].mxu0
  %3572 = vmatprep.mubr.bf16.mxu0 %v1753
  %3573 = vmatmul.mubr.bf16.gmra.mrb[0].mxu0 %v1752
  %v3574 = vpop.f32.mrb[0].mxu0
  %v3575 = vadd.f32 %v3286, %v3574
  %v3576 = vpop.f32.mrb[0].mxu0
  %v3577 = vpop.f32.mrb[0].mxu0
  %v3578 = vadd.f32 %v3289, %v3577
  %v3579 = vpop.f32.mrb[0].mxu0
  %3580 = vmatprep.mubr.bf16.mxu0 %v1764
  %3581 = vmatmul.mubr.bf16.gmra.mrb[0].mxu0 %v1763
  %v3582 = vpop.f32.mrb[0].mxu0
  %v3583 = vadd.f32 %v3294, %v3582
  %v3584 = vpop.f32.mrb[0].mxu0
  %v3585 = vpop.f32.mrb[0].mxu0
  %v3586 = vadd.f32 %v3297, %v3585
  %v3587 = vpop.f32.mrb[0].mxu0
  %3588 = vmatprep.mubr.bf16.mxu0 %v1775
  %3589 = vmatmul.mubr.bf16.gmra.mrb[0].mxu0 %v1774
  %v3590 = vpop.f32.mrb[0].mxu0
  %v3591 = vadd.f32 %v3302, %v3590
  %v3592 = vpop.f32.mrb[0].mxu0
  %v3593 = vpop.f32.mrb[0].mxu0
  %v3594 = vadd.f32 %v3305, %v3593
  %v3595 = vpop.f32.mrb[0].mxu0
  %3596 = vmatprep.mubr.bf16.mxu0 %v1786
  %3597 = vmatmul.mubr.bf16.gmra.mrb[0].mxu0 %v1785
  %v3598 = vpop.f32.mrb[0].mxu0
  %v3599 = vadd.f32 %v3310, %v3598
  %v3600 = vpop.f32.mrb[0].mxu0
  %v3601 = vpop.f32.mrb[0].mxu0
  %v3602 = vadd.f32 %v3313, %v3601
  %v3603 = vpop.f32.mrb[0].mxu0
  %3604 = vmatprep.mubr.bf16.mxu0 %v1797
  %3605 = vmatmul.mubr.bf16.gmra.mrb[0].mxu0 %v1796
  %v3606 = vpop.f32.mrb[0].mxu0
  %v3607 = vadd.f32 %v3318, %v3606
  %v3608 = vpop.f32.mrb[0].mxu0
  %v3609 = vpop.f32.mrb[0].mxu0
  %v3610 = vadd.f32 %v3321, %v3609
  %v3611 = vpop.f32.mrb[0].mxu0
  %3612 = vmatprep.mubr.bf16.mxu0 %v1808
  %3613 = vmatmul.mubr.bf16.gmra.mrb[0].mxu0 %v1807
  %v3614 = vpop.f32.mrb[0].mxu0
  %v3615 = vadd.f32 %v3326, %v3614
  %v3616 = vpop.f32.mrb[0].mxu0
  %v3617 = vpop.f32.mrb[0].mxu0
  %v3618 = vadd.f32 %v3329, %v3617
  %v3619 = vpop.f32.mrb[0].mxu0
  %3620 = vmatprep.mubr.bf16.mxu0 %v1819
  %3621 = vmatmul.mubr.bf16.gmra.mrb[0].mxu0 %v1818
  %v3622 = vpop.f32.mrb[0].mxu0
  %v3623 = vadd.f32 %v3334, %v3622
  %v3624 = vpop.f32.mrb[0].mxu0
  %v3625 = vpop.f32.mrb[0].mxu0
  %v3626 = vadd.f32 %v3337, %v3625
  %v3627 = vpop.f32.mrb[0].mxu0
  %3628 = vmatprep.mubr.bf16.mxu0 %v1830
  %3629 = vmatmul.mubr.bf16.gmra.mrb[0].mxu0 %v1829
  %v3630 = vpop.f32.mrb[0].mxu0
  %v3631 = vadd.f32 %v3342, %v3630
  %v3632 = vpop.f32.mrb[0].mxu0
  %v3633 = vpop.f32.mrb[0].mxu0
  %v3634 = vadd.f32 %v3345, %v3633
  %v3635 = vpop.f32.mrb[0].mxu0
  %3636 = vmatprep.mubr.bf16.mxu0 %v1841
  %3637 = vmatmul.mubr.bf16.gmra.mrb[0].mxu0 %v1840
  %v3638 = vpop.f32.mrb[0].mxu0
  %v3639 = vadd.f32 %v3350, %v3638
  %v3640 = vpop.f32.mrb[0].mxu0
  %v3641 = vpop.f32.mrb[0].mxu0
  %v3642 = vadd.f32 %v3353, %v3641
  %v3643 = vpop.f32.mrb[0].mxu0
  %3644 = vmatprep.mubr.bf16.mxu0 %v1852
  %3645 = vmatmul.mubr.bf16.gmra.mrb[0].mxu0 %v1851
  %v3646 = vpop.f32.mrb[0].mxu0
  %v3647 = vadd.f32 %v3358, %v3646
  %v3648 = vpop.f32.mrb[0].mxu0
  %v3649 = vpop.f32.mrb[0].mxu0
  %v3650 = vadd.f32 %v3361, %v3649
  %v3651 = vpop.f32.mrb[0].mxu0
  %3652 = vmatprep.mubr.bf16.mxu0 %v1863
  %3653 = vmatmul.mubr.bf16.gmra.mrb[0].mxu0 %v1862
  %v3654 = vpop.f32.mrb[0].mxu0
  %v3655 = vadd.f32 %v3366, %v3654
  %v3656 = vpop.f32.mrb[0].mxu0
  %v3657 = vpop.f32.mrb[0].mxu0
  %v3658 = vadd.f32 %v3369, %v3657
  %v3659 = vpop.f32.mrb[0].mxu0
  %3660 = vmatprep.mubr.bf16.mxu0 %v1874
  %3661 = vmatmul.mubr.bf16.gmra.mrb[0].mxu0 %v1873
  %v3662 = vpop.f32.mrb[0].mxu0
  %v3663 = vadd.f32 %v3374, %v3662
  %v3664 = vpop.f32.mrb[0].mxu0
  %v3665 = vpop.f32.mrb[0].mxu0
  %v3666 = vadd.f32 %v3377, %v3665
  %v3667 = vpop.f32.mrb[0].mxu0
  %3668 = vmatprep.mubr.bf16.mxu0 %v1885
  %3669 = vmatmul.mubr.bf16.gmra.mrb[0].mxu0 %v1884
  %v3670 = vpop.f32.mrb[0].mxu0
  %v3671 = vadd.f32 %v3382, %v3670
  %v3672 = vpop.f32.mrb[0].mxu0
  %v3673 = vpop.f32.mrb[0].mxu0
  %v3674 = vadd.f32 %v3385, %v3673
  %v3675 = vpop.f32.mrb[0].mxu0
  %3676 = vmatprep.mubr.bf16.mxu0 %v1896
  %3677 = vmatmul.mubr.bf16.gmra.mrb[0].mxu0 %v1895
  %v3678 = vpop.f32.mrb[0].mxu0
  %v3679 = vadd.f32 %v3390, %v3678
  %v3680 = vpop.f32.mrb[0].mxu0
  %v3681 = vpop.f32.mrb[0].mxu0
  %v3682 = vadd.f32 %v3393, %v3681
  %v3683 = vpop.f32.mrb[0].mxu0
  %3684 = vmatprep.mubr.bf16.mxu0 %v1907
  %3685 = vmatmul.mubr.bf16.gmra.mrb[0].mxu0 %v1906
  %v3686 = vpop.f32.mrb[0].mxu0
  %v3687 = vadd.f32 %v3398, %v3686
  %v3688 = vpop.f32.mrb[0].mxu0
  %v3689 = vpop.f32.mrb[0].mxu0
  %v3690 = vadd.f32 %v3401, %v3689
  %v3691 = vpop.f32.mrb[0].mxu0
  %3692 = vmatprep.mubr.bf16.mxu0 %v1918
  %3693 = vmatmul.mubr.bf16.gmra.mrb[0].mxu0 %v1917
  %v3694 = vpop.f32.mrb[0].mxu0
  %v3695 = vadd.f32 %v3406, %v3694
  %v3696 = vpop.f32.mrb[0].mxu0
  %v3697 = vpop.f32.mrb[0].mxu0
  %v3698 = vadd.f32 %v3409, %v3697
  %v3699 = vpop.f32.mrb[0].mxu0
  %3700 = vmatprep.mubr.bf16.mxu0 %v1929
  %3701 = vmatmul.mubr.bf16.gmra.mrb[0].mxu0 %v1928
  %v3702 = vpop.f32.mrb[0].mxu0
  %v3703 = vadd.f32 %v3414, %v3702
  %v3704 = vpop.f32.mrb[0].mxu0
  %v3705 = vpop.f32.mrb[0].mxu0
  %v3706 = vadd.f32 %v3417, %v3705
  %v3707 = vpop.f32.mrb[0].mxu0
  %3708 = vmatprep.mubr.bf16.mxu0 %v1940
  %3709 = vmatmul.mubr.bf16.gmra.mrb[0].mxu0 %v1939
  %v3710 = vpop.f32.mrb[0].mxu0
  %v3711 = vadd.f32 %v3422, %v3710
  %v3712 = vpop.f32.mrb[0].mxu0
  %v3713 = vpop.f32.mrb[0].mxu0
  %v3714 = vadd.f32 %v3425, %v3713
  %v3715 = vpop.f32.mrb[0].mxu0
  %3716 = vmatprep.mubr.bf16.mxu0 %v1951
  %3717 = vmatmul.mubr.bf16.gmra.mrb[0].mxu0 %v1950
  %v3718 = vpop.f32.mrb[0].mxu0
  %v3719 = vadd.f32 %v3430, %v3718
  %v3720 = vpop.f32.mrb[0].mxu0
  %v3721 = vpop.f32.mrb[0].mxu0
  %v3722 = vadd.f32 %v3433, %v3721
  %v3723 = vpop.f32.mrb[0].mxu0
  %3724 = vmatprep.mubr.bf16.mxu0 %v1962
  %3725 = vmatmul.mubr.bf16.gmra.mrb[0].mxu0 %v1961
  %v3726 = vpop.f32.mrb[0].mxu0
  %v3727 = vadd.f32 %v3438, %v3726
  %v3728 = vpop.f32.mrb[0].mxu0
  %v3729 = vpop.f32.mrb[0].mxu0
  %v3730 = vadd.f32 %v3441, %v3729
  %v3731 = vpop.f32.mrb[0].mxu0
  %3732 = vmatprep.mubr.bf16.mxu0 %v1973
  %3733 = vmatmul.mubr.bf16.gmra.mrb[0].mxu0 %v1972
  %v3734 = vpop.f32.mrb[0].mxu0
  %v3735 = vadd.f32 %v3446, %v3734
  %v3736 = vpop.f32.mrb[0].mxu0
  %v3737 = vpop.f32.mrb[0].mxu0
  %v3738 = vadd.f32 %v3449, %v3737
  %v3739 = vpop.f32.mrb[0].mxu0
  %3740 = vmatprep.mubr.bf16.mxu0 %v1984
  %3741 = vmatmul.mubr.bf16.gmra.mrb[0].mxu0 %v1983
  %v3742 = vpop.f32.mrb[0].mxu0
  %v3743 = vadd.f32 %v3454, %v3742
  %v3744 = vpop.f32.mrb[0].mxu0
  %v3745 = vpop.f32.mrb[0].mxu0
  %v3746 = vadd.f32 %v3457, %v3745
  %v3747 = vpop.f32.mrb[0].mxu0
  %3748 = vmatprep.mubr.bf16.mxu0 %v1995
  %3749 = vmatmul.mubr.bf16.gmra.mrb[0].mxu0 %v1994
  %v3750 = vpop.f32.mrb[0].mxu0
  %v3751 = vadd.f32 %v3462, %v3750
  %v3752 = vpop.f32.mrb[0].mxu0
  %v3753 = vpop.f32.mrb[0].mxu0
  %v3754 = vadd.f32 %v3465, %v3753
  %v3755 = vpop.f32.mrb[0].mxu0
  %3756 = vmatprep.mubr.bf16.mxu0 %v2006
  %3757 = vmatmul.mubr.bf16.gmra.mrb[0].mxu0 %v2005
  %v3758 = vpop.f32.mrb[0].mxu0
  %v3759 = vadd.f32 %v3470, %v3758
  %v3760 = vpop.f32.mrb[0].mxu0
  %v3761 = vpop.f32.mrb[0].mxu0
  %v3762 = vadd.f32 %v3473, %v3761
  %v3763 = vpop.f32.mrb[0].mxu0
  %3764 = vmatprep.mubr.bf16.mxu0 %v2017
  %3765 = vmatmul.mubr.bf16.gmra.mrb[0].mxu0 %v2016
  %v3766 = vpop.f32.mrb[0].mxu0
  %v3767 = vadd.f32 %v3478, %v3766
  %v3768 = vpop.f32.mrb[0].mxu0
  %v3769 = vpop.f32.mrb[0].mxu0
  %v3770 = vadd.f32 %v3481, %v3769
  %v3771 = vpop.f32.mrb[0].mxu0
  %3772 = vmatprep.mubr.bf16.mxu0 %v2028
  %3773 = vmatmul.mubr.bf16.gmra.mrb[0].mxu0 %v2027
  %v3774 = vpop.f32.mrb[0].mxu0
  %v3775 = vadd.f32 %v3486, %v3774
  %v3776 = vpop.f32.mrb[0].mxu0
  %v3777 = vpop.f32.mrb[0].mxu0
  %v3778 = vadd.f32 %v3489, %v3777
  %v3779 = vpop.f32.mrb[0].mxu0
  %3780 = vdwg.mxu0
  %3781 = vmatprep.subr.bf16.mxu0 0
  %3782 = vmatpush1.bf16.msra.mxu0 %v2786
  %3783 = vmatprep.subr.bf16.mxu0 0
  %3784 = vmatpush1.bf16.msra.mxu0 %v2787
  %3785 = vmatprep.subr.bf16.mxu0 0
  %3786 = vmatpush1.bf16.msra.mxu0 %v2788
  %3787 = vmatprep.subr.bf16.mxu0 0
  %3788 = vmatpush1.bf16.msra.mxu0 %v2789
  %3789 = vmatprep.subr.bf16.mxu0 0
  %3790 = vmatpush1.bf16.msra.mxu0 %v2790
  %3791 = vmatprep.subr.bf16.mxu0 0
  %3792 = vmatpush1.bf16.msra.mxu0 %v2791
  %3793 = vmatprep.subr.bf16.mxu0 0
  %3794 = vmatpush1.bf16.msra.mxu0 %v2792
  %3795 = vmatprep.subr.bf16.mxu0 0
  %3796 = vmatpush1.bf16.msra.mxu0 %v2793
  %3797 = vmatprep.subr.bf16.mxu0 0
  %3798 = vmatpush1.bf16.msra.mxu0 %v2794
  %3799 = vmatprep.subr.bf16.mxu0 0
  %3800 = vmatpush1.bf16.msra.mxu0 %v2795
  %3801 = vmatprep.subr.bf16.mxu0 0
  %3802 = vmatpush1.bf16.msra.mxu0 %v2796
  %3803 = vmatprep.subr.bf16.mxu0 0
  %3804 = vmatpush1.bf16.msra.mxu0 %v2797
  %3805 = vmatprep.subr.bf16.mxu0 0
  %3806 = vmatpush1.bf16.msra.mxu0 %v2798
  %3807 = vmatprep.subr.bf16.mxu0 0
  %3808 = vmatpush1.bf16.msra.mxu0 %v2799
  %3809 = vmatprep.subr.bf16.mxu0 0
  %3810 = vmatpush1.bf16.msra.mxu0 %v2800
  %3811 = vmatprep.subr.bf16.mxu0 0
  %3812 = vmatpush1.bf16.msra.mxu0 %v2801
  %3813 = vmatprep.mubr.bf16.mxu0 %v1689
  %3814 = vmatmul.mubr.bf16.gmra.mrb[0].mxu0 %v1688
  %v3815 = vpop.f32.mrb[0].mxu0
  %v3816 = vadd.f32 %v3527, %v3815
  %v3817 = vpop.f32.mrb[0].mxu0
  %v3818 = vpop.f32.mrb[0].mxu0
  %v3819 = vadd.f32 %v3530, %v3818
  %v3820 = vpop.f32.mrb[0].mxu0
  %3821 = vmatprep.mubr.bf16.mxu0 %v1700
  %3822 = vmatmul.mubr.bf16.gmra.mrb[0].mxu0 %v1699
  %v3823 = vpop.f32.mrb[0].mxu0
  %v3824 = vadd.f32 %v3535, %v3823
  %v3825 = vpop.f32.mrb[0].mxu0
  %v3826 = vpop.f32.mrb[0].mxu0
  %v3827 = vadd.f32 %v3538, %v3826
  %v3828 = vpop.f32.mrb[0].mxu0
  %3829 = vmatprep.mubr.bf16.mxu0 %v1711
  %3830 = vmatmul.mubr.bf16.gmra.mrb[0].mxu0 %v1710
  %v3831 = vpop.f32.mrb[0].mxu0
  %v3832 = vadd.f32 %v3543, %v3831
  %v3833 = vpop.f32.mrb[0].mxu0
  %v3834 = vpop.f32.mrb[0].mxu0
  %v3835 = vadd.f32 %v3546, %v3834
  %v3836 = vpop.f32.mrb[0].mxu0
  %3837 = vmatprep.mubr.bf16.mxu0 %v1722
  %3838 = vmatmul.mubr.bf16.gmra.mrb[0].mxu0 %v1721
  %v3839 = vpop.f32.mrb[0].mxu0
  %v3840 = vadd.f32 %v3551, %v3839
  %v3841 = vpop.f32.mrb[0].mxu0
  %v3842 = vpop.f32.mrb[0].mxu0
  %v3843 = vadd.f32 %v3554, %v3842
  %v3844 = vpop.f32.mrb[0].mxu0
  %3845 = vmatprep.mubr.bf16.mxu0 %v1733
  %3846 = vmatmul.mubr.bf16.gmra.mrb[0].mxu0 %v1732
  %v3847 = vpop.f32.mrb[0].mxu0
  %v3848 = vadd.f32 %v3559, %v3847
  %v3849 = vpop.f32.mrb[0].mxu0
  %v3850 = vpop.f32.mrb[0].mxu0
  %v3851 = vadd.f32 %v3562, %v3850
  %v3852 = vpop.f32.mrb[0].mxu0
  %3853 = vmatprep.mubr.bf16.mxu0 %v1744
  %3854 = vmatmul.mubr.bf16.gmra.mrb[0].mxu0 %v1743
  %v3855 = vpop.f32.mrb[0].mxu0
  %v3856 = vadd.f32 %v3567, %v3855
  %v3857 = vpop.f32.mrb[0].mxu0
  %v3858 = vpop.f32.mrb[0].mxu0
  %v3859 = vadd.f32 %v3570, %v3858
  %v3860 = vpop.f32.mrb[0].mxu0
  %3861 = vmatprep.mubr.bf16.mxu0 %v1755
  %3862 = vmatmul.mubr.bf16.gmra.mrb[0].mxu0 %v1754
  %v3863 = vpop.f32.mrb[0].mxu0
  %v3864 = vadd.f32 %v3575, %v3863
  %v3865 = vpop.f32.mrb[0].mxu0
  %v3866 = vpop.f32.mrb[0].mxu0
  %v3867 = vadd.f32 %v3578, %v3866
  %v3868 = vpop.f32.mrb[0].mxu0
  %3869 = vmatprep.mubr.bf16.mxu0 %v1766
  %3870 = vmatmul.mubr.bf16.gmra.mrb[0].mxu0 %v1765
  %v3871 = vpop.f32.mrb[0].mxu0
  %v3872 = vadd.f32 %v3583, %v3871
  %v3873 = vpop.f32.mrb[0].mxu0
  %v3874 = vpop.f32.mrb[0].mxu0
  %v3875 = vadd.f32 %v3586, %v3874
  %v3876 = vpop.f32.mrb[0].mxu0
  %3877 = vmatprep.mubr.bf16.mxu0 %v1777
  %3878 = vmatmul.mubr.bf16.gmra.mrb[0].mxu0 %v1776
  %v3879 = vpop.f32.mrb[0].mxu0
  %v3880 = vadd.f32 %v3591, %v3879
  %v3881 = vpop.f32.mrb[0].mxu0
  %v3882 = vpop.f32.mrb[0].mxu0
  %v3883 = vadd.f32 %v3594, %v3882
  %v3884 = vpop.f32.mrb[0].mxu0
  %3885 = vmatprep.mubr.bf16.mxu0 %v1788
  %3886 = vmatmul.mubr.bf16.gmra.mrb[0].mxu0 %v1787
  %v3887 = vpop.f32.mrb[0].mxu0
  %v3888 = vadd.f32 %v3599, %v3887
  %v3889 = vpop.f32.mrb[0].mxu0
  %v3890 = vpop.f32.mrb[0].mxu0
  %v3891 = vadd.f32 %v3602, %v3890
  %v3892 = vpop.f32.mrb[0].mxu0
  %3893 = vmatprep.mubr.bf16.mxu0 %v1799
  %3894 = vmatmul.mubr.bf16.gmra.mrb[0].mxu0 %v1798
  %v3895 = vpop.f32.mrb[0].mxu0
  %v3896 = vadd.f32 %v3607, %v3895
  %v3897 = vpop.f32.mrb[0].mxu0
  %v3898 = vpop.f32.mrb[0].mxu0
  %v3899 = vadd.f32 %v3610, %v3898
  %v3900 = vpop.f32.mrb[0].mxu0
  %3901 = vmatprep.mubr.bf16.mxu0 %v1810
  %3902 = vmatmul.mubr.bf16.gmra.mrb[0].mxu0 %v1809
  %v3903 = vpop.f32.mrb[0].mxu0
  %v3904 = vadd.f32 %v3615, %v3903
  %v3905 = vpop.f32.mrb[0].mxu0
  %v3906 = vpop.f32.mrb[0].mxu0
  %v3907 = vadd.f32 %v3618, %v3906
  %v3908 = vpop.f32.mrb[0].mxu0
  %3909 = vmatprep.mubr.bf16.mxu0 %v1821
  %3910 = vmatmul.mubr.bf16.gmra.mrb[0].mxu0 %v1820
  %v3911 = vpop.f32.mrb[0].mxu0
  %v3912 = vadd.f32 %v3623, %v3911
  %v3913 = vpop.f32.mrb[0].mxu0
  %v3914 = vpop.f32.mrb[0].mxu0
  %v3915 = vadd.f32 %v3626, %v3914
  %v3916 = vpop.f32.mrb[0].mxu0
  %3917 = vmatprep.mubr.bf16.mxu0 %v1832
  %3918 = vmatmul.mubr.bf16.gmra.mrb[0].mxu0 %v1831
  %v3919 = vpop.f32.mrb[0].mxu0
  %v3920 = vadd.f32 %v3631, %v3919
  %v3921 = vpop.f32.mrb[0].mxu0
  %v3922 = vpop.f32.mrb[0].mxu0
  %v3923 = vadd.f32 %v3634, %v3922
  %v3924 = vpop.f32.mrb[0].mxu0
  %3925 = vmatprep.mubr.bf16.mxu0 %v1843
  %3926 = vmatmul.mubr.bf16.gmra.mrb[0].mxu0 %v1842
  %v3927 = vpop.f32.mrb[0].mxu0
  %v3928 = vadd.f32 %v3639, %v3927
  %v3929 = vpop.f32.mrb[0].mxu0
  %v3930 = vpop.f32.mrb[0].mxu0
  %v3931 = vadd.f32 %v3642, %v3930
  %v3932 = vpop.f32.mrb[0].mxu0
  %3933 = vmatprep.mubr.bf16.mxu0 %v1854
  %3934 = vmatmul.mubr.bf16.gmra.mrb[0].mxu0 %v1853
  %v3935 = vpop.f32.mrb[0].mxu0
  %v3936 = vadd.f32 %v3647, %v3935
  %v3937 = vpop.f32.mrb[0].mxu0
  %v3938 = vpop.f32.mrb[0].mxu0
  %v3939 = vadd.f32 %v3650, %v3938
  %v3940 = vpop.f32.mrb[0].mxu0
  %3941 = vmatprep.mubr.bf16.mxu0 %v1865
  %3942 = vmatmul.mubr.bf16.gmra.mrb[0].mxu0 %v1864
  %v3943 = vpop.f32.mrb[0].mxu0
  %v3944 = vadd.f32 %v3655, %v3943
  %v3945 = vpop.f32.mrb[0].mxu0
  %v3946 = vpop.f32.mrb[0].mxu0
  %v3947 = vadd.f32 %v3658, %v3946
  %v3948 = vpop.f32.mrb[0].mxu0
  %3949 = vmatprep.mubr.bf16.mxu0 %v1876
  %3950 = vmatmul.mubr.bf16.gmra.mrb[0].mxu0 %v1875
  %v3951 = vpop.f32.mrb[0].mxu0
  %v3952 = vadd.f32 %v3663, %v3951
  %v3953 = vpop.f32.mrb[0].mxu0
  %v3954 = vpop.f32.mrb[0].mxu0
  %v3955 = vadd.f32 %v3666, %v3954
  %v3956 = vpop.f32.mrb[0].mxu0
  %3957 = vmatprep.mubr.bf16.mxu0 %v1887
  %3958 = vmatmul.mubr.bf16.gmra.mrb[0].mxu0 %v1886
  %v3959 = vpop.f32.mrb[0].mxu0
  %v3960 = vadd.f32 %v3671, %v3959
  %v3961 = vpop.f32.mrb[0].mxu0
  %v3962 = vpop.f32.mrb[0].mxu0
  %v3963 = vadd.f32 %v3674, %v3962
  %v3964 = vpop.f32.mrb[0].mxu0
  %3965 = vmatprep.mubr.bf16.mxu0 %v1898
  %3966 = vmatmul.mubr.bf16.gmra.mrb[0].mxu0 %v1897
  %v3967 = vpop.f32.mrb[0].mxu0
  %v3968 = vadd.f32 %v3679, %v3967
  %v3969 = vpop.f32.mrb[0].mxu0
  %v3970 = vpop.f32.mrb[0].mxu0
  %v3971 = vadd.f32 %v3682, %v3970
  %v3972 = vpop.f32.mrb[0].mxu0
  %3973 = vmatprep.mubr.bf16.mxu0 %v1909
  %3974 = vmatmul.mubr.bf16.gmra.mrb[0].mxu0 %v1908
  %v3975 = vpop.f32.mrb[0].mxu0
  %v3976 = vadd.f32 %v3687, %v3975
  %v3977 = vpop.f32.mrb[0].mxu0
  %v3978 = vpop.f32.mrb[0].mxu0
  %v3979 = vadd.f32 %v3690, %v3978
  %v3980 = vpop.f32.mrb[0].mxu0
  %3981 = vmatprep.mubr.bf16.mxu0 %v1920
  %3982 = vmatmul.mubr.bf16.gmra.mrb[0].mxu0 %v1919
  %v3983 = vpop.f32.mrb[0].mxu0
  %v3984 = vadd.f32 %v3695, %v3983
  %v3985 = vpop.f32.mrb[0].mxu0
  %v3986 = vpop.f32.mrb[0].mxu0
  %v3987 = vadd.f32 %v3698, %v3986
  %v3988 = vpop.f32.mrb[0].mxu0
  %3989 = vmatprep.mubr.bf16.mxu0 %v1931
  %3990 = vmatmul.mubr.bf16.gmra.mrb[0].mxu0 %v1930
  %v3991 = vpop.f32.mrb[0].mxu0
  %v3992 = vadd.f32 %v3703, %v3991
  %v3993 = vpop.f32.mrb[0].mxu0
  %v3994 = vpop.f32.mrb[0].mxu0
  %v3995 = vadd.f32 %v3706, %v3994
  %v3996 = vpop.f32.mrb[0].mxu0
  %3997 = vmatprep.mubr.bf16.mxu0 %v1942
  %3998 = vmatmul.mubr.bf16.gmra.mrb[0].mxu0 %v1941
  %v3999 = vpop.f32.mrb[0].mxu0
  %v4000 = vadd.f32 %v3711, %v3999
  %v4001 = vpop.f32.mrb[0].mxu0
  %v4002 = vpop.f32.mrb[0].mxu0
  %v4003 = vadd.f32 %v3714, %v4002
  %v4004 = vpop.f32.mrb[0].mxu0
  %4005 = vmatprep.mubr.bf16.mxu0 %v1953
  %4006 = vmatmul.mubr.bf16.gmra.mrb[0].mxu0 %v1952
  %v4007 = vpop.f32.mrb[0].mxu0
  %v4008 = vadd.f32 %v3719, %v4007
  %v4009 = vpop.f32.mrb[0].mxu0
  %v4010 = vpop.f32.mrb[0].mxu0
  %v4011 = vadd.f32 %v3722, %v4010
  %v4012 = vpop.f32.mrb[0].mxu0
  %4013 = vmatprep.mubr.bf16.mxu0 %v1964
  %4014 = vmatmul.mubr.bf16.gmra.mrb[0].mxu0 %v1963
  %v4015 = vpop.f32.mrb[0].mxu0
  %v4016 = vadd.f32 %v3727, %v4015
  %v4017 = vpop.f32.mrb[0].mxu0
  %v4018 = vpop.f32.mrb[0].mxu0
  %v4019 = vadd.f32 %v3730, %v4018
  %v4020 = vpop.f32.mrb[0].mxu0
  %4021 = vmatprep.mubr.bf16.mxu0 %v1975
  %4022 = vmatmul.mubr.bf16.gmra.mrb[0].mxu0 %v1974
  %v4023 = vpop.f32.mrb[0].mxu0
  %v4024 = vadd.f32 %v3735, %v4023
  %v4025 = vpop.f32.mrb[0].mxu0
  %v4026 = vpop.f32.mrb[0].mxu0
  %v4027 = vadd.f32 %v3738, %v4026
  %v4028 = vpop.f32.mrb[0].mxu0
  %4029 = vmatprep.mubr.bf16.mxu0 %v1986
  %4030 = vmatmul.mubr.bf16.gmra.mrb[0].mxu0 %v1985
  %v4031 = vpop.f32.mrb[0].mxu0
  %v4032 = vadd.f32 %v3743, %v4031
  %v4033 = vpop.f32.mrb[0].mxu0
  %v4034 = vpop.f32.mrb[0].mxu0
  %v4035 = vadd.f32 %v3746, %v4034
  %v4036 = vpop.f32.mrb[0].mxu0
  %4037 = vmatprep.mubr.bf16.mxu0 %v1997
  %4038 = vmatmul.mubr.bf16.gmra.mrb[0].mxu0 %v1996
  %v4039 = vpop.f32.mrb[0].mxu0
  %v4040 = vadd.f32 %v3751, %v4039
  %v4041 = vpop.f32.mrb[0].mxu0
  %v4042 = vpop.f32.mrb[0].mxu0
  %v4043 = vadd.f32 %v3754, %v4042
  %v4044 = vpop.f32.mrb[0].mxu0
  %4045 = vmatprep.mubr.bf16.mxu0 %v2008
  %4046 = vmatmul.mubr.bf16.gmra.mrb[0].mxu0 %v2007
  %v4047 = vpop.f32.mrb[0].mxu0
  %v4048 = vadd.f32 %v3759, %v4047
  %v4049 = vpop.f32.mrb[0].mxu0
  %v4050 = vpop.f32.mrb[0].mxu0
  %v4051 = vadd.f32 %v3762, %v4050
  %v4052 = vpop.f32.mrb[0].mxu0
  %4053 = vmatprep.mubr.bf16.mxu0 %v2019
  %4054 = vmatmul.mubr.bf16.gmra.mrb[0].mxu0 %v2018
  %v4055 = vpop.f32.mrb[0].mxu0
  %v4056 = vadd.f32 %v3767, %v4055
  %v4057 = vpop.f32.mrb[0].mxu0
  %v4058 = vpop.f32.mrb[0].mxu0
  %v4059 = vadd.f32 %v3770, %v4058
  %v4060 = vpop.f32.mrb[0].mxu0
  %4061 = vmatprep.mubr.bf16.mxu0 %v2030
  %4062 = vmatmul.mubr.bf16.gmra.mrb[0].mxu0 %v2029
  %v4063 = vpop.f32.mrb[0].mxu0
  %v4064 = vadd.f32 %v3775, %v4063
  %v4065 = vpop.f32.mrb[0].mxu0
  %v4066 = vpop.f32.mrb[0].mxu0
  %v4067 = vadd.f32 %v3778, %v4066
  %v4068 = vpop.f32.mrb[0].mxu0
  %4069 = vdwg.mxu0
  %4070 = vmatprep.subr.bf16.mxu0 0
  %4071 = vmatpush1.bf16.msra.mxu0 %v2802
  %4072 = vmatprep.subr.bf16.mxu0 0
  %4073 = vmatpush1.bf16.msra.mxu0 %v2803
  %4074 = vmatprep.subr.bf16.mxu0 0
  %4075 = vmatpush1.bf16.msra.mxu0 %v2804
  %4076 = vmatprep.subr.bf16.mxu0 0
  %4077 = vmatpush1.bf16.msra.mxu0 %v2805
  %4078 = vmatprep.subr.bf16.mxu0 0
  %4079 = vmatpush1.bf16.msra.mxu0 %v2806
  %4080 = vmatprep.subr.bf16.mxu0 0
  %4081 = vmatpush1.bf16.msra.mxu0 %v2807
  %4082 = vmatprep.subr.bf16.mxu0 0
  %4083 = vmatpush1.bf16.msra.mxu0 %v2808
  %4084 = vmatprep.subr.bf16.mxu0 0
  %4085 = vmatpush1.bf16.msra.mxu0 %v2809
  %4086 = vmatprep.subr.bf16.mxu0 0
  %4087 = vmatpush1.bf16.msra.mxu0 %v2810
  %4088 = vmatprep.subr.bf16.mxu0 0
  %4089 = vmatpush1.bf16.msra.mxu0 %v2811
  %4090 = vmatprep.subr.bf16.mxu0 0
  %4091 = vmatpush1.bf16.msra.mxu0 %v2812
  %4092 = vmatprep.subr.bf16.mxu0 0
  %4093 = vmatpush1.bf16.msra.mxu0 %v2813
  %4094 = vmatprep.subr.bf16.mxu0 0
  %4095 = vmatpush1.bf16.msra.mxu0 %v2814
  %4096 = vmatprep.subr.bf16.mxu0 0
  %4097 = vmatpush1.bf16.msra.mxu0 %v2815
  %4098 = vmatprep.subr.bf16.mxu0 0
  %4099 = vmatpush1.bf16.msra.mxu0 %v2816
  %4100 = vmatprep.subr.bf16.mxu0 0
  %4101 = vmatpush1.bf16.msra.mxu0 %v2817
  %4102 = vmatprep.mubr.bf16.mxu0 %v1691
  %4103 = vmatmul.mubr.bf16.gmra.mrb[0].mxu0 %v1690
  %v4104 = vpop.f32.mrb[0].mxu0
  %v4105 = vadd.f32 %v3816, %v4104
  %v4106 = vpop.f32.mrb[0].mxu0
  %v4107 = vpop.f32.mrb[0].mxu0
  %v4108 = vadd.f32 %v3819, %v4107
  %v4109 = vpop.f32.mrb[0].mxu0
  %4110 = vmatprep.mubr.bf16.mxu0 %v1702
  %4111 = vmatmul.mubr.bf16.gmra.mrb[0].mxu0 %v1701
  %v4112 = vpop.f32.mrb[0].mxu0
  %v4113 = vadd.f32 %v3824, %v4112
  %v4114 = vpop.f32.mrb[0].mxu0
  %v4115 = vpop.f32.mrb[0].mxu0
  %v4116 = vadd.f32 %v3827, %v4115
  %v4117 = vpop.f32.mrb[0].mxu0
  %4118 = vmatprep.mubr.bf16.mxu0 %v1713
  %4119 = vmatmul.mubr.bf16.gmra.mrb[0].mxu0 %v1712
  %v4120 = vpop.f32.mrb[0].mxu0
  %v4121 = vadd.f32 %v3832, %v4120
  %v4122 = vpop.f32.mrb[0].mxu0
  %v4123 = vpop.f32.mrb[0].mxu0
  %v4124 = vadd.f32 %v3835, %v4123
  %v4125 = vpop.f32.mrb[0].mxu0
  %4126 = vmatprep.mubr.bf16.mxu0 %v1724
  %4127 = vmatmul.mubr.bf16.gmra.mrb[0].mxu0 %v1723
  %v4128 = vpop.f32.mrb[0].mxu0
  %v4129 = vadd.f32 %v3840, %v4128
  %v4130 = vpop.f32.mrb[0].mxu0
  %v4131 = vpop.f32.mrb[0].mxu0
  %v4132 = vadd.f32 %v3843, %v4131
  %v4133 = vpop.f32.mrb[0].mxu0
  %4134 = vmatprep.mubr.bf16.mxu0 %v1735
  %4135 = vmatmul.mubr.bf16.gmra.mrb[0].mxu0 %v1734
  %v4136 = vpop.f32.mrb[0].mxu0
  %v4137 = vadd.f32 %v3848, %v4136
  %v4138 = vpop.f32.mrb[0].mxu0
  %v4139 = vpop.f32.mrb[0].mxu0
  %v4140 = vadd.f32 %v3851, %v4139
  %v4141 = vpop.f32.mrb[0].mxu0
  %4142 = vmatprep.mubr.bf16.mxu0 %v1746
  %4143 = vmatmul.mubr.bf16.gmra.mrb[0].mxu0 %v1745
  %v4144 = vpop.f32.mrb[0].mxu0
  %v4145 = vadd.f32 %v3856, %v4144
  %v4146 = vpop.f32.mrb[0].mxu0
  %v4147 = vpop.f32.mrb[0].mxu0
  %v4148 = vadd.f32 %v3859, %v4147
  %v4149 = vpop.f32.mrb[0].mxu0
  %4150 = vmatprep.mubr.bf16.mxu0 %v1757
  %4151 = vmatmul.mubr.bf16.gmra.mrb[0].mxu0 %v1756
  %v4152 = vpop.f32.mrb[0].mxu0
  %v4153 = vadd.f32 %v3864, %v4152
  %v4154 = vpop.f32.mrb[0].mxu0
  %v4155 = vpop.f32.mrb[0].mxu0
  %v4156 = vadd.f32 %v3867, %v4155
  %v4157 = vpop.f32.mrb[0].mxu0
  %4158 = vmatprep.mubr.bf16.mxu0 %v1768
  %4159 = vmatmul.mubr.bf16.gmra.mrb[0].mxu0 %v1767
  %v4160 = vpop.f32.mrb[0].mxu0
  %v4161 = vadd.f32 %v3872, %v4160
  %v4162 = vpop.f32.mrb[0].mxu0
  %v4163 = vpop.f32.mrb[0].mxu0
  %v4164 = vadd.f32 %v3875, %v4163
  %v4165 = vpop.f32.mrb[0].mxu0
  %4166 = vmatprep.mubr.bf16.mxu0 %v1779
  %4167 = vmatmul.mubr.bf16.gmra.mrb[0].mxu0 %v1778
  %v4168 = vpop.f32.mrb[0].mxu0
  %v4169 = vadd.f32 %v3880, %v4168
  %v4170 = vpop.f32.mrb[0].mxu0
  %v4171 = vpop.f32.mrb[0].mxu0
  %v4172 = vadd.f32 %v3883, %v4171
  %v4173 = vpop.f32.mrb[0].mxu0
  %4174 = vmatprep.mubr.bf16.mxu0 %v1790
  %4175 = vmatmul.mubr.bf16.gmra.mrb[0].mxu0 %v1789
  %v4176 = vpop.f32.mrb[0].mxu0
  %v4177 = vadd.f32 %v3888, %v4176
  %v4178 = vpop.f32.mrb[0].mxu0
  %v4179 = vpop.f32.mrb[0].mxu0
  %v4180 = vadd.f32 %v3891, %v4179
  %v4181 = vpop.f32.mrb[0].mxu0
  %4182 = vmatprep.mubr.bf16.mxu0 %v1801
  %4183 = vmatmul.mubr.bf16.gmra.mrb[0].mxu0 %v1800
  %v4184 = vpop.f32.mrb[0].mxu0
  %v4185 = vadd.f32 %v3896, %v4184
  %v4186 = vpop.f32.mrb[0].mxu0
  %v4187 = vpop.f32.mrb[0].mxu0
  %v4188 = vadd.f32 %v3899, %v4187
  %v4189 = vpop.f32.mrb[0].mxu0
  %4190 = vmatprep.mubr.bf16.mxu0 %v1812
  %4191 = vmatmul.mubr.bf16.gmra.mrb[0].mxu0 %v1811
  %v4192 = vpop.f32.mrb[0].mxu0
  %v4193 = vadd.f32 %v3904, %v4192
  %v4194 = vpop.f32.mrb[0].mxu0
  %v4195 = vpop.f32.mrb[0].mxu0
  %v4196 = vadd.f32 %v3907, %v4195
  %v4197 = vpop.f32.mrb[0].mxu0
  %4198 = vmatprep.mubr.bf16.mxu0 %v1823
  %4199 = vmatmul.mubr.bf16.gmra.mrb[0].mxu0 %v1822
  %v4200 = vpop.f32.mrb[0].mxu0
  %v4201 = vadd.f32 %v3912, %v4200
  %v4202 = vpop.f32.mrb[0].mxu0
  %v4203 = vpop.f32.mrb[0].mxu0
  %v4204 = vadd.f32 %v3915, %v4203
  %v4205 = vpop.f32.mrb[0].mxu0
  %4206 = vmatprep.mubr.bf16.mxu0 %v1834
  %4207 = vmatmul.mubr.bf16.gmra.mrb[0].mxu0 %v1833
  %v4208 = vpop.f32.mrb[0].mxu0
  %v4209 = vadd.f32 %v3920, %v4208
  %v4210 = vpop.f32.mrb[0].mxu0
  %v4211 = vpop.f32.mrb[0].mxu0
  %v4212 = vadd.f32 %v3923, %v4211
  %v4213 = vpop.f32.mrb[0].mxu0
  %4214 = vmatprep.mubr.bf16.mxu0 %v1845
  %4215 = vmatmul.mubr.bf16.gmra.mrb[0].mxu0 %v1844
  %v4216 = vpop.f32.mrb[0].mxu0
  %v4217 = vadd.f32 %v3928, %v4216
  %v4218 = vpop.f32.mrb[0].mxu0
  %v4219 = vpop.f32.mrb[0].mxu0
  %v4220 = vadd.f32 %v3931, %v4219
  %v4221 = vpop.f32.mrb[0].mxu0
  %4222 = vmatprep.mubr.bf16.mxu0 %v1856
  %4223 = vmatmul.mubr.bf16.gmra.mrb[0].mxu0 %v1855
  %v4224 = vpop.f32.mrb[0].mxu0
  %v4225 = vadd.f32 %v3936, %v4224
  %v4226 = vpop.f32.mrb[0].mxu0
  %v4227 = vpop.f32.mrb[0].mxu0
  %v4228 = vadd.f32 %v3939, %v4227
  %v4229 = vpop.f32.mrb[0].mxu0
  %4230 = vmatprep.mubr.bf16.mxu0 %v1867
  %4231 = vmatmul.mubr.bf16.gmra.mrb[0].mxu0 %v1866
  %v4232 = vpop.f32.mrb[0].mxu0
  %v4233 = vadd.f32 %v3944, %v4232
  %v4234 = vpop.f32.mrb[0].mxu0
  %v4235 = vpop.f32.mrb[0].mxu0
  %v4236 = vadd.f32 %v3947, %v4235
  %v4237 = vpop.f32.mrb[0].mxu0
  %4238 = vmatprep.mubr.bf16.mxu0 %v1878
  %4239 = vmatmul.mubr.bf16.gmra.mrb[0].mxu0 %v1877
  %v4240 = vpop.f32.mrb[0].mxu0
  %v4241 = vadd.f32 %v3952, %v4240
  %v4242 = vpop.f32.mrb[0].mxu0
  %v4243 = vpop.f32.mrb[0].mxu0
  %v4244 = vadd.f32 %v3955, %v4243
  %v4245 = vpop.f32.mrb[0].mxu0
  %4246 = vmatprep.mubr.bf16.mxu0 %v1889
  %4247 = vmatmul.mubr.bf16.gmra.mrb[0].mxu0 %v1888
  %v4248 = vpop.f32.mrb[0].mxu0
  %v4249 = vadd.f32 %v3960, %v4248
  %v4250 = vpop.f32.mrb[0].mxu0
  %v4251 = vpop.f32.mrb[0].mxu0
  %v4252 = vadd.f32 %v3963, %v4251
  %v4253 = vpop.f32.mrb[0].mxu0
  %4254 = vmatprep.mubr.bf16.mxu0 %v1900
  %4255 = vmatmul.mubr.bf16.gmra.mrb[0].mxu0 %v1899
  %v4256 = vpop.f32.mrb[0].mxu0
  %v4257 = vadd.f32 %v3968, %v4256
  %v4258 = vpop.f32.mrb[0].mxu0
  %v4259 = vpop.f32.mrb[0].mxu0
  %v4260 = vadd.f32 %v3971, %v4259
  %v4261 = vpop.f32.mrb[0].mxu0
  %4262 = vmatprep.mubr.bf16.mxu0 %v1911
  %4263 = vmatmul.mubr.bf16.gmra.mrb[0].mxu0 %v1910
  %v4264 = vpop.f32.mrb[0].mxu0
  %v4265 = vadd.f32 %v3976, %v4264
  %v4266 = vpop.f32.mrb[0].mxu0
  %v4267 = vpop.f32.mrb[0].mxu0
  %v4268 = vadd.f32 %v3979, %v4267
  %v4269 = vpop.f32.mrb[0].mxu0
  %4270 = vmatprep.mubr.bf16.mxu0 %v1922
  %4271 = vmatmul.mubr.bf16.gmra.mrb[0].mxu0 %v1921
  %v4272 = vpop.f32.mrb[0].mxu0
  %v4273 = vadd.f32 %v3984, %v4272
  %v4274 = vpop.f32.mrb[0].mxu0
  %v4275 = vpop.f32.mrb[0].mxu0
  %v4276 = vadd.f32 %v3987, %v4275
  %v4277 = vpop.f32.mrb[0].mxu0
  %4278 = vmatprep.mubr.bf16.mxu0 %v1933
  %4279 = vmatmul.mubr.bf16.gmra.mrb[0].mxu0 %v1932
  %v4280 = vpop.f32.mrb[0].mxu0
  %v4281 = vadd.f32 %v3992, %v4280
  %v4282 = vpop.f32.mrb[0].mxu0
  %v4283 = vpop.f32.mrb[0].mxu0
  %v4284 = vadd.f32 %v3995, %v4283
  %v4285 = vpop.f32.mrb[0].mxu0
  %4286 = vmatprep.mubr.bf16.mxu0 %v1944
  %4287 = vmatmul.mubr.bf16.gmra.mrb[0].mxu0 %v1943
  %v4288 = vpop.f32.mrb[0].mxu0
  %v4289 = vadd.f32 %v4000, %v4288
  %v4290 = vpop.f32.mrb[0].mxu0
  %v4291 = vpop.f32.mrb[0].mxu0
  %v4292 = vadd.f32 %v4003, %v4291
  %v4293 = vpop.f32.mrb[0].mxu0
  %4294 = vmatprep.mubr.bf16.mxu0 %v1955
  %4295 = vmatmul.mubr.bf16.gmra.mrb[0].mxu0 %v1954
  %v4296 = vpop.f32.mrb[0].mxu0
  %v4297 = vadd.f32 %v4008, %v4296
  %v4298 = vpop.f32.mrb[0].mxu0
  %v4299 = vpop.f32.mrb[0].mxu0
  %v4300 = vadd.f32 %v4011, %v4299
  %v4301 = vpop.f32.mrb[0].mxu0
  %4302 = vmatprep.mubr.bf16.mxu0 %v1966
  %4303 = vmatmul.mubr.bf16.gmra.mrb[0].mxu0 %v1965
  %v4304 = vpop.f32.mrb[0].mxu0
  %v4305 = vadd.f32 %v4016, %v4304
  %v4306 = vpop.f32.mrb[0].mxu0
  %v4307 = vpop.f32.mrb[0].mxu0
  %v4308 = vadd.f32 %v4019, %v4307
  %v4309 = vpop.f32.mrb[0].mxu0
  %4310 = vmatprep.mubr.bf16.mxu0 %v1977
  %4311 = vmatmul.mubr.bf16.gmra.mrb[0].mxu0 %v1976
  %v4312 = vpop.f32.mrb[0].mxu0
  %v4313 = vadd.f32 %v4024, %v4312
  %v4314 = vpop.f32.mrb[0].mxu0
  %v4315 = vpop.f32.mrb[0].mxu0
  %v4316 = vadd.f32 %v4027, %v4315
  %v4317 = vpop.f32.mrb[0].mxu0
  %4318 = vmatprep.mubr.bf16.mxu0 %v1988
  %4319 = vmatmul.mubr.bf16.gmra.mrb[0].mxu0 %v1987
  %v4320 = vpop.f32.mrb[0].mxu0
  %v4321 = vadd.f32 %v4032, %v4320
  %v4322 = vpop.f32.mrb[0].mxu0
  %v4323 = vpop.f32.mrb[0].mxu0
  %v4324 = vadd.f32 %v4035, %v4323
  %v4325 = vpop.f32.mrb[0].mxu0
  %4326 = vmatprep.mubr.bf16.mxu0 %v1999
  %4327 = vmatmul.mubr.bf16.gmra.mrb[0].mxu0 %v1998
  %v4328 = vpop.f32.mrb[0].mxu0
  %v4329 = vadd.f32 %v4040, %v4328
  %v4330 = vpop.f32.mrb[0].mxu0
  %v4331 = vpop.f32.mrb[0].mxu0
  %v4332 = vadd.f32 %v4043, %v4331
  %v4333 = vpop.f32.mrb[0].mxu0
  %4334 = vmatprep.mubr.bf16.mxu0 %v2010
  %4335 = vmatmul.mubr.bf16.gmra.mrb[0].mxu0 %v2009
  %v4336 = vpop.f32.mrb[0].mxu0
  %v4337 = vadd.f32 %v4048, %v4336
  %v4338 = vpop.f32.mrb[0].mxu0
  %v4339 = vpop.f32.mrb[0].mxu0
  %v4340 = vadd.f32 %v4051, %v4339
  %v4341 = vpop.f32.mrb[0].mxu0
  %4342 = vmatprep.mubr.bf16.mxu0 %v2021
  %4343 = vmatmul.mubr.bf16.gmra.mrb[0].mxu0 %v2020
  %v4344 = vpop.f32.mrb[0].mxu0
  %v4345 = vadd.f32 %v4056, %v4344
  %v4346 = vpop.f32.mrb[0].mxu0
  %v4347 = vpop.f32.mrb[0].mxu0
  %v4348 = vadd.f32 %v4059, %v4347
  %v4349 = vpop.f32.mrb[0].mxu0
  %4350 = vmatprep.mubr.bf16.mxu0 %v2032
  %4351 = vmatmul.mubr.bf16.gmra.mrb[0].mxu0 %v2031
  %v4352 = vpop.f32.mrb[0].mxu0
  %v4353 = vadd.f32 %v4064, %v4352
  %v4354 = vpop.f32.mrb[0].mxu0
  %v4355 = vpop.f32.mrb[0].mxu0
  %v4356 = vadd.f32 %v4067, %v4355
  %v4357 = vpop.f32.mrb[0].mxu0
  %4358 = vdwg.mxu0
  %4359 = vmatprep.subr.bf16.mxu0 0
  %4360 = vmatpush1.bf16.msra.mxu0 %v2818
  %4361 = vmatprep.subr.bf16.mxu0 0
  %4362 = vmatpush1.bf16.msra.mxu0 %v2819
  %4363 = vmatprep.subr.bf16.mxu0 0
  %4364 = vmatpush1.bf16.msra.mxu0 %v2820
  %4365 = vmatprep.subr.bf16.mxu0 0
  %4366 = vmatpush1.bf16.msra.mxu0 %v2821
  %4367 = vmatprep.subr.bf16.mxu0 0
  %4368 = vmatpush1.bf16.msra.mxu0 %v2822
  %4369 = vmatprep.subr.bf16.mxu0 0
  %4370 = vmatpush1.bf16.msra.mxu0 %v2823
  %4371 = vmatprep.subr.bf16.mxu0 0
  %4372 = vmatpush1.bf16.msra.mxu0 %v2824
  %4373 = vmatprep.subr.bf16.mxu0 0
  %4374 = vmatpush1.bf16.msra.mxu0 %v2825
  %4375 = vmatprep.subr.bf16.mxu0 0
  %4376 = vmatpush1.bf16.msra.mxu0 0
  %4377 = vmatprep.subr.bf16.mxu0 0
  %4378 = vmatpush1.bf16.msra.mxu0 0
  %4379 = vmatprep.subr.bf16.mxu0 0
  %4380 = vmatpush1.bf16.msra.mxu0 0
  %4381 = vmatprep.subr.bf16.mxu0 0
  %4382 = vmatpush1.bf16.msra.mxu0 0
  %4383 = vmatprep.subr.bf16.mxu0 0
  %4384 = vmatpush1.bf16.msra.mxu0 0
  %4385 = vmatprep.subr.bf16.mxu0 0
  %4386 = vmatpush1.bf16.msra.mxu0 0
  %4387 = vmatprep.subr.bf16.mxu0 0
  %4388 = vmatpush1.bf16.msra.mxu0 0
  %4389 = vmatprep.subr.bf16.mxu0 0
  %4390 = vmatpush1.bf16.msra.mxu0 0
  %4391 = vmatprep.mubr.bf16.mxu0 0
  %4392 = vmatmul.mubr.bf16.gmra.mrb[0].mxu0 %v1692
  %v4393 = vpop.f32.mrb[0].mxu0
  %v4394 = vadd.f32 %v4105, %v4393
  %v4395 = vpop.f32.mrb[0].mxu0
  %v4396 = vpop.f32.mrb[0].mxu0
  %v4397 = vadd.f32 %v4108, %v4396
  %v4398 = vpop.f32.mrb[0].mxu0
  %4399 = vmatprep.mubr.bf16.mxu0 0
  %4400 = vmatmul.mubr.bf16.gmra.mrb[0].mxu0 %v1703
  %v4401 = vpop.f32.mrb[0].mxu0
  %v4402 = vadd.f32 %v4113, %v4401
  %v4403 = vpop.f32.mrb[0].mxu0
  %v4404 = vpop.f32.mrb[0].mxu0
  %v4405 = vadd.f32 %v4116, %v4404
  %v4406 = vpop.f32.mrb[0].mxu0
  %4407 = vmatprep.mubr.bf16.mxu0 0
  %4408 = vmatmul.mubr.bf16.gmra.mrb[0].mxu0 %v1714
  %v4409 = vpop.f32.mrb[0].mxu0
  %v4410 = vadd.f32 %v4121, %v4409
  %v4411 = vpop.f32.mrb[0].mxu0
  %v4412 = vpop.f32.mrb[0].mxu0
  %v4413 = vadd.f32 %v4124, %v4412
  %v4414 = vpop.f32.mrb[0].mxu0
  %4415 = vmatprep.mubr.bf16.mxu0 0
  %4416 = vmatmul.mubr.bf16.gmra.mrb[0].mxu0 %v1725
  %v4417 = vpop.f32.mrb[0].mxu0
  %v4418 = vadd.f32 %v4129, %v4417
  %v4419 = vpop.f32.mrb[0].mxu0
  %v4420 = vpop.f32.mrb[0].mxu0
  %v4421 = vadd.f32 %v4132, %v4420
  %v4422 = vpop.f32.mrb[0].mxu0
  %4423 = vmatprep.mubr.bf16.mxu0 0
  %4424 = vmatmul.mubr.bf16.gmra.mrb[0].mxu0 %v1736
  %v4425 = vpop.f32.mrb[0].mxu0
  %v4426 = vadd.f32 %v4137, %v4425
  %v4427 = vpop.f32.mrb[0].mxu0
  %v4428 = vpop.f32.mrb[0].mxu0
  %v4429 = vadd.f32 %v4140, %v4428
  %v4430 = vpop.f32.mrb[0].mxu0
  %4431 = vmatprep.mubr.bf16.mxu0 0
  %4432 = vmatmul.mubr.bf16.gmra.mrb[0].mxu0 %v1747
  %v4433 = vpop.f32.mrb[0].mxu0
  %v4434 = vadd.f32 %v4145, %v4433
  %v4435 = vpop.f32.mrb[0].mxu0
  %v4436 = vpop.f32.mrb[0].mxu0
  %v4437 = vadd.f32 %v4148, %v4436
  %v4438 = vpop.f32.mrb[0].mxu0
  %4439 = vmatprep.mubr.bf16.mxu0 0
  %4440 = vmatmul.mubr.bf16.gmra.mrb[0].mxu0 %v1758
  %v4441 = vpop.f32.mrb[0].mxu0
  %v4442 = vadd.f32 %v4153, %v4441
  %v4443 = vpop.f32.mrb[0].mxu0
  %v4444 = vpop.f32.mrb[0].mxu0
  %v4445 = vadd.f32 %v4156, %v4444
  %v4446 = vpop.f32.mrb[0].mxu0
  %4447 = vmatprep.mubr.bf16.mxu0 0
  %4448 = vmatmul.mubr.bf16.gmra.mrb[0].mxu0 %v1769
  %v4449 = vpop.f32.mrb[0].mxu0
  %v4450 = vadd.f32 %v4161, %v4449
  %v4451 = vpop.f32.mrb[0].mxu0
  %v4452 = vpop.f32.mrb[0].mxu0
  %v4453 = vadd.f32 %v4164, %v4452
  %v4454 = vpop.f32.mrb[0].mxu0
  %4455 = vmatprep.mubr.bf16.mxu0 0
  %4456 = vmatmul.mubr.bf16.gmra.mrb[0].mxu0 %v1780
  %v4457 = vpop.f32.mrb[0].mxu0
  %v4458 = vadd.f32 %v4169, %v4457
  %v4459 = vpop.f32.mrb[0].mxu0
  %v4460 = vpop.f32.mrb[0].mxu0
  %v4461 = vadd.f32 %v4172, %v4460
  %v4462 = vpop.f32.mrb[0].mxu0
  %4463 = vmatprep.mubr.bf16.mxu0 0
  %4464 = vmatmul.mubr.bf16.gmra.mrb[0].mxu0 %v1791
  %v4465 = vpop.f32.mrb[0].mxu0
  %v4466 = vadd.f32 %v4177, %v4465
  %v4467 = vpop.f32.mrb[0].mxu0
  %v4468 = vpop.f32.mrb[0].mxu0
  %v4469 = vadd.f32 %v4180, %v4468
  %v4470 = vpop.f32.mrb[0].mxu0
  %4471 = vmatprep.mubr.bf16.mxu0 0
  %4472 = vmatmul.mubr.bf16.gmra.mrb[0].mxu0 %v1802
  %v4473 = vpop.f32.mrb[0].mxu0
  %v4474 = vadd.f32 %v4185, %v4473
  %v4475 = vpop.f32.mrb[0].mxu0
  %v4476 = vpop.f32.mrb[0].mxu0
  %v4477 = vadd.f32 %v4188, %v4476
  %v4478 = vpop.f32.mrb[0].mxu0
  %4479 = vmatprep.mubr.bf16.mxu0 0
  %4480 = vmatmul.mubr.bf16.gmra.mrb[0].mxu0 %v1813
  %v4481 = vpop.f32.mrb[0].mxu0
  %v4482 = vadd.f32 %v4193, %v4481
  %v4483 = vpop.f32.mrb[0].mxu0
  %v4484 = vpop.f32.mrb[0].mxu0
  %v4485 = vadd.f32 %v4196, %v4484
  %v4486 = vpop.f32.mrb[0].mxu0
  %4487 = vmatprep.mubr.bf16.mxu0 0
  %4488 = vmatmul.mubr.bf16.gmra.mrb[0].mxu0 %v1824
  %v4489 = vpop.f32.mrb[0].mxu0
  %v4490 = vadd.f32 %v4201, %v4489
  %v4491 = vpop.f32.mrb[0].mxu0
  %v4492 = vpop.f32.mrb[0].mxu0
  %v4493 = vadd.f32 %v4204, %v4492
  %v4494 = vpop.f32.mrb[0].mxu0
  %4495 = vmatprep.mubr.bf16.mxu0 0
  %4496 = vmatmul.mubr.bf16.gmra.mrb[0].mxu0 %v1835
  %v4497 = vpop.f32.mrb[0].mxu0
  %v4498 = vadd.f32 %v4209, %v4497
  %v4499 = vpop.f32.mrb[0].mxu0
  %v4500 = vpop.f32.mrb[0].mxu0
  %v4501 = vadd.f32 %v4212, %v4500
  %v4502 = vpop.f32.mrb[0].mxu0
  %4503 = vmatprep.mubr.bf16.mxu0 0
  %4504 = vmatmul.mubr.bf16.gmra.mrb[0].mxu0 %v1846
  %v4505 = vpop.f32.mrb[0].mxu0
  %v4506 = vadd.f32 %v4217, %v4505
  %v4507 = vpop.f32.mrb[0].mxu0
  %v4508 = vpop.f32.mrb[0].mxu0
  %v4509 = vadd.f32 %v4220, %v4508
  %v4510 = vpop.f32.mrb[0].mxu0
  %4511 = vmatprep.mubr.bf16.mxu0 0
  %4512 = vmatmul.mubr.bf16.gmra.mrb[0].mxu0 %v1857
  %v4513 = vpop.f32.mrb[0].mxu0
  %v4514 = vadd.f32 %v4225, %v4513
  %v4515 = vpop.f32.mrb[0].mxu0
  %v4516 = vpop.f32.mrb[0].mxu0
  %v4517 = vadd.f32 %v4228, %v4516
  %v4518 = vpop.f32.mrb[0].mxu0
  %4519 = vmatprep.mubr.bf16.mxu0 0
  %4520 = vmatmul.mubr.bf16.gmra.mrb[0].mxu0 %v1868
  %v4521 = vpop.f32.mrb[0].mxu0
  %v4522 = vadd.f32 %v4233, %v4521
  %v4523 = vpop.f32.mrb[0].mxu0
  %v4524 = vpop.f32.mrb[0].mxu0
  %v4525 = vadd.f32 %v4236, %v4524
  %v4526 = vpop.f32.mrb[0].mxu0
  %4527 = vmatprep.mubr.bf16.mxu0 0
  %4528 = vmatmul.mubr.bf16.gmra.mrb[0].mxu0 %v1879
  %v4529 = vpop.f32.mrb[0].mxu0
  %v4530 = vadd.f32 %v4241, %v4529
  %v4531 = vpop.f32.mrb[0].mxu0
  %v4532 = vpop.f32.mrb[0].mxu0
  %v4533 = vadd.f32 %v4244, %v4532
  %v4534 = vpop.f32.mrb[0].mxu0
  %4535 = vmatprep.mubr.bf16.mxu0 0
  %4536 = vmatmul.mubr.bf16.gmra.mrb[0].mxu0 %v1890
  %v4537 = vpop.f32.mrb[0].mxu0
  %v4538 = vadd.f32 %v4249, %v4537
  %v4539 = vpop.f32.mrb[0].mxu0
  %v4540 = vpop.f32.mrb[0].mxu0
  %v4541 = vadd.f32 %v4252, %v4540
  %v4542 = vpop.f32.mrb[0].mxu0
  %4543 = vmatprep.mubr.bf16.mxu0 0
  %4544 = vmatmul.mubr.bf16.gmra.mrb[0].mxu0 %v1901
  %v4545 = vpop.f32.mrb[0].mxu0
  %v4546 = vadd.f32 %v4257, %v4545
  %v4547 = vpop.f32.mrb[0].mxu0
  %v4548 = vpop.f32.mrb[0].mxu0
  %v4549 = vadd.f32 %v4260, %v4548
  %v4550 = vpop.f32.mrb[0].mxu0
  %4551 = vmatprep.mubr.bf16.mxu0 0
  %4552 = vmatmul.mubr.bf16.gmra.mrb[0].mxu0 %v1912
  %v4553 = vpop.f32.mrb[0].mxu0
  %v4554 = vadd.f32 %v4265, %v4553
  %v4555 = vpop.f32.mrb[0].mxu0
  %v4556 = vpop.f32.mrb[0].mxu0
  %v4557 = vadd.f32 %v4268, %v4556
  %v4558 = vpop.f32.mrb[0].mxu0
  %4559 = vmatprep.mubr.bf16.mxu0 0
  %4560 = vmatmul.mubr.bf16.gmra.mrb[0].mxu0 %v1923
  %v4561 = vpop.f32.mrb[0].mxu0
  %v4562 = vadd.f32 %v4273, %v4561
  %v4563 = vpop.f32.mrb[0].mxu0
  %v4564 = vpop.f32.mrb[0].mxu0
  %v4565 = vadd.f32 %v4276, %v4564
  %v4566 = vpop.f32.mrb[0].mxu0
  %4567 = vmatprep.mubr.bf16.mxu0 0
  %4568 = vmatmul.mubr.bf16.gmra.mrb[0].mxu0 %v1934
  %v4569 = vpop.f32.mrb[0].mxu0
  %v4570 = vadd.f32 %v4281, %v4569
  %v4571 = vpop.f32.mrb[0].mxu0
  %v4572 = vpop.f32.mrb[0].mxu0
  %v4573 = vadd.f32 %v4284, %v4572
  %v4574 = vpop.f32.mrb[0].mxu0
  %4575 = vmatprep.mubr.bf16.mxu0 0
  %4576 = vmatmul.mubr.bf16.gmra.mrb[0].mxu0 %v1945
  %v4577 = vpop.f32.mrb[0].mxu0
  %v4578 = vadd.f32 %v4289, %v4577
  %v4579 = vpop.f32.mrb[0].mxu0
  %v4580 = vpop.f32.mrb[0].mxu0
  %v4581 = vadd.f32 %v4292, %v4580
  %v4582 = vpop.f32.mrb[0].mxu0
  %4583 = vmatprep.mubr.bf16.mxu0 0
  %4584 = vmatmul.mubr.bf16.gmra.mrb[0].mxu0 %v1956
  %v4585 = vpop.f32.mrb[0].mxu0
  %v4586 = vadd.f32 %v4297, %v4585
  %v4587 = vpop.f32.mrb[0].mxu0
  %v4588 = vpop.f32.mrb[0].mxu0
  %v4589 = vadd.f32 %v4300, %v4588
  %v4590 = vpop.f32.mrb[0].mxu0
  %4591 = vmatprep.mubr.bf16.mxu0 0
  %4592 = vmatmul.mubr.bf16.gmra.mrb[0].mxu0 %v1967
  %v4593 = vpop.f32.mrb[0].mxu0
  %v4594 = vadd.f32 %v4305, %v4593
  %v4595 = vpop.f32.mrb[0].mxu0
  %v4596 = vpop.f32.mrb[0].mxu0
  %v4597 = vadd.f32 %v4308, %v4596
  %v4598 = vpop.f32.mrb[0].mxu0
  %4599 = vmatprep.mubr.bf16.mxu0 0
  %4600 = vmatmul.mubr.bf16.gmra.mrb[0].mxu0 %v1978
  %v4601 = vpop.f32.mrb[0].mxu0
  %v4602 = vadd.f32 %v4313, %v4601
  %v4603 = vpop.f32.mrb[0].mxu0
  %v4604 = vpop.f32.mrb[0].mxu0
  %v4605 = vadd.f32 %v4316, %v4604
  %v4606 = vpop.f32.mrb[0].mxu0
  %4607 = vmatprep.mubr.bf16.mxu0 0
  %4608 = vmatmul.mubr.bf16.gmra.mrb[0].mxu0 %v1989
  %v4609 = vpop.f32.mrb[0].mxu0
  %v4610 = vadd.f32 %v4321, %v4609
  %v4611 = vpop.f32.mrb[0].mxu0
  %v4612 = vpop.f32.mrb[0].mxu0
  %v4613 = vadd.f32 %v4324, %v4612
  %v4614 = vpop.f32.mrb[0].mxu0
  %4615 = vmatprep.mubr.bf16.mxu0 0
  %4616 = vmatmul.mubr.bf16.gmra.mrb[0].mxu0 %v2000
  %v4617 = vpop.f32.mrb[0].mxu0
  %v4618 = vadd.f32 %v4329, %v4617
  %v4619 = vpop.f32.mrb[0].mxu0
  %v4620 = vpop.f32.mrb[0].mxu0
  %v4621 = vadd.f32 %v4332, %v4620
  %v4622 = vpop.f32.mrb[0].mxu0
  %4623 = vmatprep.mubr.bf16.mxu0 0
  %4624 = vmatmul.mubr.bf16.gmra.mrb[0].mxu0 %v2011
  %v4625 = vpop.f32.mrb[0].mxu0
  %v4626 = vadd.f32 %v4337, %v4625
  %v4627 = vpop.f32.mrb[0].mxu0
  %v4628 = vpop.f32.mrb[0].mxu0
  %v4629 = vadd.f32 %v4340, %v4628
  %v4630 = vpop.f32.mrb[0].mxu0
  %4631 = vmatprep.mubr.bf16.mxu0 0
  %4632 = vmatmul.mubr.bf16.gmra.mrb[0].mxu0 %v2022
  %v4633 = vpop.f32.mrb[0].mxu0
  %v4634 = vadd.f32 %v4345, %v4633
  %v4635 = vpop.f32.mrb[0].mxu0
  %v4636 = vpop.f32.mrb[0].mxu0
  %v4637 = vadd.f32 %v4348, %v4636
  %v4638 = vpop.f32.mrb[0].mxu0
  %4639 = vmatprep.mubr.bf16.mxu0 0
  %4640 = vmatmul.mubr.bf16.gmra.mrb[0].mxu0 %v2033
  %v4641 = vpop.f32.mrb[0].mxu0
  %v4642 = vadd.f32 %v4353, %v4641
  %v4643 = vpop.f32.mrb[0].mxu0
  %v4644 = vpop.f32.mrb[0].mxu0
  %v4645 = vadd.f32 %v4356, %v4644
  %v4646 = vpop.f32.mrb[0].mxu0
  %4647 = vdwg.mxu0
  %v4648 = vmin.f32 %v4394, 0.0
  %v4649 = vmin.f32 %v4397, 0.0
  %v4650 = vmin.f32 %v4402, 0.0
  %v4651 = vmin.f32 %v4405, 0.0
  %v4652 = vmin.f32 %v4410, 0.0
  %v4653 = vmin.f32 %v4413, 0.0
  %v4654 = vmin.f32 %v4418, 0.0
  %v4655 = vmin.f32 %v4421, 0.0
  %v4656 = vmin.f32 %v4426, 0.0
  %v4657 = vmin.f32 %v4429, 0.0
  %v4658 = vmin.f32 %v4434, 0.0
  %v4659 = vmin.f32 %v4437, 0.0
  %v4660 = vmin.f32 %v4442, 0.0
  %v4661 = vmin.f32 %v4445, 0.0
  %v4662 = vmin.f32 %v4450, 0.0
  %v4663 = vmin.f32 %v4453, 0.0
  %v4664 = vmin.f32 %v4458, 0.0
  %v4665 = vmin.f32 %v4461, 0.0
  %v4666 = vmin.f32 %v4466, 0.0
  %v4667 = vmin.f32 %v4469, 0.0
  %v4668 = vmin.f32 %v4474, 0.0
  %v4669 = vmin.f32 %v4477, 0.0
  %v4670 = vmin.f32 %v4482, 0.0
  %v4671 = vmin.f32 %v4485, 0.0
  %v4672 = vmin.f32 %v4490, 0.0
  %v4673 = vmin.f32 %v4493, 0.0
  %v4674 = vmin.f32 %v4498, 0.0
  %v4675 = vmin.f32 %v4501, 0.0
  %v4676 = vmin.f32 %v4506, 0.0
  %v4677 = vmin.f32 %v4509, 0.0
  %v4678 = vmin.f32 %v4514, 0.0
  %v4679 = vmin.f32 %v4517, 0.0
  %v4680 = vmin.f32 %v4522, 0.0
  %v4681 = vmin.f32 %v4525, 0.0
  %v4682 = vmin.f32 %v4530, 0.0
  %v4683 = vmin.f32 %v4533, 0.0
  %v4684 = vmin.f32 %v4538, 0.0
  %v4685 = vmin.f32 %v4541, 0.0
  %v4686 = vmin.f32 %v4546, 0.0
  %v4687 = vmin.f32 %v4549, 0.0
  %v4688 = vmin.f32 %v4554, 0.0
  %v4689 = vmin.f32 %v4557, 0.0
  %v4690 = vmin.f32 %v4562, 0.0
  %v4691 = vmin.f32 %v4565, 0.0
  %v4692 = vmin.f32 %v4570, 0.0
  %v4693 = vmin.f32 %v4573, 0.0
  %v4694 = vmin.f32 %v4578, 0.0
  %v4695 = vmin.f32 %v4581, 0.0
  %v4696 = vmin.f32 %v4586, 0.0
  %v4697 = vmin.f32 %v4589, 0.0
  %v4698 = vmin.f32 %v4594, 0.0
  %v4699 = vmin.f32 %v4597, 0.0
  %v4700 = vmin.f32 %v4602, 0.0
  %v4701 = vmin.f32 %v4605, 0.0
  %v4702 = vmin.f32 %v4610, 0.0
  %v4703 = vmin.f32 %v4613, 0.0
  %v4704 = vmin.f32 %v4618, 0.0
  %v4705 = vmin.f32 %v4621, 0.0
  %v4706 = vmin.f32 %v4626, 0.0
  %v4707 = vmin.f32 %v4629, 0.0
  %v4708 = vmin.f32 %v4634, 0.0
  %v4709 = vmin.f32 %v4637, 0.0
  %v4710 = vmin.f32 %v4642, 0.0
  %v4711 = vmin.f32 %v4645, 0.0
  %v4712 = vmul.f32 %v4648, 0.5
  %v4713 = vmul.f32 %v4649, 0.5
  %v4714 = vmul.f32 %v4650, 0.5
  %v4715 = vmul.f32 %v4651, 0.5
  %v4716 = vmul.f32 %v4652, 0.5
  %v4717 = vmul.f32 %v4653, 0.5
  %v4718 = vmul.f32 %v4654, 0.5
  %v4719 = vmul.f32 %v4655, 0.5
  %v4720 = vmul.f32 %v4656, 0.5
  %v4721 = vmul.f32 %v4657, 0.5
  %v4722 = vmul.f32 %v4658, 0.5
  %v4723 = vmul.f32 %v4659, 0.5
  %v4724 = vmul.f32 %v4660, 0.5
  %v4725 = vmul.f32 %v4661, 0.5
  %v4726 = vmul.f32 %v4662, 0.5
  %v4727 = vmul.f32 %v4663, 0.5
  %v4728 = vmul.f32 %v4664, 0.5
  %v4729 = vmul.f32 %v4665, 0.5
  %v4730 = vmul.f32 %v4666, 0.5
  %v4731 = vmul.f32 %v4667, 0.5
  %v4732 = vmul.f32 %v4668, 0.5
  %v4733 = vmul.f32 %v4669, 0.5
  %v4734 = vmul.f32 %v4670, 0.5
  %v4735 = vmul.f32 %v4671, 0.5
  %v4736 = vmul.f32 %v4672, 0.5
  %v4737 = vmul.f32 %v4673, 0.5
  %v4738 = vmul.f32 %v4674, 0.5
  %v4739 = vmul.f32 %v4675, 0.5
  %v4740 = vmul.f32 %v4676, 0.5
  %v4741 = vmul.f32 %v4677, 0.5
  %v4742 = vmul.f32 %v4678, 0.5
  %v4743 = vmul.f32 %v4679, 0.5
  %v4744 = vmul.f32 %v4680, 0.5
  %v4745 = vmul.f32 %v4681, 0.5
  %v4746 = vmul.f32 %v4682, 0.5
  %v4747 = vmul.f32 %v4683, 0.5
  %v4748 = vmul.f32 %v4684, 0.5
  %v4749 = vmul.f32 %v4685, 0.5
  %v4750 = vmul.f32 %v4686, 0.5
  %v4751 = vmul.f32 %v4687, 0.5
  %v4752 = vmul.f32 %v4688, 0.5
  %v4753 = vmul.f32 %v4689, 0.5
  %v4754 = vmul.f32 %v4690, 0.5
  %v4755 = vmul.f32 %v4691, 0.5
  %v4756 = vmul.f32 %v4692, 0.5
  %v4757 = vmul.f32 %v4693, 0.5
  %v4758 = vmul.f32 %v4694, 0.5
  %v4759 = vmul.f32 %v4695, 0.5
  %v4760 = vmul.f32 %v4696, 0.5
  %v4761 = vmul.f32 %v4697, 0.5
  %v4762 = vmul.f32 %v4698, 0.5
  %v4763 = vmul.f32 %v4699, 0.5
  %v4764 = vmul.f32 %v4700, 0.5
  %v4765 = vmul.f32 %v4701, 0.5
  %v4766 = vmul.f32 %v4702, 0.5
  %v4767 = vmul.f32 %v4703, 0.5
  %v4768 = vmul.f32 %v4704, 0.5
  %v4769 = vmul.f32 %v4705, 0.5
  %v4770 = vmul.f32 %v4706, 0.5
  %v4771 = vmul.f32 %v4707, 0.5
  %v4772 = vmul.f32 %v4708, 0.5
  %v4773 = vmul.f32 %v4709, 0.5
  %v4774 = vmul.f32 %v4710, 0.5
  %v4775 = vmul.f32 %v4711, 0.5
  %v4776 = vtanh.pop %v4712
  %v4777 = vtanh.pop %v4713
  %v4778 = vtanh.pop %v4714
  %v4779 = vtanh.pop %v4715
  %v4780 = vtanh.pop %v4716
  %v4781 = vtanh.pop %v4717
  %v4782 = vtanh.pop %v4718
  %v4783 = vtanh.pop %v4719
  %v4784 = vtanh.pop %v4720
  %v4785 = vtanh.pop %v4721
  %v4786 = vtanh.pop %v4722
  %v4787 = vtanh.pop %v4723
  %v4788 = vtanh.pop %v4724
  %v4789 = vtanh.pop %v4725
  %v4790 = vtanh.pop %v4726
  %v4791 = vtanh.pop %v4727
  %v4792 = vtanh.pop %v4728
  %v4793 = vtanh.pop %v4729
  %v4794 = vtanh.pop %v4730
  %v4795 = vtanh.pop %v4731
  %v4796 = vtanh.pop %v4732
  %v4797 = vtanh.pop %v4733
  %v4798 = vtanh.pop %v4734
  %v4799 = vtanh.pop %v4735
  %v4800 = vtanh.pop %v4736
  %v4801 = vtanh.pop %v4737
  %v4802 = vtanh.pop %v4738
  %v4803 = vtanh.pop %v4739
  %v4804 = vtanh.pop %v4740
  %v4805 = vtanh.pop %v4741
  %v4806 = vtanh.pop %v4742
  %v4807 = vtanh.pop %v4743
  %v4808 = vtanh.pop %v4744
  %v4809 = vtanh.pop %v4745
  %v4810 = vtanh.pop %v4746
  %v4811 = vtanh.pop %v4747
  %v4812 = vtanh.pop %v4748
  %v4813 = vtanh.pop %v4749
  %v4814 = vtanh.pop %v4750
  %v4815 = vtanh.pop %v4751
  %v4816 = vtanh.pop %v4752
  %v4817 = vtanh.pop %v4753
  %v4818 = vtanh.pop %v4754
  %v4819 = vtanh.pop %v4755
  %v4820 = vtanh.pop %v4756
  %v4821 = vtanh.pop %v4757
  %v4822 = vtanh.pop %v4758
  %v4823 = vtanh.pop %v4759
  %v4824 = vtanh.pop %v4760
  %v4825 = vtanh.pop %v4761
  %v4826 = vtanh.pop %v4762
  %v4827 = vtanh.pop %v4763
  %v4828 = vtanh.pop %v4764
  %v4829 = vtanh.pop %v4765
  %v4830 = vtanh.pop %v4766
  %v4831 = vtanh.pop %v4767
  %v4832 = vtanh.pop %v4768
  %v4833 = vtanh.pop %v4769
  %v4834 = vtanh.pop %v4770
  %v4835 = vtanh.pop %v4771
  %v4836 = vtanh.pop %v4772
  %v4837 = vtanh.pop %v4773
  %v4838 = vtanh.pop %v4774
  %v4839 = vtanh.pop %v4775
  %v4840 = vadd.f32 %v4776, %v4776
  %v4841 = vadd.f32 %v4777, %v4777
  %v4842 = vadd.f32 %v4778, %v4778
  %v4843 = vadd.f32 %v4779, %v4779
  %v4844 = vadd.f32 %v4780, %v4780
  %v4845 = vadd.f32 %v4781, %v4781
  %v4846 = vadd.f32 %v4782, %v4782
  %v4847 = vadd.f32 %v4783, %v4783
  %v4848 = vadd.f32 %v4784, %v4784
  %v4849 = vadd.f32 %v4785, %v4785
  %v4850 = vadd.f32 %v4786, %v4786
  %v4851 = vadd.f32 %v4787, %v4787
  %v4852 = vadd.f32 %v4788, %v4788
  %v4853 = vadd.f32 %v4789, %v4789
  %v4854 = vadd.f32 %v4790, %v4790
  %v4855 = vadd.f32 %v4791, %v4791
  %v4856 = vadd.f32 %v4792, %v4792
  %v4857 = vadd.f32 %v4793, %v4793
  %v4858 = vadd.f32 %v4794, %v4794
  %v4859 = vadd.f32 %v4795, %v4795
  %v4860 = vadd.f32 %v4796, %v4796
  %v4861 = vadd.f32 %v4797, %v4797
  %v4862 = vadd.f32 %v4798, %v4798
  %v4863 = vadd.f32 %v4799, %v4799
  %v4864 = vadd.f32 %v4800, %v4800
  %v4865 = vadd.f32 %v4801, %v4801
  %v4866 = vadd.f32 %v4802, %v4802
  %v4867 = vadd.f32 %v4803, %v4803
  %v4868 = vadd.f32 %v4804, %v4804
  %v4869 = vadd.f32 %v4805, %v4805
  %v4870 = vadd.f32 %v4806, %v4806
  %v4871 = vadd.f32 %v4807, %v4807
  %v4872 = vadd.f32 %v4808, %v4808
  %v4873 = vadd.f32 %v4809, %v4809
  %v4874 = vadd.f32 %v4810, %v4810
  %v4875 = vadd.f32 %v4811, %v4811
  %v4876 = vadd.f32 %v4812, %v4812
  %v4877 = vadd.f32 %v4813, %v4813
  %v4878 = vadd.f32 %v4814, %v4814
  %v4879 = vadd.f32 %v4815, %v4815
  %v4880 = vadd.f32 %v4816, %v4816
  %v4881 = vadd.f32 %v4817, %v4817
  %v4882 = vadd.f32 %v4818, %v4818
  %v4883 = vadd.f32 %v4819, %v4819
  %v4884 = vadd.f32 %v4820, %v4820
  %v4885 = vadd.f32 %v4821, %v4821
  %v4886 = vadd.f32 %v4822, %v4822
  %v4887 = vadd.f32 %v4823, %v4823
  %v4888 = vadd.f32 %v4824, %v4824
  %v4889 = vadd.f32 %v4825, %v4825
  %v4890 = vadd.f32 %v4826, %v4826
  %v4891 = vadd.f32 %v4827, %v4827
  %v4892 = vadd.f32 %v4828, %v4828
  %v4893 = vadd.f32 %v4829, %v4829
  %v4894 = vadd.f32 %v4830, %v4830
  %v4895 = vadd.f32 %v4831, %v4831
  %v4896 = vadd.f32 %v4832, %v4832
  %v4897 = vadd.f32 %v4833, %v4833
  %v4898 = vadd.f32 %v4834, %v4834
  %v4899 = vadd.f32 %v4835, %v4835
  %v4900 = vadd.f32 %v4836, %v4836
  %v4901 = vadd.f32 %v4837, %v4837
  %v4902 = vadd.f32 %v4838, %v4838
  %v4903 = vadd.f32 %v4839, %v4839
  %v4904 = vsub.f32 1.0, %v4776
  %v4905 = vsub.f32 1.0, %v4777
  %v4906 = vsub.f32 1.0, %v4778
  %v4907 = vsub.f32 1.0, %v4779
  %v4908 = vsub.f32 1.0, %v4780
  %v4909 = vsub.f32 1.0, %v4781
  %v4910 = vsub.f32 1.0, %v4782
  %v4911 = vsub.f32 1.0, %v4783
  %v4912 = vsub.f32 1.0, %v4784
  %v4913 = vsub.f32 1.0, %v4785
  %v4914 = vsub.f32 1.0, %v4786
  %v4915 = vsub.f32 1.0, %v4787
  %v4916 = vsub.f32 1.0, %v4788
  %v4917 = vsub.f32 1.0, %v4789
  %v4918 = vsub.f32 1.0, %v4790
  %v4919 = vsub.f32 1.0, %v4791
  %v4920 = vsub.f32 1.0, %v4792
  %v4921 = vsub.f32 1.0, %v4793
  %v4922 = vsub.f32 1.0, %v4794
  %v4923 = vsub.f32 1.0, %v4795
  %v4924 = vsub.f32 1.0, %v4796
  %v4925 = vsub.f32 1.0, %v4797
  %v4926 = vsub.f32 1.0, %v4798
  %v4927 = vsub.f32 1.0, %v4799
  %v4928 = vsub.f32 1.0, %v4800
  %v4929 = vsub.f32 1.0, %v4801
  %v4930 = vsub.f32 1.0, %v4802
  %v4931 = vsub.f32 1.0, %v4803
  %v4932 = vsub.f32 1.0, %v4804
  %v4933 = vsub.f32 1.0, %v4805
  %v4934 = vsub.f32 1.0, %v4806
  %v4935 = vsub.f32 1.0, %v4807
  %v4936 = vsub.f32 1.0, %v4808
  %v4937 = vsub.f32 1.0, %v4809
  %v4938 = vsub.f32 1.0, %v4810
  %v4939 = vsub.f32 1.0, %v4811
  %v4940 = vsub.f32 1.0, %v4812
  %v4941 = vsub.f32 1.0, %v4813
  %v4942 = vsub.f32 1.0, %v4814
  %v4943 = vsub.f32 1.0, %v4815
  %v4944 = vsub.f32 1.0, %v4816
  %v4945 = vsub.f32 1.0, %v4817
  %v4946 = vsub.f32 1.0, %v4818
  %v4947 = vsub.f32 1.0, %v4819
  %v4948 = vsub.f32 1.0, %v4820
  %v4949 = vsub.f32 1.0, %v4821
  %v4950 = vsub.f32 1.0, %v4822
  %v4951 = vsub.f32 1.0, %v4823
  %v4952 = vsub.f32 1.0, %v4824
  %v4953 = vsub.f32 1.0, %v4825
  %v4954 = vsub.f32 1.0, %v4826
  %v4955 = vsub.f32 1.0, %v4827
  %v4956 = vsub.f32 1.0, %v4828
  %v4957 = vsub.f32 1.0, %v4829
  %v4958 = vsub.f32 1.0, %v4830
  %v4959 = vsub.f32 1.0, %v4831
  %v4960 = vsub.f32 1.0, %v4832
  %v4961 = vsub.f32 1.0, %v4833
  %v4962 = vsub.f32 1.0, %v4834
  %v4963 = vsub.f32 1.0, %v4835
  %v4964 = vsub.f32 1.0, %v4836
  %v4965 = vsub.f32 1.0, %v4837
  %v4966 = vsub.f32 1.0, %v4838
  %v4967 = vsub.f32 1.0, %v4839
  %v4968 = vrcp.pop %v4904
  %v4969 = vmul.f32 %v4840, %v4968
  %v4970 = vrcp.pop %v4905
  %v4971 = vmul.f32 %v4841, %v4970
  %v4972 = vrcp.pop %v4906
  %v4973 = vmul.f32 %v4842, %v4972
  %v4974 = vrcp.pop %v4907
  %v4975 = vmul.f32 %v4843, %v4974
  %v4976 = vrcp.pop %v4908
  %v4977 = vmul.f32 %v4844, %v4976
  %v4978 = vrcp.pop %v4909
  %v4979 = vmul.f32 %v4845, %v4978
  %v4980 = vrcp.pop %v4910
  %v4981 = vmul.f32 %v4846, %v4980
  %v4982 = vrcp.pop %v4911
  %v4983 = vmul.f32 %v4847, %v4982
  %v4984 = vrcp.pop %v4912
  %v4985 = vmul.f32 %v4848, %v4984
  %v4986 = vrcp.pop %v4913
  %v4987 = vmul.f32 %v4849, %v4986
  %v4988 = vrcp.pop %v4914
  %v4989 = vmul.f32 %v4850, %v4988
  %v4990 = vrcp.pop %v4915
  %v4991 = vmul.f32 %v4851, %v4990
  %v4992 = vrcp.pop %v4916
  %v4993 = vmul.f32 %v4852, %v4992
  %v4994 = vrcp.pop %v4917
  %v4995 = vmul.f32 %v4853, %v4994
  %v4996 = vrcp.pop %v4918
  %v4997 = vmul.f32 %v4854, %v4996
  %v4998 = vrcp.pop %v4919
  %v4999 = vmul.f32 %v4855, %v4998
  %v5000 = vrcp.pop %v4920
  %v5001 = vmul.f32 %v4856, %v5000
  %v5002 = vrcp.pop %v4921
  %v5003 = vmul.f32 %v4857, %v5002
  %v5004 = vrcp.pop %v4922
  %v5005 = vmul.f32 %v4858, %v5004
  %v5006 = vrcp.pop %v4923
  %v5007 = vmul.f32 %v4859, %v5006
  %v5008 = vrcp.pop %v4924
  %v5009 = vmul.f32 %v4860, %v5008
  %v5010 = vrcp.pop %v4925
  %v5011 = vmul.f32 %v4861, %v5010
  %v5012 = vrcp.pop %v4926
  %v5013 = vmul.f32 %v4862, %v5012
  %v5014 = vrcp.pop %v4927
  %v5015 = vmul.f32 %v4863, %v5014
  %v5016 = vrcp.pop %v4928
  %v5017 = vmul.f32 %v4864, %v5016
  %v5018 = vrcp.pop %v4929
  %v5019 = vmul.f32 %v4865, %v5018
  %v5020 = vrcp.pop %v4930
  %v5021 = vmul.f32 %v4866, %v5020
  %v5022 = vrcp.pop %v4931
  %v5023 = vmul.f32 %v4867, %v5022
  %v5024 = vrcp.pop %v4932
  %v5025 = vmul.f32 %v4868, %v5024
  %v5026 = vrcp.pop %v4933
  %v5027 = vmul.f32 %v4869, %v5026
  %v5028 = vrcp.pop %v4934
  %v5029 = vmul.f32 %v4870, %v5028
  %v5030 = vrcp.pop %v4935
  %v5031 = vmul.f32 %v4871, %v5030
  %v5032 = vrcp.pop %v4936
  %v5033 = vmul.f32 %v4872, %v5032
  %v5034 = vrcp.pop %v4937
  %v5035 = vmul.f32 %v4873, %v5034
  %v5036 = vrcp.pop %v4938
  %v5037 = vmul.f32 %v4874, %v5036
  %v5038 = vrcp.pop %v4939
  %v5039 = vmul.f32 %v4875, %v5038
  %v5040 = vrcp.pop %v4940
  %v5041 = vmul.f32 %v4876, %v5040
  %v5042 = vrcp.pop %v4941
  %v5043 = vmul.f32 %v4877, %v5042
  %v5044 = vrcp.pop %v4942
  %v5045 = vmul.f32 %v4878, %v5044
  %v5046 = vrcp.pop %v4943
  %v5047 = vmul.f32 %v4879, %v5046
  %v5048 = vrcp.pop %v4944
  %v5049 = vmul.f32 %v4880, %v5048
  %v5050 = vrcp.pop %v4945
  %v5051 = vmul.f32 %v4881, %v5050
  %v5052 = vrcp.pop %v4946
  %v5053 = vmul.f32 %v4882, %v5052
  %v5054 = vrcp.pop %v4947
  %v5055 = vmul.f32 %v4883, %v5054
  %v5056 = vrcp.pop %v4948
  %v5057 = vmul.f32 %v4884, %v5056
  %v5058 = vrcp.pop %v4949
  %v5059 = vmul.f32 %v4885, %v5058
  %v5060 = vrcp.pop %v4950
  %v5061 = vmul.f32 %v4886, %v5060
  %v5062 = vrcp.pop %v4951
  %v5063 = vmul.f32 %v4887, %v5062
  %v5064 = vrcp.pop %v4952
  %v5065 = vmul.f32 %v4888, %v5064
  %v5066 = vrcp.pop %v4953
  %v5067 = vmul.f32 %v4889, %v5066
  %v5068 = vrcp.pop %v4954
  %v5069 = vmul.f32 %v4890, %v5068
  %v5070 = vrcp.pop %v4955
  %v5071 = vmul.f32 %v4891, %v5070
  %v5072 = vrcp.pop %v4956
  %v5073 = vmul.f32 %v4892, %v5072
  %v5074 = vrcp.pop %v4957
  %v5075 = vmul.f32 %v4893, %v5074
  %v5076 = vrcp.pop %v4958
  %v5077 = vmul.f32 %v4894, %v5076
  %v5078 = vrcp.pop %v4959
  %v5079 = vmul.f32 %v4895, %v5078
  %v5080 = vrcp.pop %v4960
  %v5081 = vmul.f32 %v4896, %v5080
  %v5082 = vrcp.pop %v4961
  %v5083 = vmul.f32 %v4897, %v5082
  %v5084 = vrcp.pop %v4962
  %v5085 = vmul.f32 %v4898, %v5084
  %v5086 = vrcp.pop %v4963
  %v5087 = vmul.f32 %v4899, %v5086
  %v5088 = vrcp.pop %v4964
  %v5089 = vmul.f32 %v4900, %v5088
  %v5090 = vrcp.pop %v4965
  %v5091 = vmul.f32 %v4901, %v5090
  %v5092 = vrcp.pop %v4966
  %v5093 = vmul.f32 %v4902, %v5092
  %v5094 = vrcp.pop %v4967
  %v5095 = vmul.f32 %v4903, %v5094
  %vm5096 = vcmp.gt.f32.partialorder %v4394, 0.0
  %vm5097 = vcmp.gt.f32.partialorder %v4397, 0.0
  %vm5098 = vcmp.gt.f32.partialorder %v4402, 0.0
  %vm5099 = vcmp.gt.f32.partialorder %v4405, 0.0
  %vm5100 = vcmp.gt.f32.partialorder %v4410, 0.0
  %vm5101 = vcmp.gt.f32.partialorder %v4413, 0.0
  %vm5102 = vcmp.gt.f32.partialorder %v4418, 0.0
  %vm5103 = vcmp.gt.f32.partialorder %v4421, 0.0
  %vm5104 = vcmp.gt.f32.partialorder %v4426, 0.0
  %vm5105 = vcmp.gt.f32.partialorder %v4429, 0.0
  %vm5106 = vcmp.gt.f32.partialorder %v4434, 0.0
  %vm5107 = vcmp.gt.f32.partialorder %v4437, 0.0
  %vm5108 = vcmp.gt.f32.partialorder %v4442, 0.0
  %vm5109 = vcmp.gt.f32.partialorder %v4445, 0.0
  %vm5110 = vcmp.gt.f32.partialorder %v4450, 0.0
  %vm5111 = vcmp.gt.f32.partialorder %v4453, 0.0
  %vm5112 = vcmp.gt.f32.partialorder %v4458, 0.0
  %vm5113 = vcmp.gt.f32.partialorder %v4461, 0.0
  %vm5114 = vcmp.gt.f32.partialorder %v4466, 0.0
  %vm5115 = vcmp.gt.f32.partialorder %v4469, 0.0
  %vm5116 = vcmp.gt.f32.partialorder %v4474, 0.0
  %vm5117 = vcmp.gt.f32.partialorder %v4477, 0.0
  %vm5118 = vcmp.gt.f32.partialorder %v4482, 0.0
  %vm5119 = vcmp.gt.f32.partialorder %v4485, 0.0
  %vm5120 = vcmp.gt.f32.partialorder %v4490, 0.0
  %vm5121 = vcmp.gt.f32.partialorder %v4493, 0.0
  %vm5122 = vcmp.gt.f32.partialorder %v4498, 0.0
  %vm5123 = vcmp.gt.f32.partialorder %v4501, 0.0
  %vm5124 = vcmp.gt.f32.partialorder %v4506, 0.0
  %vm5125 = vcmp.gt.f32.partialorder %v4509, 0.0
  %vm5126 = vcmp.gt.f32.partialorder %v4514, 0.0
  %vm5127 = vcmp.gt.f32.partialorder %v4517, 0.0
  %vm5128 = vcmp.gt.f32.partialorder %v4522, 0.0
  %vm5129 = vcmp.gt.f32.partialorder %v4525, 0.0
  %vm5130 = vcmp.gt.f32.partialorder %v4530, 0.0
  %vm5131 = vcmp.gt.f32.partialorder %v4533, 0.0
  %vm5132 = vcmp.gt.f32.partialorder %v4538, 0.0
  %vm5133 = vcmp.gt.f32.partialorder %v4541, 0.0
  %vm5134 = vcmp.gt.f32.partialorder %v4546, 0.0
  %vm5135 = vcmp.gt.f32.partialorder %v4549, 0.0
  %vm5136 = vcmp.gt.f32.partialorder %v4554, 0.0
  %vm5137 = vcmp.gt.f32.partialorder %v4557, 0.0
  %vm5138 = vcmp.gt.f32.partialorder %v4562, 0.0
  %vm5139 = vcmp.gt.f32.partialorder %v4565, 0.0
  %vm5140 = vcmp.gt.f32.partialorder %v4570, 0.0
  %vm5141 = vcmp.gt.f32.partialorder %v4573, 0.0
  %vm5142 = vcmp.gt.f32.partialorder %v4578, 0.0
  %vm5143 = vcmp.gt.f32.partialorder %v4581, 0.0
  %vm5144 = vcmp.gt.f32.partialorder %v4586, 0.0
  %vm5145 = vcmp.gt.f32.partialorder %v4589, 0.0
  %vm5146 = vcmp.gt.f32.partialorder %v4594, 0.0
  %vm5147 = vcmp.gt.f32.partialorder %v4597, 0.0
  %vm5148 = vcmp.gt.f32.partialorder %v4602, 0.0
  %vm5149 = vcmp.gt.f32.partialorder %v4605, 0.0
  %vm5150 = vcmp.gt.f32.partialorder %v4610, 0.0
  %vm5151 = vcmp.gt.f32.partialorder %v4613, 0.0
  %vm5152 = vcmp.gt.f32.partialorder %v4618, 0.0
  %vm5153 = vcmp.gt.f32.partialorder %v4621, 0.0
  %vm5154 = vcmp.gt.f32.partialorder %v4626, 0.0
  %vm5155 = vcmp.gt.f32.partialorder %v4629, 0.0
  %vm5156 = vcmp.gt.f32.partialorder %v4634, 0.0
  %vm5157 = vcmp.gt.f32.partialorder %v4637, 0.0
  %vm5158 = vcmp.gt.f32.partialorder %v4642, 0.0
  %vm5159 = vcmp.gt.f32.partialorder %v4645, 0.0
  %v5160 = vsel %vm5096, %v4394, %v4969
  %v5161 = vsel %vm5097, %v4397, %v4971
  %v5162 = vsel %vm5098, %v4402, %v4973
  %v5163 = vsel %vm5099, %v4405, %v4975
  %v5164 = vsel %vm5100, %v4410, %v4977
  %v5165 = vsel %vm5101, %v4413, %v4979
  %v5166 = vsel %vm5102, %v4418, %v4981
  %v5167 = vsel %vm5103, %v4421, %v4983
  %v5168 = vsel %vm5104, %v4426, %v4985
  %v5169 = vsel %vm5105, %v4429, %v4987
  %v5170 = vsel %vm5106, %v4434, %v4989
  %v5171 = vsel %vm5107, %v4437, %v4991
  %v5172 = vsel %vm5108, %v4442, %v4993
  %v5173 = vsel %vm5109, %v4445, %v4995
  %v5174 = vsel %vm5110, %v4450, %v4997
  %v5175 = vsel %vm5111, %v4453, %v4999
  %v5176 = vsel %vm5112, %v4458, %v5001
  %v5177 = vsel %vm5113, %v4461, %v5003
  %v5178 = vsel %vm5114, %v4466, %v5005
  %v5179 = vsel %vm5115, %v4469, %v5007
  %v5180 = vsel %vm5116, %v4474, %v5009
  %v5181 = vsel %vm5117, %v4477, %v5011
  %v5182 = vsel %vm5118, %v4482, %v5013
  %v5183 = vsel %vm5119, %v4485, %v5015
  %v5184 = vsel %vm5120, %v4490, %v5017
  %v5185 = vsel %vm5121, %v4493, %v5019
  %v5186 = vsel %vm5122, %v4498, %v5021
  %v5187 = vsel %vm5123, %v4501, %v5023
  %v5188 = vsel %vm5124, %v4506, %v5025
  %v5189 = vsel %vm5125, %v4509, %v5027
  %v5190 = vsel %vm5126, %v4514, %v5029
  %v5191 = vsel %vm5127, %v4517, %v5031
  %v5192 = vsel %vm5128, %v4522, %v5033
  %v5193 = vsel %vm5129, %v4525, %v5035
  %v5194 = vsel %vm5130, %v4530, %v5037
  %v5195 = vsel %vm5131, %v4533, %v5039
  %v5196 = vsel %vm5132, %v4538, %v5041
  %v5197 = vsel %vm5133, %v4541, %v5043
  %v5198 = vsel %vm5134, %v4546, %v5045
  %v5199 = vsel %vm5135, %v4549, %v5047
  %v5200 = vsel %vm5136, %v4554, %v5049
  %v5201 = vsel %vm5137, %v4557, %v5051
  %v5202 = vsel %vm5138, %v4562, %v5053
  %v5203 = vsel %vm5139, %v4565, %v5055
  %v5204 = vsel %vm5140, %v4570, %v5057
  %v5205 = vsel %vm5141, %v4573, %v5059
  %v5206 = vsel %vm5142, %v4578, %v5061
  %v5207 = vsel %vm5143, %v4581, %v5063
  %v5208 = vsel %vm5144, %v4586, %v5065
  %v5209 = vsel %vm5145, %v4589, %v5067
  %v5210 = vsel %vm5146, %v4594, %v5069
  %v5211 = vsel %vm5147, %v4597, %v5071
  %v5212 = vsel %vm5148, %v4602, %v5073
  %v5213 = vsel %vm5149, %v4605, %v5075
  %v5214 = vsel %vm5150, %v4610, %v5077
  %v5215 = vsel %vm5151, %v4613, %v5079
  %v5216 = vsel %vm5152, %v4618, %v5081
  %v5217 = vsel %vm5153, %v4621, %v5083
  %v5218 = vsel %vm5154, %v4626, %v5085
  %v5219 = vsel %vm5155, %v4629, %v5087
  %v5220 = vsel %vm5156, %v4634, %v5089
  %v5221 = vsel %vm5157, %v4637, %v5091
  %v5222 = vsel %vm5158, %v4642, %v5093
  %v5223 = vsel %vm5159, %v4645, %v5095
  %vm5224 = vcmask 261120
  %5225 = vst.msk [vmem:[#allocation2] sm:$0xff] %vm5224, %v5160
  %5226 = vst.msk [vmem:[#allocation2 + $0x8] sm:$0xff] %vm5224, %v5161
  %5227 = vst.msk [vmem:[#allocation2 + $0x10] sm:$0xff] %vm5224, %v5162
  %5228 = vst.msk [vmem:[#allocation2 + $0x18] sm:$0xff] %vm5224, %v5163
  %5229 = vst.msk [vmem:[#allocation2 + $0x20] sm:$0xff] %vm5224, %v5164
  %5230 = vst.msk [vmem:[#allocation2 + $0x28] sm:$0xff] %vm5224, %v5165
  %5231 = vst.msk [vmem:[#allocation2 + $0x30] sm:$0xff] %vm5224, %v5166
  %5232 = vst.msk [vmem:[#allocation2 + $0x38] sm:$0xff] %vm5224, %v5167
  %5233 = vst.msk [vmem:[#allocation2 + $0x40] sm:$0xff] %vm5224, %v5168
  %5234 = vst.msk [vmem:[#allocation2 + $0x48] sm:$0xff] %vm5224, %v5169
  %5235 = vst.msk [vmem:[#allocation2 + $0x50] sm:$0xff] %vm5224, %v5170
  %5236 = vst.msk [vmem:[#allocation2 + $0x58] sm:$0xff] %vm5224, %v5171
  %5237 = vst.msk [vmem:[#allocation2 + $0x60] sm:$0xff] %vm5224, %v5172
  %5238 = vst.msk [vmem:[#allocation2 + $0x68] sm:$0xff] %vm5224, %v5173
  %5239 = vst.msk [vmem:[#allocation2 + $0x70] sm:$0xff] %vm5224, %v5174
  %5240 = vst.msk [vmem:[#allocation2 + $0x78] sm:$0xff] %vm5224, %v5175
  %5241 = vst.msk [vmem:[#allocation2 + $0x80] sm:$0xff] %vm5224, %v5176
  %5242 = vst.msk [vmem:[#allocation2 + $0x88] sm:$0xff] %vm5224, %v5177
  %5243 = vst.msk [vmem:[#allocation2 + $0x90] sm:$0xff] %vm5224, %v5178
  %5244 = vst.msk [vmem:[#allocation2 + $0x98] sm:$0xff] %vm5224, %v5179
  %5245 = vst.msk [vmem:[#allocation2 + $0xa0] sm:$0xff] %vm5224, %v5180
  %5246 = vst.msk [vmem:[#allocation2 + $0xa8] sm:$0xff] %vm5224, %v5181
  %5247 = vst.msk [vmem:[#allocation2 + $0xb0] sm:$0xff] %vm5224, %v5182
  %5248 = vst.msk [vmem:[#allocation2 + $0xb8] sm:$0xff] %vm5224, %v5183
  %5249 = vst.msk [vmem:[#allocation2 + $0xc0] sm:$0xff] %vm5224, %v5184
  %5250 = vst.msk [vmem:[#allocation2 + $0xc8] sm:$0xff] %vm5224, %v5185
  %5251 = vst.msk [vmem:[#allocation2 + $0xd0] sm:$0xff] %vm5224, %v5186
  %5252 = vst.msk [vmem:[#allocation2 + $0xd8] sm:$0xff] %vm5224, %v5187
  %5253 = vst.msk [vmem:[#allocation2 + $0xe0] sm:$0xff] %vm5224, %v5188
  %5254 = vst.msk [vmem:[#allocation2 + $0xe8] sm:$0xff] %vm5224, %v5189
  %5255 = vst.msk [vmem:[#allocation2 + $0xf0] sm:$0xff] %vm5224, %v5190
  %5256 = vst.msk [vmem:[#allocation2 + $0xf8] sm:$0xff] %vm5224, %v5191
  %5257 = vst.msk [vmem:[#allocation2 + $0x100] sm:$0xff] %vm5224, %v5192
  %5258 = vst.msk [vmem:[#allocation2 + $0x108] sm:$0xff] %vm5224, %v5193
  %5259 = vst.msk [vmem:[#allocation2 + $0x110] sm:$0xff] %vm5224, %v5194
  %5260 = vst.msk [vmem:[#allocation2 + $0x118] sm:$0xff] %vm5224, %v5195
  %5261 = vst.msk [vmem:[#allocation2 + $0x120] sm:$0xff] %vm5224, %v5196
  %5262 = vst.msk [vmem:[#allocation2 + $0x128] sm:$0xff] %vm5224, %v5197
  %5263 = vst.msk [vmem:[#allocation2 + $0x130] sm:$0xff] %vm5224, %v5198
  %5264 = vst.msk [vmem:[#allocation2 + $0x138] sm:$0xff] %vm5224, %v5199
  %5265 = vst.msk [vmem:[#allocation2 + $0x140] sm:$0xff] %vm5224, %v5200
  %5266 = vst.msk [vmem:[#allocation2 + $0x148] sm:$0xff] %vm5224, %v5201
  %5267 = vst.msk [vmem:[#allocation2 + $0x150] sm:$0xff] %vm5224, %v5202
  %5268 = vst.msk [vmem:[#allocation2 + $0x158] sm:$0xff] %vm5224, %v5203
  %5269 = vst.msk [vmem:[#allocation2 + $0x160] sm:$0xff] %vm5224, %v5204
  %5270 = vst.msk [vmem:[#allocation2 + $0x168] sm:$0xff] %vm5224, %v5205
  %5271 = vst.msk [vmem:[#allocation2 + $0x170] sm:$0xff] %vm5224, %v5206
  %5272 = vst.msk [vmem:[#allocation2 + $0x178] sm:$0xff] %vm5224, %v5207
  %5273 = vst.msk [vmem:[#allocation2 + $0x180] sm:$0xff] %vm5224, %v5208
  %5274 = vst.msk [vmem:[#allocation2 + $0x188] sm:$0xff] %vm5224, %v5209
  %5275 = vst.msk [vmem:[#allocation2 + $0x190] sm:$0xff] %vm5224, %v5210
  %5276 = vst.msk [vmem:[#allocation2 + $0x198] sm:$0xff] %vm5224, %v5211
  %5277 = vst.msk [vmem:[#allocation2 + $0x1a0] sm:$0xff] %vm5224, %v5212
  %5278 = vst.msk [vmem:[#allocation2 + $0x1a8] sm:$0xff] %vm5224, %v5213
  %5279 = vst.msk [vmem:[#allocation2 + $0x1b0] sm:$0xff] %vm5224, %v5214
  %5280 = vst.msk [vmem:[#allocation2 + $0x1b8] sm:$0xff] %vm5224, %v5215
  %5281 = vst.msk [vmem:[#allocation2 + $0x1c0] sm:$0xff] %vm5224, %v5216
  %5282 = vst.msk [vmem:[#allocation2 + $0x1c8] sm:$0xff] %vm5224, %v5217
  %5283 = vst.msk [vmem:[#allocation2 + $0x1d0] sm:$0xff] %vm5224, %v5218
  %5284 = vst.msk [vmem:[#allocation2 + $0x1d8] sm:$0xff] %vm5224, %v5219
  %5285 = vst.msk [vmem:[#allocation2 + $0x1e0] sm:$0xff] %vm5224, %v5220
  %5286 = vst.msk [vmem:[#allocation2 + $0x1e8] sm:$0xff] %vm5224, %v5221
  %5287 = vst.msk [vmem:[#allocation2 + $0x1f0] sm:$0xff] %vm5224, %v5222
  %5288 = vst.msk [vmem:[#allocation2 + $0x1f8] sm:$0xff] %vm5224, %v5223
  %v5289 = vld [vmem:[#allocation2] sm:$0xff]
  %5290 = vst.msk [vmem:[#allocation3] sm:$0xff] %vm5224, %v5289
  %v5291 = vld [vmem:[#allocation2 + $0x8] sm:$0xff]
  %5293 = vrot.lane.b32.xlu0 %v5291, 32
  %v5294 = vpop.permute.xlu0 %5293
  %vm5296 = vcmask 523520
  %5297 = vst.msk [vmem:[#allocation3] sm:$0xff] %vm5296, %v5294
  %v5298 = vld [vmem:[#allocation2 + $0x10] sm:$0xff]
  %5300 = vrot.lane.b32.xlu0 %v5298, 64
  %v5301 = vpop.permute.xlu0 %5300
  %vm5303 = vcmask 785920
  %5304 = vst.msk [vmem:[#allocation3] sm:$0xff] %vm5303, %v5301
  %v5305 = vld [vmem:[#allocation2 + $0x18] sm:$0xff]
  %5307 = vrot.lane.b32.xlu0 %v5305, 96
  %v5308 = vpop.permute.xlu0 %5307
  %vm5310 = vcmask 1048320
  %5311 = vst.msk [vmem:[#allocation3] sm:$0xff] %vm5310, %v5308
  %v5312 = vld [vmem:[#allocation2 + $0x20] sm:$0xff]
  %5313 = vst.msk [vmem:[#allocation3 + $0x8] sm:$0xff] %vm5224, %v5312
  %v5314 = vld [vmem:[#allocation2 + $0x28] sm:$0xff]
  %5316 = vrot.lane.b32.xlu0 %v5314, 32
  %v5317 = vpop.permute.xlu0 %5316
  %5319 = vst.msk [vmem:[#allocation3 + $0x8] sm:$0xff] %vm5296, %v5317
  %v5320 = vld [vmem:[#allocation2 + $0x30] sm:$0xff]
  %5322 = vrot.lane.b32.xlu0 %v5320, 64
  %v5323 = vpop.permute.xlu0 %5322
  %5325 = vst.msk [vmem:[#allocation3 + $0x8] sm:$0xff] %vm5303, %v5323
  %v5326 = vld [vmem:[#allocation2 + $0x38] sm:$0xff]
  %5328 = vrot.lane.b32.xlu0 %v5326, 96
  %v5329 = vpop.permute.xlu0 %5328
  %5331 = vst.msk [vmem:[#allocation3 + $0x8] sm:$0xff] %vm5310, %v5329
  %v5332 = vld [vmem:[#allocation2 + $0x40] sm:$0xff]
  %5333 = vst.msk [vmem:[#allocation3 + $0x10] sm:$0xff] %vm5224, %v5332
  %v5334 = vld [vmem:[#allocation2 + $0x48] sm:$0xff]
  %5336 = vrot.lane.b32.xlu0 %v5334, 32
  %v5337 = vpop.permute.xlu0 %5336
  %5339 = vst.msk [vmem:[#allocation3 + $0x10] sm:$0xff] %vm5296, %v5337
  %v5340 = vld [vmem:[#allocation2 + $0x50] sm:$0xff]
  %5342 = vrot.lane.b32.xlu0 %v5340, 64
  %v5343 = vpop.permute.xlu0 %5342
  %5345 = vst.msk [vmem:[#allocation3 + $0x10] sm:$0xff] %vm5303, %v5343
  %v5346 = vld [vmem:[#allocation2 + $0x58] sm:$0xff]
  %5348 = vrot.lane.b32.xlu0 %v5346, 96
  %v5349 = vpop.permute.xlu0 %5348
  %5351 = vst.msk [vmem:[#allocation3 + $0x10] sm:$0xff] %vm5310, %v5349
  %v5352 = vld [vmem:[#allocation2 + $0x60] sm:$0xff]
  %5353 = vst.msk [vmem:[#allocation3 + $0x18] sm:$0xff] %vm5224, %v5352
  %v5354 = vld [vmem:[#allocation2 + $0x68] sm:$0xff]
  %5356 = vrot.lane.b32.xlu0 %v5354, 32
  %v5357 = vpop.permute.xlu0 %5356
  %5359 = vst.msk [vmem:[#allocation3 + $0x18] sm:$0xff] %vm5296, %v5357
  %v5360 = vld [vmem:[#allocation2 + $0x70] sm:$0xff]
  %5362 = vrot.lane.b32.xlu0 %v5360, 64
  %v5363 = vpop.permute.xlu0 %5362
  %5365 = vst.msk [vmem:[#allocation3 + $0x18] sm:$0xff] %vm5303, %v5363
  %v5366 = vld [vmem:[#allocation2 + $0x78] sm:$0xff]
  %5368 = vrot.lane.b32.xlu0 %v5366, 96
  %v5369 = vpop.permute.xlu0 %5368
  %5371 = vst.msk [vmem:[#allocation3 + $0x18] sm:$0xff] %vm5310, %v5369
  %v5372 = vld [vmem:[#allocation2 + $0x80] sm:$0xff]
  %5373 = vst.msk [vmem:[#allocation3 + $0x20] sm:$0xff] %vm5224, %v5372
  %v5374 = vld [vmem:[#allocation2 + $0x88] sm:$0xff]
  %5376 = vrot.lane.b32.xlu0 %v5374, 32
  %v5377 = vpop.permute.xlu0 %5376
  %5379 = vst.msk [vmem:[#allocation3 + $0x20] sm:$0xff] %vm5296, %v5377
  %v5380 = vld [vmem:[#allocation2 + $0x90] sm:$0xff]
  %5382 = vrot.lane.b32.xlu0 %v5380, 64
  %v5383 = vpop.permute.xlu0 %5382
  %5385 = vst.msk [vmem:[#allocation3 + $0x20] sm:$0xff] %vm5303, %v5383
  %v5386 = vld [vmem:[#allocation2 + $0x98] sm:$0xff]
  %5388 = vrot.lane.b32.xlu0 %v5386, 96
  %v5389 = vpop.permute.xlu0 %5388
  %5391 = vst.msk [vmem:[#allocation3 + $0x20] sm:$0xff] %vm5310, %v5389
  %v5392 = vld [vmem:[#allocation2 + $0xa0] sm:$0xff]
  %5393 = vst.msk [vmem:[#allocation3 + $0x28] sm:$0xff] %vm5224, %v5392
  %v5394 = vld [vmem:[#allocation2 + $0xa8] sm:$0xff]
  %5396 = vrot.lane.b32.xlu0 %v5394, 32
  %v5397 = vpop.permute.xlu0 %5396
  %5399 = vst.msk [vmem:[#allocation3 + $0x28] sm:$0xff] %vm5296, %v5397
  %v5400 = vld [vmem:[#allocation2 + $0xb0] sm:$0xff]
  %5402 = vrot.lane.b32.xlu0 %v5400, 64
  %v5403 = vpop.permute.xlu0 %5402
  %5405 = vst.msk [vmem:[#allocation3 + $0x28] sm:$0xff] %vm5303, %v5403
  %v5406 = vld [vmem:[#allocation2 + $0xb8] sm:$0xff]
  %5408 = vrot.lane.b32.xlu0 %v5406, 96
  %v5409 = vpop.permute.xlu0 %5408
  %5411 = vst.msk [vmem:[#allocation3 + $0x28] sm:$0xff] %vm5310, %v5409
  %v5412 = vld [vmem:[#allocation2 + $0xc0] sm:$0xff]
  %5413 = vst.msk [vmem:[#allocation3 + $0x30] sm:$0xff] %vm5224, %v5412
  %v5414 = vld [vmem:[#allocation2 + $0xc8] sm:$0xff]
  %5416 = vrot.lane.b32.xlu0 %v5414, 32
  %v5417 = vpop.permute.xlu0 %5416
  %5419 = vst.msk [vmem:[#allocation3 + $0x30] sm:$0xff] %vm5296, %v5417
  %v5420 = vld [vmem:[#allocation2 + $0xd0] sm:$0xff]
  %5422 = vrot.lane.b32.xlu0 %v5420, 64
  %v5423 = vpop.permute.xlu0 %5422
  %5425 = vst.msk [vmem:[#allocation3 + $0x30] sm:$0xff] %vm5303, %v5423
  %v5426 = vld [vmem:[#allocation2 + $0xd8] sm:$0xff]
  %5428 = vrot.lane.b32.xlu0 %v5426, 96
  %v5429 = vpop.permute.xlu0 %5428
  %5431 = vst.msk [vmem:[#allocation3 + $0x30] sm:$0xff] %vm5310, %v5429
  %v5432 = vld [vmem:[#allocation2 + $0xe0] sm:$0xff]
  %5433 = vst.msk [vmem:[#allocation3 + $0x38] sm:$0xff] %vm5224, %v5432
  %v5434 = vld [vmem:[#allocation2 + $0xe8] sm:$0xff]
  %5436 = vrot.lane.b32.xlu0 %v5434, 32
  %v5437 = vpop.permute.xlu0 %5436
  %5439 = vst.msk [vmem:[#allocation3 + $0x38] sm:$0xff] %vm5296, %v5437
  %v5440 = vld [vmem:[#allocation2 + $0xf0] sm:$0xff]
  %5442 = vrot.lane.b32.xlu0 %v5440, 64
  %v5443 = vpop.permute.xlu0 %5442
  %5445 = vst.msk [vmem:[#allocation3 + $0x38] sm:$0xff] %vm5303, %v5443
  %v5446 = vld [vmem:[#allocation2 + $0xf8] sm:$0xff]
  %5448 = vrot.lane.b32.xlu0 %v5446, 96
  %v5449 = vpop.permute.xlu0 %5448
  %5451 = vst.msk [vmem:[#allocation3 + $0x38] sm:$0xff] %vm5310, %v5449
  %v5452 = vld [vmem:[#allocation2 + $0x100] sm:$0xff]
  %5453 = vst.msk [vmem:[#allocation3 + $0x40] sm:$0xff] %vm5224, %v5452
  %v5454 = vld [vmem:[#allocation2 + $0x108] sm:$0xff]
  %5456 = vrot.lane.b32.xlu0 %v5454, 32
  %v5457 = vpop.permute.xlu0 %5456
  %5459 = vst.msk [vmem:[#allocation3 + $0x40] sm:$0xff] %vm5296, %v5457
  %v5460 = vld [vmem:[#allocation2 + $0x110] sm:$0xff]
  %5462 = vrot.lane.b32.xlu0 %v5460, 64
  %v5463 = vpop.permute.xlu0 %5462
  %5465 = vst.msk [vmem:[#allocation3 + $0x40] sm:$0xff] %vm5303, %v5463
  %v5466 = vld [vmem:[#allocation2 + $0x118] sm:$0xff]
  %5468 = vrot.lane.b32.xlu0 %v5466, 96
  %v5469 = vpop.permute.xlu0 %5468
  %5471 = vst.msk [vmem:[#allocation3 + $0x40] sm:$0xff] %vm5310, %v5469
  %v5472 = vld [vmem:[#allocation2 + $0x120] sm:$0xff]
  %5473 = vst.msk [vmem:[#allocation3 + $0x48] sm:$0xff] %vm5224, %v5472
  %v5474 = vld [vmem:[#allocation2 + $0x128] sm:$0xff]
  %5476 = vrot.lane.b32.xlu0 %v5474, 32
  %v5477 = vpop.permute.xlu0 %5476
  %5479 = vst.msk [vmem:[#allocation3 + $0x48] sm:$0xff] %vm5296, %v5477
  %v5480 = vld [vmem:[#allocation2 + $0x130] sm:$0xff]
  %5482 = vrot.lane.b32.xlu0 %v5480, 64
  %v5483 = vpop.permute.xlu0 %5482
  %5485 = vst.msk [vmem:[#allocation3 + $0x48] sm:$0xff] %vm5303, %v5483
  %v5486 = vld [vmem:[#allocation2 + $0x138] sm:$0xff]
  %5488 = vrot.lane.b32.xlu0 %v5486, 96
  %v5489 = vpop.permute.xlu0 %5488
  %5491 = vst.msk [vmem:[#allocation3 + $0x48] sm:$0xff] %vm5310, %v5489
  %v5492 = vld [vmem:[#allocation2 + $0x140] sm:$0xff]
  %5493 = vst.msk [vmem:[#allocation3 + $0x50] sm:$0xff] %vm5224, %v5492
  %v5494 = vld [vmem:[#allocation2 + $0x148] sm:$0xff]
  %5496 = vrot.lane.b32.xlu0 %v5494, 32
  %v5497 = vpop.permute.xlu0 %5496
  %5499 = vst.msk [vmem:[#allocation3 + $0x50] sm:$0xff] %vm5296, %v5497
  %v5500 = vld [vmem:[#allocation2 + $0x150] sm:$0xff]
  %5502 = vrot.lane.b32.xlu0 %v5500, 64
  %v5503 = vpop.permute.xlu0 %5502
  %5505 = vst.msk [vmem:[#allocation3 + $0x50] sm:$0xff] %vm5303, %v5503
  %v5506 = vld [vmem:[#allocation2 + $0x158] sm:$0xff]
  %5508 = vrot.lane.b32.xlu0 %v5506, 96
  %v5509 = vpop.permute.xlu0 %5508
  %5511 = vst.msk [vmem:[#allocation3 + $0x50] sm:$0xff] %vm5310, %v5509
  %v5512 = vld [vmem:[#allocation2 + $0x160] sm:$0xff]
  %5513 = vst.msk [vmem:[#allocation3 + $0x58] sm:$0xff] %vm5224, %v5512
  %v5514 = vld [vmem:[#allocation2 + $0x168] sm:$0xff]
  %5516 = vrot.lane.b32.xlu0 %v5514, 32
  %v5517 = vpop.permute.xlu0 %5516
  %5519 = vst.msk [vmem:[#allocation3 + $0x58] sm:$0xff] %vm5296, %v5517
  %v5520 = vld [vmem:[#allocation2 + $0x170] sm:$0xff]
  %5522 = vrot.lane.b32.xlu0 %v5520, 64
  %v5523 = vpop.permute.xlu0 %5522
  %5525 = vst.msk [vmem:[#allocation3 + $0x58] sm:$0xff] %vm5303, %v5523
  %v5526 = vld [vmem:[#allocation2 + $0x178] sm:$0xff]
  %5528 = vrot.lane.b32.xlu0 %v5526, 96
  %v5529 = vpop.permute.xlu0 %5528
  %5531 = vst.msk [vmem:[#allocation3 + $0x58] sm:$0xff] %vm5310, %v5529
  %v5532 = vld [vmem:[#allocation2 + $0x180] sm:$0xff]
  %5533 = vst.msk [vmem:[#allocation3 + $0x60] sm:$0xff] %vm5224, %v5532
  %v5534 = vld [vmem:[#allocation2 + $0x188] sm:$0xff]
  %5536 = vrot.lane.b32.xlu0 %v5534, 32
  %v5537 = vpop.permute.xlu0 %5536
  %5539 = vst.msk [vmem:[#allocation3 + $0x60] sm:$0xff] %vm5296, %v5537
  %v5540 = vld [vmem:[#allocation2 + $0x190] sm:$0xff]
  %5542 = vrot.lane.b32.xlu0 %v5540, 64
  %v5543 = vpop.permute.xlu0 %5542
  %5545 = vst.msk [vmem:[#allocation3 + $0x60] sm:$0xff] %vm5303, %v5543
  %v5546 = vld [vmem:[#allocation2 + $0x198] sm:$0xff]
  %5548 = vrot.lane.b32.xlu0 %v5546, 96
  %v5549 = vpop.permute.xlu0 %5548
  %5551 = vst.msk [vmem:[#allocation3 + $0x60] sm:$0xff] %vm5310, %v5549
  %v5552 = vld [vmem:[#allocation2 + $0x1a0] sm:$0xff]
  %5553 = vst.msk [vmem:[#allocation3 + $0x68] sm:$0xff] %vm5224, %v5552
  %v5554 = vld [vmem:[#allocation2 + $0x1a8] sm:$0xff]
  %5556 = vrot.lane.b32.xlu0 %v5554, 32
  %v5557 = vpop.permute.xlu0 %5556
  %5559 = vst.msk [vmem:[#allocation3 + $0x68] sm:$0xff] %vm5296, %v5557
  %v5560 = vld [vmem:[#allocation2 + $0x1b0] sm:$0xff]
  %5562 = vrot.lane.b32.xlu0 %v5560, 64
  %v5563 = vpop.permute.xlu0 %5562
  %5565 = vst.msk [vmem:[#allocation3 + $0x68] sm:$0xff] %vm5303, %v5563
  %v5566 = vld [vmem:[#allocation2 + $0x1b8] sm:$0xff]
  %5568 = vrot.lane.b32.xlu0 %v5566, 96
  %v5569 = vpop.permute.xlu0 %5568
  %5571 = vst.msk [vmem:[#allocation3 + $0x68] sm:$0xff] %vm5310, %v5569
  %v5572 = vld [vmem:[#allocation2 + $0x1c0] sm:$0xff]
  %5573 = vst.msk [vmem:[#allocation3 + $0x70] sm:$0xff] %vm5224, %v5572
  %v5574 = vld [vmem:[#allocation2 + $0x1c8] sm:$0xff]
  %5576 = vrot.lane.b32.xlu0 %v5574, 32
  %v5577 = vpop.permute.xlu0 %5576
  %5579 = vst.msk [vmem:[#allocation3 + $0x70] sm:$0xff] %vm5296, %v5577
  %v5580 = vld [vmem:[#allocation2 + $0x1d0] sm:$0xff]
  %5582 = vrot.lane.b32.xlu0 %v5580, 64
  %v5583 = vpop.permute.xlu0 %5582
  %5585 = vst.msk [vmem:[#allocation3 + $0x70] sm:$0xff] %vm5303, %v5583
  %v5586 = vld [vmem:[#allocation2 + $0x1d8] sm:$0xff]
  %5588 = vrot.lane.b32.xlu0 %v5586, 96
  %v5589 = vpop.permute.xlu0 %5588
  %5591 = vst.msk [vmem:[#allocation3 + $0x70] sm:$0xff] %vm5310, %v5589
  %v5592 = vld [vmem:[#allocation2 + $0x1e0] sm:$0xff]
  %5593 = vst.msk [vmem:[#allocation3 + $0x78] sm:$0xff] %vm5224, %v5592
  %v5594 = vld [vmem:[#allocation2 + $0x1e8] sm:$0xff]
  %5596 = vrot.lane.b32.xlu0 %v5594, 32
  %v5597 = vpop.permute.xlu0 %5596
  %5599 = vst.msk [vmem:[#allocation3 + $0x78] sm:$0xff] %vm5296, %v5597
  %v5600 = vld [vmem:[#allocation2 + $0x1f0] sm:$0xff]
  %5602 = vrot.lane.b32.xlu0 %v5600, 64
  %v5603 = vpop.permute.xlu0 %5602
  %5605 = vst.msk [vmem:[#allocation3 + $0x78] sm:$0xff] %vm5303, %v5603
  %v5606 = vld [vmem:[#allocation2 + $0x1f8] sm:$0xff]
  %5608 = vrot.lane.b32.xlu0 %v5606, 96
  %v5609 = vpop.permute.xlu0 %5608
  %5611 = vst.msk [vmem:[#allocation3 + $0x78] sm:$0xff] %vm5310, %v5609
  %v5612 = vld [vmem:[#allocation3] sm:$0xff]
  %v5613 = vld [vmem:[#allocation3 + $0x8] sm:$0xff]
  %v5614 = vld [vmem:[#allocation3 + $0x10] sm:$0xff]
  %v5615 = vld [vmem:[#allocation3 + $0x18] sm:$0xff]
  %v5616 = vld [vmem:[#allocation3 + $0x20] sm:$0xff]
  %v5617 = vld [vmem:[#allocation3 + $0x28] sm:$0xff]
  %v5618 = vld [vmem:[#allocation3 + $0x30] sm:$0xff]
  %v5619 = vld [vmem:[#allocation3 + $0x38] sm:$0xff]
  %v5620 = vld [vmem:[#allocation3 + $0x40] sm:$0xff]
  %v5621 = vld [vmem:[#allocation3 + $0x48] sm:$0xff]
  %v5622 = vld [vmem:[#allocation3 + $0x50] sm:$0xff]
  %v5623 = vld [vmem:[#allocation3 + $0x58] sm:$0xff]
  %v5624 = vld [vmem:[#allocation3 + $0x60] sm:$0xff]
  %v5625 = vld [vmem:[#allocation3 + $0x68] sm:$0xff]
  %v5626 = vld [vmem:[#allocation3 + $0x70] sm:$0xff]
  %v5627 = vld [vmem:[#allocation3 + $0x78] sm:$0xff]
  %v5628 = vpack.c.bf16 %v5612, %v5612
  %v5629 = vpack.c.bf16 %v5613, %v5613
  %v5630 = vpack.c.bf16 %v5614, %v5614
  %v5631 = vpack.c.bf16 %v5615, %v5615
  %v5632 = vpack.c.bf16 %v5616, %v5616
  %v5633 = vpack.c.bf16 %v5617, %v5617
  %v5634 = vpack.c.bf16 %v5618, %v5618
  %v5635 = vpack.c.bf16 %v5619, %v5619
  %v5636 = vpack.c.bf16 %v5620, %v5620
  %v5637 = vpack.c.bf16 %v5621, %v5621
  %v5638 = vpack.c.bf16 %v5622, %v5622
  %v5639 = vpack.c.bf16 %v5623, %v5623
  %v5640 = vpack.c.bf16 %v5624, %v5624
  %v5641 = vpack.c.bf16 %v5625, %v5625
  %v5642 = vpack.c.bf16 %v5626, %v5626
  %v5643 = vpack.c.bf16 %v5627, %v5627
  %v5644 = vld [vmem:[%s3] sm:$0xff]
  %v5645 = vld [vmem:[%s3 + $0x8] sm:$0xff]
  %v5646 = vld [vmem:[%s3 + $0x10] sm:$0xff]
  %v5647 = vld [vmem:[%s3 + $0x18] sm:$0xff]
  %v5648 = vld [vmem:[%s3 + $0x20] sm:$0xff]
  %v5649 = vld [vmem:[%s3 + $0x28] sm:$0xff]
  %v5650 = vld [vmem:[%s3 + $0x30] sm:$0xff]
  %v5651 = vld [vmem:[%s3 + $0x38] sm:$0xff]
  %v5652 = vld [vmem:[%s3 + $0x40] sm:$0xff]
  %v5653 = vld [vmem:[%s3 + $0x48] sm:$0xff]
  %v5654 = vld [vmem:[%s3 + $0x50] sm:$0xff]
  %v5655 = vld [vmem:[%s3 + $0x58] sm:$0xff]
  %v5656 = vld [vmem:[%s3 + $0x60] sm:$0xff]
  %v5657 = vld [vmem:[%s3 + $0x68] sm:$0xff]
  %v5658 = vld [vmem:[%s3 + $0x70] sm:$0xff]
  %v5659 = vld [vmem:[%s3 + $0x78] sm:$0xff]
  %v5660 = vld [vmem:[%s3 + $0x80] sm:$0xff]
  %v5661 = vld [vmem:[%s3 + $0x88] sm:$0xff]
  %v5662 = vld [vmem:[%s3 + $0x90] sm:$0xff]
  %v5663 = vld [vmem:[%s3 + $0x98] sm:$0xff]
  %v5664 = vld [vmem:[%s3 + $0xa0] sm:$0xff]
  %v5665 = vld [vmem:[%s3 + $0xa8] sm:$0xff]
  %v5666 = vld [vmem:[%s3 + $0xb0] sm:$0xff]
  %v5667 = vld [vmem:[%s3 + $0xb8] sm:$0xff]
  %v5668 = vld [vmem:[%s3 + $0xc0] sm:$0xff]
  %v5669 = vld [vmem:[%s3 + $0xc8] sm:$0xff]
  %v5670 = vld [vmem:[%s3 + $0xd0] sm:$0xff]
  %v5671 = vld [vmem:[%s3 + $0xd8] sm:$0xff]
  %v5672 = vld [vmem:[%s3 + $0xe0] sm:$0xff]
  %v5673 = vld [vmem:[%s3 + $0xe8] sm:$0xff]
  %v5674 = vld [vmem:[%s3 + $0xf0] sm:$0xff]
  %v5675 = vld [vmem:[%s3 + $0xf8] sm:$0xff]
  %v5676 = vld [vmem:[%s3 + $0x100] sm:$0xff]
  %v5677 = vld [vmem:[%s3 + $0x108] sm:$0xff]
  %v5678 = vld [vmem:[%s3 + $0x110] sm:$0xff]
  %v5679 = vld [vmem:[%s3 + $0x118] sm:$0xff]
  %v5680 = vld [vmem:[%s3 + $0x120] sm:$0xff]
  %v5681 = vld [vmem:[%s3 + $0x128] sm:$0xff]
  %v5682 = vld [vmem:[%s3 + $0x130] sm:$0xff]
  %v5683 = vld [vmem:[%s3 + $0x138] sm:$0xff]
  %v5684 = vld [vmem:[%s3 + $0x140] sm:$0xff]
  %v5685 = vld [vmem:[%s3 + $0x148] sm:$0xff]
  %v5686 = vld [vmem:[%s3 + $0x150] sm:$0xff]
  %v5687 = vld [vmem:[%s3 + $0x158] sm:$0xff]
  %v5688 = vld [vmem:[%s3 + $0x160] sm:$0xff]
  %v5689 = vld [vmem:[%s3 + $0x168] sm:$0xff]
  %v5690 = vld [vmem:[%s3 + $0x170] sm:$0xff]
  %v5691 = vld [vmem:[%s3 + $0x178] sm:$0xff]
  %v5692 = vld [vmem:[%s3 + $0x180] sm:$0xff]
  %v5693 = vld [vmem:[%s3 + $0x188] sm:$0xff]
  %v5694 = vld [vmem:[%s3 + $0x190] sm:$0xff]
  %v5695 = vld [vmem:[%s3 + $0x198] sm:$0xff]
  %v5696 = vld [vmem:[%s3 + $0x1a0] sm:$0xff]
  %v5697 = vld [vmem:[%s3 + $0x1a8] sm:$0xff]
  %v5698 = vld [vmem:[%s3 + $0x1b0] sm:$0xff]
  %v5699 = vld [vmem:[%s3 + $0x1b8] sm:$0xff]
  %v5700 = vld [vmem:[%s3 + $0x1c0] sm:$0xff]
  %v5701 = vld [vmem:[%s3 + $0x1c8] sm:$0xff]
  %v5702 = vld [vmem:[%s3 + $0x1d0] sm:$0xff]
  %v5703 = vld [vmem:[%s3 + $0x1d8] sm:$0xff]
  %v5704 = vld [vmem:[%s3 + $0x1e0] sm:$0xff]
  %v5705 = vld [vmem:[%s3 + $0x1e8] sm:$0xff]
  %v5706 = vld [vmem:[%s3 + $0x1f0] sm:$0xff]
  %v5707 = vld [vmem:[%s3 + $0x1f8] sm:$0xff]
  %v5708 = vld [vmem:[%s3 + $0x200] sm:$0xff]
  %v5709 = vld [vmem:[%s3 + $0x208] sm:$0xff]
  %v5710 = vld [vmem:[%s3 + $0x210] sm:$0xff]
  %v5711 = vld [vmem:[%s3 + $0x218] sm:$0xff]
  %v5712 = vld [vmem:[%s3 + $0x220] sm:$0xff]
  %v5713 = vld [vmem:[%s3 + $0x228] sm:$0xff]
  %v5714 = vld [vmem:[%s3 + $0x230] sm:$0xff]
  %v5715 = vld [vmem:[%s3 + $0x238] sm:$0xff]
  %v5716 = vld [vmem:[%s3 + $0x240] sm:$0xff]
  %v5717 = vld [vmem:[%s3 + $0x248] sm:$0xff]
  %v5718 = vld [vmem:[%s3 + $0x250] sm:$0xff]
  %v5719 = vld [vmem:[%s3 + $0x258] sm:$0xff]
  %v5720 = vld [vmem:[%s3 + $0x260] sm:$0xff]
  %v5721 = vld [vmem:[%s3 + $0x268] sm:$0xff]
  %v5722 = vld [vmem:[%s3 + $0x270] sm:$0xff]
  %v5723 = vld [vmem:[%s3 + $0x278] sm:$0xff]
  %v5724 = vld [vmem:[%s3 + $0x280] sm:$0xff]
  %v5725 = vld [vmem:[%s3 + $0x288] sm:$0xff]
  %v5726 = vld [vmem:[%s3 + $0x290] sm:$0xff]
  %v5727 = vld [vmem:[%s3 + $0x298] sm:$0xff]
  %v5728 = vld [vmem:[%s3 + $0x2a0] sm:$0xff]
  %v5729 = vld [vmem:[%s3 + $0x2a8] sm:$0xff]
  %v5730 = vld [vmem:[%s3 + $0x2b0] sm:$0xff]
  %v5731 = vld [vmem:[%s3 + $0x2b8] sm:$0xff]
  %v5732 = vld [vmem:[%s3 + $0x2c0] sm:$0xff]
  %v5733 = vld [vmem:[%s3 + $0x2c8] sm:$0xff]
  %v5734 = vld [vmem:[%s3 + $0x2d0] sm:$0xff]
  %v5735 = vld [vmem:[%s3 + $0x2d8] sm:$0xff]
  %v5736 = vld [vmem:[%s3 + $0x2e0] sm:$0xff]
  %v5737 = vld [vmem:[%s3 + $0x2e8] sm:$0xff]
  %v5738 = vld [vmem:[%s3 + $0x2f0] sm:$0xff]
  %v5739 = vld [vmem:[%s3 + $0x2f8] sm:$0xff]
  %v5740 = vld [vmem:[%s3 + $0x300] sm:$0xff]
  %v5741 = vld [vmem:[%s3 + $0x308] sm:$0xff]
  %v5742 = vld [vmem:[%s3 + $0x310] sm:$0xff]
  %v5743 = vld [vmem:[%s3 + $0x318] sm:$0xff]
  %v5744 = vld [vmem:[%s3 + $0x320] sm:$0xff]
  %v5745 = vld [vmem:[%s3 + $0x328] sm:$0xff]
  %v5746 = vld [vmem:[%s3 + $0x330] sm:$0xff]
  %v5747 = vld [vmem:[%s3 + $0x338] sm:$0xff]
  %v5748 = vld [vmem:[%s3 + $0x340] sm:$0xff]
  %v5749 = vld [vmem:[%s3 + $0x348] sm:$0xff]
  %v5750 = vld [vmem:[%s3 + $0x350] sm:$0xff]
  %v5751 = vld [vmem:[%s3 + $0x358] sm:$0xff]
  %v5752 = vld [vmem:[%s3 + $0x360] sm:$0xff]
  %v5753 = vld [vmem:[%s3 + $0x368] sm:$0xff]
  %v5754 = vld [vmem:[%s3 + $0x370] sm:$0xff]
  %v5755 = vld [vmem:[%s3 + $0x378] sm:$0xff]
  %v5756 = vld [vmem:[%s3 + $0x380] sm:$0xff]
  %v5757 = vld [vmem:[%s3 + $0x388] sm:$0xff]
  %v5758 = vld [vmem:[%s3 + $0x390] sm:$0xff]
  %v5759 = vld [vmem:[%s3 + $0x398] sm:$0xff]
  %v5760 = vld [vmem:[%s3 + $0x3a0] sm:$0xff]
  %v5761 = vld [vmem:[%s3 + $0x3a8] sm:$0xff]
  %v5762 = vld [vmem:[%s3 + $0x3b0] sm:$0xff]
  %v5763 = vld [vmem:[%s3 + $0x3b8] sm:$0xff]
  %v5764 = vld [vmem:[%s3 + $0x3c0] sm:$0xff]
  %v5765 = vld [vmem:[%s3 + $0x3c8] sm:$0xff]
  %v5766 = vld [vmem:[%s3 + $0x3d0] sm:$0xff]
  %v5767 = vld [vmem:[%s3 + $0x3d8] sm:$0xff]
  %v5768 = vld [vmem:[%s3 + $0x3e0] sm:$0xff]
  %v5769 = vld [vmem:[%s3 + $0x3e8] sm:$0xff]
  %v5770 = vld [vmem:[%s3 + $0x3f0] sm:$0xff]
  %v5771 = vld [vmem:[%s3 + $0x3f8] sm:$0xff]
  %v5772 = vld [vmem:[%s3 + $0x400] sm:$0xff]
  %v5773 = vld [vmem:[%s3 + $0x408] sm:$0xff]
  %v5774 = vld [vmem:[%s3 + $0x410] sm:$0xff]
  %v5775 = vld [vmem:[%s3 + $0x418] sm:$0xff]
  %v5776 = vld [vmem:[%s3 + $0x420] sm:$0xff]
  %v5777 = vld [vmem:[%s3 + $0x428] sm:$0xff]
  %v5778 = vld [vmem:[%s3 + $0x430] sm:$0xff]
  %v5779 = vld [vmem:[%s3 + $0x438] sm:$0xff]
  %v5780 = vld [vmem:[%s3 + $0x440] sm:$0xff]
  %v5781 = vld [vmem:[%s3 + $0x448] sm:$0xff]
  %v5782 = vld [vmem:[%s3 + $0x450] sm:$0xff]
  %v5783 = vld [vmem:[%s3 + $0x458] sm:$0xff]
  %v5784 = vld [vmem:[%s3 + $0x460] sm:$0xff]
  %v5785 = vld [vmem:[%s3 + $0x468] sm:$0xff]
  %v5786 = vld [vmem:[%s3 + $0x470] sm:$0xff]
  %v5787 = vld [vmem:[%s3 + $0x478] sm:$0xff]
  %v5788 = vld [vmem:[%s3 + $0x480] sm:$0xff]
  %v5789 = vld [vmem:[%s3 + $0x488] sm:$0xff]
  %v5790 = vld [vmem:[%s3 + $0x490] sm:$0xff]
  %v5791 = vld [vmem:[%s3 + $0x498] sm:$0xff]
  %v5792 = vld [vmem:[%s3 + $0x4a0] sm:$0xff]
  %v5793 = vld [vmem:[%s3 + $0x4a8] sm:$0xff]
  %v5794 = vld [vmem:[%s3 + $0x4b0] sm:$0xff]
  %v5795 = vld [vmem:[%s3 + $0x4b8] sm:$0xff]
  %v5796 = vld [vmem:[%s3 + $0x4c0] sm:$0xff]
  %v5797 = vld [vmem:[%s3 + $0x4c8] sm:$0xff]
  %v5798 = vld [vmem:[%s3 + $0x4d0] sm:$0xff]
  %v5799 = vld [vmem:[%s3 + $0x4d8] sm:$0xff]
  %v5800 = vld [vmem:[%s3 + $0x4e0] sm:$0xff]
  %v5801 = vld [vmem:[%s3 + $0x4e8] sm:$0xff]
  %v5802 = vld [vmem:[%s3 + $0x4f0] sm:$0xff]
  %v5803 = vld [vmem:[%s3 + $0x4f8] sm:$0xff]
  %v5804 = vld [vmem:[%s3 + $0x500] sm:$0xff]
  %v5805 = vld [vmem:[%s3 + $0x508] sm:$0xff]
  %v5806 = vld [vmem:[%s3 + $0x510] sm:$0xff]
  %v5807 = vld [vmem:[%s3 + $0x518] sm:$0xff]
  %v5808 = vld [vmem:[%s3 + $0x520] sm:$0xff]
  %v5809 = vld [vmem:[%s3 + $0x528] sm:$0xff]
  %v5810 = vld [vmem:[%s3 + $0x530] sm:$0xff]
  %v5811 = vld [vmem:[%s3 + $0x538] sm:$0xff]
  %v5812 = vld [vmem:[%s3 + $0x540] sm:$0xff]
  %v5813 = vld [vmem:[%s3 + $0x548] sm:$0xff]
  %v5814 = vld [vmem:[%s3 + $0x550] sm:$0xff]
  %v5815 = vld [vmem:[%s3 + $0x558] sm:$0xff]
  %v5816 = vld [vmem:[%s3 + $0x560] sm:$0xff]
  %v5817 = vld [vmem:[%s3 + $0x568] sm:$0xff]
  %v5818 = vld [vmem:[%s3 + $0x570] sm:$0xff]
  %v5819 = vld [vmem:[%s3 + $0x578] sm:$0xff]
  %v5820 = vld [vmem:[%s3 + $0x580] sm:$0xff]
  %v5821 = vld [vmem:[%s3 + $0x588] sm:$0xff]
  %v5822 = vld [vmem:[%s3 + $0x590] sm:$0xff]
  %v5823 = vld [vmem:[%s3 + $0x598] sm:$0xff]
  %v5824 = vld [vmem:[%s3 + $0x5a0] sm:$0xff]
  %v5825 = vld [vmem:[%s3 + $0x5a8] sm:$0xff]
  %v5826 = vld [vmem:[%s3 + $0x5b0] sm:$0xff]
  %v5827 = vld [vmem:[%s3 + $0x5b8] sm:$0xff]
  %v5828 = vld [vmem:[%s3 + $0x5c0] sm:$0xff]
  %v5829 = vld [vmem:[%s3 + $0x5c8] sm:$0xff]
  %v5830 = vld [vmem:[%s3 + $0x5d0] sm:$0xff]
  %v5831 = vld [vmem:[%s3 + $0x5d8] sm:$0xff]
  %v5832 = vld [vmem:[%s3 + $0x5e0] sm:$0xff]
  %v5833 = vld [vmem:[%s3 + $0x5e8] sm:$0xff]
  %v5834 = vld [vmem:[%s3 + $0x5f0] sm:$0xff]
  %v5835 = vld [vmem:[%s3 + $0x5f8] sm:$0xff]
  %v5836 = vld [vmem:[%s3 + $0x600] sm:$0xff]
  %v5837 = vld [vmem:[%s3 + $0x608] sm:$0xff]
  %v5838 = vld [vmem:[%s3 + $0x610] sm:$0xff]
  %v5839 = vld [vmem:[%s3 + $0x618] sm:$0xff]
  %v5840 = vld [vmem:[%s3 + $0x620] sm:$0xff]
  %v5841 = vld [vmem:[%s3 + $0x628] sm:$0xff]
  %v5842 = vld [vmem:[%s3 + $0x630] sm:$0xff]
  %v5843 = vld [vmem:[%s3 + $0x638] sm:$0xff]
  %v5844 = vld [vmem:[%s3 + $0x640] sm:$0xff]
  %v5845 = vld [vmem:[%s3 + $0x648] sm:$0xff]
  %v5846 = vld [vmem:[%s3 + $0x650] sm:$0xff]
  %v5847 = vld [vmem:[%s3 + $0x658] sm:$0xff]
  %v5848 = vld [vmem:[%s3 + $0x660] sm:$0xff]
  %v5849 = vld [vmem:[%s3 + $0x668] sm:$0xff]
  %v5850 = vld [vmem:[%s3 + $0x670] sm:$0xff]
  %v5851 = vld [vmem:[%s3 + $0x678] sm:$0xff]
  %v5852 = vld [vmem:[%s3 + $0x680] sm:$0xff]
  %v5853 = vld [vmem:[%s3 + $0x688] sm:$0xff]
  %v5854 = vld [vmem:[%s3 + $0x690] sm:$0xff]
  %v5855 = vld [vmem:[%s3 + $0x698] sm:$0xff]
  %v5856 = vld [vmem:[%s3 + $0x6a0] sm:$0xff]
  %v5857 = vld [vmem:[%s3 + $0x6a8] sm:$0xff]
  %v5858 = vld [vmem:[%s3 + $0x6b0] sm:$0xff]
  %v5859 = vld [vmem:[%s3 + $0x6b8] sm:$0xff]
  %v5860 = vld [vmem:[%s3 + $0x6c0] sm:$0xff]
  %v5861 = vld [vmem:[%s3 + $0x6c8] sm:$0xff]
  %v5862 = vld [vmem:[%s3 + $0x6d0] sm:$0xff]
  %v5863 = vld [vmem:[%s3 + $0x6d8] sm:$0xff]
  %v5864 = vld [vmem:[%s3 + $0x6e0] sm:$0xff]
  %v5865 = vld [vmem:[%s3 + $0x6e8] sm:$0xff]
  %v5866 = vld [vmem:[%s3 + $0x6f0] sm:$0xff]
  %v5867 = vld [vmem:[%s3 + $0x6f8] sm:$0xff]
  %v5868 = vld [vmem:[%s3 + $0x700] sm:$0xff]
  %v5869 = vld [vmem:[%s3 + $0x708] sm:$0xff]
  %v5870 = vld [vmem:[%s3 + $0x710] sm:$0xff]
  %v5871 = vld [vmem:[%s3 + $0x718] sm:$0xff]
  %v5872 = vld [vmem:[%s3 + $0x720] sm:$0xff]
  %v5873 = vld [vmem:[%s3 + $0x728] sm:$0xff]
  %v5874 = vld [vmem:[%s3 + $0x730] sm:$0xff]
  %v5875 = vld [vmem:[%s3 + $0x738] sm:$0xff]
  %v5876 = vld [vmem:[%s3 + $0x740] sm:$0xff]
  %v5877 = vld [vmem:[%s3 + $0x748] sm:$0xff]
  %v5878 = vld [vmem:[%s3 + $0x750] sm:$0xff]
  %v5879 = vld [vmem:[%s3 + $0x758] sm:$0xff]
  %v5880 = vld [vmem:[%s3 + $0x760] sm:$0xff]
  %v5881 = vld [vmem:[%s3 + $0x768] sm:$0xff]
  %v5882 = vld [vmem:[%s3 + $0x770] sm:$0xff]
  %v5883 = vld [vmem:[%s3 + $0x778] sm:$0xff]
  %v5884 = vld [vmem:[%s3 + $0x780] sm:$0xff]
  %v5885 = vld [vmem:[%s3 + $0x788] sm:$0xff]
  %v5886 = vld [vmem:[%s3 + $0x790] sm:$0xff]
  %v5887 = vld [vmem:[%s3 + $0x798] sm:$0xff]
  %v5888 = vld [vmem:[%s3 + $0x7a0] sm:$0xff]
  %v5889 = vld [vmem:[%s3 + $0x7a8] sm:$0xff]
  %v5890 = vld [vmem:[%s3 + $0x7b0] sm:$0xff]
  %v5891 = vld [vmem:[%s3 + $0x7b8] sm:$0xff]
  %v5892 = vld [vmem:[%s3 + $0x7c0] sm:$0xff]
  %v5893 = vld [vmem:[%s3 + $0x7c8] sm:$0xff]
  %v5894 = vld [vmem:[%s3 + $0x7d0] sm:$0xff]
  %v5895 = vld [vmem:[%s3 + $0x7d8] sm:$0xff]
  %v5896 = vld [vmem:[%s3 + $0x7e0] sm:$0xff]
  %v5897 = vld [vmem:[%s3 + $0x7e8] sm:$0xff]
  %v5898 = vld [vmem:[%s3 + $0x7f0] sm:$0xff]
  %v5899 = vld [vmem:[%s3 + $0x7f8] sm:$0xff]
  %v5900 = vld [vmem:[%s3 + $0x800] sm:$0xff]
  %v5901 = vld [vmem:[%s3 + $0x808] sm:$0xff]
  %v5902 = vld [vmem:[%s3 + $0x810] sm:$0xff]
  %v5903 = vld [vmem:[%s3 + $0x818] sm:$0xff]
  %v5904 = vld [vmem:[%s3 + $0x820] sm:$0xff]
  %v5905 = vld [vmem:[%s3 + $0x828] sm:$0xff]
  %v5906 = vld [vmem:[%s3 + $0x830] sm:$0xff]
  %v5907 = vld [vmem:[%s3 + $0x838] sm:$0xff]
  %v5908 = vld [vmem:[%s3 + $0x840] sm:$0xff]
  %v5909 = vld [vmem:[%s3 + $0x848] sm:$0xff]
  %v5910 = vld [vmem:[%s3 + $0x850] sm:$0xff]
  %v5911 = vld [vmem:[%s3 + $0x858] sm:$0xff]
  %v5912 = vld [vmem:[%s3 + $0x860] sm:$0xff]
  %v5913 = vld [vmem:[%s3 + $0x868] sm:$0xff]
  %v5914 = vld [vmem:[%s3 + $0x870] sm:$0xff]
  %v5915 = vld [vmem:[%s3 + $0x878] sm:$0xff]
  %v5916 = vld [vmem:[%s3 + $0x880] sm:$0xff]
  %v5917 = vld [vmem:[%s3 + $0x888] sm:$0xff]
  %v5918 = vld [vmem:[%s3 + $0x890] sm:$0xff]
  %v5919 = vld [vmem:[%s3 + $0x898] sm:$0xff]
  %v5920 = vld [vmem:[%s3 + $0x8a0] sm:$0xff]
  %v5921 = vld [vmem:[%s3 + $0x8a8] sm:$0xff]
  %v5922 = vld [vmem:[%s3 + $0x8b0] sm:$0xff]
  %v5923 = vld [vmem:[%s3 + $0x8b8] sm:$0xff]
  %v5924 = vld [vmem:[%s3 + $0x8c0] sm:$0xff]
  %v5925 = vld [vmem:[%s3 + $0x8c8] sm:$0xff]
  %v5926 = vld [vmem:[%s3 + $0x8d0] sm:$0xff]
  %v5927 = vld [vmem:[%s3 + $0x8d8] sm:$0xff]
  %v5928 = vld [vmem:[%s3 + $0x8e0] sm:$0xff]
  %v5929 = vld [vmem:[%s3 + $0x8e8] sm:$0xff]
  %v5930 = vld [vmem:[%s3 + $0x8f0] sm:$0xff]
  %v5931 = vld [vmem:[%s3 + $0x8f8] sm:$0xff]
  %v5932 = vld [vmem:[%s3 + $0x900] sm:$0xff]
  %v5933 = vld [vmem:[%s3 + $0x908] sm:$0xff]
  %v5934 = vld [vmem:[%s3 + $0x910] sm:$0xff]
  %v5935 = vld [vmem:[%s3 + $0x918] sm:$0xff]
  %v5936 = vld [vmem:[%s3 + $0x920] sm:$0xff]
  %v5937 = vld [vmem:[%s3 + $0x928] sm:$0xff]
  %v5938 = vld [vmem:[%s3 + $0x930] sm:$0xff]
  %v5939 = vld [vmem:[%s3 + $0x938] sm:$0xff]
  %v5940 = vld [vmem:[%s3 + $0x940] sm:$0xff]
  %v5941 = vld [vmem:[%s3 + $0x948] sm:$0xff]
  %v5942 = vld [vmem:[%s3 + $0x950] sm:$0xff]
  %v5943 = vld [vmem:[%s3 + $0x958] sm:$0xff]
  %v5944 = vld [vmem:[%s3 + $0x960] sm:$0xff]
  %v5945 = vld [vmem:[%s3 + $0x968] sm:$0xff]
  %v5946 = vld [vmem:[%s3 + $0x970] sm:$0xff]
  %v5947 = vld [vmem:[%s3 + $0x978] sm:$0xff]
  %v5948 = vld [vmem:[%s3 + $0x980] sm:$0xff]
  %v5949 = vld [vmem:[%s3 + $0x988] sm:$0xff]
  %v5950 = vld [vmem:[%s3 + $0x990] sm:$0xff]
  %v5951 = vld [vmem:[%s3 + $0x998] sm:$0xff]
  %v5952 = vld [vmem:[%s3 + $0x9a0] sm:$0xff]
  %v5953 = vld [vmem:[%s3 + $0x9a8] sm:$0xff]
  %v5954 = vld [vmem:[%s3 + $0x9b0] sm:$0xff]
  %v5955 = vld [vmem:[%s3 + $0x9b8] sm:$0xff]
  %v5956 = vld [vmem:[%s3 + $0x9c0] sm:$0xff]
  %v5957 = vld [vmem:[%s3 + $0x9c8] sm:$0xff]
  %v5958 = vld [vmem:[%s3 + $0x9d0] sm:$0xff]
  %v5959 = vld [vmem:[%s3 + $0x9d8] sm:$0xff]
  %v5960 = vld [vmem:[%s3 + $0x9e0] sm:$0xff]
  %v5961 = vld [vmem:[%s3 + $0x9e8] sm:$0xff]
  %v5962 = vld [vmem:[%s3 + $0x9f0] sm:$0xff]
  %v5963 = vld [vmem:[%s3 + $0x9f8] sm:$0xff]
  %v5964 = vld [vmem:[%s3 + $0xa00] sm:$0xff]
  %v5965 = vld [vmem:[%s3 + $0xa08] sm:$0xff]
  %v5966 = vld [vmem:[%s3 + $0xa10] sm:$0xff]
  %v5967 = vld [vmem:[%s3 + $0xa18] sm:$0xff]
  %v5968 = vld [vmem:[%s3 + $0xa20] sm:$0xff]
  %v5969 = vld [vmem:[%s3 + $0xa28] sm:$0xff]
  %v5970 = vld [vmem:[%s3 + $0xa30] sm:$0xff]
  %v5971 = vld [vmem:[%s3 + $0xa38] sm:$0xff]
  %v5972 = vld [vmem:[%s3 + $0xa40] sm:$0xff]
  %v5973 = vld [vmem:[%s3 + $0xa48] sm:$0xff]
  %v5974 = vld [vmem:[%s3 + $0xa50] sm:$0xff]
  %v5975 = vld [vmem:[%s3 + $0xa58] sm:$0xff]
  %v5976 = vld [vmem:[%s3 + $0xa60] sm:$0xff]
  %v5977 = vld [vmem:[%s3 + $0xa68] sm:$0xff]
  %v5978 = vld [vmem:[%s3 + $0xa70] sm:$0xff]
  %v5979 = vld [vmem:[%s3 + $0xa78] sm:$0xff]
  %v5980 = vld [vmem:[%s3 + $0xa80] sm:$0xff]
  %v5981 = vld [vmem:[%s3 + $0xa88] sm:$0xff]
  %v5982 = vld [vmem:[%s3 + $0xa90] sm:$0xff]
  %v5983 = vld [vmem:[%s3 + $0xa98] sm:$0xff]
  %v5984 = vld [vmem:[%s3 + $0xaa0] sm:$0xff]
  %v5985 = vld [vmem:[%s3 + $0xaa8] sm:$0xff]
  %v5986 = vld [vmem:[%s3 + $0xab0] sm:$0xff]
  %v5987 = vld [vmem:[%s3 + $0xab8] sm:$0xff]
  %v5988 = vld [vmem:[%s3 + $0xac0] sm:$0xff]
  %v5989 = vld [vmem:[%s3 + $0xac8] sm:$0xff]
  %v5990 = vld [vmem:[%s3 + $0xad0] sm:$0xff]
  %v5991 = vld [vmem:[%s3 + $0xad8] sm:$0xff]
  %v5992 = vld [vmem:[%s3 + $0xae0] sm:$0xff]
  %v5993 = vld [vmem:[%s3 + $0xae8] sm:$0xff]
  %v5994 = vld [vmem:[%s3 + $0xaf0] sm:$0xff]
  %v5995 = vld [vmem:[%s3 + $0xaf8] sm:$0xff]
  %v5996 = vld [vmem:[%s3 + $0xb00] sm:$0xff]
  %v5997 = vld [vmem:[%s3 + $0xb08] sm:$0xff]
  %v5998 = vld [vmem:[%s3 + $0xb10] sm:$0xff]
  %v5999 = vld [vmem:[%s3 + $0xb18] sm:$0xff]
  %v6000 = vld [vmem:[%s3 + $0xb20] sm:$0xff]
  %v6001 = vld [vmem:[%s3 + $0xb28] sm:$0xff]
  %v6002 = vld [vmem:[%s3 + $0xb30] sm:$0xff]
  %v6003 = vld [vmem:[%s3 + $0xb38] sm:$0xff]
  %v6004 = vld [vmem:[%s3 + $0xb40] sm:$0xff]
  %v6005 = vld [vmem:[%s3 + $0xb48] sm:$0xff]
  %v6006 = vld [vmem:[%s3 + $0xb50] sm:$0xff]
  %v6007 = vld [vmem:[%s3 + $0xb58] sm:$0xff]
  %v6008 = vld [vmem:[%s3 + $0xb60] sm:$0xff]
  %v6009 = vld [vmem:[%s3 + $0xb68] sm:$0xff]
  %v6010 = vld [vmem:[%s3 + $0xb70] sm:$0xff]
  %v6011 = vld [vmem:[%s3 + $0xb78] sm:$0xff]
  %v6012 = vld [vmem:[%s3 + $0xb80] sm:$0xff]
  %v6013 = vld [vmem:[%s3 + $0xb88] sm:$0xff]
  %v6014 = vld [vmem:[%s3 + $0xb90] sm:$0xff]
  %v6015 = vld [vmem:[%s3 + $0xb98] sm:$0xff]
  %v6016 = vld [vmem:[%s3 + $0xba0] sm:$0xff]
  %v6017 = vld [vmem:[%s3 + $0xba8] sm:$0xff]
  %v6018 = vld [vmem:[%s3 + $0xbb0] sm:$0xff]
  %v6019 = vld [vmem:[%s3 + $0xbb8] sm:$0xff]
  %v6020 = vld [vmem:[%s3 + $0xbc0] sm:$0xff]
  %v6021 = vld [vmem:[%s3 + $0xbc8] sm:$0xff]
  %v6022 = vld [vmem:[%s3 + $0xbd0] sm:$0xff]
  %v6023 = vld [vmem:[%s3 + $0xbd8] sm:$0xff]
  %v6024 = vld [vmem:[%s3 + $0xbe0] sm:$0xff]
  %v6025 = vld [vmem:[%s3 + $0xbe8] sm:$0xff]
  %v6026 = vld [vmem:[%s3 + $0xbf0] sm:$0xff]
  %v6027 = vld [vmem:[%s3 + $0xbf8] sm:$0xff]
  %v6028 = vld [vmem:[%s3 + $0xc00] sm:$0xff]
  %v6029 = vld [vmem:[%s3 + $0xc08] sm:$0xff]
  %v6030 = vld [vmem:[%s3 + $0xc10] sm:$0xff]
  %v6031 = vld [vmem:[%s3 + $0xc18] sm:$0xff]
  %v6032 = vld [vmem:[%s3 + $0xc20] sm:$0xff]
  %v6033 = vld [vmem:[%s3 + $0xc28] sm:$0xff]
  %v6034 = vld [vmem:[%s3 + $0xc30] sm:$0xff]
  %v6035 = vld [vmem:[%s3 + $0xc38] sm:$0xff]
  %v6036 = vld [vmem:[%s3 + $0xc40] sm:$0xff]
  %v6037 = vld [vmem:[%s3 + $0xc48] sm:$0xff]
  %v6038 = vld [vmem:[%s3 + $0xc50] sm:$0xff]
  %v6039 = vld [vmem:[%s3 + $0xc58] sm:$0xff]
  %v6040 = vld [vmem:[%s3 + $0xc60] sm:$0xff]
  %v6041 = vld [vmem:[%s3 + $0xc68] sm:$0xff]
  %v6042 = vld [vmem:[%s3 + $0xc70] sm:$0xff]
  %v6043 = vld [vmem:[%s3 + $0xc78] sm:$0xff]
  %v6044 = vld [vmem:[%s3 + $0xc80] sm:$0xff]
  %v6045 = vld [vmem:[%s3 + $0xc88] sm:$0xff]
  %v6046 = vld [vmem:[%s3 + $0xc90] sm:$0xff]
  %v6047 = vld [vmem:[%s3 + $0xc98] sm:$0xff]
  %v6048 = vld [vmem:[%s3 + $0xca0] sm:$0xff]
  %v6049 = vld [vmem:[%s3 + $0xca8] sm:$0xff]
  %v6050 = vld [vmem:[%s3 + $0xcb0] sm:$0xff]
  %v6051 = vld [vmem:[%s3 + $0xcb8] sm:$0xff]
  %v6052 = vld [vmem:[%s3 + $0xcc0] sm:$0xff]
  %v6053 = vld [vmem:[%s3 + $0xcc8] sm:$0xff]
  %v6054 = vld [vmem:[%s3 + $0xcd0] sm:$0xff]
  %v6055 = vld [vmem:[%s3 + $0xcd8] sm:$0xff]
  %v6056 = vld [vmem:[%s3 + $0xce0] sm:$0xff]
  %v6057 = vld [vmem:[%s3 + $0xce8] sm:$0xff]
  %v6058 = vld [vmem:[%s3 + $0xcf0] sm:$0xff]
  %v6059 = vld [vmem:[%s3 + $0xcf8] sm:$0xff]
  %v6060 = vld [vmem:[%s3 + $0xd00] sm:$0xff]
  %v6061 = vld [vmem:[%s3 + $0xd08] sm:$0xff]
  %v6062 = vld [vmem:[%s3 + $0xd10] sm:$0xff]
  %v6063 = vld [vmem:[%s3 + $0xd18] sm:$0xff]
  %v6064 = vld [vmem:[%s3 + $0xd20] sm:$0xff]
  %v6065 = vld [vmem:[%s3 + $0xd28] sm:$0xff]
  %v6066 = vld [vmem:[%s3 + $0xd30] sm:$0xff]
  %v6067 = vld [vmem:[%s3 + $0xd38] sm:$0xff]
  %v6068 = vld [vmem:[%s3 + $0xd40] sm:$0xff]
  %v6069 = vld [vmem:[%s3 + $0xd48] sm:$0xff]
  %v6070 = vld [vmem:[%s3 + $0xd50] sm:$0xff]
  %v6071 = vld [vmem:[%s3 + $0xd58] sm:$0xff]
  %v6072 = vld [vmem:[%s3 + $0xd60] sm:$0xff]
  %v6073 = vld [vmem:[%s3 + $0xd68] sm:$0xff]
  %v6074 = vld [vmem:[%s3 + $0xd70] sm:$0xff]
  %v6075 = vld [vmem:[%s3 + $0xd78] sm:$0xff]
  %v6076 = vld [vmem:[%s3 + $0xd80] sm:$0xff]
  %v6077 = vld [vmem:[%s3 + $0xd88] sm:$0xff]
  %v6078 = vld [vmem:[%s3 + $0xd90] sm:$0xff]
  %v6079 = vld [vmem:[%s3 + $0xd98] sm:$0xff]
  %v6080 = vld [vmem:[%s3 + $0xda0] sm:$0xff]
  %v6081 = vld [vmem:[%s3 + $0xda8] sm:$0xff]
  %v6082 = vld [vmem:[%s3 + $0xdb0] sm:$0xff]
  %v6083 = vld [vmem:[%s3 + $0xdb8] sm:$0xff]
  %v6084 = vld [vmem:[%s3 + $0xdc0] sm:$0xff]
  %v6085 = vld [vmem:[%s3 + $0xdc8] sm:$0xff]
  %v6086 = vld [vmem:[%s3 + $0xdd0] sm:$0xff]
  %v6087 = vld [vmem:[%s3 + $0xdd8] sm:$0xff]
  %v6088 = vld [vmem:[%s3 + $0xde0] sm:$0xff]
  %v6089 = vld [vmem:[%s3 + $0xde8] sm:$0xff]
  %v6090 = vld [vmem:[%s3 + $0xdf0] sm:$0xff]
  %v6091 = vld [vmem:[%s3 + $0xdf8] sm:$0xff]
  %v6092 = vld [vmem:[%s3 + $0xe00] sm:$0xff]
  %v6093 = vld [vmem:[%s3 + $0xe08] sm:$0xff]
  %v6094 = vld [vmem:[%s3 + $0xe10] sm:$0xff]
  %v6095 = vld [vmem:[%s3 + $0xe18] sm:$0xff]
  %v6096 = vld [vmem:[%s3 + $0xe20] sm:$0xff]
  %v6097 = vld [vmem:[%s3 + $0xe28] sm:$0xff]
  %v6098 = vld [vmem:[%s3 + $0xe30] sm:$0xff]
  %v6099 = vld [vmem:[%s3 + $0xe38] sm:$0xff]
  %v6100 = vld [vmem:[%s3 + $0xe40] sm:$0xff]
  %v6101 = vld [vmem:[%s3 + $0xe48] sm:$0xff]
  %v6102 = vld [vmem:[%s3 + $0xe50] sm:$0xff]
  %v6103 = vld [vmem:[%s3 + $0xe58] sm:$0xff]
  %v6104 = vld [vmem:[%s3 + $0xe60] sm:$0xff]
  %v6105 = vld [vmem:[%s3 + $0xe68] sm:$0xff]
  %v6106 = vld [vmem:[%s3 + $0xe70] sm:$0xff]
  %v6107 = vld [vmem:[%s3 + $0xe78] sm:$0xff]
  %v6108 = vld [vmem:[%s3 + $0xe80] sm:$0xff]
  %v6109 = vld [vmem:[%s3 + $0xe88] sm:$0xff]
  %v6110 = vld [vmem:[%s3 + $0xe90] sm:$0xff]
  %v6111 = vld [vmem:[%s3 + $0xe98] sm:$0xff]
  %v6112 = vld [vmem:[%s3 + $0xea0] sm:$0xff]
  %v6113 = vld [vmem:[%s3 + $0xea8] sm:$0xff]
  %v6114 = vld [vmem:[%s3 + $0xeb0] sm:$0xff]
  %v6115 = vld [vmem:[%s3 + $0xeb8] sm:$0xff]
  %v6116 = vld [vmem:[%s3 + $0xec0] sm:$0xff]
  %v6117 = vld [vmem:[%s3 + $0xec8] sm:$0xff]
  %v6118 = vld [vmem:[%s3 + $0xed0] sm:$0xff]
  %v6119 = vld [vmem:[%s3 + $0xed8] sm:$0xff]
  %v6120 = vld [vmem:[%s3 + $0xee0] sm:$0xff]
  %v6121 = vld [vmem:[%s3 + $0xee8] sm:$0xff]
  %v6122 = vld [vmem:[%s3 + $0xef0] sm:$0xff]
  %v6123 = vld [vmem:[%s3 + $0xef8] sm:$0xff]
  %v6124 = vld [vmem:[%s3 + $0xf00] sm:$0xff]
  %v6125 = vld [vmem:[%s3 + $0xf08] sm:$0xff]
  %v6126 = vld [vmem:[%s3 + $0xf10] sm:$0xff]
  %v6127 = vld [vmem:[%s3 + $0xf18] sm:$0xff]
  %v6128 = vld [vmem:[%s3 + $0xf20] sm:$0xff]
  %v6129 = vld [vmem:[%s3 + $0xf28] sm:$0xff]
  %v6130 = vld [vmem:[%s3 + $0xf30] sm:$0xff]
  %v6131 = vld [vmem:[%s3 + $0xf38] sm:$0xff]
  %v6132 = vld [vmem:[%s3 + $0xf40] sm:$0xff]
  %v6133 = vld [vmem:[%s3 + $0xf48] sm:$0xff]
  %v6134 = vld [vmem:[%s3 + $0xf50] sm:$0xff]
  %v6135 = vld [vmem:[%s3 + $0xf58] sm:$0xff]
  %v6136 = vld [vmem:[%s3 + $0xf60] sm:$0xff]
  %v6137 = vld [vmem:[%s3 + $0xf68] sm:$0xff]
  %v6138 = vld [vmem:[%s3 + $0xf70] sm:$0xff]
  %v6139 = vld [vmem:[%s3 + $0xf78] sm:$0xff]
  %v6140 = vld [vmem:[%s3 + $0xf80] sm:$0xff]
  %v6141 = vld [vmem:[%s3 + $0xf88] sm:$0xff]
  %v6142 = vld [vmem:[%s3 + $0xf90] sm:$0xff]
  %v6143 = vld [vmem:[%s3 + $0xf98] sm:$0xff]
  %v6144 = vld [vmem:[%s3 + $0xfa0] sm:$0xff]
  %v6145 = vld [vmem:[%s3 + $0xfa8] sm:$0xff]
  %v6146 = vld [vmem:[%s3 + $0xfb0] sm:$0xff]
  %v6147 = vld [vmem:[%s3 + $0xfb8] sm:$0xff]
  %v6148 = vld [vmem:[%s3 + $0xfc0] sm:$0xff]
  %v6149 = vld [vmem:[%s3 + $0xfc8] sm:$0xff]
  %v6150 = vld [vmem:[%s3 + $0xfd0] sm:$0xff]
  %v6151 = vld [vmem:[%s3 + $0xfd8] sm:$0xff]
  %v6152 = vld [vmem:[%s3 + $0xfe0] sm:$0xff]
  %v6153 = vld [vmem:[%s3 + $0xfe8] sm:$0xff]
  %v6154 = vld [vmem:[%s3 + $0xff0] sm:$0xff]
  %v6155 = vld [vmem:[%s3 + $0xff8] sm:$0xff]
  %v6156 = vld [vmem:[%s3 + $0x1000] sm:$0xff]
  %v6157 = vld [vmem:[%s3 + $0x1008] sm:$0xff]
  %v6158 = vld [vmem:[%s3 + $0x1010] sm:$0xff]
  %v6159 = vld [vmem:[%s3 + $0x1018] sm:$0xff]
  %v6160 = vld [vmem:[%s3 + $0x1020] sm:$0xff]
  %v6161 = vld [vmem:[%s3 + $0x1028] sm:$0xff]
  %v6162 = vld [vmem:[%s3 + $0x1030] sm:$0xff]
  %v6163 = vld [vmem:[%s3 + $0x1038] sm:$0xff]
  %v6164 = vld [vmem:[%s3 + $0x1040] sm:$0xff]
  %v6165 = vld [vmem:[%s3 + $0x1048] sm:$0xff]
  %v6166 = vld [vmem:[%s3 + $0x1050] sm:$0xff]
  %v6167 = vld [vmem:[%s3 + $0x1058] sm:$0xff]
  %v6168 = vld [vmem:[%s3 + $0x1060] sm:$0xff]
  %v6169 = vld [vmem:[%s3 + $0x1068] sm:$0xff]
  %v6170 = vld [vmem:[%s3 + $0x1070] sm:$0xff]
  %v6171 = vld [vmem:[%s3 + $0x1078] sm:$0xff]
  %v6172 = vld [vmem:[%s3 + $0x1080] sm:$0xff]
  %v6173 = vld [vmem:[%s3 + $0x1088] sm:$0xff]
  %v6174 = vld [vmem:[%s3 + $0x1090] sm:$0xff]
  %v6175 = vld [vmem:[%s3 + $0x1098] sm:$0xff]
  %v6176 = vld [vmem:[%s3 + $0x10a0] sm:$0xff]
  %v6177 = vld [vmem:[%s3 + $0x10a8] sm:$0xff]
  %v6178 = vld [vmem:[%s3 + $0x10b0] sm:$0xff]
  %v6179 = vld [vmem:[%s3 + $0x10b8] sm:$0xff]
  %v6180 = vld [vmem:[%s3 + $0x10c0] sm:$0xff]
  %v6181 = vld [vmem:[%s3 + $0x10c8] sm:$0xff]
  %v6182 = vld [vmem:[%s3 + $0x10d0] sm:$0xff]
  %v6183 = vld [vmem:[%s3 + $0x10d8] sm:$0xff]
  %v6184 = vld [vmem:[%s3 + $0x10e0] sm:$0xff]
  %v6185 = vld [vmem:[%s3 + $0x10e8] sm:$0xff]
  %v6186 = vld [vmem:[%s3 + $0x10f0] sm:$0xff]
  %v6187 = vld [vmem:[%s3 + $0x10f8] sm:$0xff]
  %v6188 = vld [vmem:[%s3 + $0x1100] sm:$0xff]
  %v6189 = vld [vmem:[%s3 + $0x1108] sm:$0xff]
  %v6190 = vld [vmem:[%s3 + $0x1110] sm:$0xff]
  %v6191 = vld [vmem:[%s3 + $0x1118] sm:$0xff]
  %v6192 = vld [vmem:[%s3 + $0x1120] sm:$0xff]
  %v6193 = vld [vmem:[%s3 + $0x1128] sm:$0xff]
  %v6194 = vld [vmem:[%s3 + $0x1130] sm:$0xff]
  %v6195 = vld [vmem:[%s3 + $0x1138] sm:$0xff]
  %v6196 = vld [vmem:[%s3 + $0x1140] sm:$0xff]
  %v6197 = vld [vmem:[%s3 + $0x1148] sm:$0xff]
  %v6198 = vld [vmem:[%s3 + $0x1150] sm:$0xff]
  %v6199 = vld [vmem:[%s3 + $0x1158] sm:$0xff]
  %v6200 = vld [vmem:[%s3 + $0x1160] sm:$0xff]
  %v6201 = vld [vmem:[%s3 + $0x1168] sm:$0xff]
  %v6202 = vld [vmem:[%s3 + $0x1170] sm:$0xff]
  %v6203 = vld [vmem:[%s3 + $0x1178] sm:$0xff]
  %v6204 = vld [vmem:[%s3 + $0x1180] sm:$0xff]
  %v6205 = vld [vmem:[%s3 + $0x1188] sm:$0xff]
  %v6206 = vld [vmem:[%s3 + $0x1190] sm:$0xff]
  %v6207 = vld [vmem:[%s3 + $0x1198] sm:$0xff]
  %v6208 = vld [vmem:[%s3 + $0x11a0] sm:$0xff]
  %v6209 = vld [vmem:[%s3 + $0x11a8] sm:$0xff]
  %v6210 = vld [vmem:[%s3 + $0x11b0] sm:$0xff]
  %v6211 = vld [vmem:[%s3 + $0x11b8] sm:$0xff]
  %v6212 = vld [vmem:[%s3 + $0x11c0] sm:$0xff]
  %v6213 = vld [vmem:[%s3 + $0x11c8] sm:$0xff]
  %v6214 = vld [vmem:[%s3 + $0x11d0] sm:$0xff]
  %v6215 = vld [vmem:[%s3 + $0x11d8] sm:$0xff]
  %v6216 = vld [vmem:[%s3 + $0x11e0] sm:$0xff]
  %v6217 = vld [vmem:[%s3 + $0x11e8] sm:$0xff]
  %v6218 = vld [vmem:[%s3 + $0x11f0] sm:$0xff]
  %v6219 = vld [vmem:[%s3 + $0x11f8] sm:$0xff]
  %v6220 = vld [vmem:[%s3 + $0x1200] sm:$0xff]
  %v6221 = vld [vmem:[%s3 + $0x1208] sm:$0xff]
  %v6222 = vld [vmem:[%s3 + $0x1210] sm:$0xff]
  %v6223 = vld [vmem:[%s3 + $0x1218] sm:$0xff]
  %v6224 = vld [vmem:[%s3 + $0x1220] sm:$0xff]
  %v6225 = vld [vmem:[%s3 + $0x1228] sm:$0xff]
  %v6226 = vld [vmem:[%s3 + $0x1230] sm:$0xff]
  %v6227 = vld [vmem:[%s3 + $0x1238] sm:$0xff]
  %v6228 = vld [vmem:[%s3 + $0x1240] sm:$0xff]
  %v6229 = vld [vmem:[%s3 + $0x1248] sm:$0xff]
  %v6230 = vld [vmem:[%s3 + $0x1250] sm:$0xff]
  %v6231 = vld [vmem:[%s3 + $0x1258] sm:$0xff]
  %v6232 = vld [vmem:[%s3 + $0x1260] sm:$0xff]
  %v6233 = vld [vmem:[%s3 + $0x1268] sm:$0xff]
  %v6234 = vld [vmem:[%s3 + $0x1270] sm:$0xff]
  %v6235 = vld [vmem:[%s3 + $0x1278] sm:$0xff]
  %v6236 = vld [vmem:[%s3 + $0x1280] sm:$0xff]
  %v6237 = vld [vmem:[%s3 + $0x1288] sm:$0xff]
  %v6238 = vld [vmem:[%s3 + $0x1290] sm:$0xff]
  %v6239 = vld [vmem:[%s3 + $0x1298] sm:$0xff]
  %v6240 = vld [vmem:[%s3 + $0x12a0] sm:$0xff]
  %v6241 = vld [vmem:[%s3 + $0x12a8] sm:$0xff]
  %v6242 = vld [vmem:[%s3 + $0x12b0] sm:$0xff]
  %v6243 = vld [vmem:[%s3 + $0x12b8] sm:$0xff]
  %v6244 = vld [vmem:[%s3 + $0x12c0] sm:$0xff]
  %v6245 = vld [vmem:[%s3 + $0x12c8] sm:$0xff]
  %v6246 = vld [vmem:[%s3 + $0x12d0] sm:$0xff]
  %v6247 = vld [vmem:[%s3 + $0x12d8] sm:$0xff]
  %v6248 = vld [vmem:[%s3 + $0x12e0] sm:$0xff]
  %v6249 = vld [vmem:[%s3 + $0x12e8] sm:$0xff]
  %v6250 = vld [vmem:[%s3 + $0x12f0] sm:$0xff]
  %v6251 = vld [vmem:[%s3 + $0x12f8] sm:$0xff]
  %v6252 = vld [vmem:[%s3 + $0x1300] sm:$0xff]
  %v6253 = vld [vmem:[%s3 + $0x1308] sm:$0xff]
  %v6254 = vld [vmem:[%s3 + $0x1310] sm:$0xff]
  %v6255 = vld [vmem:[%s3 + $0x1318] sm:$0xff]
  %v6256 = vld [vmem:[%s3 + $0x1320] sm:$0xff]
  %v6257 = vld [vmem:[%s3 + $0x1328] sm:$0xff]
  %v6258 = vld [vmem:[%s3 + $0x1330] sm:$0xff]
  %v6259 = vld [vmem:[%s3 + $0x1338] sm:$0xff]
  %v6260 = vld [vmem:[%s3 + $0x1340] sm:$0xff]
  %v6261 = vld [vmem:[%s3 + $0x1348] sm:$0xff]
  %v6262 = vld [vmem:[%s3 + $0x1350] sm:$0xff]
  %v6263 = vld [vmem:[%s3 + $0x1358] sm:$0xff]
  %v6264 = vld [vmem:[%s3 + $0x1360] sm:$0xff]
  %v6265 = vld [vmem:[%s3 + $0x1368] sm:$0xff]
  %v6266 = vld [vmem:[%s3 + $0x1370] sm:$0xff]
  %v6267 = vld [vmem:[%s3 + $0x1378] sm:$0xff]
  %v6268 = vld [vmem:[%s3 + $0x1380] sm:$0xff]
  %v6269 = vld [vmem:[%s3 + $0x1388] sm:$0xff]
  %v6270 = vld [vmem:[%s3 + $0x1390] sm:$0xff]
  %v6271 = vld [vmem:[%s3 + $0x1398] sm:$0xff]
  %v6272 = vld [vmem:[%s3 + $0x13a0] sm:$0xff]
  %v6273 = vld [vmem:[%s3 + $0x13a8] sm:$0xff]
  %v6274 = vld [vmem:[%s3 + $0x13b0] sm:$0xff]
  %v6275 = vld [vmem:[%s3 + $0x13b8] sm:$0xff]
  %v6276 = vld [vmem:[%s3 + $0x13c0] sm:$0xff]
  %v6277 = vld [vmem:[%s3 + $0x13c8] sm:$0xff]
  %v6278 = vld [vmem:[%s3 + $0x13d0] sm:$0xff]
  %v6279 = vld [vmem:[%s3 + $0x13d8] sm:$0xff]
  %v6280 = vld [vmem:[%s3 + $0x13e0] sm:$0xff]
  %v6281 = vld [vmem:[%s3 + $0x13e8] sm:$0xff]
  %v6282 = vld [vmem:[%s3 + $0x13f0] sm:$0xff]
  %v6283 = vld [vmem:[%s3 + $0x13f8] sm:$0xff]
  %v6284 = vld [vmem:[%s3 + $0x1400] sm:$0xff]
  %v6285 = vld [vmem:[%s3 + $0x1408] sm:$0xff]
  %v6286 = vld [vmem:[%s3 + $0x1410] sm:$0xff]
  %v6287 = vld [vmem:[%s3 + $0x1418] sm:$0xff]
  %v6288 = vld [vmem:[%s3 + $0x1420] sm:$0xff]
  %v6289 = vld [vmem:[%s3 + $0x1428] sm:$0xff]
  %v6290 = vld [vmem:[%s3 + $0x1430] sm:$0xff]
  %v6291 = vld [vmem:[%s3 + $0x1438] sm:$0xff]
  %v6292 = vld [vmem:[%s3 + $0x1440] sm:$0xff]
  %v6293 = vld [vmem:[%s3 + $0x1448] sm:$0xff]
  %v6294 = vld [vmem:[%s3 + $0x1450] sm:$0xff]
  %v6295 = vld [vmem:[%s3 + $0x1458] sm:$0xff]
  %v6296 = vld [vmem:[%s3 + $0x1460] sm:$0xff]
  %v6297 = vld [vmem:[%s3 + $0x1468] sm:$0xff]
  %v6298 = vld [vmem:[%s3 + $0x1470] sm:$0xff]
  %v6299 = vld [vmem:[%s3 + $0x1478] sm:$0xff]
  %v6300 = vld [vmem:[%s3 + $0x1480] sm:$0xff]
  %v6301 = vld [vmem:[%s3 + $0x1488] sm:$0xff]
  %v6302 = vld [vmem:[%s3 + $0x1490] sm:$0xff]
  %v6303 = vld [vmem:[%s3 + $0x1498] sm:$0xff]
  %v6304 = vld [vmem:[%s3 + $0x14a0] sm:$0xff]
  %v6305 = vld [vmem:[%s3 + $0x14a8] sm:$0xff]
  %v6306 = vld [vmem:[%s3 + $0x14b0] sm:$0xff]
  %v6307 = vld [vmem:[%s3 + $0x14b8] sm:$0xff]
  %v6308 = vld [vmem:[%s3 + $0x14c0] sm:$0xff]
  %v6309 = vld [vmem:[%s3 + $0x14c8] sm:$0xff]
  %v6310 = vld [vmem:[%s3 + $0x14d0] sm:$0xff]
  %v6311 = vld [vmem:[%s3 + $0x14d8] sm:$0xff]
  %v6312 = vld [vmem:[%s3 + $0x14e0] sm:$0xff]
  %v6313 = vld [vmem:[%s3 + $0x14e8] sm:$0xff]
  %v6314 = vld [vmem:[%s3 + $0x14f0] sm:$0xff]
  %v6315 = vld [vmem:[%s3 + $0x14f8] sm:$0xff]
  %v6316 = vld [vmem:[%s3 + $0x1500] sm:$0xff]
  %v6317 = vld [vmem:[%s3 + $0x1508] sm:$0xff]
  %v6318 = vld [vmem:[%s3 + $0x1510] sm:$0xff]
  %v6319 = vld [vmem:[%s3 + $0x1518] sm:$0xff]
  %v6320 = vld [vmem:[%s3 + $0x1520] sm:$0xff]
  %v6321 = vld [vmem:[%s3 + $0x1528] sm:$0xff]
  %v6322 = vld [vmem:[%s3 + $0x1530] sm:$0xff]
  %v6323 = vld [vmem:[%s3 + $0x1538] sm:$0xff]
  %v6324 = vld [vmem:[%s3 + $0x1540] sm:$0xff]
  %v6325 = vld [vmem:[%s3 + $0x1548] sm:$0xff]
  %v6326 = vld [vmem:[%s3 + $0x1550] sm:$0xff]
  %v6327 = vld [vmem:[%s3 + $0x1558] sm:$0xff]
  %v6328 = vld [vmem:[%s3 + $0x1560] sm:$0xff]
  %v6329 = vld [vmem:[%s3 + $0x1568] sm:$0xff]
  %v6330 = vld [vmem:[%s3 + $0x1570] sm:$0xff]
  %v6331 = vld [vmem:[%s3 + $0x1578] sm:$0xff]
  %v6332 = vld [vmem:[%s3 + $0x1580] sm:$0xff]
  %v6333 = vld [vmem:[%s3 + $0x1588] sm:$0xff]
  %v6334 = vld [vmem:[%s3 + $0x1590] sm:$0xff]
  %v6335 = vld [vmem:[%s3 + $0x1598] sm:$0xff]
  %v6336 = vld [vmem:[%s3 + $0x15a0] sm:$0xff]
  %v6337 = vld [vmem:[%s3 + $0x15a8] sm:$0xff]
  %v6338 = vld [vmem:[%s3 + $0x15b0] sm:$0xff]
  %v6339 = vld [vmem:[%s3 + $0x15b8] sm:$0xff]
  %v6340 = vld [vmem:[%s3 + $0x15c0] sm:$0xff]
  %v6341 = vld [vmem:[%s3 + $0x15c8] sm:$0xff]
  %v6342 = vld [vmem:[%s3 + $0x15d0] sm:$0xff]
  %v6343 = vld [vmem:[%s3 + $0x15d8] sm:$0xff]
  %v6344 = vld [vmem:[%s3 + $0x15e0] sm:$0xff]
  %v6345 = vld [vmem:[%s3 + $0x15e8] sm:$0xff]
  %v6346 = vld [vmem:[%s3 + $0x15f0] sm:$0xff]
  %v6347 = vld [vmem:[%s3 + $0x15f8] sm:$0xff]
  %v6348 = vld [vmem:[%s3 + $0x1600] sm:$0xff]
  %v6349 = vld [vmem:[%s3 + $0x1608] sm:$0xff]
  %v6350 = vld [vmem:[%s3 + $0x1610] sm:$0xff]
  %v6351 = vld [vmem:[%s3 + $0x1618] sm:$0xff]
  %v6352 = vld [vmem:[%s3 + $0x1620] sm:$0xff]
  %v6353 = vld [vmem:[%s3 + $0x1628] sm:$0xff]
  %v6354 = vld [vmem:[%s3 + $0x1630] sm:$0xff]
  %v6355 = vld [vmem:[%s3 + $0x1638] sm:$0xff]
  %v6356 = vld [vmem:[%s3 + $0x1640] sm:$0xff]
  %v6357 = vld [vmem:[%s3 + $0x1648] sm:$0xff]
  %v6358 = vld [vmem:[%s3 + $0x1650] sm:$0xff]
  %v6359 = vld [vmem:[%s3 + $0x1658] sm:$0xff]
  %v6360 = vld [vmem:[%s3 + $0x1660] sm:$0xff]
  %v6361 = vld [vmem:[%s3 + $0x1668] sm:$0xff]
  %v6362 = vld [vmem:[%s3 + $0x1670] sm:$0xff]
  %v6363 = vld [vmem:[%s3 + $0x1678] sm:$0xff]
  %v6364 = vld [vmem:[%s3 + $0x1680] sm:$0xff]
  %v6365 = vld [vmem:[%s3 + $0x1688] sm:$0xff]
  %v6366 = vld [vmem:[%s3 + $0x1690] sm:$0xff]
  %v6367 = vld [vmem:[%s3 + $0x1698] sm:$0xff]
  %v6368 = vld [vmem:[%s3 + $0x16a0] sm:$0xff]
  %v6369 = vld [vmem:[%s3 + $0x16a8] sm:$0xff]
  %v6370 = vld [vmem:[%s3 + $0x16b0] sm:$0xff]
  %v6371 = vld [vmem:[%s3 + $0x16b8] sm:$0xff]
  %v6372 = vld [vmem:[%s3 + $0x16c0] sm:$0xff]
  %v6373 = vld [vmem:[%s3 + $0x16c8] sm:$0xff]
  %v6374 = vld [vmem:[%s3 + $0x16d0] sm:$0xff]
  %v6375 = vld [vmem:[%s3 + $0x16d8] sm:$0xff]
  %v6376 = vld [vmem:[%s3 + $0x16e0] sm:$0xff]
  %v6377 = vld [vmem:[%s3 + $0x16e8] sm:$0xff]
  %v6378 = vld [vmem:[%s3 + $0x16f0] sm:$0xff]
  %v6379 = vld [vmem:[%s3 + $0x16f8] sm:$0xff]
  %v6380 = vld [vmem:[%s3 + $0x1700] sm:$0xff]
  %v6381 = vld [vmem:[%s3 + $0x1708] sm:$0xff]
  %v6382 = vld [vmem:[%s3 + $0x1710] sm:$0xff]
  %v6383 = vld [vmem:[%s3 + $0x1718] sm:$0xff]
  %v6384 = vld [vmem:[%s3 + $0x1720] sm:$0xff]
  %v6385 = vld [vmem:[%s3 + $0x1728] sm:$0xff]
  %v6386 = vld [vmem:[%s3 + $0x1730] sm:$0xff]
  %v6387 = vld [vmem:[%s3 + $0x1738] sm:$0xff]
  %v6388 = vld [vmem:[%s3 + $0x1740] sm:$0xff]
  %v6389 = vld [vmem:[%s3 + $0x1748] sm:$0xff]
  %v6390 = vld [vmem:[%s3 + $0x1750] sm:$0xff]
  %v6391 = vld [vmem:[%s3 + $0x1758] sm:$0xff]
  %v6392 = vld [vmem:[%s3 + $0x1760] sm:$0xff]
  %v6393 = vld [vmem:[%s3 + $0x1768] sm:$0xff]
  %v6394 = vld [vmem:[%s3 + $0x1770] sm:$0xff]
  %v6395 = vld [vmem:[%s3 + $0x1778] sm:$0xff]
  %v6396 = vld [vmem:[%s3 + $0x1780] sm:$0xff]
  %v6397 = vld [vmem:[%s3 + $0x1788] sm:$0xff]
  %v6398 = vld [vmem:[%s3 + $0x1790] sm:$0xff]
  %v6399 = vld [vmem:[%s3 + $0x1798] sm:$0xff]
  %v6400 = vld [vmem:[%s3 + $0x17a0] sm:$0xff]
  %v6401 = vld [vmem:[%s3 + $0x17a8] sm:$0xff]
  %v6402 = vld [vmem:[%s3 + $0x17b0] sm:$0xff]
  %v6403 = vld [vmem:[%s3 + $0x17b8] sm:$0xff]
  %v6404 = vld [vmem:[%s3 + $0x17c0] sm:$0xff]
  %v6405 = vld [vmem:[%s3 + $0x17c8] sm:$0xff]
  %v6406 = vld [vmem:[%s3 + $0x17d0] sm:$0xff]
  %v6407 = vld [vmem:[%s3 + $0x17d8] sm:$0xff]
  %v6408 = vld [vmem:[%s3 + $0x17e0] sm:$0xff]
  %v6409 = vld [vmem:[%s3 + $0x17e8] sm:$0xff]
  %v6410 = vld [vmem:[%s3 + $0x17f0] sm:$0xff]
  %v6411 = vld [vmem:[%s3 + $0x17f8] sm:$0xff]
  %v6412 = vld [vmem:[%s3 + $0x1800] sm:$0xff]
  %v6413 = vld [vmem:[%s3 + $0x1808] sm:$0xff]
  %v6414 = vld [vmem:[%s3 + $0x1810] sm:$0xff]
  %v6415 = vld [vmem:[%s3 + $0x1818] sm:$0xff]
  %v6416 = vld [vmem:[%s3 + $0x1820] sm:$0xff]
  %v6417 = vld [vmem:[%s3 + $0x1828] sm:$0xff]
  %v6418 = vld [vmem:[%s3 + $0x1830] sm:$0xff]
  %v6419 = vld [vmem:[%s3 + $0x1838] sm:$0xff]
  %v6420 = vld [vmem:[%s3 + $0x1840] sm:$0xff]
  %v6421 = vld [vmem:[%s3 + $0x1848] sm:$0xff]
  %v6422 = vld [vmem:[%s3 + $0x1850] sm:$0xff]
  %v6423 = vld [vmem:[%s3 + $0x1858] sm:$0xff]
  %v6424 = vld [vmem:[%s3 + $0x1860] sm:$0xff]
  %v6425 = vld [vmem:[%s3 + $0x1868] sm:$0xff]
  %v6426 = vld [vmem:[%s3 + $0x1870] sm:$0xff]
  %v6427 = vld [vmem:[%s3 + $0x1878] sm:$0xff]
  %v6428 = vld [vmem:[%s3 + $0x1880] sm:$0xff]
  %v6429 = vld [vmem:[%s3 + $0x1888] sm:$0xff]
  %v6430 = vld [vmem:[%s3 + $0x1890] sm:$0xff]
  %v6431 = vld [vmem:[%s3 + $0x1898] sm:$0xff]
  %v6432 = vld [vmem:[%s3 + $0x18a0] sm:$0xff]
  %v6433 = vld [vmem:[%s3 + $0x18a8] sm:$0xff]
  %v6434 = vld [vmem:[%s3 + $0x18b0] sm:$0xff]
  %v6435 = vld [vmem:[%s3 + $0x18b8] sm:$0xff]
  %v6436 = vld [vmem:[%s3 + $0x18c0] sm:$0xff]
  %v6437 = vld [vmem:[%s3 + $0x18c8] sm:$0xff]
  %v6438 = vld [vmem:[%s3 + $0x18d0] sm:$0xff]
  %v6439 = vld [vmem:[%s3 + $0x18d8] sm:$0xff]
  %v6440 = vld [vmem:[%s3 + $0x18e0] sm:$0xff]
  %v6441 = vld [vmem:[%s3 + $0x18e8] sm:$0xff]
  %v6442 = vld [vmem:[%s3 + $0x18f0] sm:$0xff]
  %v6443 = vld [vmem:[%s3 + $0x18f8] sm:$0xff]
  %v6444 = vld [vmem:[%s3 + $0x1900] sm:$0xff]
  %v6445 = vld [vmem:[%s3 + $0x1908] sm:$0xff]
  %v6446 = vld [vmem:[%s3 + $0x1910] sm:$0xff]
  %v6447 = vld [vmem:[%s3 + $0x1918] sm:$0xff]
  %v6448 = vld [vmem:[%s3 + $0x1920] sm:$0xff]
  %v6449 = vld [vmem:[%s3 + $0x1928] sm:$0xff]
  %v6450 = vld [vmem:[%s3 + $0x1930] sm:$0xff]
  %v6451 = vld [vmem:[%s3 + $0x1938] sm:$0xff]
  %v6452 = vld [vmem:[%s3 + $0x1940] sm:$0xff]
  %v6453 = vld [vmem:[%s3 + $0x1948] sm:$0xff]
  %v6454 = vld [vmem:[%s3 + $0x1950] sm:$0xff]
  %v6455 = vld [vmem:[%s3 + $0x1958] sm:$0xff]
  %v6456 = vld [vmem:[%s3 + $0x1960] sm:$0xff]
  %v6457 = vld [vmem:[%s3 + $0x1968] sm:$0xff]
  %v6458 = vld [vmem:[%s3 + $0x1970] sm:$0xff]
  %v6459 = vld [vmem:[%s3 + $0x1978] sm:$0xff]
  %v6460 = vld [vmem:[%s3 + $0x1980] sm:$0xff]
  %v6461 = vld [vmem:[%s3 + $0x1988] sm:$0xff]
  %v6462 = vld [vmem:[%s3 + $0x1990] sm:$0xff]
  %v6463 = vld [vmem:[%s3 + $0x1998] sm:$0xff]
  %v6464 = vld [vmem:[%s3 + $0x19a0] sm:$0xff]
  %v6465 = vld [vmem:[%s3 + $0x19a8] sm:$0xff]
  %v6466 = vld [vmem:[%s3 + $0x19b0] sm:$0xff]
  %v6467 = vld [vmem:[%s3 + $0x19b8] sm:$0xff]
  %v6468 = vld [vmem:[%s3 + $0x19c0] sm:$0xff]
  %v6469 = vld [vmem:[%s3 + $0x19c8] sm:$0xff]
  %v6470 = vld [vmem:[%s3 + $0x19d0] sm:$0xff]
  %v6471 = vld [vmem:[%s3 + $0x19d8] sm:$0xff]
  %v6472 = vld [vmem:[%s3 + $0x19e0] sm:$0xff]
  %v6473 = vld [vmem:[%s3 + $0x19e8] sm:$0xff]
  %v6474 = vld [vmem:[%s3 + $0x19f0] sm:$0xff]
  %v6475 = vld [vmem:[%s3 + $0x19f8] sm:$0xff]
  %v6476 = vld [vmem:[%s3 + $0x1a00] sm:$0xff]
  %v6477 = vld [vmem:[%s3 + $0x1a08] sm:$0xff]
  %v6478 = vld [vmem:[%s3 + $0x1a10] sm:$0xff]
  %v6479 = vld [vmem:[%s3 + $0x1a18] sm:$0xff]
  %v6480 = vld [vmem:[%s3 + $0x1a20] sm:$0xff]
  %v6481 = vld [vmem:[%s3 + $0x1a28] sm:$0xff]
  %v6482 = vld [vmem:[%s3 + $0x1a30] sm:$0xff]
  %v6483 = vld [vmem:[%s3 + $0x1a38] sm:$0xff]
  %v6484 = vld [vmem:[%s3 + $0x1a40] sm:$0xff]
  %v6485 = vld [vmem:[%s3 + $0x1a48] sm:$0xff]
  %v6486 = vld [vmem:[%s3 + $0x1a50] sm:$0xff]
  %v6487 = vld [vmem:[%s3 + $0x1a58] sm:$0xff]
  %v6488 = vld [vmem:[%s3 + $0x1a60] sm:$0xff]
  %v6489 = vld [vmem:[%s3 + $0x1a68] sm:$0xff]
  %v6490 = vld [vmem:[%s3 + $0x1a70] sm:$0xff]
  %v6491 = vld [vmem:[%s3 + $0x1a78] sm:$0xff]
  %v6492 = vld [vmem:[%s3 + $0x1a80] sm:$0xff]
  %v6493 = vld [vmem:[%s3 + $0x1a88] sm:$0xff]
  %v6494 = vld [vmem:[%s3 + $0x1a90] sm:$0xff]
  %v6495 = vld [vmem:[%s3 + $0x1a98] sm:$0xff]
  %v6496 = vld [vmem:[%s3 + $0x1aa0] sm:$0xff]
  %v6497 = vld [vmem:[%s3 + $0x1aa8] sm:$0xff]
  %v6498 = vld [vmem:[%s3 + $0x1ab0] sm:$0xff]
  %v6499 = vld [vmem:[%s3 + $0x1ab8] sm:$0xff]
  %v6500 = vld [vmem:[%s3 + $0x1ac0] sm:$0xff]
  %v6501 = vld [vmem:[%s3 + $0x1ac8] sm:$0xff]
  %v6502 = vld [vmem:[%s3 + $0x1ad0] sm:$0xff]
  %v6503 = vld [vmem:[%s3 + $0x1ad8] sm:$0xff]
  %v6504 = vld [vmem:[%s3 + $0x1ae0] sm:$0xff]
  %v6505 = vld [vmem:[%s3 + $0x1ae8] sm:$0xff]
  %v6506 = vld [vmem:[%s3 + $0x1af0] sm:$0xff]
  %v6507 = vld [vmem:[%s3 + $0x1af8] sm:$0xff]
  %v6508 = vld [vmem:[%s3 + $0x1b00] sm:$0xff]
  %v6509 = vld [vmem:[%s3 + $0x1b08] sm:$0xff]
  %v6510 = vld [vmem:[%s3 + $0x1b10] sm:$0xff]
  %v6511 = vld [vmem:[%s3 + $0x1b18] sm:$0xff]
  %v6512 = vld [vmem:[%s3 + $0x1b20] sm:$0xff]
  %v6513 = vld [vmem:[%s3 + $0x1b28] sm:$0xff]
  %v6514 = vld [vmem:[%s3 + $0x1b30] sm:$0xff]
  %v6515 = vld [vmem:[%s3 + $0x1b38] sm:$0xff]
  %v6516 = vld [vmem:[%s3 + $0x1b40] sm:$0xff]
  %v6517 = vld [vmem:[%s3 + $0x1b48] sm:$0xff]
  %v6518 = vld [vmem:[%s3 + $0x1b50] sm:$0xff]
  %v6519 = vld [vmem:[%s3 + $0x1b58] sm:$0xff]
  %v6520 = vld [vmem:[%s3 + $0x1b60] sm:$0xff]
  %v6521 = vld [vmem:[%s3 + $0x1b68] sm:$0xff]
  %v6522 = vld [vmem:[%s3 + $0x1b70] sm:$0xff]
  %v6523 = vld [vmem:[%s3 + $0x1b78] sm:$0xff]
  %v6524 = vld [vmem:[%s3 + $0x1b80] sm:$0xff]
  %v6525 = vld [vmem:[%s3 + $0x1b88] sm:$0xff]
  %v6526 = vld [vmem:[%s3 + $0x1b90] sm:$0xff]
  %v6527 = vld [vmem:[%s3 + $0x1b98] sm:$0xff]
  %v6528 = vld [vmem:[%s3 + $0x1ba0] sm:$0xff]
  %v6529 = vld [vmem:[%s3 + $0x1ba8] sm:$0xff]
  %v6530 = vld [vmem:[%s3 + $0x1bb0] sm:$0xff]
  %v6531 = vld [vmem:[%s3 + $0x1bb8] sm:$0xff]
  %v6532 = vld [vmem:[%s3 + $0x1bc0] sm:$0xff]
  %v6533 = vld [vmem:[%s3 + $0x1bc8] sm:$0xff]
  %v6534 = vld [vmem:[%s3 + $0x1bd0] sm:$0xff]
  %v6535 = vld [vmem:[%s3 + $0x1bd8] sm:$0xff]
  %v6536 = vld [vmem:[%s3 + $0x1be0] sm:$0xff]
  %v6537 = vld [vmem:[%s3 + $0x1be8] sm:$0xff]
  %v6538 = vld [vmem:[%s3 + $0x1bf0] sm:$0xff]
  %v6539 = vld [vmem:[%s3 + $0x1bf8] sm:$0xff]
  %v6540 = vld [vmem:[%s3 + $0x1c00] sm:$0xff]
  %v6541 = vld [vmem:[%s3 + $0x1c08] sm:$0xff]
  %v6542 = vld [vmem:[%s3 + $0x1c10] sm:$0xff]
  %v6543 = vld [vmem:[%s3 + $0x1c18] sm:$0xff]
  %v6544 = vld [vmem:[%s3 + $0x1c20] sm:$0xff]
  %v6545 = vld [vmem:[%s3 + $0x1c28] sm:$0xff]
  %v6546 = vld [vmem:[%s3 + $0x1c30] sm:$0xff]
  %v6547 = vld [vmem:[%s3 + $0x1c38] sm:$0xff]
  %v6548 = vld [vmem:[%s3 + $0x1c40] sm:$0xff]
  %v6549 = vld [vmem:[%s3 + $0x1c48] sm:$0xff]
  %v6550 = vld [vmem:[%s3 + $0x1c50] sm:$0xff]
  %v6551 = vld [vmem:[%s3 + $0x1c58] sm:$0xff]
  %v6552 = vld [vmem:[%s3 + $0x1c60] sm:$0xff]
  %v6553 = vld [vmem:[%s3 + $0x1c68] sm:$0xff]
  %v6554 = vld [vmem:[%s3 + $0x1c70] sm:$0xff]
  %v6555 = vld [vmem:[%s3 + $0x1c78] sm:$0xff]
  %v6556 = vld [vmem:[%s3 + $0x1c80] sm:$0xff]
  %v6557 = vld [vmem:[%s3 + $0x1c88] sm:$0xff]
  %v6558 = vld [vmem:[%s3 + $0x1c90] sm:$0xff]
  %v6559 = vld [vmem:[%s3 + $0x1c98] sm:$0xff]
  %v6560 = vld [vmem:[%s3 + $0x1ca0] sm:$0xff]
  %v6561 = vld [vmem:[%s3 + $0x1ca8] sm:$0xff]
  %v6562 = vld [vmem:[%s3 + $0x1cb0] sm:$0xff]
  %v6563 = vld [vmem:[%s3 + $0x1cb8] sm:$0xff]
  %v6564 = vld [vmem:[%s3 + $0x1cc0] sm:$0xff]
  %v6565 = vld [vmem:[%s3 + $0x1cc8] sm:$0xff]
  %v6566 = vld [vmem:[%s3 + $0x1cd0] sm:$0xff]
  %v6567 = vld [vmem:[%s3 + $0x1cd8] sm:$0xff]
  %v6568 = vld [vmem:[%s3 + $0x1ce0] sm:$0xff]
  %v6569 = vld [vmem:[%s3 + $0x1ce8] sm:$0xff]
  %v6570 = vld [vmem:[%s3 + $0x1cf0] sm:$0xff]
  %v6571 = vld [vmem:[%s3 + $0x1cf8] sm:$0xff]
  %v6572 = vld [vmem:[%s3 + $0x1d00] sm:$0xff]
  %v6573 = vld [vmem:[%s3 + $0x1d08] sm:$0xff]
  %v6574 = vld [vmem:[%s3 + $0x1d10] sm:$0xff]
  %v6575 = vld [vmem:[%s3 + $0x1d18] sm:$0xff]
  %v6576 = vld [vmem:[%s3 + $0x1d20] sm:$0xff]
  %v6577 = vld [vmem:[%s3 + $0x1d28] sm:$0xff]
  %v6578 = vld [vmem:[%s3 + $0x1d30] sm:$0xff]
  %v6579 = vld [vmem:[%s3 + $0x1d38] sm:$0xff]
  %v6580 = vld [vmem:[%s3 + $0x1d40] sm:$0xff]
  %v6581 = vld [vmem:[%s3 + $0x1d48] sm:$0xff]
  %v6582 = vld [vmem:[%s3 + $0x1d50] sm:$0xff]
  %v6583 = vld [vmem:[%s3 + $0x1d58] sm:$0xff]
  %v6584 = vld [vmem:[%s3 + $0x1d60] sm:$0xff]
  %v6585 = vld [vmem:[%s3 + $0x1d68] sm:$0xff]
  %v6586 = vld [vmem:[%s3 + $0x1d70] sm:$0xff]
  %v6587 = vld [vmem:[%s3 + $0x1d78] sm:$0xff]
  %v6588 = vld [vmem:[%s3 + $0x1d80] sm:$0xff]
  %v6589 = vld [vmem:[%s3 + $0x1d88] sm:$0xff]
  %v6590 = vld [vmem:[%s3 + $0x1d90] sm:$0xff]
  %v6591 = vld [vmem:[%s3 + $0x1d98] sm:$0xff]
  %v6592 = vld [vmem:[%s3 + $0x1da0] sm:$0xff]
  %v6593 = vld [vmem:[%s3 + $0x1da8] sm:$0xff]
  %v6594 = vld [vmem:[%s3 + $0x1db0] sm:$0xff]
  %v6595 = vld [vmem:[%s3 + $0x1db8] sm:$0xff]
  %v6596 = vld [vmem:[%s3 + $0x1dc0] sm:$0xff]
  %v6597 = vld [vmem:[%s3 + $0x1dc8] sm:$0xff]
  %v6598 = vld [vmem:[%s3 + $0x1dd0] sm:$0xff]
  %v6599 = vld [vmem:[%s3 + $0x1dd8] sm:$0xff]
  %v6600 = vld [vmem:[%s3 + $0x1de0] sm:$0xff]
  %v6601 = vld [vmem:[%s3 + $0x1de8] sm:$0xff]
  %v6602 = vld [vmem:[%s3 + $0x1df0] sm:$0xff]
  %v6603 = vld [vmem:[%s3 + $0x1df8] sm:$0xff]
  %v6604 = vld [vmem:[%s3 + $0x1e00] sm:$0xff]
  %v6605 = vld [vmem:[%s3 + $0x1e08] sm:$0xff]
  %v6606 = vld [vmem:[%s3 + $0x1e10] sm:$0xff]
  %v6607 = vld [vmem:[%s3 + $0x1e18] sm:$0xff]
  %v6608 = vld [vmem:[%s3 + $0x1e20] sm:$0xff]
  %v6609 = vld [vmem:[%s3 + $0x1e28] sm:$0xff]
  %v6610 = vld [vmem:[%s3 + $0x1e30] sm:$0xff]
  %v6611 = vld [vmem:[%s3 + $0x1e38] sm:$0xff]
  %v6612 = vld [vmem:[%s3 + $0x1e40] sm:$0xff]
  %v6613 = vld [vmem:[%s3 + $0x1e48] sm:$0xff]
  %v6614 = vld [vmem:[%s3 + $0x1e50] sm:$0xff]
  %v6615 = vld [vmem:[%s3 + $0x1e58] sm:$0xff]
  %v6616 = vld [vmem:[%s3 + $0x1e60] sm:$0xff]
  %v6617 = vld [vmem:[%s3 + $0x1e68] sm:$0xff]
  %v6618 = vld [vmem:[%s3 + $0x1e70] sm:$0xff]
  %v6619 = vld [vmem:[%s3 + $0x1e78] sm:$0xff]
  %v6620 = vld [vmem:[%s3 + $0x1e80] sm:$0xff]
  %v6621 = vld [vmem:[%s3 + $0x1e88] sm:$0xff]
  %v6622 = vld [vmem:[%s3 + $0x1e90] sm:$0xff]
  %v6623 = vld [vmem:[%s3 + $0x1e98] sm:$0xff]
  %v6624 = vld [vmem:[%s3 + $0x1ea0] sm:$0xff]
  %v6625 = vld [vmem:[%s3 + $0x1ea8] sm:$0xff]
  %v6626 = vld [vmem:[%s3 + $0x1eb0] sm:$0xff]
  %v6627 = vld [vmem:[%s3 + $0x1eb8] sm:$0xff]
  %v6628 = vld [vmem:[%s3 + $0x1ec0] sm:$0xff]
  %v6629 = vld [vmem:[%s3 + $0x1ec8] sm:$0xff]
  %v6630 = vld [vmem:[%s3 + $0x1ed0] sm:$0xff]
  %v6631 = vld [vmem:[%s3 + $0x1ed8] sm:$0xff]
  %v6632 = vld [vmem:[%s3 + $0x1ee0] sm:$0xff]
  %v6633 = vld [vmem:[%s3 + $0x1ee8] sm:$0xff]
  %v6634 = vld [vmem:[%s3 + $0x1ef0] sm:$0xff]
  %v6635 = vld [vmem:[%s3 + $0x1ef8] sm:$0xff]
  %v6636 = vld [vmem:[%s3 + $0x1f00] sm:$0xff]
  %v6637 = vld [vmem:[%s3 + $0x1f08] sm:$0xff]
  %v6638 = vld [vmem:[%s3 + $0x1f10] sm:$0xff]
  %v6639 = vld [vmem:[%s3 + $0x1f18] sm:$0xff]
  %v6640 = vld [vmem:[%s3 + $0x1f20] sm:$0xff]
  %v6641 = vld [vmem:[%s3 + $0x1f28] sm:$0xff]
  %v6642 = vld [vmem:[%s3 + $0x1f30] sm:$0xff]
  %v6643 = vld [vmem:[%s3 + $0x1f38] sm:$0xff]
  %v6644 = vld [vmem:[%s3 + $0x1f40] sm:$0xff]
  %v6645 = vld [vmem:[%s3 + $0x1f48] sm:$0xff]
  %v6646 = vld [vmem:[%s3 + $0x1f50] sm:$0xff]
  %v6647 = vld [vmem:[%s3 + $0x1f58] sm:$0xff]
  %v6648 = vld [vmem:[%s3 + $0x1f60] sm:$0xff]
  %v6649 = vld [vmem:[%s3 + $0x1f68] sm:$0xff]
  %v6650 = vld [vmem:[%s3 + $0x1f70] sm:$0xff]
  %v6651 = vld [vmem:[%s3 + $0x1f78] sm:$0xff]
  %v6652 = vld [vmem:[%s3 + $0x1f80] sm:$0xff]
  %v6653 = vld [vmem:[%s3 + $0x1f88] sm:$0xff]
  %v6654 = vld [vmem:[%s3 + $0x1f90] sm:$0xff]
  %v6655 = vld [vmem:[%s3 + $0x1f98] sm:$0xff]
  %v6656 = vld [vmem:[%s3 + $0x1fa0] sm:$0xff]
  %v6657 = vld [vmem:[%s3 + $0x1fa8] sm:$0xff]
  %v6658 = vld [vmem:[%s3 + $0x1fb0] sm:$0xff]
  %v6659 = vld [vmem:[%s3 + $0x1fb8] sm:$0xff]
  %v6660 = vld [vmem:[%s3 + $0x1fc0] sm:$0xff]
  %v6661 = vld [vmem:[%s3 + $0x1fc8] sm:$0xff]
  %v6662 = vld [vmem:[%s3 + $0x1fd0] sm:$0xff]
  %v6663 = vld [vmem:[%s3 + $0x1fd8] sm:$0xff]
  %v6664 = vld [vmem:[%s3 + $0x1fe0] sm:$0xff]
  %v6665 = vld [vmem:[%s3 + $0x1fe8] sm:$0xff]
  %v6666 = vld [vmem:[%s3 + $0x1ff0] sm:$0xff]
  %v6667 = vld [vmem:[%s3 + $0x1ff8] sm:$0xff]
  %v6668 = vld [vmem:[%s4] sm:$0xff]
  %v6670 = vlaneseq
  %v6671 = vshrl.u32 %v6670, 7
  %v6672 = vsub.s32 0, %v6671
  %v6673 = vrot.slane %v6668, %v6672
  %v6674 = vlaneseq
  %v6675 = vshrl.u32 %v6674, 7
  %v6676 = vsub.s32 1, %v6675
  %v6677 = vrot.slane %v6668, %v6676
  %v6678 = vlaneseq
  %v6679 = vshrl.u32 %v6678, 7
  %v6680 = vsub.s32 2, %v6679
  %v6681 = vrot.slane %v6668, %v6680
  %v6682 = vlaneseq
  %v6683 = vshrl.u32 %v6682, 7
  %v6684 = vsub.s32 3, %v6683
  %v6685 = vrot.slane %v6668, %v6684
  %v6686 = vlaneseq
  %v6687 = vshrl.u32 %v6686, 7
  %v6688 = vsub.s32 4, %v6687
  %v6689 = vrot.slane %v6668, %v6688
  %v6690 = vlaneseq
  %v6691 = vshrl.u32 %v6690, 7
  %v6692 = vsub.s32 5, %v6691
  %v6693 = vrot.slane %v6668, %v6692
  %v6694 = vlaneseq
  %v6695 = vshrl.u32 %v6694, 7
  %v6696 = vsub.s32 6, %v6695
  %v6697 = vrot.slane %v6668, %v6696
  %v6698 = vlaneseq
  %v6699 = vshrl.u32 %v6698, 7
  %v6700 = vsub.s32 7, %v6699
  %v6701 = vrot.slane %v6668, %v6700
  %v7734 = vunpack.c.l.b16 %v5644
  %v7735 = vunpack.c.h.b16 %v5644
  %v7736 = vunpack.c.l.b16 %v5645
  %v7737 = vunpack.c.h.b16 %v5645
  %v7738 = vunpack.c.l.b16 %v5646
  %v7739 = vunpack.c.h.b16 %v5646
  %v7740 = vunpack.c.l.b16 %v5647
  %v7741 = vunpack.c.h.b16 %v5647
  %v7742 = vunpack.c.l.b16 %v5648
  %v7743 = vunpack.c.h.b16 %v5648
  %v7744 = vunpack.c.l.b16 %v5649
  %v7745 = vunpack.c.h.b16 %v5649
  %v7746 = vunpack.c.l.b16 %v5650
  %v7747 = vunpack.c.h.b16 %v5650
  %v7748 = vunpack.c.l.b16 %v5651
  %v7749 = vunpack.c.h.b16 %v5651
  %v7750 = vunpack.c.l.b16 %v5652
  %v7751 = vunpack.c.h.b16 %v5652
  %v7752 = vunpack.c.l.b16 %v5653
  %v7753 = vunpack.c.h.b16 %v5653
  %v7754 = vunpack.c.l.b16 %v5654
  %v7755 = vunpack.c.h.b16 %v5654
  %v7756 = vunpack.c.l.b16 %v5655
  %v7757 = vunpack.c.h.b16 %v5655
  %v7758 = vunpack.c.l.b16 %v5656
  %v7759 = vunpack.c.h.b16 %v5656
  %v7760 = vunpack.c.l.b16 %v5657
  %v7761 = vunpack.c.h.b16 %v5657
  %v7762 = vunpack.c.l.b16 %v5658
  %v7763 = vunpack.c.h.b16 %v5658
  %v7764 = vunpack.c.l.b16 %v5659
  %v7765 = vunpack.c.h.b16 %v5659
  %v7766 = vunpack.c.l.b16 %v5660
  %v7767 = vunpack.c.h.b16 %v5660
  %v7768 = vunpack.c.l.b16 %v5661
  %v7769 = vunpack.c.h.b16 %v5661
  %v7770 = vunpack.c.l.b16 %v5662
  %v7771 = vunpack.c.h.b16 %v5662
  %v7772 = vunpack.c.l.b16 %v5663
  %v7773 = vunpack.c.h.b16 %v5663
  %v7774 = vunpack.c.l.b16 %v5664
  %v7775 = vunpack.c.h.b16 %v5664
  %v7776 = vunpack.c.l.b16 %v5665
  %v7777 = vunpack.c.h.b16 %v5665
  %v7778 = vunpack.c.l.b16 %v5666
  %v7779 = vunpack.c.h.b16 %v5666
  %v7780 = vunpack.c.l.b16 %v5667
  %v7781 = vunpack.c.h.b16 %v5667
  %v7782 = vunpack.c.l.b16 %v5668
  %v7783 = vunpack.c.h.b16 %v5668
  %v7784 = vunpack.c.l.b16 %v5669
  %v7785 = vunpack.c.h.b16 %v5669
  %v7786 = vunpack.c.l.b16 %v5670
  %v7787 = vunpack.c.h.b16 %v5670
  %v7788 = vunpack.c.l.b16 %v5671
  %v7789 = vunpack.c.h.b16 %v5671
  %v7790 = vunpack.c.l.b16 %v5672
  %v7791 = vunpack.c.h.b16 %v5672
  %v7792 = vunpack.c.l.b16 %v5673
  %v7793 = vunpack.c.h.b16 %v5673
  %v7794 = vunpack.c.l.b16 %v5674
  %v7795 = vunpack.c.h.b16 %v5674
  %v7796 = vunpack.c.l.b16 %v5675
  %v7797 = vunpack.c.h.b16 %v5675
  %v7798 = vunpack.c.l.b16 %v5676
  %v7799 = vunpack.c.h.b16 %v5676
  %v7800 = vunpack.c.l.b16 %v5677
  %v7801 = vunpack.c.h.b16 %v5677
  %v7802 = vunpack.c.l.b16 %v5678
  %v7803 = vunpack.c.h.b16 %v5678
  %v7804 = vunpack.c.l.b16 %v5679
  %v7805 = vunpack.c.h.b16 %v5679
  %v7806 = vunpack.c.l.b16 %v5680
  %v7807 = vunpack.c.h.b16 %v5680
  %v7808 = vunpack.c.l.b16 %v5681
  %v7809 = vunpack.c.h.b16 %v5681
  %v7810 = vunpack.c.l.b16 %v5682
  %v7811 = vunpack.c.h.b16 %v5682
  %v7812 = vunpack.c.l.b16 %v5683
  %v7813 = vunpack.c.h.b16 %v5683
  %v7814 = vunpack.c.l.b16 %v5684
  %v7815 = vunpack.c.h.b16 %v5684
  %v7816 = vunpack.c.l.b16 %v5685
  %v7817 = vunpack.c.h.b16 %v5685
  %v7818 = vunpack.c.l.b16 %v5686
  %v7819 = vunpack.c.h.b16 %v5686
  %v7820 = vunpack.c.l.b16 %v5687
  %v7821 = vunpack.c.h.b16 %v5687
  %v7822 = vunpack.c.l.b16 %v5688
  %v7823 = vunpack.c.h.b16 %v5688
  %v7824 = vunpack.c.l.b16 %v5689
  %v7825 = vunpack.c.h.b16 %v5689
  %v7826 = vunpack.c.l.b16 %v5690
  %v7827 = vunpack.c.h.b16 %v5690
  %v7828 = vunpack.c.l.b16 %v5691
  %v7829 = vunpack.c.h.b16 %v5691
  %v7830 = vunpack.c.l.b16 %v5692
  %v7831 = vunpack.c.h.b16 %v5692
  %v7832 = vunpack.c.l.b16 %v5693
  %v7833 = vunpack.c.h.b16 %v5693
  %v7834 = vunpack.c.l.b16 %v5694
  %v7835 = vunpack.c.h.b16 %v5694
  %v7836 = vunpack.c.l.b16 %v5695
  %v7837 = vunpack.c.h.b16 %v5695
  %v7838 = vunpack.c.l.b16 %v5696
  %v7839 = vunpack.c.h.b16 %v5696
  %v7840 = vunpack.c.l.b16 %v5697
  %v7841 = vunpack.c.h.b16 %v5697
  %v7842 = vunpack.c.l.b16 %v5698
  %v7843 = vunpack.c.h.b16 %v5698
  %v7844 = vunpack.c.l.b16 %v5699
  %v7845 = vunpack.c.h.b16 %v5699
  %v7846 = vunpack.c.l.b16 %v5700
  %v7847 = vunpack.c.h.b16 %v5700
  %v7848 = vunpack.c.l.b16 %v5701
  %v7849 = vunpack.c.h.b16 %v5701
  %v7850 = vunpack.c.l.b16 %v5702
  %v7851 = vunpack.c.h.b16 %v5702
  %v7852 = vunpack.c.l.b16 %v5703
  %v7853 = vunpack.c.h.b16 %v5703
  %v7854 = vunpack.c.l.b16 %v5704
  %v7855 = vunpack.c.h.b16 %v5704
  %v7856 = vunpack.c.l.b16 %v5705
  %v7857 = vunpack.c.h.b16 %v5705
  %v7858 = vunpack.c.l.b16 %v5706
  %v7859 = vunpack.c.h.b16 %v5706
  %v7860 = vunpack.c.l.b16 %v5707
  %v7861 = vunpack.c.h.b16 %v5707
  %v7862 = vunpack.c.l.b16 %v5708
  %v7863 = vunpack.c.h.b16 %v5708
  %v7864 = vunpack.c.l.b16 %v5709
  %v7865 = vunpack.c.h.b16 %v5709
  %v7866 = vunpack.c.l.b16 %v5710
  %v7867 = vunpack.c.h.b16 %v5710
  %v7868 = vunpack.c.l.b16 %v5711
  %v7869 = vunpack.c.h.b16 %v5711
  %v7870 = vunpack.c.l.b16 %v5712
  %v7871 = vunpack.c.h.b16 %v5712
  %v7872 = vunpack.c.l.b16 %v5713
  %v7873 = vunpack.c.h.b16 %v5713
  %v7874 = vunpack.c.l.b16 %v5714
  %v7875 = vunpack.c.h.b16 %v5714
  %v7876 = vunpack.c.l.b16 %v5715
  %v7877 = vunpack.c.h.b16 %v5715
  %v7878 = vunpack.c.l.b16 %v5716
  %v7879 = vunpack.c.h.b16 %v5716
  %v7880 = vunpack.c.l.b16 %v5717
  %v7881 = vunpack.c.h.b16 %v5717
  %v7882 = vunpack.c.l.b16 %v5718
  %v7883 = vunpack.c.h.b16 %v5718
  %v7884 = vunpack.c.l.b16 %v5719
  %v7885 = vunpack.c.h.b16 %v5719
  %v7886 = vunpack.c.l.b16 %v5720
  %v7887 = vunpack.c.h.b16 %v5720
  %v7888 = vunpack.c.l.b16 %v5721
  %v7889 = vunpack.c.h.b16 %v5721
  %v7890 = vunpack.c.l.b16 %v5722
  %v7891 = vunpack.c.h.b16 %v5722
  %v7892 = vunpack.c.l.b16 %v5723
  %v7893 = vunpack.c.h.b16 %v5723
  %v7894 = vunpack.c.l.b16 %v5724
  %v7895 = vunpack.c.h.b16 %v5724
  %v7896 = vunpack.c.l.b16 %v5725
  %v7897 = vunpack.c.h.b16 %v5725
  %v7898 = vunpack.c.l.b16 %v5726
  %v7899 = vunpack.c.h.b16 %v5726
  %v7900 = vunpack.c.l.b16 %v5727
  %v7901 = vunpack.c.h.b16 %v5727
  %v7902 = vunpack.c.l.b16 %v5728
  %v7903 = vunpack.c.h.b16 %v5728
  %v7904 = vunpack.c.l.b16 %v5729
  %v7905 = vunpack.c.h.b16 %v5729
  %v7906 = vunpack.c.l.b16 %v5730
  %v7907 = vunpack.c.h.b16 %v5730
  %v7908 = vunpack.c.l.b16 %v5731
  %v7909 = vunpack.c.h.b16 %v5731
  %v7910 = vunpack.c.l.b16 %v5732
  %v7911 = vunpack.c.h.b16 %v5732
  %v7912 = vunpack.c.l.b16 %v5733
  %v7913 = vunpack.c.h.b16 %v5733
  %v7914 = vunpack.c.l.b16 %v5734
  %v7915 = vunpack.c.h.b16 %v5734
  %v7916 = vunpack.c.l.b16 %v5735
  %v7917 = vunpack.c.h.b16 %v5735
  %v7918 = vunpack.c.l.b16 %v5736
  %v7919 = vunpack.c.h.b16 %v5736
  %v7920 = vunpack.c.l.b16 %v5737
  %v7921 = vunpack.c.h.b16 %v5737
  %v7922 = vunpack.c.l.b16 %v5738
  %v7923 = vunpack.c.h.b16 %v5738
  %v7924 = vunpack.c.l.b16 %v5739
  %v7925 = vunpack.c.h.b16 %v5739
  %v7926 = vunpack.c.l.b16 %v5740
  %v7927 = vunpack.c.h.b16 %v5740
  %v7928 = vunpack.c.l.b16 %v5741
  %v7929 = vunpack.c.h.b16 %v5741
  %v7930 = vunpack.c.l.b16 %v5742
  %v7931 = vunpack.c.h.b16 %v5742
  %v7932 = vunpack.c.l.b16 %v5743
  %v7933 = vunpack.c.h.b16 %v5743
  %v7934 = vunpack.c.l.b16 %v5744
  %v7935 = vunpack.c.h.b16 %v5744
  %v7936 = vunpack.c.l.b16 %v5745
  %v7937 = vunpack.c.h.b16 %v5745
  %v7938 = vunpack.c.l.b16 %v5746
  %v7939 = vunpack.c.h.b16 %v5746
  %v7940 = vunpack.c.l.b16 %v5747
  %v7941 = vunpack.c.h.b16 %v5747
  %v7942 = vunpack.c.l.b16 %v5748
  %v7943 = vunpack.c.h.b16 %v5748
  %v7944 = vunpack.c.l.b16 %v5749
  %v7945 = vunpack.c.h.b16 %v5749
  %v7946 = vunpack.c.l.b16 %v5750
  %v7947 = vunpack.c.h.b16 %v5750
  %v7948 = vunpack.c.l.b16 %v5751
  %v7949 = vunpack.c.h.b16 %v5751
  %v7950 = vunpack.c.l.b16 %v5752
  %v7951 = vunpack.c.h.b16 %v5752
  %v7952 = vunpack.c.l.b16 %v5753
  %v7953 = vunpack.c.h.b16 %v5753
  %v7954 = vunpack.c.l.b16 %v5754
  %v7955 = vunpack.c.h.b16 %v5754
  %v7956 = vunpack.c.l.b16 %v5755
  %v7957 = vunpack.c.h.b16 %v5755
  %v7958 = vunpack.c.l.b16 %v5756
  %v7959 = vunpack.c.h.b16 %v5756
  %v7960 = vunpack.c.l.b16 %v5757
  %v7961 = vunpack.c.h.b16 %v5757
  %v7962 = vunpack.c.l.b16 %v5758
  %v7963 = vunpack.c.h.b16 %v5758
  %v7964 = vunpack.c.l.b16 %v5759
  %v7965 = vunpack.c.h.b16 %v5759
  %v7966 = vunpack.c.l.b16 %v5760
  %v7967 = vunpack.c.h.b16 %v5760
  %v7968 = vunpack.c.l.b16 %v5761
  %v7969 = vunpack.c.h.b16 %v5761
  %v7970 = vunpack.c.l.b16 %v5762
  %v7971 = vunpack.c.h.b16 %v5762
  %v7972 = vunpack.c.l.b16 %v5763
  %v7973 = vunpack.c.h.b16 %v5763
  %v7974 = vunpack.c.l.b16 %v5764
  %v7975 = vunpack.c.h.b16 %v5764
  %v7976 = vunpack.c.l.b16 %v5765
  %v7977 = vunpack.c.h.b16 %v5765
  %v7978 = vunpack.c.l.b16 %v5766
  %v7979 = vunpack.c.h.b16 %v5766
  %v7980 = vunpack.c.l.b16 %v5767
  %v7981 = vunpack.c.h.b16 %v5767
  %v7982 = vunpack.c.l.b16 %v5768
  %v7983 = vunpack.c.h.b16 %v5768
  %v7984 = vunpack.c.l.b16 %v5769
  %v7985 = vunpack.c.h.b16 %v5769
  %v7986 = vunpack.c.l.b16 %v5770
  %v7987 = vunpack.c.h.b16 %v5770
  %v7988 = vunpack.c.l.b16 %v5771
  %v7989 = vunpack.c.h.b16 %v5771
  %v7990 = vunpack.c.l.b16 %v5772
  %v7991 = vunpack.c.h.b16 %v5772
  %v7992 = vunpack.c.l.b16 %v5773
  %v7993 = vunpack.c.h.b16 %v5773
  %v7994 = vunpack.c.l.b16 %v5774
  %v7995 = vunpack.c.h.b16 %v5774
  %v7996 = vunpack.c.l.b16 %v5775
  %v7997 = vunpack.c.h.b16 %v5775
  %v7998 = vunpack.c.l.b16 %v5776
  %v7999 = vunpack.c.h.b16 %v5776
  %v8000 = vunpack.c.l.b16 %v5777
  %v8001 = vunpack.c.h.b16 %v5777
  %v8002 = vunpack.c.l.b16 %v5778
  %v8003 = vunpack.c.h.b16 %v5778
  %v8004 = vunpack.c.l.b16 %v5779
  %v8005 = vunpack.c.h.b16 %v5779
  %v8006 = vunpack.c.l.b16 %v5780
  %v8007 = vunpack.c.h.b16 %v5780
  %v8008 = vunpack.c.l.b16 %v5781
  %v8009 = vunpack.c.h.b16 %v5781
  %v8010 = vunpack.c.l.b16 %v5782
  %v8011 = vunpack.c.h.b16 %v5782
  %v8012 = vunpack.c.l.b16 %v5783
  %v8013 = vunpack.c.h.b16 %v5783
  %v8014 = vunpack.c.l.b16 %v5784
  %v8015 = vunpack.c.h.b16 %v5784
  %v8016 = vunpack.c.l.b16 %v5785
  %v8017 = vunpack.c.h.b16 %v5785
  %v8018 = vunpack.c.l.b16 %v5786
  %v8019 = vunpack.c.h.b16 %v5786
  %v8020 = vunpack.c.l.b16 %v5787
  %v8021 = vunpack.c.h.b16 %v5787
  %v8022 = vunpack.c.l.b16 %v5788
  %v8023 = vunpack.c.h.b16 %v5788
  %v8024 = vunpack.c.l.b16 %v5789
  %v8025 = vunpack.c.h.b16 %v5789
  %v8026 = vunpack.c.l.b16 %v5790
  %v8027 = vunpack.c.h.b16 %v5790
  %v8028 = vunpack.c.l.b16 %v5791
  %v8029 = vunpack.c.h.b16 %v5791
  %v8030 = vunpack.c.l.b16 %v5792
  %v8031 = vunpack.c.h.b16 %v5792
  %v8032 = vunpack.c.l.b16 %v5793
  %v8033 = vunpack.c.h.b16 %v5793
  %v8034 = vunpack.c.l.b16 %v5794
  %v8035 = vunpack.c.h.b16 %v5794
  %v8036 = vunpack.c.l.b16 %v5795
  %v8037 = vunpack.c.h.b16 %v5795
  %v8038 = vunpack.c.l.b16 %v5796
  %v8039 = vunpack.c.h.b16 %v5796
  %v8040 = vunpack.c.l.b16 %v5797
  %v8041 = vunpack.c.h.b16 %v5797
  %v8042 = vunpack.c.l.b16 %v5798
  %v8043 = vunpack.c.h.b16 %v5798
  %v8044 = vunpack.c.l.b16 %v5799
  %v8045 = vunpack.c.h.b16 %v5799
  %v8046 = vunpack.c.l.b16 %v5800
  %v8047 = vunpack.c.h.b16 %v5800
  %v8048 = vunpack.c.l.b16 %v5801
  %v8049 = vunpack.c.h.b16 %v5801
  %v8050 = vunpack.c.l.b16 %v5802
  %v8051 = vunpack.c.h.b16 %v5802
  %v8052 = vunpack.c.l.b16 %v5803
  %v8053 = vunpack.c.h.b16 %v5803
  %v8054 = vunpack.c.l.b16 %v5804
  %v8055 = vunpack.c.h.b16 %v5804
  %v8056 = vunpack.c.l.b16 %v5805
  %v8057 = vunpack.c.h.b16 %v5805
  %v8058 = vunpack.c.l.b16 %v5806
  %v8059 = vunpack.c.h.b16 %v5806
  %v8060 = vunpack.c.l.b16 %v5807
  %v8061 = vunpack.c.h.b16 %v5807
  %v8062 = vunpack.c.l.b16 %v5808
  %v8063 = vunpack.c.h.b16 %v5808
  %v8064 = vunpack.c.l.b16 %v5809
  %v8065 = vunpack.c.h.b16 %v5809
  %v8066 = vunpack.c.l.b16 %v5810
  %v8067 = vunpack.c.h.b16 %v5810
  %v8068 = vunpack.c.l.b16 %v5811
  %v8069 = vunpack.c.h.b16 %v5811
  %v8070 = vunpack.c.l.b16 %v5812
  %v8071 = vunpack.c.h.b16 %v5812
  %v8072 = vunpack.c.l.b16 %v5813
  %v8073 = vunpack.c.h.b16 %v5813
  %v8074 = vunpack.c.l.b16 %v5814
  %v8075 = vunpack.c.h.b16 %v5814
  %v8076 = vunpack.c.l.b16 %v5815
  %v8077 = vunpack.c.h.b16 %v5815
  %v8078 = vunpack.c.l.b16 %v5816
  %v8079 = vunpack.c.h.b16 %v5816
  %v8080 = vunpack.c.l.b16 %v5817
  %v8081 = vunpack.c.h.b16 %v5817
  %v8082 = vunpack.c.l.b16 %v5818
  %v8083 = vunpack.c.h.b16 %v5818
  %v8084 = vunpack.c.l.b16 %v5819
  %v8085 = vunpack.c.h.b16 %v5819
  %v8086 = vunpack.c.l.b16 %v5820
  %v8087 = vunpack.c.h.b16 %v5820
  %v8088 = vunpack.c.l.b16 %v5821
  %v8089 = vunpack.c.h.b16 %v5821
  %v8090 = vunpack.c.l.b16 %v5822
  %v8091 = vunpack.c.h.b16 %v5822
  %v8092 = vunpack.c.l.b16 %v5823
  %v8093 = vunpack.c.h.b16 %v5823
  %v8094 = vunpack.c.l.b16 %v5824
  %v8095 = vunpack.c.h.b16 %v5824
  %v8096 = vunpack.c.l.b16 %v5825
  %v8097 = vunpack.c.h.b16 %v5825
  %v8098 = vunpack.c.l.b16 %v5826
  %v8099 = vunpack.c.h.b16 %v5826
  %v8100 = vunpack.c.l.b16 %v5827
  %v8101 = vunpack.c.h.b16 %v5827
  %v8102 = vunpack.c.l.b16 %v5828
  %v8103 = vunpack.c.h.b16 %v5828
  %v8104 = vunpack.c.l.b16 %v5829
  %v8105 = vunpack.c.h.b16 %v5829
  %v8106 = vunpack.c.l.b16 %v5830
  %v8107 = vunpack.c.h.b16 %v5830
  %v8108 = vunpack.c.l.b16 %v5831
  %v8109 = vunpack.c.h.b16 %v5831
  %v8110 = vunpack.c.l.b16 %v5832
  %v8111 = vunpack.c.h.b16 %v5832
  %v8112 = vunpack.c.l.b16 %v5833
  %v8113 = vunpack.c.h.b16 %v5833
  %v8114 = vunpack.c.l.b16 %v5834
  %v8115 = vunpack.c.h.b16 %v5834
  %v8116 = vunpack.c.l.b16 %v5835
  %v8117 = vunpack.c.h.b16 %v5835
  %v8118 = vunpack.c.l.b16 %v5836
  %v8119 = vunpack.c.h.b16 %v5836
  %v8120 = vunpack.c.l.b16 %v5837
  %v8121 = vunpack.c.h.b16 %v5837
  %v8122 = vunpack.c.l.b16 %v5838
  %v8123 = vunpack.c.h.b16 %v5838
  %v8124 = vunpack.c.l.b16 %v5839
  %v8125 = vunpack.c.h.b16 %v5839
  %v8126 = vunpack.c.l.b16 %v5840
  %v8127 = vunpack.c.h.b16 %v5840
  %v8128 = vunpack.c.l.b16 %v5841
  %v8129 = vunpack.c.h.b16 %v5841
  %v8130 = vunpack.c.l.b16 %v5842
  %v8131 = vunpack.c.h.b16 %v5842
  %v8132 = vunpack.c.l.b16 %v5843
  %v8133 = vunpack.c.h.b16 %v5843
  %v8134 = vunpack.c.l.b16 %v5844
  %v8135 = vunpack.c.h.b16 %v5844
  %v8136 = vunpack.c.l.b16 %v5845
  %v8137 = vunpack.c.h.b16 %v5845
  %v8138 = vunpack.c.l.b16 %v5846
  %v8139 = vunpack.c.h.b16 %v5846
  %v8140 = vunpack.c.l.b16 %v5847
  %v8141 = vunpack.c.h.b16 %v5847
  %v8142 = vunpack.c.l.b16 %v5848
  %v8143 = vunpack.c.h.b16 %v5848
  %v8144 = vunpack.c.l.b16 %v5849
  %v8145 = vunpack.c.h.b16 %v5849
  %v8146 = vunpack.c.l.b16 %v5850
  %v8147 = vunpack.c.h.b16 %v5850
  %v8148 = vunpack.c.l.b16 %v5851
  %v8149 = vunpack.c.h.b16 %v5851
  %v8150 = vunpack.c.l.b16 %v5852
  %v8151 = vunpack.c.h.b16 %v5852
  %v8152 = vunpack.c.l.b16 %v5853
  %v8153 = vunpack.c.h.b16 %v5853
  %v8154 = vunpack.c.l.b16 %v5854
  %v8155 = vunpack.c.h.b16 %v5854
  %v8156 = vunpack.c.l.b16 %v5855
  %v8157 = vunpack.c.h.b16 %v5855
  %v8158 = vunpack.c.l.b16 %v5856
  %v8159 = vunpack.c.h.b16 %v5856
  %v8160 = vunpack.c.l.b16 %v5857
  %v8161 = vunpack.c.h.b16 %v5857
  %v8162 = vunpack.c.l.b16 %v5858
  %v8163 = vunpack.c.h.b16 %v5858
  %v8164 = vunpack.c.l.b16 %v5859
  %v8165 = vunpack.c.h.b16 %v5859
  %v8166 = vunpack.c.l.b16 %v5860
  %v8167 = vunpack.c.h.b16 %v5860
  %v8168 = vunpack.c.l.b16 %v5861
  %v8169 = vunpack.c.h.b16 %v5861
  %v8170 = vunpack.c.l.b16 %v5862
  %v8171 = vunpack.c.h.b16 %v5862
  %v8172 = vunpack.c.l.b16 %v5863
  %v8173 = vunpack.c.h.b16 %v5863
  %v8174 = vunpack.c.l.b16 %v5864
  %v8175 = vunpack.c.h.b16 %v5864
  %v8176 = vunpack.c.l.b16 %v5865
  %v8177 = vunpack.c.h.b16 %v5865
  %v8178 = vunpack.c.l.b16 %v5866
  %v8179 = vunpack.c.h.b16 %v5866
  %v8180 = vunpack.c.l.b16 %v5867
  %v8181 = vunpack.c.h.b16 %v5867
  %v8182 = vunpack.c.l.b16 %v5868
  %v8183 = vunpack.c.h.b16 %v5868
  %v8184 = vunpack.c.l.b16 %v5869
  %v8185 = vunpack.c.h.b16 %v5869
  %v8186 = vunpack.c.l.b16 %v5870
  %v8187 = vunpack.c.h.b16 %v5870
  %v8188 = vunpack.c.l.b16 %v5871
  %v8189 = vunpack.c.h.b16 %v5871
  %v8190 = vunpack.c.l.b16 %v5872
  %v8191 = vunpack.c.h.b16 %v5872
  %v8192 = vunpack.c.l.b16 %v5873
  %v8193 = vunpack.c.h.b16 %v5873
  %v8194 = vunpack.c.l.b16 %v5874
  %v8195 = vunpack.c.h.b16 %v5874
  %v8196 = vunpack.c.l.b16 %v5875
  %v8197 = vunpack.c.h.b16 %v5875
  %v8198 = vunpack.c.l.b16 %v5876
  %v8199 = vunpack.c.h.b16 %v5876
  %v8200 = vunpack.c.l.b16 %v5877
  %v8201 = vunpack.c.h.b16 %v5877
  %v8202 = vunpack.c.l.b16 %v5878
  %v8203 = vunpack.c.h.b16 %v5878
  %v8204 = vunpack.c.l.b16 %v5879
  %v8205 = vunpack.c.h.b16 %v5879
  %v8206 = vunpack.c.l.b16 %v5880
  %v8207 = vunpack.c.h.b16 %v5880
  %v8208 = vunpack.c.l.b16 %v5881
  %v8209 = vunpack.c.h.b16 %v5881
  %v8210 = vunpack.c.l.b16 %v5882
  %v8211 = vunpack.c.h.b16 %v5882
  %v8212 = vunpack.c.l.b16 %v5883
  %v8213 = vunpack.c.h.b16 %v5883
  %v8214 = vunpack.c.l.b16 %v5884
  %v8215 = vunpack.c.h.b16 %v5884
  %v8216 = vunpack.c.l.b16 %v5885
  %v8217 = vunpack.c.h.b16 %v5885
  %v8218 = vunpack.c.l.b16 %v5886
  %v8219 = vunpack.c.h.b16 %v5886
  %v8220 = vunpack.c.l.b16 %v5887
  %v8221 = vunpack.c.h.b16 %v5887
  %v8222 = vunpack.c.l.b16 %v5888
  %v8223 = vunpack.c.h.b16 %v5888
  %v8224 = vunpack.c.l.b16 %v5889
  %v8225 = vunpack.c.h.b16 %v5889
  %v8226 = vunpack.c.l.b16 %v5890
  %v8227 = vunpack.c.h.b16 %v5890
  %v8228 = vunpack.c.l.b16 %v5891
  %v8229 = vunpack.c.h.b16 %v5891
  %v8230 = vunpack.c.l.b16 %v5892
  %v8231 = vunpack.c.h.b16 %v5892
  %v8232 = vunpack.c.l.b16 %v5893
  %v8233 = vunpack.c.h.b16 %v5893
  %v8234 = vunpack.c.l.b16 %v5894
  %v8235 = vunpack.c.h.b16 %v5894
  %v8236 = vunpack.c.l.b16 %v5895
  %v8237 = vunpack.c.h.b16 %v5895
  %v8238 = vunpack.c.l.b16 %v5896
  %v8239 = vunpack.c.h.b16 %v5896
  %v8240 = vunpack.c.l.b16 %v5897
  %v8241 = vunpack.c.h.b16 %v5897
  %v8242 = vunpack.c.l.b16 %v5898
  %v8243 = vunpack.c.h.b16 %v5898
  %v8244 = vunpack.c.l.b16 %v5899
  %v8245 = vunpack.c.h.b16 %v5899
  %v8246 = vunpack.c.l.b16 %v5900
  %v8247 = vunpack.c.h.b16 %v5900
  %v8248 = vunpack.c.l.b16 %v5901
  %v8249 = vunpack.c.h.b16 %v5901
  %v8250 = vunpack.c.l.b16 %v5902
  %v8251 = vunpack.c.h.b16 %v5902
  %v8252 = vunpack.c.l.b16 %v5903
  %v8253 = vunpack.c.h.b16 %v5903
  %v8254 = vunpack.c.l.b16 %v5904
  %v8255 = vunpack.c.h.b16 %v5904
  %v8256 = vunpack.c.l.b16 %v5905
  %v8257 = vunpack.c.h.b16 %v5905
  %v8258 = vunpack.c.l.b16 %v5906
  %v8259 = vunpack.c.h.b16 %v5906
  %v8260 = vunpack.c.l.b16 %v5907
  %v8261 = vunpack.c.h.b16 %v5907
  %v8262 = vunpack.c.l.b16 %v5908
  %v8263 = vunpack.c.h.b16 %v5908
  %v8264 = vunpack.c.l.b16 %v5909
  %v8265 = vunpack.c.h.b16 %v5909
  %v8266 = vunpack.c.l.b16 %v5910
  %v8267 = vunpack.c.h.b16 %v5910
  %v8268 = vunpack.c.l.b16 %v5911
  %v8269 = vunpack.c.h.b16 %v5911
  %v8270 = vunpack.c.l.b16 %v5912
  %v8271 = vunpack.c.h.b16 %v5912
  %v8272 = vunpack.c.l.b16 %v5913
  %v8273 = vunpack.c.h.b16 %v5913
  %v8274 = vunpack.c.l.b16 %v5914
  %v8275 = vunpack.c.h.b16 %v5914
  %v8276 = vunpack.c.l.b16 %v5915
  %v8277 = vunpack.c.h.b16 %v5915
  %v8278 = vunpack.c.l.b16 %v5916
  %v8279 = vunpack.c.h.b16 %v5916
  %v8280 = vunpack.c.l.b16 %v5917
  %v8281 = vunpack.c.h.b16 %v5917
  %v8282 = vunpack.c.l.b16 %v5918
  %v8283 = vunpack.c.h.b16 %v5918
  %v8284 = vunpack.c.l.b16 %v5919
  %v8285 = vunpack.c.h.b16 %v5919
  %v8286 = vunpack.c.l.b16 %v5920
  %v8287 = vunpack.c.h.b16 %v5920
  %v8288 = vunpack.c.l.b16 %v5921
  %v8289 = vunpack.c.h.b16 %v5921
  %v8290 = vunpack.c.l.b16 %v5922
  %v8291 = vunpack.c.h.b16 %v5922
  %v8292 = vunpack.c.l.b16 %v5923
  %v8293 = vunpack.c.h.b16 %v5923
  %v8294 = vunpack.c.l.b16 %v5924
  %v8295 = vunpack.c.h.b16 %v5924
  %v8296 = vunpack.c.l.b16 %v5925
  %v8297 = vunpack.c.h.b16 %v5925
  %v8298 = vunpack.c.l.b16 %v5926
  %v8299 = vunpack.c.h.b16 %v5926
  %v8300 = vunpack.c.l.b16 %v5927
  %v8301 = vunpack.c.h.b16 %v5927
  %v8302 = vunpack.c.l.b16 %v5928
  %v8303 = vunpack.c.h.b16 %v5928
  %v8304 = vunpack.c.l.b16 %v5929
  %v8305 = vunpack.c.h.b16 %v5929
  %v8306 = vunpack.c.l.b16 %v5930
  %v8307 = vunpack.c.h.b16 %v5930
  %v8308 = vunpack.c.l.b16 %v5931
  %v8309 = vunpack.c.h.b16 %v5931
  %v8310 = vunpack.c.l.b16 %v5932
  %v8311 = vunpack.c.h.b16 %v5932
  %v8312 = vunpack.c.l.b16 %v5933
  %v8313 = vunpack.c.h.b16 %v5933
  %v8314 = vunpack.c.l.b16 %v5934
  %v8315 = vunpack.c.h.b16 %v5934
  %v8316 = vunpack.c.l.b16 %v5935
  %v8317 = vunpack.c.h.b16 %v5935
  %v8318 = vunpack.c.l.b16 %v5936
  %v8319 = vunpack.c.h.b16 %v5936
  %v8320 = vunpack.c.l.b16 %v5937
  %v8321 = vunpack.c.h.b16 %v5937
  %v8322 = vunpack.c.l.b16 %v5938
  %v8323 = vunpack.c.h.b16 %v5938
  %v8324 = vunpack.c.l.b16 %v5939
  %v8325 = vunpack.c.h.b16 %v5939
  %v8326 = vunpack.c.l.b16 %v5940
  %v8327 = vunpack.c.h.b16 %v5940
  %v8328 = vunpack.c.l.b16 %v5941
  %v8329 = vunpack.c.h.b16 %v5941
  %v8330 = vunpack.c.l.b16 %v5942
  %v8331 = vunpack.c.h.b16 %v5942
  %v8332 = vunpack.c.l.b16 %v5943
  %v8333 = vunpack.c.h.b16 %v5943
  %v8334 = vunpack.c.l.b16 %v5944
  %v8335 = vunpack.c.h.b16 %v5944
  %v8336 = vunpack.c.l.b16 %v5945
  %v8337 = vunpack.c.h.b16 %v5945
  %v8338 = vunpack.c.l.b16 %v5946
  %v8339 = vunpack.c.h.b16 %v5946
  %v8340 = vunpack.c.l.b16 %v5947
  %v8341 = vunpack.c.h.b16 %v5947
  %v8342 = vunpack.c.l.b16 %v5948
  %v8343 = vunpack.c.h.b16 %v5948
  %v8344 = vunpack.c.l.b16 %v5949
  %v8345 = vunpack.c.h.b16 %v5949
  %v8346 = vunpack.c.l.b16 %v5950
  %v8347 = vunpack.c.h.b16 %v5950
  %v8348 = vunpack.c.l.b16 %v5951
  %v8349 = vunpack.c.h.b16 %v5951
  %v8350 = vunpack.c.l.b16 %v5952
  %v8351 = vunpack.c.h.b16 %v5952
  %v8352 = vunpack.c.l.b16 %v5953
  %v8353 = vunpack.c.h.b16 %v5953
  %v8354 = vunpack.c.l.b16 %v5954
  %v8355 = vunpack.c.h.b16 %v5954
  %v8356 = vunpack.c.l.b16 %v5955
  %v8357 = vunpack.c.h.b16 %v5955
  %v8358 = vunpack.c.l.b16 %v5956
  %v8359 = vunpack.c.h.b16 %v5956
  %v8360 = vunpack.c.l.b16 %v5957
  %v8361 = vunpack.c.h.b16 %v5957
  %v8362 = vunpack.c.l.b16 %v5958
  %v8363 = vunpack.c.h.b16 %v5958
  %v8364 = vunpack.c.l.b16 %v5959
  %v8365 = vunpack.c.h.b16 %v5959
  %v8366 = vunpack.c.l.b16 %v5960
  %v8367 = vunpack.c.h.b16 %v5960
  %v8368 = vunpack.c.l.b16 %v5961
  %v8369 = vunpack.c.h.b16 %v5961
  %v8370 = vunpack.c.l.b16 %v5962
  %v8371 = vunpack.c.h.b16 %v5962
  %v8372 = vunpack.c.l.b16 %v5963
  %v8373 = vunpack.c.h.b16 %v5963
  %v8374 = vunpack.c.l.b16 %v5964
  %v8375 = vunpack.c.h.b16 %v5964
  %v8376 = vunpack.c.l.b16 %v5965
  %v8377 = vunpack.c.h.b16 %v5965
  %v8378 = vunpack.c.l.b16 %v5966
  %v8379 = vunpack.c.h.b16 %v5966
  %v8380 = vunpack.c.l.b16 %v5967
  %v8381 = vunpack.c.h.b16 %v5967
  %v8382 = vunpack.c.l.b16 %v5968
  %v8383 = vunpack.c.h.b16 %v5968
  %v8384 = vunpack.c.l.b16 %v5969
  %v8385 = vunpack.c.h.b16 %v5969
  %v8386 = vunpack.c.l.b16 %v5970
  %v8387 = vunpack.c.h.b16 %v5970
  %v8388 = vunpack.c.l.b16 %v5971
  %v8389 = vunpack.c.h.b16 %v5971
  %v8390 = vunpack.c.l.b16 %v5972
  %v8391 = vunpack.c.h.b16 %v5972
  %v8392 = vunpack.c.l.b16 %v5973
  %v8393 = vunpack.c.h.b16 %v5973
  %v8394 = vunpack.c.l.b16 %v5974
  %v8395 = vunpack.c.h.b16 %v5974
  %v8396 = vunpack.c.l.b16 %v5975
  %v8397 = vunpack.c.h.b16 %v5975
  %v8398 = vunpack.c.l.b16 %v5976
  %v8399 = vunpack.c.h.b16 %v5976
  %v8400 = vunpack.c.l.b16 %v5977
  %v8401 = vunpack.c.h.b16 %v5977
  %v8402 = vunpack.c.l.b16 %v5978
  %v8403 = vunpack.c.h.b16 %v5978
  %v8404 = vunpack.c.l.b16 %v5979
  %v8405 = vunpack.c.h.b16 %v5979
  %v8406 = vunpack.c.l.b16 %v5980
  %v8407 = vunpack.c.h.b16 %v5980
  %v8408 = vunpack.c.l.b16 %v5981
  %v8409 = vunpack.c.h.b16 %v5981
  %v8410 = vunpack.c.l.b16 %v5982
  %v8411 = vunpack.c.h.b16 %v5982
  %v8412 = vunpack.c.l.b16 %v5983
  %v8413 = vunpack.c.h.b16 %v5983
  %v8414 = vunpack.c.l.b16 %v5984
  %v8415 = vunpack.c.h.b16 %v5984
  %v8416 = vunpack.c.l.b16 %v5985
  %v8417 = vunpack.c.h.b16 %v5985
  %v8418 = vunpack.c.l.b16 %v5986
  %v8419 = vunpack.c.h.b16 %v5986
  %v8420 = vunpack.c.l.b16 %v5987
  %v8421 = vunpack.c.h.b16 %v5987
  %v8422 = vunpack.c.l.b16 %v5988
  %v8423 = vunpack.c.h.b16 %v5988
  %v8424 = vunpack.c.l.b16 %v5989
  %v8425 = vunpack.c.h.b16 %v5989
  %v8426 = vunpack.c.l.b16 %v5990
  %v8427 = vunpack.c.h.b16 %v5990
  %v8428 = vunpack.c.l.b16 %v5991
  %v8429 = vunpack.c.h.b16 %v5991
  %v8430 = vunpack.c.l.b16 %v5992
  %v8431 = vunpack.c.h.b16 %v5992
  %v8432 = vunpack.c.l.b16 %v5993
  %v8433 = vunpack.c.h.b16 %v5993
  %v8434 = vunpack.c.l.b16 %v5994
  %v8435 = vunpack.c.h.b16 %v5994
  %v8436 = vunpack.c.l.b16 %v5995
  %v8437 = vunpack.c.h.b16 %v5995
  %v8438 = vunpack.c.l.b16 %v5996
  %v8439 = vunpack.c.h.b16 %v5996
  %v8440 = vunpack.c.l.b16 %v5997
  %v8441 = vunpack.c.h.b16 %v5997
  %v8442 = vunpack.c.l.b16 %v5998
  %v8443 = vunpack.c.h.b16 %v5998
  %v8444 = vunpack.c.l.b16 %v5999
  %v8445 = vunpack.c.h.b16 %v5999
  %v8446 = vunpack.c.l.b16 %v6000
  %v8447 = vunpack.c.h.b16 %v6000
  %v8448 = vunpack.c.l.b16 %v6001
  %v8449 = vunpack.c.h.b16 %v6001
  %v8450 = vunpack.c.l.b16 %v6002
  %v8451 = vunpack.c.h.b16 %v6002
  %v8452 = vunpack.c.l.b16 %v6003
  %v8453 = vunpack.c.h.b16 %v6003
  %v8454 = vunpack.c.l.b16 %v6004
  %v8455 = vunpack.c.h.b16 %v6004
  %v8456 = vunpack.c.l.b16 %v6005
  %v8457 = vunpack.c.h.b16 %v6005
  %v8458 = vunpack.c.l.b16 %v6006
  %v8459 = vunpack.c.h.b16 %v6006
  %v8460 = vunpack.c.l.b16 %v6007
  %v8461 = vunpack.c.h.b16 %v6007
  %v8462 = vunpack.c.l.b16 %v6008
  %v8463 = vunpack.c.h.b16 %v6008
  %v8464 = vunpack.c.l.b16 %v6009
  %v8465 = vunpack.c.h.b16 %v6009
  %v8466 = vunpack.c.l.b16 %v6010
  %v8467 = vunpack.c.h.b16 %v6010
  %v8468 = vunpack.c.l.b16 %v6011
  %v8469 = vunpack.c.h.b16 %v6011
  %v8470 = vunpack.c.l.b16 %v6012
  %v8471 = vunpack.c.h.b16 %v6012
  %v8472 = vunpack.c.l.b16 %v6013
  %v8473 = vunpack.c.h.b16 %v6013
  %v8474 = vunpack.c.l.b16 %v6014
  %v8475 = vunpack.c.h.b16 %v6014
  %v8476 = vunpack.c.l.b16 %v6015
  %v8477 = vunpack.c.h.b16 %v6015
  %v8478 = vunpack.c.l.b16 %v6016
  %v8479 = vunpack.c.h.b16 %v6016
  %v8480 = vunpack.c.l.b16 %v6017
  %v8481 = vunpack.c.h.b16 %v6017
  %v8482 = vunpack.c.l.b16 %v6018
  %v8483 = vunpack.c.h.b16 %v6018
  %v8484 = vunpack.c.l.b16 %v6019
  %v8485 = vunpack.c.h.b16 %v6019
  %v8486 = vunpack.c.l.b16 %v6020
  %v8487 = vunpack.c.h.b16 %v6020
  %v8488 = vunpack.c.l.b16 %v6021
  %v8489 = vunpack.c.h.b16 %v6021
  %v8490 = vunpack.c.l.b16 %v6022
  %v8491 = vunpack.c.h.b16 %v6022
  %v8492 = vunpack.c.l.b16 %v6023
  %v8493 = vunpack.c.h.b16 %v6023
  %v8494 = vunpack.c.l.b16 %v6024
  %v8495 = vunpack.c.h.b16 %v6024
  %v8496 = vunpack.c.l.b16 %v6025
  %v8497 = vunpack.c.h.b16 %v6025
  %v8498 = vunpack.c.l.b16 %v6026
  %v8499 = vunpack.c.h.b16 %v6026
  %v8500 = vunpack.c.l.b16 %v6027
  %v8501 = vunpack.c.h.b16 %v6027
  %v8502 = vunpack.c.l.b16 %v6028
  %v8503 = vunpack.c.h.b16 %v6028
  %v8504 = vunpack.c.l.b16 %v6029
  %v8505 = vunpack.c.h.b16 %v6029
  %v8506 = vunpack.c.l.b16 %v6030
  %v8507 = vunpack.c.h.b16 %v6030
  %v8508 = vunpack.c.l.b16 %v6031
  %v8509 = vunpack.c.h.b16 %v6031
  %v8510 = vunpack.c.l.b16 %v6032
  %v8511 = vunpack.c.h.b16 %v6032
  %v8512 = vunpack.c.l.b16 %v6033
  %v8513 = vunpack.c.h.b16 %v6033
  %v8514 = vunpack.c.l.b16 %v6034
  %v8515 = vunpack.c.h.b16 %v6034
  %v8516 = vunpack.c.l.b16 %v6035
  %v8517 = vunpack.c.h.b16 %v6035
  %v8518 = vunpack.c.l.b16 %v6036
  %v8519 = vunpack.c.h.b16 %v6036
  %v8520 = vunpack.c.l.b16 %v6037
  %v8521 = vunpack.c.h.b16 %v6037
  %v8522 = vunpack.c.l.b16 %v6038
  %v8523 = vunpack.c.h.b16 %v6038
  %v8524 = vunpack.c.l.b16 %v6039
  %v8525 = vunpack.c.h.b16 %v6039
  %v8526 = vunpack.c.l.b16 %v6040
  %v8527 = vunpack.c.h.b16 %v6040
  %v8528 = vunpack.c.l.b16 %v6041
  %v8529 = vunpack.c.h.b16 %v6041
  %v8530 = vunpack.c.l.b16 %v6042
  %v8531 = vunpack.c.h.b16 %v6042
  %v8532 = vunpack.c.l.b16 %v6043
  %v8533 = vunpack.c.h.b16 %v6043
  %v8534 = vunpack.c.l.b16 %v6044
  %v8535 = vunpack.c.h.b16 %v6044
  %v8536 = vunpack.c.l.b16 %v6045
  %v8537 = vunpack.c.h.b16 %v6045
  %v8538 = vunpack.c.l.b16 %v6046
  %v8539 = vunpack.c.h.b16 %v6046
  %v8540 = vunpack.c.l.b16 %v6047
  %v8541 = vunpack.c.h.b16 %v6047
  %v8542 = vunpack.c.l.b16 %v6048
  %v8543 = vunpack.c.h.b16 %v6048
  %v8544 = vunpack.c.l.b16 %v6049
  %v8545 = vunpack.c.h.b16 %v6049
  %v8546 = vunpack.c.l.b16 %v6050
  %v8547 = vunpack.c.h.b16 %v6050
  %v8548 = vunpack.c.l.b16 %v6051
  %v8549 = vunpack.c.h.b16 %v6051
  %v8550 = vunpack.c.l.b16 %v6052
  %v8551 = vunpack.c.h.b16 %v6052
  %v8552 = vunpack.c.l.b16 %v6053
  %v8553 = vunpack.c.h.b16 %v6053
  %v8554 = vunpack.c.l.b16 %v6054
  %v8555 = vunpack.c.h.b16 %v6054
  %v8556 = vunpack.c.l.b16 %v6055
  %v8557 = vunpack.c.h.b16 %v6055
  %v8558 = vunpack.c.l.b16 %v6056
  %v8559 = vunpack.c.h.b16 %v6056
  %v8560 = vunpack.c.l.b16 %v6057
  %v8561 = vunpack.c.h.b16 %v6057
  %v8562 = vunpack.c.l.b16 %v6058
  %v8563 = vunpack.c.h.b16 %v6058
  %v8564 = vunpack.c.l.b16 %v6059
  %v8565 = vunpack.c.h.b16 %v6059
  %v8566 = vunpack.c.l.b16 %v6060
  %v8567 = vunpack.c.h.b16 %v6060
  %v8568 = vunpack.c.l.b16 %v6061
  %v8569 = vunpack.c.h.b16 %v6061
  %v8570 = vunpack.c.l.b16 %v6062
  %v8571 = vunpack.c.h.b16 %v6062
  %v8572 = vunpack.c.l.b16 %v6063
  %v8573 = vunpack.c.h.b16 %v6063
  %v8574 = vunpack.c.l.b16 %v6064
  %v8575 = vunpack.c.h.b16 %v6064
  %v8576 = vunpack.c.l.b16 %v6065
  %v8577 = vunpack.c.h.b16 %v6065
  %v8578 = vunpack.c.l.b16 %v6066
  %v8579 = vunpack.c.h.b16 %v6066
  %v8580 = vunpack.c.l.b16 %v6067
  %v8581 = vunpack.c.h.b16 %v6067
  %v8582 = vunpack.c.l.b16 %v6068
  %v8583 = vunpack.c.h.b16 %v6068
  %v8584 = vunpack.c.l.b16 %v6069
  %v8585 = vunpack.c.h.b16 %v6069
  %v8586 = vunpack.c.l.b16 %v6070
  %v8587 = vunpack.c.h.b16 %v6070
  %v8588 = vunpack.c.l.b16 %v6071
  %v8589 = vunpack.c.h.b16 %v6071
  %v8590 = vunpack.c.l.b16 %v6072
  %v8591 = vunpack.c.h.b16 %v6072
  %v8592 = vunpack.c.l.b16 %v6073
  %v8593 = vunpack.c.h.b16 %v6073
  %v8594 = vunpack.c.l.b16 %v6074
  %v8595 = vunpack.c.h.b16 %v6074
  %v8596 = vunpack.c.l.b16 %v6075
  %v8597 = vunpack.c.h.b16 %v6075
  %v8598 = vunpack.c.l.b16 %v6076
  %v8599 = vunpack.c.h.b16 %v6076
  %v8600 = vunpack.c.l.b16 %v6077
  %v8601 = vunpack.c.h.b16 %v6077
  %v8602 = vunpack.c.l.b16 %v6078
  %v8603 = vunpack.c.h.b16 %v6078
  %v8604 = vunpack.c.l.b16 %v6079
  %v8605 = vunpack.c.h.b16 %v6079
  %v8606 = vunpack.c.l.b16 %v6080
  %v8607 = vunpack.c.h.b16 %v6080
  %v8608 = vunpack.c.l.b16 %v6081
  %v8609 = vunpack.c.h.b16 %v6081
  %v8610 = vunpack.c.l.b16 %v6082
  %v8611 = vunpack.c.h.b16 %v6082
  %v8612 = vunpack.c.l.b16 %v6083
  %v8613 = vunpack.c.h.b16 %v6083
  %v8614 = vunpack.c.l.b16 %v6084
  %v8615 = vunpack.c.h.b16 %v6084
  %v8616 = vunpack.c.l.b16 %v6085
  %v8617 = vunpack.c.h.b16 %v6085
  %v8618 = vunpack.c.l.b16 %v6086
  %v8619 = vunpack.c.h.b16 %v6086
  %v8620 = vunpack.c.l.b16 %v6087
  %v8621 = vunpack.c.h.b16 %v6087
  %v8622 = vunpack.c.l.b16 %v6088
  %v8623 = vunpack.c.h.b16 %v6088
  %v8624 = vunpack.c.l.b16 %v6089
  %v8625 = vunpack.c.h.b16 %v6089
  %v8626 = vunpack.c.l.b16 %v6090
  %v8627 = vunpack.c.h.b16 %v6090
  %v8628 = vunpack.c.l.b16 %v6091
  %v8629 = vunpack.c.h.b16 %v6091
  %v8630 = vunpack.c.l.b16 %v6092
  %v8631 = vunpack.c.h.b16 %v6092
  %v8632 = vunpack.c.l.b16 %v6093
  %v8633 = vunpack.c.h.b16 %v6093
  %v8634 = vunpack.c.l.b16 %v6094
  %v8635 = vunpack.c.h.b16 %v6094
  %v8636 = vunpack.c.l.b16 %v6095
  %v8637 = vunpack.c.h.b16 %v6095
  %v8638 = vunpack.c.l.b16 %v6096
  %v8639 = vunpack.c.h.b16 %v6096
  %v8640 = vunpack.c.l.b16 %v6097
  %v8641 = vunpack.c.h.b16 %v6097
  %v8642 = vunpack.c.l.b16 %v6098
  %v8643 = vunpack.c.h.b16 %v6098
  %v8644 = vunpack.c.l.b16 %v6099
  %v8645 = vunpack.c.h.b16 %v6099
  %v8646 = vunpack.c.l.b16 %v6100
  %v8647 = vunpack.c.h.b16 %v6100
  %v8648 = vunpack.c.l.b16 %v6101
  %v8649 = vunpack.c.h.b16 %v6101
  %v8650 = vunpack.c.l.b16 %v6102
  %v8651 = vunpack.c.h.b16 %v6102
  %v8652 = vunpack.c.l.b16 %v6103
  %v8653 = vunpack.c.h.b16 %v6103
  %v8654 = vunpack.c.l.b16 %v6104
  %v8655 = vunpack.c.h.b16 %v6104
  %v8656 = vunpack.c.l.b16 %v6105
  %v8657 = vunpack.c.h.b16 %v6105
  %v8658 = vunpack.c.l.b16 %v6106
  %v8659 = vunpack.c.h.b16 %v6106
  %v8660 = vunpack.c.l.b16 %v6107
  %v8661 = vunpack.c.h.b16 %v6107
  %v8662 = vunpack.c.l.b16 %v6108
  %v8663 = vunpack.c.h.b16 %v6108
  %v8664 = vunpack.c.l.b16 %v6109
  %v8665 = vunpack.c.h.b16 %v6109
  %v8666 = vunpack.c.l.b16 %v6110
  %v8667 = vunpack.c.h.b16 %v6110
  %v8668 = vunpack.c.l.b16 %v6111
  %v8669 = vunpack.c.h.b16 %v6111
  %v8670 = vunpack.c.l.b16 %v6112
  %v8671 = vunpack.c.h.b16 %v6112
  %v8672 = vunpack.c.l.b16 %v6113
  %v8673 = vunpack.c.h.b16 %v6113
  %v8674 = vunpack.c.l.b16 %v6114
  %v8675 = vunpack.c.h.b16 %v6114
  %v8676 = vunpack.c.l.b16 %v6115
  %v8677 = vunpack.c.h.b16 %v6115
  %v8678 = vunpack.c.l.b16 %v6116
  %v8679 = vunpack.c.h.b16 %v6116
  %v8680 = vunpack.c.l.b16 %v6117
  %v8681 = vunpack.c.h.b16 %v6117
  %v8682 = vunpack.c.l.b16 %v6118
  %v8683 = vunpack.c.h.b16 %v6118
  %v8684 = vunpack.c.l.b16 %v6119
  %v8685 = vunpack.c.h.b16 %v6119
  %v8686 = vunpack.c.l.b16 %v6120
  %v8687 = vunpack.c.h.b16 %v6120
  %v8688 = vunpack.c.l.b16 %v6121
  %v8689 = vunpack.c.h.b16 %v6121
  %v8690 = vunpack.c.l.b16 %v6122
  %v8691 = vunpack.c.h.b16 %v6122
  %v8692 = vunpack.c.l.b16 %v6123
  %v8693 = vunpack.c.h.b16 %v6123
  %v8694 = vunpack.c.l.b16 %v6124
  %v8695 = vunpack.c.h.b16 %v6124
  %v8696 = vunpack.c.l.b16 %v6125
  %v8697 = vunpack.c.h.b16 %v6125
  %v8698 = vunpack.c.l.b16 %v6126
  %v8699 = vunpack.c.h.b16 %v6126
  %v8700 = vunpack.c.l.b16 %v6127
  %v8701 = vunpack.c.h.b16 %v6127
  %v8702 = vunpack.c.l.b16 %v6128
  %v8703 = vunpack.c.h.b16 %v6128
  %v8704 = vunpack.c.l.b16 %v6129
  %v8705 = vunpack.c.h.b16 %v6129
  %v8706 = vunpack.c.l.b16 %v6130
  %v8707 = vunpack.c.h.b16 %v6130
  %v8708 = vunpack.c.l.b16 %v6131
  %v8709 = vunpack.c.h.b16 %v6131
  %v8710 = vunpack.c.l.b16 %v6132
  %v8711 = vunpack.c.h.b16 %v6132
  %v8712 = vunpack.c.l.b16 %v6133
  %v8713 = vunpack.c.h.b16 %v6133
  %v8714 = vunpack.c.l.b16 %v6134
  %v8715 = vunpack.c.h.b16 %v6134
  %v8716 = vunpack.c.l.b16 %v6135
  %v8717 = vunpack.c.h.b16 %v6135
  %v8718 = vunpack.c.l.b16 %v6136
  %v8719 = vunpack.c.h.b16 %v6136
  %v8720 = vunpack.c.l.b16 %v6137
  %v8721 = vunpack.c.h.b16 %v6137
  %v8722 = vunpack.c.l.b16 %v6138
  %v8723 = vunpack.c.h.b16 %v6138
  %v8724 = vunpack.c.l.b16 %v6139
  %v8725 = vunpack.c.h.b16 %v6139
  %v8726 = vunpack.c.l.b16 %v6140
  %v8727 = vunpack.c.h.b16 %v6140
  %v8728 = vunpack.c.l.b16 %v6141
  %v8729 = vunpack.c.h.b16 %v6141
  %v8730 = vunpack.c.l.b16 %v6142
  %v8731 = vunpack.c.h.b16 %v6142
  %v8732 = vunpack.c.l.b16 %v6143
  %v8733 = vunpack.c.h.b16 %v6143
  %v8734 = vunpack.c.l.b16 %v6144
  %v8735 = vunpack.c.h.b16 %v6144
  %v8736 = vunpack.c.l.b16 %v6145
  %v8737 = vunpack.c.h.b16 %v6145
  %v8738 = vunpack.c.l.b16 %v6146
  %v8739 = vunpack.c.h.b16 %v6146
  %v8740 = vunpack.c.l.b16 %v6147
  %v8741 = vunpack.c.h.b16 %v6147
  %v8742 = vunpack.c.l.b16 %v6148
  %v8743 = vunpack.c.h.b16 %v6148
  %v8744 = vunpack.c.l.b16 %v6149
  %v8745 = vunpack.c.h.b16 %v6149
  %v8746 = vunpack.c.l.b16 %v6150
  %v8747 = vunpack.c.h.b16 %v6150
  %v8748 = vunpack.c.l.b16 %v6151
  %v8749 = vunpack.c.h.b16 %v6151
  %v8750 = vunpack.c.l.b16 %v6152
  %v8751 = vunpack.c.h.b16 %v6152
  %v8752 = vunpack.c.l.b16 %v6153
  %v8753 = vunpack.c.h.b16 %v6153
  %v8754 = vunpack.c.l.b16 %v6154
  %v8755 = vunpack.c.h.b16 %v6154
  %v8756 = vunpack.c.l.b16 %v6155
  %v8757 = vunpack.c.h.b16 %v6155
  %v8758 = vunpack.c.l.b16 %v6156
  %v8759 = vunpack.c.h.b16 %v6156
  %v8760 = vunpack.c.l.b16 %v6157
  %v8761 = vunpack.c.h.b16 %v6157
  %v8762 = vunpack.c.l.b16 %v6158
  %v8763 = vunpack.c.h.b16 %v6158
  %v8764 = vunpack.c.l.b16 %v6159
  %v8765 = vunpack.c.h.b16 %v6159
  %v8766 = vunpack.c.l.b16 %v6160
  %v8767 = vunpack.c.h.b16 %v6160
  %v8768 = vunpack.c.l.b16 %v6161
  %v8769 = vunpack.c.h.b16 %v6161
  %v8770 = vunpack.c.l.b16 %v6162
  %v8771 = vunpack.c.h.b16 %v6162
  %v8772 = vunpack.c.l.b16 %v6163
  %v8773 = vunpack.c.h.b16 %v6163
  %v8774 = vunpack.c.l.b16 %v6164
  %v8775 = vunpack.c.h.b16 %v6164
  %v8776 = vunpack.c.l.b16 %v6165
  %v8777 = vunpack.c.h.b16 %v6165
  %v8778 = vunpack.c.l.b16 %v6166
  %v8779 = vunpack.c.h.b16 %v6166
  %v8780 = vunpack.c.l.b16 %v6167
  %v8781 = vunpack.c.h.b16 %v6167
  %v8782 = vunpack.c.l.b16 %v6168
  %v8783 = vunpack.c.h.b16 %v6168
  %v8784 = vunpack.c.l.b16 %v6169
  %v8785 = vunpack.c.h.b16 %v6169
  %v8786 = vunpack.c.l.b16 %v6170
  %v8787 = vunpack.c.h.b16 %v6170
  %v8788 = vunpack.c.l.b16 %v6171
  %v8789 = vunpack.c.h.b16 %v6171
  %v8790 = vunpack.c.l.b16 %v6172
  %v8791 = vunpack.c.h.b16 %v6172
  %v8792 = vunpack.c.l.b16 %v6173
  %v8793 = vunpack.c.h.b16 %v6173
  %v8794 = vunpack.c.l.b16 %v6174
  %v8795 = vunpack.c.h.b16 %v6174
  %v8796 = vunpack.c.l.b16 %v6175
  %v8797 = vunpack.c.h.b16 %v6175
  %v8798 = vunpack.c.l.b16 %v6176
  %v8799 = vunpack.c.h.b16 %v6176
  %v8800 = vunpack.c.l.b16 %v6177
  %v8801 = vunpack.c.h.b16 %v6177
  %v8802 = vunpack.c.l.b16 %v6178
  %v8803 = vunpack.c.h.b16 %v6178
  %v8804 = vunpack.c.l.b16 %v6179
  %v8805 = vunpack.c.h.b16 %v6179
  %v8806 = vunpack.c.l.b16 %v6180
  %v8807 = vunpack.c.h.b16 %v6180
  %v8808 = vunpack.c.l.b16 %v6181
  %v8809 = vunpack.c.h.b16 %v6181
  %v8810 = vunpack.c.l.b16 %v6182
  %v8811 = vunpack.c.h.b16 %v6182
  %v8812 = vunpack.c.l.b16 %v6183
  %v8813 = vunpack.c.h.b16 %v6183
  %v8814 = vunpack.c.l.b16 %v6184
  %v8815 = vunpack.c.h.b16 %v6184
  %v8816 = vunpack.c.l.b16 %v6185
  %v8817 = vunpack.c.h.b16 %v6185
  %v8818 = vunpack.c.l.b16 %v6186
  %v8819 = vunpack.c.h.b16 %v6186
  %v8820 = vunpack.c.l.b16 %v6187
  %v8821 = vunpack.c.h.b16 %v6187
  %v8822 = vunpack.c.l.b16 %v6188
  %v8823 = vunpack.c.h.b16 %v6188
  %v8824 = vunpack.c.l.b16 %v6189
  %v8825 = vunpack.c.h.b16 %v6189
  %v8826 = vunpack.c.l.b16 %v6190
  %v8827 = vunpack.c.h.b16 %v6190
  %v8828 = vunpack.c.l.b16 %v6191
  %v8829 = vunpack.c.h.b16 %v6191
  %v8830 = vunpack.c.l.b16 %v6192
  %v8831 = vunpack.c.h.b16 %v6192
  %v8832 = vunpack.c.l.b16 %v6193
  %v8833 = vunpack.c.h.b16 %v6193
  %v8834 = vunpack.c.l.b16 %v6194
  %v8835 = vunpack.c.h.b16 %v6194
  %v8836 = vunpack.c.l.b16 %v6195
  %v8837 = vunpack.c.h.b16 %v6195
  %v8838 = vunpack.c.l.b16 %v6196
  %v8839 = vunpack.c.h.b16 %v6196
  %v8840 = vunpack.c.l.b16 %v6197
  %v8841 = vunpack.c.h.b16 %v6197
  %v8842 = vunpack.c.l.b16 %v6198
  %v8843 = vunpack.c.h.b16 %v6198
  %v8844 = vunpack.c.l.b16 %v6199
  %v8845 = vunpack.c.h.b16 %v6199
  %v8846 = vunpack.c.l.b16 %v6200
  %v8847 = vunpack.c.h.b16 %v6200
  %v8848 = vunpack.c.l.b16 %v6201
  %v8849 = vunpack.c.h.b16 %v6201
  %v8850 = vunpack.c.l.b16 %v6202
  %v8851 = vunpack.c.h.b16 %v6202
  %v8852 = vunpack.c.l.b16 %v6203
  %v8853 = vunpack.c.h.b16 %v6203
  %v8854 = vunpack.c.l.b16 %v6204
  %v8855 = vunpack.c.h.b16 %v6204
  %v8856 = vunpack.c.l.b16 %v6205
  %v8857 = vunpack.c.h.b16 %v6205
  %v8858 = vunpack.c.l.b16 %v6206
  %v8859 = vunpack.c.h.b16 %v6206
  %v8860 = vunpack.c.l.b16 %v6207
  %v8861 = vunpack.c.h.b16 %v6207
  %v8862 = vunpack.c.l.b16 %v6208
  %v8863 = vunpack.c.h.b16 %v6208
  %v8864 = vunpack.c.l.b16 %v6209
  %v8865 = vunpack.c.h.b16 %v6209
  %v8866 = vunpack.c.l.b16 %v6210
  %v8867 = vunpack.c.h.b16 %v6210
  %v8868 = vunpack.c.l.b16 %v6211
  %v8869 = vunpack.c.h.b16 %v6211
  %v8870 = vunpack.c.l.b16 %v6212
  %v8871 = vunpack.c.h.b16 %v6212
  %v8872 = vunpack.c.l.b16 %v6213
  %v8873 = vunpack.c.h.b16 %v6213
  %v8874 = vunpack.c.l.b16 %v6214
  %v8875 = vunpack.c.h.b16 %v6214
  %v8876 = vunpack.c.l.b16 %v6215
  %v8877 = vunpack.c.h.b16 %v6215
  %v8878 = vunpack.c.l.b16 %v6216
  %v8879 = vunpack.c.h.b16 %v6216
  %v8880 = vunpack.c.l.b16 %v6217
  %v8881 = vunpack.c.h.b16 %v6217
  %v8882 = vunpack.c.l.b16 %v6218
  %v8883 = vunpack.c.h.b16 %v6218
  %v8884 = vunpack.c.l.b16 %v6219
  %v8885 = vunpack.c.h.b16 %v6219
  %v8886 = vunpack.c.l.b16 %v6220
  %v8887 = vunpack.c.h.b16 %v6220
  %v8888 = vunpack.c.l.b16 %v6221
  %v8889 = vunpack.c.h.b16 %v6221
  %v8890 = vunpack.c.l.b16 %v6222
  %v8891 = vunpack.c.h.b16 %v6222
  %v8892 = vunpack.c.l.b16 %v6223
  %v8893 = vunpack.c.h.b16 %v6223
  %v8894 = vunpack.c.l.b16 %v6224
  %v8895 = vunpack.c.h.b16 %v6224
  %v8896 = vunpack.c.l.b16 %v6225
  %v8897 = vunpack.c.h.b16 %v6225
  %v8898 = vunpack.c.l.b16 %v6226
  %v8899 = vunpack.c.h.b16 %v6226
  %v8900 = vunpack.c.l.b16 %v6227
  %v8901 = vunpack.c.h.b16 %v6227
  %v8902 = vunpack.c.l.b16 %v6228
  %v8903 = vunpack.c.h.b16 %v6228
  %v8904 = vunpack.c.l.b16 %v6229
  %v8905 = vunpack.c.h.b16 %v6229
  %v8906 = vunpack.c.l.b16 %v6230
  %v8907 = vunpack.c.h.b16 %v6230
  %v8908 = vunpack.c.l.b16 %v6231
  %v8909 = vunpack.c.h.b16 %v6231
  %v8910 = vunpack.c.l.b16 %v6232
  %v8911 = vunpack.c.h.b16 %v6232
  %v8912 = vunpack.c.l.b16 %v6233
  %v8913 = vunpack.c.h.b16 %v6233
  %v8914 = vunpack.c.l.b16 %v6234
  %v8915 = vunpack.c.h.b16 %v6234
  %v8916 = vunpack.c.l.b16 %v6235
  %v8917 = vunpack.c.h.b16 %v6235
  %v8918 = vunpack.c.l.b16 %v6236
  %v8919 = vunpack.c.h.b16 %v6236
  %v8920 = vunpack.c.l.b16 %v6237
  %v8921 = vunpack.c.h.b16 %v6237
  %v8922 = vunpack.c.l.b16 %v6238
  %v8923 = vunpack.c.h.b16 %v6238
  %v8924 = vunpack.c.l.b16 %v6239
  %v8925 = vunpack.c.h.b16 %v6239
  %v8926 = vunpack.c.l.b16 %v6240
  %v8927 = vunpack.c.h.b16 %v6240
  %v8928 = vunpack.c.l.b16 %v6241
  %v8929 = vunpack.c.h.b16 %v6241
  %v8930 = vunpack.c.l.b16 %v6242
  %v8931 = vunpack.c.h.b16 %v6242
  %v8932 = vunpack.c.l.b16 %v6243
  %v8933 = vunpack.c.h.b16 %v6243
  %v8934 = vunpack.c.l.b16 %v6244
  %v8935 = vunpack.c.h.b16 %v6244
  %v8936 = vunpack.c.l.b16 %v6245
  %v8937 = vunpack.c.h.b16 %v6245
  %v8938 = vunpack.c.l.b16 %v6246
  %v8939 = vunpack.c.h.b16 %v6246
  %v8940 = vunpack.c.l.b16 %v6247
  %v8941 = vunpack.c.h.b16 %v6247
  %v8942 = vunpack.c.l.b16 %v6248
  %v8943 = vunpack.c.h.b16 %v6248
  %v8944 = vunpack.c.l.b16 %v6249
  %v8945 = vunpack.c.h.b16 %v6249
  %v8946 = vunpack.c.l.b16 %v6250
  %v8947 = vunpack.c.h.b16 %v6250
  %v8948 = vunpack.c.l.b16 %v6251
  %v8949 = vunpack.c.h.b16 %v6251
  %v8950 = vunpack.c.l.b16 %v6252
  %v8951 = vunpack.c.h.b16 %v6252
  %v8952 = vunpack.c.l.b16 %v6253
  %v8953 = vunpack.c.h.b16 %v6253
  %v8954 = vunpack.c.l.b16 %v6254
  %v8955 = vunpack.c.h.b16 %v6254
  %v8956 = vunpack.c.l.b16 %v6255
  %v8957 = vunpack.c.h.b16 %v6255
  %v8958 = vunpack.c.l.b16 %v6256
  %v8959 = vunpack.c.h.b16 %v6256
  %v8960 = vunpack.c.l.b16 %v6257
  %v8961 = vunpack.c.h.b16 %v6257
  %v8962 = vunpack.c.l.b16 %v6258
  %v8963 = vunpack.c.h.b16 %v6258
  %v8964 = vunpack.c.l.b16 %v6259
  %v8965 = vunpack.c.h.b16 %v6259
  %v8966 = vunpack.c.l.b16 %v6260
  %v8967 = vunpack.c.h.b16 %v6260
  %v8968 = vunpack.c.l.b16 %v6261
  %v8969 = vunpack.c.h.b16 %v6261
  %v8970 = vunpack.c.l.b16 %v6262
  %v8971 = vunpack.c.h.b16 %v6262
  %v8972 = vunpack.c.l.b16 %v6263
  %v8973 = vunpack.c.h.b16 %v6263
  %v8974 = vunpack.c.l.b16 %v6264
  %v8975 = vunpack.c.h.b16 %v6264
  %v8976 = vunpack.c.l.b16 %v6265
  %v8977 = vunpack.c.h.b16 %v6265
  %v8978 = vunpack.c.l.b16 %v6266
  %v8979 = vunpack.c.h.b16 %v6266
  %v8980 = vunpack.c.l.b16 %v6267
  %v8981 = vunpack.c.h.b16 %v6267
  %v8982 = vunpack.c.l.b16 %v6268
  %v8983 = vunpack.c.h.b16 %v6268
  %v8984 = vunpack.c.l.b16 %v6269
  %v8985 = vunpack.c.h.b16 %v6269
  %v8986 = vunpack.c.l.b16 %v6270
  %v8987 = vunpack.c.h.b16 %v6270
  %v8988 = vunpack.c.l.b16 %v6271
  %v8989 = vunpack.c.h.b16 %v6271
  %v8990 = vunpack.c.l.b16 %v6272
  %v8991 = vunpack.c.h.b16 %v6272
  %v8992 = vunpack.c.l.b16 %v6273
  %v8993 = vunpack.c.h.b16 %v6273
  %v8994 = vunpack.c.l.b16 %v6274
  %v8995 = vunpack.c.h.b16 %v6274
  %v8996 = vunpack.c.l.b16 %v6275
  %v8997 = vunpack.c.h.b16 %v6275
  %v8998 = vunpack.c.l.b16 %v6276
  %v8999 = vunpack.c.h.b16 %v6276
  %v9000 = vunpack.c.l.b16 %v6277
  %v9001 = vunpack.c.h.b16 %v6277
  %v9002 = vunpack.c.l.b16 %v6278
  %v9003 = vunpack.c.h.b16 %v6278
  %v9004 = vunpack.c.l.b16 %v6279
  %v9005 = vunpack.c.h.b16 %v6279
  %v9006 = vunpack.c.l.b16 %v6280
  %v9007 = vunpack.c.h.b16 %v6280
  %v9008 = vunpack.c.l.b16 %v6281
  %v9009 = vunpack.c.h.b16 %v6281
  %v9010 = vunpack.c.l.b16 %v6282
  %v9011 = vunpack.c.h.b16 %v6282
  %v9012 = vunpack.c.l.b16 %v6283
  %v9013 = vunpack.c.h.b16 %v6283
  %v9014 = vunpack.c.l.b16 %v6284
  %v9015 = vunpack.c.h.b16 %v6284
  %v9016 = vunpack.c.l.b16 %v6285
  %v9017 = vunpack.c.h.b16 %v6285
  %v9018 = vunpack.c.l.b16 %v6286
  %v9019 = vunpack.c.h.b16 %v6286
  %v9020 = vunpack.c.l.b16 %v6287
  %v9021 = vunpack.c.h.b16 %v6287
  %v9022 = vunpack.c.l.b16 %v6288
  %v9023 = vunpack.c.h.b16 %v6288
  %v9024 = vunpack.c.l.b16 %v6289
  %v9025 = vunpack.c.h.b16 %v6289
  %v9026 = vunpack.c.l.b16 %v6290
  %v9027 = vunpack.c.h.b16 %v6290
  %v9028 = vunpack.c.l.b16 %v6291
  %v9029 = vunpack.c.h.b16 %v6291
  %v9030 = vunpack.c.l.b16 %v6292
  %v9031 = vunpack.c.h.b16 %v6292
  %v9032 = vunpack.c.l.b16 %v6293
  %v9033 = vunpack.c.h.b16 %v6293
  %v9034 = vunpack.c.l.b16 %v6294
  %v9035 = vunpack.c.h.b16 %v6294
  %v9036 = vunpack.c.l.b16 %v6295
  %v9037 = vunpack.c.h.b16 %v6295
  %v9038 = vunpack.c.l.b16 %v6296
  %v9039 = vunpack.c.h.b16 %v6296
  %v9040 = vunpack.c.l.b16 %v6297
  %v9041 = vunpack.c.h.b16 %v6297
  %v9042 = vunpack.c.l.b16 %v6298
  %v9043 = vunpack.c.h.b16 %v6298
  %v9044 = vunpack.c.l.b16 %v6299
  %v9045 = vunpack.c.h.b16 %v6299
  %v9046 = vunpack.c.l.b16 %v6300
  %v9047 = vunpack.c.h.b16 %v6300
  %v9048 = vunpack.c.l.b16 %v6301
  %v9049 = vunpack.c.h.b16 %v6301
  %v9050 = vunpack.c.l.b16 %v6302
  %v9051 = vunpack.c.h.b16 %v6302
  %v9052 = vunpack.c.l.b16 %v6303
  %v9053 = vunpack.c.h.b16 %v6303
  %v9054 = vunpack.c.l.b16 %v6304
  %v9055 = vunpack.c.h.b16 %v6304
  %v9056 = vunpack.c.l.b16 %v6305
  %v9057 = vunpack.c.h.b16 %v6305
  %v9058 = vunpack.c.l.b16 %v6306
  %v9059 = vunpack.c.h.b16 %v6306
  %v9060 = vunpack.c.l.b16 %v6307
  %v9061 = vunpack.c.h.b16 %v6307
  %v9062 = vunpack.c.l.b16 %v6308
  %v9063 = vunpack.c.h.b16 %v6308
  %v9064 = vunpack.c.l.b16 %v6309
  %v9065 = vunpack.c.h.b16 %v6309
  %v9066 = vunpack.c.l.b16 %v6310
  %v9067 = vunpack.c.h.b16 %v6310
  %v9068 = vunpack.c.l.b16 %v6311
  %v9069 = vunpack.c.h.b16 %v6311
  %v9070 = vunpack.c.l.b16 %v6312
  %v9071 = vunpack.c.h.b16 %v6312
  %v9072 = vunpack.c.l.b16 %v6313
  %v9073 = vunpack.c.h.b16 %v6313
  %v9074 = vunpack.c.l.b16 %v6314
  %v9075 = vunpack.c.h.b16 %v6314
  %v9076 = vunpack.c.l.b16 %v6315
  %v9077 = vunpack.c.h.b16 %v6315
  %v9078 = vunpack.c.l.b16 %v6316
  %v9079 = vunpack.c.h.b16 %v6316
  %v9080 = vunpack.c.l.b16 %v6317
  %v9081 = vunpack.c.h.b16 %v6317
  %v9082 = vunpack.c.l.b16 %v6318
  %v9083 = vunpack.c.h.b16 %v6318
  %v9084 = vunpack.c.l.b16 %v6319
  %v9085 = vunpack.c.h.b16 %v6319
  %v9086 = vunpack.c.l.b16 %v6320
  %v9087 = vunpack.c.h.b16 %v6320
  %v9088 = vunpack.c.l.b16 %v6321
  %v9089 = vunpack.c.h.b16 %v6321
  %v9090 = vunpack.c.l.b16 %v6322
  %v9091 = vunpack.c.h.b16 %v6322
  %v9092 = vunpack.c.l.b16 %v6323
  %v9093 = vunpack.c.h.b16 %v6323
  %v9094 = vunpack.c.l.b16 %v6324
  %v9095 = vunpack.c.h.b16 %v6324
  %v9096 = vunpack.c.l.b16 %v6325
  %v9097 = vunpack.c.h.b16 %v6325
  %v9098 = vunpack.c.l.b16 %v6326
  %v9099 = vunpack.c.h.b16 %v6326
  %v9100 = vunpack.c.l.b16 %v6327
  %v9101 = vunpack.c.h.b16 %v6327
  %v9102 = vunpack.c.l.b16 %v6328
  %v9103 = vunpack.c.h.b16 %v6328
  %v9104 = vunpack.c.l.b16 %v6329
  %v9105 = vunpack.c.h.b16 %v6329
  %v9106 = vunpack.c.l.b16 %v6330
  %v9107 = vunpack.c.h.b16 %v6330
  %v9108 = vunpack.c.l.b16 %v6331
  %v9109 = vunpack.c.h.b16 %v6331
  %v9110 = vunpack.c.l.b16 %v6332
  %v9111 = vunpack.c.h.b16 %v6332
  %v9112 = vunpack.c.l.b16 %v6333
  %v9113 = vunpack.c.h.b16 %v6333
  %v9114 = vunpack.c.l.b16 %v6334
  %v9115 = vunpack.c.h.b16 %v6334
  %v9116 = vunpack.c.l.b16 %v6335
  %v9117 = vunpack.c.h.b16 %v6335
  %v9118 = vunpack.c.l.b16 %v6336
  %v9119 = vunpack.c.h.b16 %v6336
  %v9120 = vunpack.c.l.b16 %v6337
  %v9121 = vunpack.c.h.b16 %v6337
  %v9122 = vunpack.c.l.b16 %v6338
  %v9123 = vunpack.c.h.b16 %v6338
  %v9124 = vunpack.c.l.b16 %v6339
  %v9125 = vunpack.c.h.b16 %v6339
  %v9126 = vunpack.c.l.b16 %v6340
  %v9127 = vunpack.c.h.b16 %v6340
  %v9128 = vunpack.c.l.b16 %v6341
  %v9129 = vunpack.c.h.b16 %v6341
  %v9130 = vunpack.c.l.b16 %v6342
  %v9131 = vunpack.c.h.b16 %v6342
  %v9132 = vunpack.c.l.b16 %v6343
  %v9133 = vunpack.c.h.b16 %v6343
  %v9134 = vunpack.c.l.b16 %v6344
  %v9135 = vunpack.c.h.b16 %v6344
  %v9136 = vunpack.c.l.b16 %v6345
  %v9137 = vunpack.c.h.b16 %v6345
  %v9138 = vunpack.c.l.b16 %v6346
  %v9139 = vunpack.c.h.b16 %v6346
  %v9140 = vunpack.c.l.b16 %v6347
  %v9141 = vunpack.c.h.b16 %v6347
  %v9142 = vunpack.c.l.b16 %v6348
  %v9143 = vunpack.c.h.b16 %v6348
  %v9144 = vunpack.c.l.b16 %v6349
  %v9145 = vunpack.c.h.b16 %v6349
  %v9146 = vunpack.c.l.b16 %v6350
  %v9147 = vunpack.c.h.b16 %v6350
  %v9148 = vunpack.c.l.b16 %v6351
  %v9149 = vunpack.c.h.b16 %v6351
  %v9150 = vunpack.c.l.b16 %v6352
  %v9151 = vunpack.c.h.b16 %v6352
  %v9152 = vunpack.c.l.b16 %v6353
  %v9153 = vunpack.c.h.b16 %v6353
  %v9154 = vunpack.c.l.b16 %v6354
  %v9155 = vunpack.c.h.b16 %v6354
  %v9156 = vunpack.c.l.b16 %v6355
  %v9157 = vunpack.c.h.b16 %v6355
  %v9158 = vunpack.c.l.b16 %v6356
  %v9159 = vunpack.c.h.b16 %v6356
  %v9160 = vunpack.c.l.b16 %v6357
  %v9161 = vunpack.c.h.b16 %v6357
  %v9162 = vunpack.c.l.b16 %v6358
  %v9163 = vunpack.c.h.b16 %v6358
  %v9164 = vunpack.c.l.b16 %v6359
  %v9165 = vunpack.c.h.b16 %v6359
  %v9166 = vunpack.c.l.b16 %v6360
  %v9167 = vunpack.c.h.b16 %v6360
  %v9168 = vunpack.c.l.b16 %v6361
  %v9169 = vunpack.c.h.b16 %v6361
  %v9170 = vunpack.c.l.b16 %v6362
  %v9171 = vunpack.c.h.b16 %v6362
  %v9172 = vunpack.c.l.b16 %v6363
  %v9173 = vunpack.c.h.b16 %v6363
  %v9174 = vunpack.c.l.b16 %v6364
  %v9175 = vunpack.c.h.b16 %v6364
  %v9176 = vunpack.c.l.b16 %v6365
  %v9177 = vunpack.c.h.b16 %v6365
  %v9178 = vunpack.c.l.b16 %v6366
  %v9179 = vunpack.c.h.b16 %v6366
  %v9180 = vunpack.c.l.b16 %v6367
  %v9181 = vunpack.c.h.b16 %v6367
  %v9182 = vunpack.c.l.b16 %v6368
  %v9183 = vunpack.c.h.b16 %v6368
  %v9184 = vunpack.c.l.b16 %v6369
  %v9185 = vunpack.c.h.b16 %v6369
  %v9186 = vunpack.c.l.b16 %v6370
  %v9187 = vunpack.c.h.b16 %v6370
  %v9188 = vunpack.c.l.b16 %v6371
  %v9189 = vunpack.c.h.b16 %v6371
  %v9190 = vunpack.c.l.b16 %v6372
  %v9191 = vunpack.c.h.b16 %v6372
  %v9192 = vunpack.c.l.b16 %v6373
  %v9193 = vunpack.c.h.b16 %v6373
  %v9194 = vunpack.c.l.b16 %v6374
  %v9195 = vunpack.c.h.b16 %v6374
  %v9196 = vunpack.c.l.b16 %v6375
  %v9197 = vunpack.c.h.b16 %v6375
  %v9198 = vunpack.c.l.b16 %v6376
  %v9199 = vunpack.c.h.b16 %v6376
  %v9200 = vunpack.c.l.b16 %v6377
  %v9201 = vunpack.c.h.b16 %v6377
  %v9202 = vunpack.c.l.b16 %v6378
  %v9203 = vunpack.c.h.b16 %v6378
  %v9204 = vunpack.c.l.b16 %v6379
  %v9205 = vunpack.c.h.b16 %v6379
  %v9206 = vunpack.c.l.b16 %v6380
  %v9207 = vunpack.c.h.b16 %v6380
  %v9208 = vunpack.c.l.b16 %v6381
  %v9209 = vunpack.c.h.b16 %v6381
  %v9210 = vunpack.c.l.b16 %v6382
  %v9211 = vunpack.c.h.b16 %v6382
  %v9212 = vunpack.c.l.b16 %v6383
  %v9213 = vunpack.c.h.b16 %v6383
  %v9214 = vunpack.c.l.b16 %v6384
  %v9215 = vunpack.c.h.b16 %v6384
  %v9216 = vunpack.c.l.b16 %v6385
  %v9217 = vunpack.c.h.b16 %v6385
  %v9218 = vunpack.c.l.b16 %v6386
  %v9219 = vunpack.c.h.b16 %v6386
  %v9220 = vunpack.c.l.b16 %v6387
  %v9221 = vunpack.c.h.b16 %v6387
  %v9222 = vunpack.c.l.b16 %v6388
  %v9223 = vunpack.c.h.b16 %v6388
  %v9224 = vunpack.c.l.b16 %v6389
  %v9225 = vunpack.c.h.b16 %v6389
  %v9226 = vunpack.c.l.b16 %v6390
  %v9227 = vunpack.c.h.b16 %v6390
  %v9228 = vunpack.c.l.b16 %v6391
  %v9229 = vunpack.c.h.b16 %v6391
  %v9230 = vunpack.c.l.b16 %v6392
  %v9231 = vunpack.c.h.b16 %v6392
  %v9232 = vunpack.c.l.b16 %v6393
  %v9233 = vunpack.c.h.b16 %v6393
  %v9234 = vunpack.c.l.b16 %v6394
  %v9235 = vunpack.c.h.b16 %v6394
  %v9236 = vunpack.c.l.b16 %v6395
  %v9237 = vunpack.c.h.b16 %v6395
  %v9238 = vunpack.c.l.b16 %v6396
  %v9239 = vunpack.c.h.b16 %v6396
  %v9240 = vunpack.c.l.b16 %v6397
  %v9241 = vunpack.c.h.b16 %v6397
  %v9242 = vunpack.c.l.b16 %v6398
  %v9243 = vunpack.c.h.b16 %v6398
  %v9244 = vunpack.c.l.b16 %v6399
  %v9245 = vunpack.c.h.b16 %v6399
  %v9246 = vunpack.c.l.b16 %v6400
  %v9247 = vunpack.c.h.b16 %v6400
  %v9248 = vunpack.c.l.b16 %v6401
  %v9249 = vunpack.c.h.b16 %v6401
  %v9250 = vunpack.c.l.b16 %v6402
  %v9251 = vunpack.c.h.b16 %v6402
  %v9252 = vunpack.c.l.b16 %v6403
  %v9253 = vunpack.c.h.b16 %v6403
  %v9254 = vunpack.c.l.b16 %v6404
  %v9255 = vunpack.c.h.b16 %v6404
  %v9256 = vunpack.c.l.b16 %v6405
  %v9257 = vunpack.c.h.b16 %v6405
  %v9258 = vunpack.c.l.b16 %v6406
  %v9259 = vunpack.c.h.b16 %v6406
  %v9260 = vunpack.c.l.b16 %v6407
  %v9261 = vunpack.c.h.b16 %v6407
  %v9262 = vunpack.c.l.b16 %v6408
  %v9263 = vunpack.c.h.b16 %v6408
  %v9264 = vunpack.c.l.b16 %v6409
  %v9265 = vunpack.c.h.b16 %v6409
  %v9266 = vunpack.c.l.b16 %v6410
  %v9267 = vunpack.c.h.b16 %v6410
  %v9268 = vunpack.c.l.b16 %v6411
  %v9269 = vunpack.c.h.b16 %v6411
  %v9270 = vunpack.c.l.b16 %v6412
  %v9271 = vunpack.c.h.b16 %v6412
  %v9272 = vunpack.c.l.b16 %v6413
  %v9273 = vunpack.c.h.b16 %v6413
  %v9274 = vunpack.c.l.b16 %v6414
  %v9275 = vunpack.c.h.b16 %v6414
  %v9276 = vunpack.c.l.b16 %v6415
  %v9277 = vunpack.c.h.b16 %v6415
  %v9278 = vunpack.c.l.b16 %v6416
  %v9279 = vunpack.c.h.b16 %v6416
  %v9280 = vunpack.c.l.b16 %v6417
  %v9281 = vunpack.c.h.b16 %v6417
  %v9282 = vunpack.c.l.b16 %v6418
  %v9283 = vunpack.c.h.b16 %v6418
  %v9284 = vunpack.c.l.b16 %v6419
  %v9285 = vunpack.c.h.b16 %v6419
  %v9286 = vunpack.c.l.b16 %v6420
  %v9287 = vunpack.c.h.b16 %v6420
  %v9288 = vunpack.c.l.b16 %v6421
  %v9289 = vunpack.c.h.b16 %v6421
  %v9290 = vunpack.c.l.b16 %v6422
  %v9291 = vunpack.c.h.b16 %v6422
  %v9292 = vunpack.c.l.b16 %v6423
  %v9293 = vunpack.c.h.b16 %v6423
  %v9294 = vunpack.c.l.b16 %v6424
  %v9295 = vunpack.c.h.b16 %v6424
  %v9296 = vunpack.c.l.b16 %v6425
  %v9297 = vunpack.c.h.b16 %v6425
  %v9298 = vunpack.c.l.b16 %v6426
  %v9299 = vunpack.c.h.b16 %v6426
  %v9300 = vunpack.c.l.b16 %v6427
  %v9301 = vunpack.c.h.b16 %v6427
  %v9302 = vunpack.c.l.b16 %v6428
  %v9303 = vunpack.c.h.b16 %v6428
  %v9304 = vunpack.c.l.b16 %v6429
  %v9305 = vunpack.c.h.b16 %v6429
  %v9306 = vunpack.c.l.b16 %v6430
  %v9307 = vunpack.c.h.b16 %v6430
  %v9308 = vunpack.c.l.b16 %v6431
  %v9309 = vunpack.c.h.b16 %v6431
  %v9310 = vunpack.c.l.b16 %v6432
  %v9311 = vunpack.c.h.b16 %v6432
  %v9312 = vunpack.c.l.b16 %v6433
  %v9313 = vunpack.c.h.b16 %v6433
  %v9314 = vunpack.c.l.b16 %v6434
  %v9315 = vunpack.c.h.b16 %v6434
  %v9316 = vunpack.c.l.b16 %v6435
  %v9317 = vunpack.c.h.b16 %v6435
  %v9318 = vunpack.c.l.b16 %v6436
  %v9319 = vunpack.c.h.b16 %v6436
  %v9320 = vunpack.c.l.b16 %v6437
  %v9321 = vunpack.c.h.b16 %v6437
  %v9322 = vunpack.c.l.b16 %v6438
  %v9323 = vunpack.c.h.b16 %v6438
  %v9324 = vunpack.c.l.b16 %v6439
  %v9325 = vunpack.c.h.b16 %v6439
  %v9326 = vunpack.c.l.b16 %v6440
  %v9327 = vunpack.c.h.b16 %v6440
  %v9328 = vunpack.c.l.b16 %v6441
  %v9329 = vunpack.c.h.b16 %v6441
  %v9330 = vunpack.c.l.b16 %v6442
  %v9331 = vunpack.c.h.b16 %v6442
  %v9332 = vunpack.c.l.b16 %v6443
  %v9333 = vunpack.c.h.b16 %v6443
  %v9334 = vunpack.c.l.b16 %v6444
  %v9335 = vunpack.c.h.b16 %v6444
  %v9336 = vunpack.c.l.b16 %v6445
  %v9337 = vunpack.c.h.b16 %v6445
  %v9338 = vunpack.c.l.b16 %v6446
  %v9339 = vunpack.c.h.b16 %v6446
  %v9340 = vunpack.c.l.b16 %v6447
  %v9341 = vunpack.c.h.b16 %v6447
  %v9342 = vunpack.c.l.b16 %v6448
  %v9343 = vunpack.c.h.b16 %v6448
  %v9344 = vunpack.c.l.b16 %v6449
  %v9345 = vunpack.c.h.b16 %v6449
  %v9346 = vunpack.c.l.b16 %v6450
  %v9347 = vunpack.c.h.b16 %v6450
  %v9348 = vunpack.c.l.b16 %v6451
  %v9349 = vunpack.c.h.b16 %v6451
  %v9350 = vunpack.c.l.b16 %v6452
  %v9351 = vunpack.c.h.b16 %v6452
  %v9352 = vunpack.c.l.b16 %v6453
  %v9353 = vunpack.c.h.b16 %v6453
  %v9354 = vunpack.c.l.b16 %v6454
  %v9355 = vunpack.c.h.b16 %v6454
  %v9356 = vunpack.c.l.b16 %v6455
  %v9357 = vunpack.c.h.b16 %v6455
  %v9358 = vunpack.c.l.b16 %v6456
  %v9359 = vunpack.c.h.b16 %v6456
  %v9360 = vunpack.c.l.b16 %v6457
  %v9361 = vunpack.c.h.b16 %v6457
  %v9362 = vunpack.c.l.b16 %v6458
  %v9363 = vunpack.c.h.b16 %v6458
  %v9364 = vunpack.c.l.b16 %v6459
  %v9365 = vunpack.c.h.b16 %v6459
  %v9366 = vunpack.c.l.b16 %v6460
  %v9367 = vunpack.c.h.b16 %v6460
  %v9368 = vunpack.c.l.b16 %v6461
  %v9369 = vunpack.c.h.b16 %v6461
  %v9370 = vunpack.c.l.b16 %v6462
  %v9371 = vunpack.c.h.b16 %v6462
  %v9372 = vunpack.c.l.b16 %v6463
  %v9373 = vunpack.c.h.b16 %v6463
  %v9374 = vunpack.c.l.b16 %v6464
  %v9375 = vunpack.c.h.b16 %v6464
  %v9376 = vunpack.c.l.b16 %v6465
  %v9377 = vunpack.c.h.b16 %v6465
  %v9378 = vunpack.c.l.b16 %v6466
  %v9379 = vunpack.c.h.b16 %v6466
  %v9380 = vunpack.c.l.b16 %v6467
  %v9381 = vunpack.c.h.b16 %v6467
  %v9382 = vunpack.c.l.b16 %v6468
  %v9383 = vunpack.c.h.b16 %v6468
  %v9384 = vunpack.c.l.b16 %v6469
  %v9385 = vunpack.c.h.b16 %v6469
  %v9386 = vunpack.c.l.b16 %v6470
  %v9387 = vunpack.c.h.b16 %v6470
  %v9388 = vunpack.c.l.b16 %v6471
  %v9389 = vunpack.c.h.b16 %v6471
  %v9390 = vunpack.c.l.b16 %v6472
  %v9391 = vunpack.c.h.b16 %v6472
  %v9392 = vunpack.c.l.b16 %v6473
  %v9393 = vunpack.c.h.b16 %v6473
  %v9394 = vunpack.c.l.b16 %v6474
  %v9395 = vunpack.c.h.b16 %v6474
  %v9396 = vunpack.c.l.b16 %v6475
  %v9397 = vunpack.c.h.b16 %v6475
  %v9398 = vunpack.c.l.b16 %v6476
  %v9399 = vunpack.c.h.b16 %v6476
  %v9400 = vunpack.c.l.b16 %v6477
  %v9401 = vunpack.c.h.b16 %v6477
  %v9402 = vunpack.c.l.b16 %v6478
  %v9403 = vunpack.c.h.b16 %v6478
  %v9404 = vunpack.c.l.b16 %v6479
  %v9405 = vunpack.c.h.b16 %v6479
  %v9406 = vunpack.c.l.b16 %v6480
  %v9407 = vunpack.c.h.b16 %v6480
  %v9408 = vunpack.c.l.b16 %v6481
  %v9409 = vunpack.c.h.b16 %v6481
  %v9410 = vunpack.c.l.b16 %v6482
  %v9411 = vunpack.c.h.b16 %v6482
  %v9412 = vunpack.c.l.b16 %v6483
  %v9413 = vunpack.c.h.b16 %v6483
  %v9414 = vunpack.c.l.b16 %v6484
  %v9415 = vunpack.c.h.b16 %v6484
  %v9416 = vunpack.c.l.b16 %v6485
  %v9417 = vunpack.c.h.b16 %v6485
  %v9418 = vunpack.c.l.b16 %v6486
  %v9419 = vunpack.c.h.b16 %v6486
  %v9420 = vunpack.c.l.b16 %v6487
  %v9421 = vunpack.c.h.b16 %v6487
  %v9422 = vunpack.c.l.b16 %v6488
  %v9423 = vunpack.c.h.b16 %v6488
  %v9424 = vunpack.c.l.b16 %v6489
  %v9425 = vunpack.c.h.b16 %v6489
  %v9426 = vunpack.c.l.b16 %v6490
  %v9427 = vunpack.c.h.b16 %v6490
  %v9428 = vunpack.c.l.b16 %v6491
  %v9429 = vunpack.c.h.b16 %v6491
  %v9430 = vunpack.c.l.b16 %v6492
  %v9431 = vunpack.c.h.b16 %v6492
  %v9432 = vunpack.c.l.b16 %v6493
  %v9433 = vunpack.c.h.b16 %v6493
  %v9434 = vunpack.c.l.b16 %v6494
  %v9435 = vunpack.c.h.b16 %v6494
  %v9436 = vunpack.c.l.b16 %v6495
  %v9437 = vunpack.c.h.b16 %v6495
  %v9438 = vunpack.c.l.b16 %v6496
  %v9439 = vunpack.c.h.b16 %v6496
  %v9440 = vunpack.c.l.b16 %v6497
  %v9441 = vunpack.c.h.b16 %v6497
  %v9442 = vunpack.c.l.b16 %v6498
  %v9443 = vunpack.c.h.b16 %v6498
  %v9444 = vunpack.c.l.b16 %v6499
  %v9445 = vunpack.c.h.b16 %v6499
  %v9446 = vunpack.c.l.b16 %v6500
  %v9447 = vunpack.c.h.b16 %v6500
  %v9448 = vunpack.c.l.b16 %v6501
  %v9449 = vunpack.c.h.b16 %v6501
  %v9450 = vunpack.c.l.b16 %v6502
  %v9451 = vunpack.c.h.b16 %v6502
  %v9452 = vunpack.c.l.b16 %v6503
  %v9453 = vunpack.c.h.b16 %v6503
  %v9454 = vunpack.c.l.b16 %v6504
  %v9455 = vunpack.c.h.b16 %v6504
  %v9456 = vunpack.c.l.b16 %v6505
  %v9457 = vunpack.c.h.b16 %v6505
  %v9458 = vunpack.c.l.b16 %v6506
  %v9459 = vunpack.c.h.b16 %v6506
  %v9460 = vunpack.c.l.b16 %v6507
  %v9461 = vunpack.c.h.b16 %v6507
  %v9462 = vunpack.c.l.b16 %v6508
  %v9463 = vunpack.c.h.b16 %v6508
  %v9464 = vunpack.c.l.b16 %v6509
  %v9465 = vunpack.c.h.b16 %v6509
  %v9466 = vunpack.c.l.b16 %v6510
  %v9467 = vunpack.c.h.b16 %v6510
  %v9468 = vunpack.c.l.b16 %v6511
  %v9469 = vunpack.c.h.b16 %v6511
  %v9470 = vunpack.c.l.b16 %v6512
  %v9471 = vunpack.c.h.b16 %v6512
  %v9472 = vunpack.c.l.b16 %v6513
  %v9473 = vunpack.c.h.b16 %v6513
  %v9474 = vunpack.c.l.b16 %v6514
  %v9475 = vunpack.c.h.b16 %v6514
  %v9476 = vunpack.c.l.b16 %v6515
  %v9477 = vunpack.c.h.b16 %v6515
  %v9478 = vunpack.c.l.b16 %v6516
  %v9479 = vunpack.c.h.b16 %v6516
  %v9480 = vunpack.c.l.b16 %v6517
  %v9481 = vunpack.c.h.b16 %v6517
  %v9482 = vunpack.c.l.b16 %v6518
  %v9483 = vunpack.c.h.b16 %v6518
  %v9484 = vunpack.c.l.b16 %v6519
  %v9485 = vunpack.c.h.b16 %v6519
  %v9486 = vunpack.c.l.b16 %v6520
  %v9487 = vunpack.c.h.b16 %v6520
  %v9488 = vunpack.c.l.b16 %v6521
  %v9489 = vunpack.c.h.b16 %v6521
  %v9490 = vunpack.c.l.b16 %v6522
  %v9491 = vunpack.c.h.b16 %v6522
  %v9492 = vunpack.c.l.b16 %v6523
  %v9493 = vunpack.c.h.b16 %v6523
  %v9494 = vunpack.c.l.b16 %v6524
  %v9495 = vunpack.c.h.b16 %v6524
  %v9496 = vunpack.c.l.b16 %v6525
  %v9497 = vunpack.c.h.b16 %v6525
  %v9498 = vunpack.c.l.b16 %v6526
  %v9499 = vunpack.c.h.b16 %v6526
  %v9500 = vunpack.c.l.b16 %v6527
  %v9501 = vunpack.c.h.b16 %v6527
  %v9502 = vunpack.c.l.b16 %v6528
  %v9503 = vunpack.c.h.b16 %v6528
  %v9504 = vunpack.c.l.b16 %v6529
  %v9505 = vunpack.c.h.b16 %v6529
  %v9506 = vunpack.c.l.b16 %v6530
  %v9507 = vunpack.c.h.b16 %v6530
  %v9508 = vunpack.c.l.b16 %v6531
  %v9509 = vunpack.c.h.b16 %v6531
  %v9510 = vunpack.c.l.b16 %v6532
  %v9511 = vunpack.c.h.b16 %v6532
  %v9512 = vunpack.c.l.b16 %v6533
  %v9513 = vunpack.c.h.b16 %v6533
  %v9514 = vunpack.c.l.b16 %v6534
  %v9515 = vunpack.c.h.b16 %v6534
  %v9516 = vunpack.c.l.b16 %v6535
  %v9517 = vunpack.c.h.b16 %v6535
  %v9518 = vunpack.c.l.b16 %v6536
  %v9519 = vunpack.c.h.b16 %v6536
  %v9520 = vunpack.c.l.b16 %v6537
  %v9521 = vunpack.c.h.b16 %v6537
  %v9522 = vunpack.c.l.b16 %v6538
  %v9523 = vunpack.c.h.b16 %v6538
  %v9524 = vunpack.c.l.b16 %v6539
  %v9525 = vunpack.c.h.b16 %v6539
  %v9526 = vunpack.c.l.b16 %v6540
  %v9527 = vunpack.c.h.b16 %v6540
  %v9528 = vunpack.c.l.b16 %v6541
  %v9529 = vunpack.c.h.b16 %v6541
  %v9530 = vunpack.c.l.b16 %v6542
  %v9531 = vunpack.c.h.b16 %v6542
  %v9532 = vunpack.c.l.b16 %v6543
  %v9533 = vunpack.c.h.b16 %v6543
  %v9534 = vunpack.c.l.b16 %v6544
  %v9535 = vunpack.c.h.b16 %v6544
  %v9536 = vunpack.c.l.b16 %v6545
  %v9537 = vunpack.c.h.b16 %v6545
  %v9538 = vunpack.c.l.b16 %v6546
  %v9539 = vunpack.c.h.b16 %v6546
  %v9540 = vunpack.c.l.b16 %v6547
  %v9541 = vunpack.c.h.b16 %v6547
  %v9542 = vunpack.c.l.b16 %v6548
  %v9543 = vunpack.c.h.b16 %v6548
  %v9544 = vunpack.c.l.b16 %v6549
  %v9545 = vunpack.c.h.b16 %v6549
  %v9546 = vunpack.c.l.b16 %v6550
  %v9547 = vunpack.c.h.b16 %v6550
  %v9548 = vunpack.c.l.b16 %v6551
  %v9549 = vunpack.c.h.b16 %v6551
  %v9550 = vunpack.c.l.b16 %v6552
  %v9551 = vunpack.c.h.b16 %v6552
  %v9552 = vunpack.c.l.b16 %v6553
  %v9553 = vunpack.c.h.b16 %v6553
  %v9554 = vunpack.c.l.b16 %v6554
  %v9555 = vunpack.c.h.b16 %v6554
  %v9556 = vunpack.c.l.b16 %v6555
  %v9557 = vunpack.c.h.b16 %v6555
  %v9558 = vunpack.c.l.b16 %v6556
  %v9559 = vunpack.c.h.b16 %v6556
  %v9560 = vunpack.c.l.b16 %v6557
  %v9561 = vunpack.c.h.b16 %v6557
  %v9562 = vunpack.c.l.b16 %v6558
  %v9563 = vunpack.c.h.b16 %v6558
  %v9564 = vunpack.c.l.b16 %v6559
  %v9565 = vunpack.c.h.b16 %v6559
  %v9566 = vunpack.c.l.b16 %v6560
  %v9567 = vunpack.c.h.b16 %v6560
  %v9568 = vunpack.c.l.b16 %v6561
  %v9569 = vunpack.c.h.b16 %v6561
  %v9570 = vunpack.c.l.b16 %v6562
  %v9571 = vunpack.c.h.b16 %v6562
  %v9572 = vunpack.c.l.b16 %v6563
  %v9573 = vunpack.c.h.b16 %v6563
  %v9574 = vunpack.c.l.b16 %v6564
  %v9575 = vunpack.c.h.b16 %v6564
  %v9576 = vunpack.c.l.b16 %v6565
  %v9577 = vunpack.c.h.b16 %v6565
  %v9578 = vunpack.c.l.b16 %v6566
  %v9579 = vunpack.c.h.b16 %v6566
  %v9580 = vunpack.c.l.b16 %v6567
  %v9581 = vunpack.c.h.b16 %v6567
  %v9582 = vunpack.c.l.b16 %v6568
  %v9583 = vunpack.c.h.b16 %v6568
  %v9584 = vunpack.c.l.b16 %v6569
  %v9585 = vunpack.c.h.b16 %v6569
  %v9586 = vunpack.c.l.b16 %v6570
  %v9587 = vunpack.c.h.b16 %v6570
  %v9588 = vunpack.c.l.b16 %v6571
  %v9589 = vunpack.c.h.b16 %v6571
  %v9590 = vunpack.c.l.b16 %v6572
  %v9591 = vunpack.c.h.b16 %v6572
  %v9592 = vunpack.c.l.b16 %v6573
  %v9593 = vunpack.c.h.b16 %v6573
  %v9594 = vunpack.c.l.b16 %v6574
  %v9595 = vunpack.c.h.b16 %v6574
  %v9596 = vunpack.c.l.b16 %v6575
  %v9597 = vunpack.c.h.b16 %v6575
  %v9598 = vunpack.c.l.b16 %v6576
  %v9599 = vunpack.c.h.b16 %v6576
  %v9600 = vunpack.c.l.b16 %v6577
  %v9601 = vunpack.c.h.b16 %v6577
  %v9602 = vunpack.c.l.b16 %v6578
  %v9603 = vunpack.c.h.b16 %v6578
  %v9604 = vunpack.c.l.b16 %v6579
  %v9605 = vunpack.c.h.b16 %v6579
  %v9606 = vunpack.c.l.b16 %v6580
  %v9607 = vunpack.c.h.b16 %v6580
  %v9608 = vunpack.c.l.b16 %v6581
  %v9609 = vunpack.c.h.b16 %v6581
  %v9610 = vunpack.c.l.b16 %v6582
  %v9611 = vunpack.c.h.b16 %v6582
  %v9612 = vunpack.c.l.b16 %v6583
  %v9613 = vunpack.c.h.b16 %v6583
  %v9614 = vunpack.c.l.b16 %v6584
  %v9615 = vunpack.c.h.b16 %v6584
  %v9616 = vunpack.c.l.b16 %v6585
  %v9617 = vunpack.c.h.b16 %v6585
  %v9618 = vunpack.c.l.b16 %v6586
  %v9619 = vunpack.c.h.b16 %v6586
  %v9620 = vunpack.c.l.b16 %v6587
  %v9621 = vunpack.c.h.b16 %v6587
  %v9622 = vunpack.c.l.b16 %v6588
  %v9623 = vunpack.c.h.b16 %v6588
  %v9624 = vunpack.c.l.b16 %v6589
  %v9625 = vunpack.c.h.b16 %v6589
  %v9626 = vunpack.c.l.b16 %v6590
  %v9627 = vunpack.c.h.b16 %v6590
  %v9628 = vunpack.c.l.b16 %v6591
  %v9629 = vunpack.c.h.b16 %v6591
  %v9630 = vunpack.c.l.b16 %v6592
  %v9631 = vunpack.c.h.b16 %v6592
  %v9632 = vunpack.c.l.b16 %v6593
  %v9633 = vunpack.c.h.b16 %v6593
  %v9634 = vunpack.c.l.b16 %v6594
  %v9635 = vunpack.c.h.b16 %v6594
  %v9636 = vunpack.c.l.b16 %v6595
  %v9637 = vunpack.c.h.b16 %v6595
  %v9638 = vunpack.c.l.b16 %v6596
  %v9639 = vunpack.c.h.b16 %v6596
  %v9640 = vunpack.c.l.b16 %v6597
  %v9641 = vunpack.c.h.b16 %v6597
  %v9642 = vunpack.c.l.b16 %v6598
  %v9643 = vunpack.c.h.b16 %v6598
  %v9644 = vunpack.c.l.b16 %v6599
  %v9645 = vunpack.c.h.b16 %v6599
  %v9646 = vunpack.c.l.b16 %v6600
  %v9647 = vunpack.c.h.b16 %v6600
  %v9648 = vunpack.c.l.b16 %v6601
  %v9649 = vunpack.c.h.b16 %v6601
  %v9650 = vunpack.c.l.b16 %v6602
  %v9651 = vunpack.c.h.b16 %v6602
  %v9652 = vunpack.c.l.b16 %v6603
  %v9653 = vunpack.c.h.b16 %v6603
  %v9654 = vunpack.c.l.b16 %v6604
  %v9655 = vunpack.c.h.b16 %v6604
  %v9656 = vunpack.c.l.b16 %v6605
  %v9657 = vunpack.c.h.b16 %v6605
  %v9658 = vunpack.c.l.b16 %v6606
  %v9659 = vunpack.c.h.b16 %v6606
  %v9660 = vunpack.c.l.b16 %v6607
  %v9661 = vunpack.c.h.b16 %v6607
  %v9662 = vunpack.c.l.b16 %v6608
  %v9663 = vunpack.c.h.b16 %v6608
  %v9664 = vunpack.c.l.b16 %v6609
  %v9665 = vunpack.c.h.b16 %v6609
  %v9666 = vunpack.c.l.b16 %v6610
  %v9667 = vunpack.c.h.b16 %v6610
  %v9668 = vunpack.c.l.b16 %v6611
  %v9669 = vunpack.c.h.b16 %v6611
  %v9670 = vunpack.c.l.b16 %v6612
  %v9671 = vunpack.c.h.b16 %v6612
  %v9672 = vunpack.c.l.b16 %v6613
  %v9673 = vunpack.c.h.b16 %v6613
  %v9674 = vunpack.c.l.b16 %v6614
  %v9675 = vunpack.c.h.b16 %v6614
  %v9676 = vunpack.c.l.b16 %v6615
  %v9677 = vunpack.c.h.b16 %v6615
  %v9678 = vunpack.c.l.b16 %v6616
  %v9679 = vunpack.c.h.b16 %v6616
  %v9680 = vunpack.c.l.b16 %v6617
  %v9681 = vunpack.c.h.b16 %v6617
  %v9682 = vunpack.c.l.b16 %v6618
  %v9683 = vunpack.c.h.b16 %v6618
  %v9684 = vunpack.c.l.b16 %v6619
  %v9685 = vunpack.c.h.b16 %v6619
  %v9686 = vunpack.c.l.b16 %v6620
  %v9687 = vunpack.c.h.b16 %v6620
  %v9688 = vunpack.c.l.b16 %v6621
  %v9689 = vunpack.c.h.b16 %v6621
  %v9690 = vunpack.c.l.b16 %v6622
  %v9691 = vunpack.c.h.b16 %v6622
  %v9692 = vunpack.c.l.b16 %v6623
  %v9693 = vunpack.c.h.b16 %v6623
  %v9694 = vunpack.c.l.b16 %v6624
  %v9695 = vunpack.c.h.b16 %v6624
  %v9696 = vunpack.c.l.b16 %v6625
  %v9697 = vunpack.c.h.b16 %v6625
  %v9698 = vunpack.c.l.b16 %v6626
  %v9699 = vunpack.c.h.b16 %v6626
  %v9700 = vunpack.c.l.b16 %v6627
  %v9701 = vunpack.c.h.b16 %v6627
  %v9702 = vunpack.c.l.b16 %v6628
  %v9703 = vunpack.c.h.b16 %v6628
  %v9704 = vunpack.c.l.b16 %v6629
  %v9705 = vunpack.c.h.b16 %v6629
  %v9706 = vunpack.c.l.b16 %v6630
  %v9707 = vunpack.c.h.b16 %v6630
  %v9708 = vunpack.c.l.b16 %v6631
  %v9709 = vunpack.c.h.b16 %v6631
  %v9710 = vunpack.c.l.b16 %v6632
  %v9711 = vunpack.c.h.b16 %v6632
  %v9712 = vunpack.c.l.b16 %v6633
  %v9713 = vunpack.c.h.b16 %v6633
  %v9714 = vunpack.c.l.b16 %v6634
  %v9715 = vunpack.c.h.b16 %v6634
  %v9716 = vunpack.c.l.b16 %v6635
  %v9717 = vunpack.c.h.b16 %v6635
  %v9718 = vunpack.c.l.b16 %v6636
  %v9719 = vunpack.c.h.b16 %v6636
  %v9720 = vunpack.c.l.b16 %v6637
  %v9721 = vunpack.c.h.b16 %v6637
  %v9722 = vunpack.c.l.b16 %v6638
  %v9723 = vunpack.c.h.b16 %v6638
  %v9724 = vunpack.c.l.b16 %v6639
  %v9725 = vunpack.c.h.b16 %v6639
  %v9726 = vunpack.c.l.b16 %v6640
  %v9727 = vunpack.c.h.b16 %v6640
  %v9728 = vunpack.c.l.b16 %v6641
  %v9729 = vunpack.c.h.b16 %v6641
  %v9730 = vunpack.c.l.b16 %v6642
  %v9731 = vunpack.c.h.b16 %v6642
  %v9732 = vunpack.c.l.b16 %v6643
  %v9733 = vunpack.c.h.b16 %v6643
  %v9734 = vunpack.c.l.b16 %v6644
  %v9735 = vunpack.c.h.b16 %v6644
  %v9736 = vunpack.c.l.b16 %v6645
  %v9737 = vunpack.c.h.b16 %v6645
  %v9738 = vunpack.c.l.b16 %v6646
  %v9739 = vunpack.c.h.b16 %v6646
  %v9740 = vunpack.c.l.b16 %v6647
  %v9741 = vunpack.c.h.b16 %v6647
  %v9742 = vunpack.c.l.b16 %v6648
  %v9743 = vunpack.c.h.b16 %v6648
  %v9744 = vunpack.c.l.b16 %v6649
  %v9745 = vunpack.c.h.b16 %v6649
  %v9746 = vunpack.c.l.b16 %v6650
  %v9747 = vunpack.c.h.b16 %v6650
  %v9748 = vunpack.c.l.b16 %v6651
  %v9749 = vunpack.c.h.b16 %v6651
  %v9750 = vunpack.c.l.b16 %v6652
  %v9751 = vunpack.c.h.b16 %v6652
  %v9752 = vunpack.c.l.b16 %v6653
  %v9753 = vunpack.c.h.b16 %v6653
  %v9754 = vunpack.c.l.b16 %v6654
  %v9755 = vunpack.c.h.b16 %v6654
  %v9756 = vunpack.c.l.b16 %v6655
  %v9757 = vunpack.c.h.b16 %v6655
  %v9758 = vunpack.c.l.b16 %v6656
  %v9759 = vunpack.c.h.b16 %v6656
  %v9760 = vunpack.c.l.b16 %v6657
  %v9761 = vunpack.c.h.b16 %v6657
  %v9762 = vunpack.c.l.b16 %v6658
  %v9763 = vunpack.c.h.b16 %v6658
  %v9764 = vunpack.c.l.b16 %v6659
  %v9765 = vunpack.c.h.b16 %v6659
  %v9766 = vunpack.c.l.b16 %v6660
  %v9767 = vunpack.c.h.b16 %v6660
  %v9768 = vunpack.c.l.b16 %v6661
  %v9769 = vunpack.c.h.b16 %v6661
  %v9770 = vunpack.c.l.b16 %v6662
  %v9771 = vunpack.c.h.b16 %v6662
  %v9772 = vunpack.c.l.b16 %v6663
  %v9773 = vunpack.c.h.b16 %v6663
  %v9774 = vunpack.c.l.b16 %v6664
  %v9775 = vunpack.c.h.b16 %v6664
  %v9776 = vunpack.c.l.b16 %v6665
  %v9777 = vunpack.c.h.b16 %v6665
  %v9778 = vunpack.c.l.b16 %v6666
  %v9779 = vunpack.c.h.b16 %v6666
  %v9780 = vunpack.c.l.b16 %v6667
  %v9781 = vunpack.c.h.b16 %v6667
  %v9782 = vpack.c.b16 %v7742, %v7734
  %v9783 = vpack.c.b16 %v7743, %v7735
  %v9784 = vpack.c.b16 %v7744, %v7736
  %v9785 = vpack.c.b16 %v7745, %v7737
  %v9786 = vpack.c.b16 %v7746, %v7738
  %v9787 = vpack.c.b16 %v7747, %v7739
  %v9788 = vpack.c.b16 %v7748, %v7740
  %v9789 = vpack.c.b16 %v7749, %v7741
  %v9790 = vpack.c.b16 %v7758, %v7750
  %v9791 = vpack.c.b16 %v7759, %v7751
  %v9792 = vpack.c.b16 %v7760, %v7752
  %v9793 = vpack.c.b16 %v7761, %v7753
  %v9794 = vpack.c.b16 %v7762, %v7754
  %v9795 = vpack.c.b16 %v7763, %v7755
  %v9796 = vpack.c.b16 %v7764, %v7756
  %v9797 = vpack.c.b16 %v7765, %v7757
  %v9798 = vpack.c.b16 %v7774, %v7766
  %v9799 = vpack.c.b16 %v7775, %v7767
  %v9800 = vpack.c.b16 %v7776, %v7768
  %v9801 = vpack.c.b16 %v7777, %v7769
  %v9802 = vpack.c.b16 %v7778, %v7770
  %v9803 = vpack.c.b16 %v7779, %v7771
  %v9804 = vpack.c.b16 %v7780, %v7772
  %v9805 = vpack.c.b16 %v7781, %v7773
  %v9806 = vpack.c.b16 %v7790, %v7782
  %v9807 = vpack.c.b16 %v7791, %v7783
  %v9808 = vpack.c.b16 %v7792, %v7784
  %v9809 = vpack.c.b16 %v7793, %v7785
  %v9810 = vpack.c.b16 %v7794, %v7786
  %v9811 = vpack.c.b16 %v7795, %v7787
  %v9812 = vpack.c.b16 %v7796, %v7788
  %v9813 = vpack.c.b16 %v7797, %v7789
  %v9814 = vpack.c.b16 %v7806, %v7798
  %v9815 = vpack.c.b16 %v7807, %v7799
  %v9816 = vpack.c.b16 %v7808, %v7800
  %v9817 = vpack.c.b16 %v7809, %v7801
  %v9818 = vpack.c.b16 %v7810, %v7802
  %v9819 = vpack.c.b16 %v7811, %v7803
  %v9820 = vpack.c.b16 %v7812, %v7804
  %v9821 = vpack.c.b16 %v7813, %v7805
  %v9822 = vpack.c.b16 %v7822, %v7814
  %v9823 = vpack.c.b16 %v7823, %v7815
  %v9824 = vpack.c.b16 %v7824, %v7816
  %v9825 = vpack.c.b16 %v7825, %v7817
  %v9826 = vpack.c.b16 %v7826, %v7818
  %v9827 = vpack.c.b16 %v7827, %v7819
  %v9828 = vpack.c.b16 %v7828, %v7820
  %v9829 = vpack.c.b16 %v7829, %v7821
  %v9830 = vpack.c.b16 %v7838, %v7830
  %v9831 = vpack.c.b16 %v7839, %v7831
  %v9832 = vpack.c.b16 %v7840, %v7832
  %v9833 = vpack.c.b16 %v7841, %v7833
  %v9834 = vpack.c.b16 %v7842, %v7834
  %v9835 = vpack.c.b16 %v7843, %v7835
  %v9836 = vpack.c.b16 %v7844, %v7836
  %v9837 = vpack.c.b16 %v7845, %v7837
  %v9838 = vpack.c.b16 %v7854, %v7846
  %v9839 = vpack.c.b16 %v7855, %v7847
  %v9840 = vpack.c.b16 %v7856, %v7848
  %v9841 = vpack.c.b16 %v7857, %v7849
  %v9842 = vpack.c.b16 %v7858, %v7850
  %v9843 = vpack.c.b16 %v7859, %v7851
  %v9844 = vpack.c.b16 %v7860, %v7852
  %v9845 = vpack.c.b16 %v7861, %v7853
  %v9846 = vpack.c.b16 %v7870, %v7862
  %v9847 = vpack.c.b16 %v7871, %v7863
  %v9848 = vpack.c.b16 %v7872, %v7864
  %v9849 = vpack.c.b16 %v7873, %v7865
  %v9850 = vpack.c.b16 %v7874, %v7866
  %v9851 = vpack.c.b16 %v7875, %v7867
  %v9852 = vpack.c.b16 %v7876, %v7868
  %v9853 = vpack.c.b16 %v7877, %v7869
  %v9854 = vpack.c.b16 %v7886, %v7878
  %v9855 = vpack.c.b16 %v7887, %v7879
  %v9856 = vpack.c.b16 %v7888, %v7880
  %v9857 = vpack.c.b16 %v7889, %v7881
  %v9858 = vpack.c.b16 %v7890, %v7882
  %v9859 = vpack.c.b16 %v7891, %v7883
  %v9860 = vpack.c.b16 %v7892, %v7884
  %v9861 = vpack.c.b16 %v7893, %v7885
  %v9862 = vpack.c.b16 %v7902, %v7894
  %v9863 = vpack.c.b16 %v7903, %v7895
  %v9864 = vpack.c.b16 %v7904, %v7896
  %v9865 = vpack.c.b16 %v7905, %v7897
  %v9866 = vpack.c.b16 %v7906, %v7898
  %v9867 = vpack.c.b16 %v7907, %v7899
  %v9868 = vpack.c.b16 %v7908, %v7900
  %v9869 = vpack.c.b16 %v7909, %v7901
  %v9870 = vpack.c.b16 %v7918, %v7910
  %v9871 = vpack.c.b16 %v7919, %v7911
  %v9872 = vpack.c.b16 %v7920, %v7912
  %v9873 = vpack.c.b16 %v7921, %v7913
  %v9874 = vpack.c.b16 %v7922, %v7914
  %v9875 = vpack.c.b16 %v7923, %v7915
  %v9876 = vpack.c.b16 %v7924, %v7916
  %v9877 = vpack.c.b16 %v7925, %v7917
  %v9878 = vpack.c.b16 %v7934, %v7926
  %v9879 = vpack.c.b16 %v7935, %v7927
  %v9880 = vpack.c.b16 %v7936, %v7928
  %v9881 = vpack.c.b16 %v7937, %v7929
  %v9882 = vpack.c.b16 %v7938, %v7930
  %v9883 = vpack.c.b16 %v7939, %v7931
  %v9884 = vpack.c.b16 %v7940, %v7932
  %v9885 = vpack.c.b16 %v7941, %v7933
  %v9886 = vpack.c.b16 %v7950, %v7942
  %v9887 = vpack.c.b16 %v7951, %v7943
  %v9888 = vpack.c.b16 %v7952, %v7944
  %v9889 = vpack.c.b16 %v7953, %v7945
  %v9890 = vpack.c.b16 %v7954, %v7946
  %v9891 = vpack.c.b16 %v7955, %v7947
  %v9892 = vpack.c.b16 %v7956, %v7948
  %v9893 = vpack.c.b16 %v7957, %v7949
  %v9894 = vpack.c.b16 %v7966, %v7958
  %v9895 = vpack.c.b16 %v7967, %v7959
  %v9896 = vpack.c.b16 %v7968, %v7960
  %v9897 = vpack.c.b16 %v7969, %v7961
  %v9898 = vpack.c.b16 %v7970, %v7962
  %v9899 = vpack.c.b16 %v7971, %v7963
  %v9900 = vpack.c.b16 %v7972, %v7964
  %v9901 = vpack.c.b16 %v7973, %v7965
  %v9902 = vpack.c.b16 %v7982, %v7974
  %v9903 = vpack.c.b16 %v7983, %v7975
  %v9904 = vpack.c.b16 %v7984, %v7976
  %v9905 = vpack.c.b16 %v7985, %v7977
  %v9906 = vpack.c.b16 %v7986, %v7978
  %v9907 = vpack.c.b16 %v7987, %v7979
  %v9908 = vpack.c.b16 %v7988, %v7980
  %v9909 = vpack.c.b16 %v7989, %v7981
  %v9910 = vpack.c.b16 %v7998, %v7990
  %v9911 = vpack.c.b16 %v7999, %v7991
  %v9912 = vpack.c.b16 %v8000, %v7992
  %v9913 = vpack.c.b16 %v8001, %v7993
  %v9914 = vpack.c.b16 %v8002, %v7994
  %v9915 = vpack.c.b16 %v8003, %v7995
  %v9916 = vpack.c.b16 %v8004, %v7996
  %v9917 = vpack.c.b16 %v8005, %v7997
  %v9918 = vpack.c.b16 %v8014, %v8006
  %v9919 = vpack.c.b16 %v8015, %v8007
  %v9920 = vpack.c.b16 %v8016, %v8008
  %v9921 = vpack.c.b16 %v8017, %v8009
  %v9922 = vpack.c.b16 %v8018, %v8010
  %v9923 = vpack.c.b16 %v8019, %v8011
  %v9924 = vpack.c.b16 %v8020, %v8012
  %v9925 = vpack.c.b16 %v8021, %v8013
  %v9926 = vpack.c.b16 %v8030, %v8022
  %v9927 = vpack.c.b16 %v8031, %v8023
  %v9928 = vpack.c.b16 %v8032, %v8024
  %v9929 = vpack.c.b16 %v8033, %v8025
  %v9930 = vpack.c.b16 %v8034, %v8026
  %v9931 = vpack.c.b16 %v8035, %v8027
  %v9932 = vpack.c.b16 %v8036, %v8028
  %v9933 = vpack.c.b16 %v8037, %v8029
  %v9934 = vpack.c.b16 %v8046, %v8038
  %v9935 = vpack.c.b16 %v8047, %v8039
  %v9936 = vpack.c.b16 %v8048, %v8040
  %v9937 = vpack.c.b16 %v8049, %v8041
  %v9938 = vpack.c.b16 %v8050, %v8042
  %v9939 = vpack.c.b16 %v8051, %v8043
  %v9940 = vpack.c.b16 %v8052, %v8044
  %v9941 = vpack.c.b16 %v8053, %v8045
  %v9942 = vpack.c.b16 %v8062, %v8054
  %v9943 = vpack.c.b16 %v8063, %v8055
  %v9944 = vpack.c.b16 %v8064, %v8056
  %v9945 = vpack.c.b16 %v8065, %v8057
  %v9946 = vpack.c.b16 %v8066, %v8058
  %v9947 = vpack.c.b16 %v8067, %v8059
  %v9948 = vpack.c.b16 %v8068, %v8060
  %v9949 = vpack.c.b16 %v8069, %v8061
  %v9950 = vpack.c.b16 %v8078, %v8070
  %v9951 = vpack.c.b16 %v8079, %v8071
  %v9952 = vpack.c.b16 %v8080, %v8072
  %v9953 = vpack.c.b16 %v8081, %v8073
  %v9954 = vpack.c.b16 %v8082, %v8074
  %v9955 = vpack.c.b16 %v8083, %v8075
  %v9956 = vpack.c.b16 %v8084, %v8076
  %v9957 = vpack.c.b16 %v8085, %v8077
  %v9958 = vpack.c.b16 %v8094, %v8086
  %v9959 = vpack.c.b16 %v8095, %v8087
  %v9960 = vpack.c.b16 %v8096, %v8088
  %v9961 = vpack.c.b16 %v8097, %v8089
  %v9962 = vpack.c.b16 %v8098, %v8090
  %v9963 = vpack.c.b16 %v8099, %v8091
  %v9964 = vpack.c.b16 %v8100, %v8092
  %v9965 = vpack.c.b16 %v8101, %v8093
  %v9966 = vpack.c.b16 %v8110, %v8102
  %v9967 = vpack.c.b16 %v8111, %v8103
  %v9968 = vpack.c.b16 %v8112, %v8104
  %v9969 = vpack.c.b16 %v8113, %v8105
  %v9970 = vpack.c.b16 %v8114, %v8106
  %v9971 = vpack.c.b16 %v8115, %v8107
  %v9972 = vpack.c.b16 %v8116, %v8108
  %v9973 = vpack.c.b16 %v8117, %v8109
  %v9974 = vpack.c.b16 %v8126, %v8118
  %v9975 = vpack.c.b16 %v8127, %v8119
  %v9976 = vpack.c.b16 %v8128, %v8120
  %v9977 = vpack.c.b16 %v8129, %v8121
  %v9978 = vpack.c.b16 %v8130, %v8122
  %v9979 = vpack.c.b16 %v8131, %v8123
  %v9980 = vpack.c.b16 %v8132, %v8124
  %v9981 = vpack.c.b16 %v8133, %v8125
  %v9982 = vpack.c.b16 %v8142, %v8134
  %v9983 = vpack.c.b16 %v8143, %v8135
  %v9984 = vpack.c.b16 %v8144, %v8136
  %v9985 = vpack.c.b16 %v8145, %v8137
  %v9986 = vpack.c.b16 %v8146, %v8138
  %v9987 = vpack.c.b16 %v8147, %v8139
  %v9988 = vpack.c.b16 %v8148, %v8140
  %v9989 = vpack.c.b16 %v8149, %v8141
  %v9990 = vpack.c.b16 %v8158, %v8150
  %v9991 = vpack.c.b16 %v8159, %v8151
  %v9992 = vpack.c.b16 %v8160, %v8152
  %v9993 = vpack.c.b16 %v8161, %v8153
  %v9994 = vpack.c.b16 %v8162, %v8154
  %v9995 = vpack.c.b16 %v8163, %v8155
  %v9996 = vpack.c.b16 %v8164, %v8156
  %v9997 = vpack.c.b16 %v8165, %v8157
  %v9998 = vpack.c.b16 %v8174, %v8166
  %v9999 = vpack.c.b16 %v8175, %v8167
  %v10000 = vpack.c.b16 %v8176, %v8168
  %v10001 = vpack.c.b16 %v8177, %v8169
  %v10002 = vpack.c.b16 %v8178, %v8170
  %v10003 = vpack.c.b16 %v8179, %v8171
  %v10004 = vpack.c.b16 %v8180, %v8172
  %v10005 = vpack.c.b16 %v8181, %v8173
  %v10006 = vpack.c.b16 %v8190, %v8182
  %v10007 = vpack.c.b16 %v8191, %v8183
  %v10008 = vpack.c.b16 %v8192, %v8184
  %v10009 = vpack.c.b16 %v8193, %v8185
  %v10010 = vpack.c.b16 %v8194, %v8186
  %v10011 = vpack.c.b16 %v8195, %v8187
  %v10012 = vpack.c.b16 %v8196, %v8188
  %v10013 = vpack.c.b16 %v8197, %v8189
  %v10014 = vpack.c.b16 %v8206, %v8198
  %v10015 = vpack.c.b16 %v8207, %v8199
  %v10016 = vpack.c.b16 %v8208, %v8200
  %v10017 = vpack.c.b16 %v8209, %v8201
  %v10018 = vpack.c.b16 %v8210, %v8202
  %v10019 = vpack.c.b16 %v8211, %v8203
  %v10020 = vpack.c.b16 %v8212, %v8204
  %v10021 = vpack.c.b16 %v8213, %v8205
  %v10022 = vpack.c.b16 %v8222, %v8214
  %v10023 = vpack.c.b16 %v8223, %v8215
  %v10024 = vpack.c.b16 %v8224, %v8216
  %v10025 = vpack.c.b16 %v8225, %v8217
  %v10026 = vpack.c.b16 %v8226, %v8218
  %v10027 = vpack.c.b16 %v8227, %v8219
  %v10028 = vpack.c.b16 %v8228, %v8220
  %v10029 = vpack.c.b16 %v8229, %v8221
  %v10030 = vpack.c.b16 %v8238, %v8230
  %v10031 = vpack.c.b16 %v8239, %v8231
  %v10032 = vpack.c.b16 %v8240, %v8232
  %v10033 = vpack.c.b16 %v8241, %v8233
  %v10034 = vpack.c.b16 %v8242, %v8234
  %v10035 = vpack.c.b16 %v8243, %v8235
  %v10036 = vpack.c.b16 %v8244, %v8236
  %v10037 = vpack.c.b16 %v8245, %v8237
  %v10038 = vpack.c.b16 %v8254, %v8246
  %v10039 = vpack.c.b16 %v8255, %v8247
  %v10040 = vpack.c.b16 %v8256, %v8248
  %v10041 = vpack.c.b16 %v8257, %v8249
  %v10042 = vpack.c.b16 %v8258, %v8250
  %v10043 = vpack.c.b16 %v8259, %v8251
  %v10044 = vpack.c.b16 %v8260, %v8252
  %v10045 = vpack.c.b16 %v8261, %v8253
  %v10046 = vpack.c.b16 %v8270, %v8262
  %v10047 = vpack.c.b16 %v8271, %v8263
  %v10048 = vpack.c.b16 %v8272, %v8264
  %v10049 = vpack.c.b16 %v8273, %v8265
  %v10050 = vpack.c.b16 %v8274, %v8266
  %v10051 = vpack.c.b16 %v8275, %v8267
  %v10052 = vpack.c.b16 %v8276, %v8268
  %v10053 = vpack.c.b16 %v8277, %v8269
  %v10054 = vpack.c.b16 %v8286, %v8278
  %v10055 = vpack.c.b16 %v8287, %v8279
  %v10056 = vpack.c.b16 %v8288, %v8280
  %v10057 = vpack.c.b16 %v8289, %v8281
  %v10058 = vpack.c.b16 %v8290, %v8282
  %v10059 = vpack.c.b16 %v8291, %v8283
  %v10060 = vpack.c.b16 %v8292, %v8284
  %v10061 = vpack.c.b16 %v8293, %v8285
  %v10062 = vpack.c.b16 %v8302, %v8294
  %v10063 = vpack.c.b16 %v8303, %v8295
  %v10064 = vpack.c.b16 %v8304, %v8296
  %v10065 = vpack.c.b16 %v8305, %v8297
  %v10066 = vpack.c.b16 %v8306, %v8298
  %v10067 = vpack.c.b16 %v8307, %v8299
  %v10068 = vpack.c.b16 %v8308, %v8300
  %v10069 = vpack.c.b16 %v8309, %v8301
  %v10070 = vpack.c.b16 %v8318, %v8310
  %v10071 = vpack.c.b16 %v8319, %v8311
  %v10072 = vpack.c.b16 %v8320, %v8312
  %v10073 = vpack.c.b16 %v8321, %v8313
  %v10074 = vpack.c.b16 %v8322, %v8314
  %v10075 = vpack.c.b16 %v8323, %v8315
  %v10076 = vpack.c.b16 %v8324, %v8316
  %v10077 = vpack.c.b16 %v8325, %v8317
  %v10078 = vpack.c.b16 %v8334, %v8326
  %v10079 = vpack.c.b16 %v8335, %v8327
  %v10080 = vpack.c.b16 %v8336, %v8328
  %v10081 = vpack.c.b16 %v8337, %v8329
  %v10082 = vpack.c.b16 %v8338, %v8330
  %v10083 = vpack.c.b16 %v8339, %v8331
  %v10084 = vpack.c.b16 %v8340, %v8332
  %v10085 = vpack.c.b16 %v8341, %v8333
  %v10086 = vpack.c.b16 %v8350, %v8342
  %v10087 = vpack.c.b16 %v8351, %v8343
  %v10088 = vpack.c.b16 %v8352, %v8344
  %v10089 = vpack.c.b16 %v8353, %v8345
  %v10090 = vpack.c.b16 %v8354, %v8346
  %v10091 = vpack.c.b16 %v8355, %v8347
  %v10092 = vpack.c.b16 %v8356, %v8348
  %v10093 = vpack.c.b16 %v8357, %v8349
  %v10094 = vpack.c.b16 %v8366, %v8358
  %v10095 = vpack.c.b16 %v8367, %v8359
  %v10096 = vpack.c.b16 %v8368, %v8360
  %v10097 = vpack.c.b16 %v8369, %v8361
  %v10098 = vpack.c.b16 %v8370, %v8362
  %v10099 = vpack.c.b16 %v8371, %v8363
  %v10100 = vpack.c.b16 %v8372, %v8364
  %v10101 = vpack.c.b16 %v8373, %v8365
  %v10102 = vpack.c.b16 %v8382, %v8374
  %v10103 = vpack.c.b16 %v8383, %v8375
  %v10104 = vpack.c.b16 %v8384, %v8376
  %v10105 = vpack.c.b16 %v8385, %v8377
  %v10106 = vpack.c.b16 %v8386, %v8378
  %v10107 = vpack.c.b16 %v8387, %v8379
  %v10108 = vpack.c.b16 %v8388, %v8380
  %v10109 = vpack.c.b16 %v8389, %v8381
  %v10110 = vpack.c.b16 %v8398, %v8390
  %v10111 = vpack.c.b16 %v8399, %v8391
  %v10112 = vpack.c.b16 %v8400, %v8392
  %v10113 = vpack.c.b16 %v8401, %v8393
  %v10114 = vpack.c.b16 %v8402, %v8394
  %v10115 = vpack.c.b16 %v8403, %v8395
  %v10116 = vpack.c.b16 %v8404, %v8396
  %v10117 = vpack.c.b16 %v8405, %v8397
  %v10118 = vpack.c.b16 %v8414, %v8406
  %v10119 = vpack.c.b16 %v8415, %v8407
  %v10120 = vpack.c.b16 %v8416, %v8408
  %v10121 = vpack.c.b16 %v8417, %v8409
  %v10122 = vpack.c.b16 %v8418, %v8410
  %v10123 = vpack.c.b16 %v8419, %v8411
  %v10124 = vpack.c.b16 %v8420, %v8412
  %v10125 = vpack.c.b16 %v8421, %v8413
  %v10126 = vpack.c.b16 %v8430, %v8422
  %v10127 = vpack.c.b16 %v8431, %v8423
  %v10128 = vpack.c.b16 %v8432, %v8424
  %v10129 = vpack.c.b16 %v8433, %v8425
  %v10130 = vpack.c.b16 %v8434, %v8426
  %v10131 = vpack.c.b16 %v8435, %v8427
  %v10132 = vpack.c.b16 %v8436, %v8428
  %v10133 = vpack.c.b16 %v8437, %v8429
  %v10134 = vpack.c.b16 %v8446, %v8438
  %v10135 = vpack.c.b16 %v8447, %v8439
  %v10136 = vpack.c.b16 %v8448, %v8440
  %v10137 = vpack.c.b16 %v8449, %v8441
  %v10138 = vpack.c.b16 %v8450, %v8442
  %v10139 = vpack.c.b16 %v8451, %v8443
  %v10140 = vpack.c.b16 %v8452, %v8444
  %v10141 = vpack.c.b16 %v8453, %v8445
  %v10142 = vpack.c.b16 %v8462, %v8454
  %v10143 = vpack.c.b16 %v8463, %v8455
  %v10144 = vpack.c.b16 %v8464, %v8456
  %v10145 = vpack.c.b16 %v8465, %v8457
  %v10146 = vpack.c.b16 %v8466, %v8458
  %v10147 = vpack.c.b16 %v8467, %v8459
  %v10148 = vpack.c.b16 %v8468, %v8460
  %v10149 = vpack.c.b16 %v8469, %v8461
  %v10150 = vpack.c.b16 %v8478, %v8470
  %v10151 = vpack.c.b16 %v8479, %v8471
  %v10152 = vpack.c.b16 %v8480, %v8472
  %v10153 = vpack.c.b16 %v8481, %v8473
  %v10154 = vpack.c.b16 %v8482, %v8474
  %v10155 = vpack.c.b16 %v8483, %v8475
  %v10156 = vpack.c.b16 %v8484, %v8476
  %v10157 = vpack.c.b16 %v8485, %v8477
  %v10158 = vpack.c.b16 %v8494, %v8486
  %v10159 = vpack.c.b16 %v8495, %v8487
  %v10160 = vpack.c.b16 %v8496, %v8488
  %v10161 = vpack.c.b16 %v8497, %v8489
  %v10162 = vpack.c.b16 %v8498, %v8490
  %v10163 = vpack.c.b16 %v8499, %v8491
  %v10164 = vpack.c.b16 %v8500, %v8492
  %v10165 = vpack.c.b16 %v8501, %v8493
  %v10166 = vpack.c.b16 %v8510, %v8502
  %v10167 = vpack.c.b16 %v8511, %v8503
  %v10168 = vpack.c.b16 %v8512, %v8504
  %v10169 = vpack.c.b16 %v8513, %v8505
  %v10170 = vpack.c.b16 %v8514, %v8506
  %v10171 = vpack.c.b16 %v8515, %v8507
  %v10172 = vpack.c.b16 %v8516, %v8508
  %v10173 = vpack.c.b16 %v8517, %v8509
  %v10174 = vpack.c.b16 %v8526, %v8518
  %v10175 = vpack.c.b16 %v8527, %v8519
  %v10176 = vpack.c.b16 %v8528, %v8520
  %v10177 = vpack.c.b16 %v8529, %v8521
  %v10178 = vpack.c.b16 %v8530, %v8522
  %v10179 = vpack.c.b16 %v8531, %v8523
  %v10180 = vpack.c.b16 %v8532, %v8524
  %v10181 = vpack.c.b16 %v8533, %v8525
  %v10182 = vpack.c.b16 %v8542, %v8534
  %v10183 = vpack.c.b16 %v8543, %v8535
  %v10184 = vpack.c.b16 %v8544, %v8536
  %v10185 = vpack.c.b16 %v8545, %v8537
  %v10186 = vpack.c.b16 %v8546, %v8538
  %v10187 = vpack.c.b16 %v8547, %v8539
  %v10188 = vpack.c.b16 %v8548, %v8540
  %v10189 = vpack.c.b16 %v8549, %v8541
  %v10190 = vpack.c.b16 %v8558, %v8550
  %v10191 = vpack.c.b16 %v8559, %v8551
  %v10192 = vpack.c.b16 %v8560, %v8552
  %v10193 = vpack.c.b16 %v8561, %v8553
  %v10194 = vpack.c.b16 %v8562, %v8554
  %v10195 = vpack.c.b16 %v8563, %v8555
  %v10196 = vpack.c.b16 %v8564, %v8556
  %v10197 = vpack.c.b16 %v8565, %v8557
  %v10198 = vpack.c.b16 %v8574, %v8566
  %v10199 = vpack.c.b16 %v8575, %v8567
  %v10200 = vpack.c.b16 %v8576, %v8568
  %v10201 = vpack.c.b16 %v8577, %v8569
  %v10202 = vpack.c.b16 %v8578, %v8570
  %v10203 = vpack.c.b16 %v8579, %v8571
  %v10204 = vpack.c.b16 %v8580, %v8572
  %v10205 = vpack.c.b16 %v8581, %v8573
  %v10206 = vpack.c.b16 %v8590, %v8582
  %v10207 = vpack.c.b16 %v8591, %v8583
  %v10208 = vpack.c.b16 %v8592, %v8584
  %v10209 = vpack.c.b16 %v8593, %v8585
  %v10210 = vpack.c.b16 %v8594, %v8586
  %v10211 = vpack.c.b16 %v8595, %v8587
  %v10212 = vpack.c.b16 %v8596, %v8588
  %v10213 = vpack.c.b16 %v8597, %v8589
  %v10214 = vpack.c.b16 %v8606, %v8598
  %v10215 = vpack.c.b16 %v8607, %v8599
  %v10216 = vpack.c.b16 %v8608, %v8600
  %v10217 = vpack.c.b16 %v8609, %v8601
  %v10218 = vpack.c.b16 %v8610, %v8602
  %v10219 = vpack.c.b16 %v8611, %v8603
  %v10220 = vpack.c.b16 %v8612, %v8604
  %v10221 = vpack.c.b16 %v8613, %v8605
  %v10222 = vpack.c.b16 %v8622, %v8614
  %v10223 = vpack.c.b16 %v8623, %v8615
  %v10224 = vpack.c.b16 %v8624, %v8616
  %v10225 = vpack.c.b16 %v8625, %v8617
  %v10226 = vpack.c.b16 %v8626, %v8618
  %v10227 = vpack.c.b16 %v8627, %v8619
  %v10228 = vpack.c.b16 %v8628, %v8620
  %v10229 = vpack.c.b16 %v8629, %v8621
  %v10230 = vpack.c.b16 %v8638, %v8630
  %v10231 = vpack.c.b16 %v8639, %v8631
  %v10232 = vpack.c.b16 %v8640, %v8632
  %v10233 = vpack.c.b16 %v8641, %v8633
  %v10234 = vpack.c.b16 %v8642, %v8634
  %v10235 = vpack.c.b16 %v8643, %v8635
  %v10236 = vpack.c.b16 %v8644, %v8636
  %v10237 = vpack.c.b16 %v8645, %v8637
  %v10238 = vpack.c.b16 %v8654, %v8646
  %v10239 = vpack.c.b16 %v8655, %v8647
  %v10240 = vpack.c.b16 %v8656, %v8648
  %v10241 = vpack.c.b16 %v8657, %v8649
  %v10242 = vpack.c.b16 %v8658, %v8650
  %v10243 = vpack.c.b16 %v8659, %v8651
  %v10244 = vpack.c.b16 %v8660, %v8652
  %v10245 = vpack.c.b16 %v8661, %v8653
  %v10246 = vpack.c.b16 %v8670, %v8662
  %v10247 = vpack.c.b16 %v8671, %v8663
  %v10248 = vpack.c.b16 %v8672, %v8664
  %v10249 = vpack.c.b16 %v8673, %v8665
  %v10250 = vpack.c.b16 %v8674, %v8666
  %v10251 = vpack.c.b16 %v8675, %v8667
  %v10252 = vpack.c.b16 %v8676, %v8668
  %v10253 = vpack.c.b16 %v8677, %v8669
  %v10254 = vpack.c.b16 %v8686, %v8678
  %v10255 = vpack.c.b16 %v8687, %v8679
  %v10256 = vpack.c.b16 %v8688, %v8680
  %v10257 = vpack.c.b16 %v8689, %v8681
  %v10258 = vpack.c.b16 %v8690, %v8682
  %v10259 = vpack.c.b16 %v8691, %v8683
  %v10260 = vpack.c.b16 %v8692, %v8684
  %v10261 = vpack.c.b16 %v8693, %v8685
  %v10262 = vpack.c.b16 %v8702, %v8694
  %v10263 = vpack.c.b16 %v8703, %v8695
  %v10264 = vpack.c.b16 %v8704, %v8696
  %v10265 = vpack.c.b16 %v8705, %v8697
  %v10266 = vpack.c.b16 %v8706, %v8698
  %v10267 = vpack.c.b16 %v8707, %v8699
  %v10268 = vpack.c.b16 %v8708, %v8700
  %v10269 = vpack.c.b16 %v8709, %v8701
  %v10270 = vpack.c.b16 %v8718, %v8710
  %v10271 = vpack.c.b16 %v8719, %v8711
  %v10272 = vpack.c.b16 %v8720, %v8712
  %v10273 = vpack.c.b16 %v8721, %v8713
  %v10274 = vpack.c.b16 %v8722, %v8714
  %v10275 = vpack.c.b16 %v8723, %v8715
  %v10276 = vpack.c.b16 %v8724, %v8716
  %v10277 = vpack.c.b16 %v8725, %v8717
  %v10278 = vpack.c.b16 %v8734, %v8726
  %v10279 = vpack.c.b16 %v8735, %v8727
  %v10280 = vpack.c.b16 %v8736, %v8728
  %v10281 = vpack.c.b16 %v8737, %v8729
  %v10282 = vpack.c.b16 %v8738, %v8730
  %v10283 = vpack.c.b16 %v8739, %v8731
  %v10284 = vpack.c.b16 %v8740, %v8732
  %v10285 = vpack.c.b16 %v8741, %v8733
  %v10286 = vpack.c.b16 %v8750, %v8742
  %v10287 = vpack.c.b16 %v8751, %v8743
  %v10288 = vpack.c.b16 %v8752, %v8744
  %v10289 = vpack.c.b16 %v8753, %v8745
  %v10290 = vpack.c.b16 %v8754, %v8746
  %v10291 = vpack.c.b16 %v8755, %v8747
  %v10292 = vpack.c.b16 %v8756, %v8748
  %v10293 = vpack.c.b16 %v8757, %v8749
  %v10294 = vpack.c.b16 %v8766, %v8758
  %v10295 = vpack.c.b16 %v8767, %v8759
  %v10296 = vpack.c.b16 %v8768, %v8760
  %v10297 = vpack.c.b16 %v8769, %v8761
  %v10298 = vpack.c.b16 %v8770, %v8762
  %v10299 = vpack.c.b16 %v8771, %v8763
  %v10300 = vpack.c.b16 %v8772, %v8764
  %v10301 = vpack.c.b16 %v8773, %v8765
  %v10302 = vpack.c.b16 %v8782, %v8774
  %v10303 = vpack.c.b16 %v8783, %v8775
  %v10304 = vpack.c.b16 %v8784, %v8776
  %v10305 = vpack.c.b16 %v8785, %v8777
  %v10306 = vpack.c.b16 %v8786, %v8778
  %v10307 = vpack.c.b16 %v8787, %v8779
  %v10308 = vpack.c.b16 %v8788, %v8780
  %v10309 = vpack.c.b16 %v8789, %v8781
  %v10310 = vpack.c.b16 %v8798, %v8790
  %v10311 = vpack.c.b16 %v8799, %v8791
  %v10312 = vpack.c.b16 %v8800, %v8792
  %v10313 = vpack.c.b16 %v8801, %v8793
  %v10314 = vpack.c.b16 %v8802, %v8794
  %v10315 = vpack.c.b16 %v8803, %v8795
  %v10316 = vpack.c.b16 %v8804, %v8796
  %v10317 = vpack.c.b16 %v8805, %v8797
  %v10318 = vpack.c.b16 %v8814, %v8806
  %v10319 = vpack.c.b16 %v8815, %v8807
  %v10320 = vpack.c.b16 %v8816, %v8808
  %v10321 = vpack.c.b16 %v8817, %v8809
  %v10322 = vpack.c.b16 %v8818, %v8810
  %v10323 = vpack.c.b16 %v8819, %v8811
  %v10324 = vpack.c.b16 %v8820, %v8812
  %v10325 = vpack.c.b16 %v8821, %v8813
  %v10326 = vpack.c.b16 %v8830, %v8822
  %v10327 = vpack.c.b16 %v8831, %v8823
  %v10328 = vpack.c.b16 %v8832, %v8824
  %v10329 = vpack.c.b16 %v8833, %v8825
  %v10330 = vpack.c.b16 %v8834, %v8826
  %v10331 = vpack.c.b16 %v8835, %v8827
  %v10332 = vpack.c.b16 %v8836, %v8828
  %v10333 = vpack.c.b16 %v8837, %v8829
  %v10334 = vpack.c.b16 %v8846, %v8838
  %v10335 = vpack.c.b16 %v8847, %v8839
  %v10336 = vpack.c.b16 %v8848, %v8840
  %v10337 = vpack.c.b16 %v8849, %v8841
  %v10338 = vpack.c.b16 %v8850, %v8842
  %v10339 = vpack.c.b16 %v8851, %v8843
  %v10340 = vpack.c.b16 %v8852, %v8844
  %v10341 = vpack.c.b16 %v8853, %v8845
  %v10342 = vpack.c.b16 %v8862, %v8854
  %v10343 = vpack.c.b16 %v8863, %v8855
  %v10344 = vpack.c.b16 %v8864, %v8856
  %v10345 = vpack.c.b16 %v8865, %v8857
  %v10346 = vpack.c.b16 %v8866, %v8858
  %v10347 = vpack.c.b16 %v8867, %v8859
  %v10348 = vpack.c.b16 %v8868, %v8860
  %v10349 = vpack.c.b16 %v8869, %v8861
  %v10350 = vpack.c.b16 %v8878, %v8870
  %v10351 = vpack.c.b16 %v8879, %v8871
  %v10352 = vpack.c.b16 %v8880, %v8872
  %v10353 = vpack.c.b16 %v8881, %v8873
  %v10354 = vpack.c.b16 %v8882, %v8874
  %v10355 = vpack.c.b16 %v8883, %v8875
  %v10356 = vpack.c.b16 %v8884, %v8876
  %v10357 = vpack.c.b16 %v8885, %v8877
  %v10358 = vpack.c.b16 %v8894, %v8886
  %v10359 = vpack.c.b16 %v8895, %v8887
  %v10360 = vpack.c.b16 %v8896, %v8888
  %v10361 = vpack.c.b16 %v8897, %v8889
  %v10362 = vpack.c.b16 %v8898, %v8890
  %v10363 = vpack.c.b16 %v8899, %v8891
  %v10364 = vpack.c.b16 %v8900, %v8892
  %v10365 = vpack.c.b16 %v8901, %v8893
  %v10366 = vpack.c.b16 %v8910, %v8902
  %v10367 = vpack.c.b16 %v8911, %v8903
  %v10368 = vpack.c.b16 %v8912, %v8904
  %v10369 = vpack.c.b16 %v8913, %v8905
  %v10370 = vpack.c.b16 %v8914, %v8906
  %v10371 = vpack.c.b16 %v8915, %v8907
  %v10372 = vpack.c.b16 %v8916, %v8908
  %v10373 = vpack.c.b16 %v8917, %v8909
  %v10374 = vpack.c.b16 %v8926, %v8918
  %v10375 = vpack.c.b16 %v8927, %v8919
  %v10376 = vpack.c.b16 %v8928, %v8920
  %v10377 = vpack.c.b16 %v8929, %v8921
  %v10378 = vpack.c.b16 %v8930, %v8922
  %v10379 = vpack.c.b16 %v8931, %v8923
  %v10380 = vpack.c.b16 %v8932, %v8924
  %v10381 = vpack.c.b16 %v8933, %v8925
  %v10382 = vpack.c.b16 %v8942, %v8934
  %v10383 = vpack.c.b16 %v8943, %v8935
  %v10384 = vpack.c.b16 %v8944, %v8936
  %v10385 = vpack.c.b16 %v8945, %v8937
  %v10386 = vpack.c.b16 %v8946, %v8938
  %v10387 = vpack.c.b16 %v8947, %v8939
  %v10388 = vpack.c.b16 %v8948, %v8940
  %v10389 = vpack.c.b16 %v8949, %v8941
  %v10390 = vpack.c.b16 %v8958, %v8950
  %v10391 = vpack.c.b16 %v8959, %v8951
  %v10392 = vpack.c.b16 %v8960, %v8952
  %v10393 = vpack.c.b16 %v8961, %v8953
  %v10394 = vpack.c.b16 %v8962, %v8954
  %v10395 = vpack.c.b16 %v8963, %v8955
  %v10396 = vpack.c.b16 %v8964, %v8956
  %v10397 = vpack.c.b16 %v8965, %v8957
  %v10398 = vpack.c.b16 %v8974, %v8966
  %v10399 = vpack.c.b16 %v8975, %v8967
  %v10400 = vpack.c.b16 %v8976, %v8968
  %v10401 = vpack.c.b16 %v8977, %v8969
  %v10402 = vpack.c.b16 %v8978, %v8970
  %v10403 = vpack.c.b16 %v8979, %v8971
  %v10404 = vpack.c.b16 %v8980, %v8972
  %v10405 = vpack.c.b16 %v8981, %v8973
  %v10406 = vpack.c.b16 %v8990, %v8982
  %v10407 = vpack.c.b16 %v8991, %v8983
  %v10408 = vpack.c.b16 %v8992, %v8984
  %v10409 = vpack.c.b16 %v8993, %v8985
  %v10410 = vpack.c.b16 %v8994, %v8986
  %v10411 = vpack.c.b16 %v8995, %v8987
  %v10412 = vpack.c.b16 %v8996, %v8988
  %v10413 = vpack.c.b16 %v8997, %v8989
  %v10414 = vpack.c.b16 %v9006, %v8998
  %v10415 = vpack.c.b16 %v9007, %v8999
  %v10416 = vpack.c.b16 %v9008, %v9000
  %v10417 = vpack.c.b16 %v9009, %v9001
  %v10418 = vpack.c.b16 %v9010, %v9002
  %v10419 = vpack.c.b16 %v9011, %v9003
  %v10420 = vpack.c.b16 %v9012, %v9004
  %v10421 = vpack.c.b16 %v9013, %v9005
  %v10422 = vpack.c.b16 %v9022, %v9014
  %v10423 = vpack.c.b16 %v9023, %v9015
  %v10424 = vpack.c.b16 %v9024, %v9016
  %v10425 = vpack.c.b16 %v9025, %v9017
  %v10426 = vpack.c.b16 %v9026, %v9018
  %v10427 = vpack.c.b16 %v9027, %v9019
  %v10428 = vpack.c.b16 %v9028, %v9020
  %v10429 = vpack.c.b16 %v9029, %v9021
  %v10430 = vpack.c.b16 %v9038, %v9030
  %v10431 = vpack.c.b16 %v9039, %v9031
  %v10432 = vpack.c.b16 %v9040, %v9032
  %v10433 = vpack.c.b16 %v9041, %v9033
  %v10434 = vpack.c.b16 %v9042, %v9034
  %v10435 = vpack.c.b16 %v9043, %v9035
  %v10436 = vpack.c.b16 %v9044, %v9036
  %v10437 = vpack.c.b16 %v9045, %v9037
  %v10438 = vpack.c.b16 %v9054, %v9046
  %v10439 = vpack.c.b16 %v9055, %v9047
  %v10440 = vpack.c.b16 %v9056, %v9048
  %v10441 = vpack.c.b16 %v9057, %v9049
  %v10442 = vpack.c.b16 %v9058, %v9050
  %v10443 = vpack.c.b16 %v9059, %v9051
  %v10444 = vpack.c.b16 %v9060, %v9052
  %v10445 = vpack.c.b16 %v9061, %v9053
  %v10446 = vpack.c.b16 %v9070, %v9062
  %v10447 = vpack.c.b16 %v9071, %v9063
  %v10448 = vpack.c.b16 %v9072, %v9064
  %v10449 = vpack.c.b16 %v9073, %v9065
  %v10450 = vpack.c.b16 %v9074, %v9066
  %v10451 = vpack.c.b16 %v9075, %v9067
  %v10452 = vpack.c.b16 %v9076, %v9068
  %v10453 = vpack.c.b16 %v9077, %v9069
  %v10454 = vpack.c.b16 %v9086, %v9078
  %v10455 = vpack.c.b16 %v9087, %v9079
  %v10456 = vpack.c.b16 %v9088, %v9080
  %v10457 = vpack.c.b16 %v9089, %v9081
  %v10458 = vpack.c.b16 %v9090, %v9082
  %v10459 = vpack.c.b16 %v9091, %v9083
  %v10460 = vpack.c.b16 %v9092, %v9084
  %v10461 = vpack.c.b16 %v9093, %v9085
  %v10462 = vpack.c.b16 %v9102, %v9094
  %v10463 = vpack.c.b16 %v9103, %v9095
  %v10464 = vpack.c.b16 %v9104, %v9096
  %v10465 = vpack.c.b16 %v9105, %v9097
  %v10466 = vpack.c.b16 %v9106, %v9098
  %v10467 = vpack.c.b16 %v9107, %v9099
  %v10468 = vpack.c.b16 %v9108, %v9100
  %v10469 = vpack.c.b16 %v9109, %v9101
  %v10470 = vpack.c.b16 %v9118, %v9110
  %v10471 = vpack.c.b16 %v9119, %v9111
  %v10472 = vpack.c.b16 %v9120, %v9112
  %v10473 = vpack.c.b16 %v9121, %v9113
  %v10474 = vpack.c.b16 %v9122, %v9114
  %v10475 = vpack.c.b16 %v9123, %v9115
  %v10476 = vpack.c.b16 %v9124, %v9116
  %v10477 = vpack.c.b16 %v9125, %v9117
  %v10478 = vpack.c.b16 %v9134, %v9126
  %v10479 = vpack.c.b16 %v9135, %v9127
  %v10480 = vpack.c.b16 %v9136, %v9128
  %v10481 = vpack.c.b16 %v9137, %v9129
  %v10482 = vpack.c.b16 %v9138, %v9130
  %v10483 = vpack.c.b16 %v9139, %v9131
  %v10484 = vpack.c.b16 %v9140, %v9132
  %v10485 = vpack.c.b16 %v9141, %v9133
  %v10486 = vpack.c.b16 %v9150, %v9142
  %v10487 = vpack.c.b16 %v9151, %v9143
  %v10488 = vpack.c.b16 %v9152, %v9144
  %v10489 = vpack.c.b16 %v9153, %v9145
  %v10490 = vpack.c.b16 %v9154, %v9146
  %v10491 = vpack.c.b16 %v9155, %v9147
  %v10492 = vpack.c.b16 %v9156, %v9148
  %v10493 = vpack.c.b16 %v9157, %v9149
  %v10494 = vpack.c.b16 %v9166, %v9158
  %v10495 = vpack.c.b16 %v9167, %v9159
  %v10496 = vpack.c.b16 %v9168, %v9160
  %v10497 = vpack.c.b16 %v9169, %v9161
  %v10498 = vpack.c.b16 %v9170, %v9162
  %v10499 = vpack.c.b16 %v9171, %v9163
  %v10500 = vpack.c.b16 %v9172, %v9164
  %v10501 = vpack.c.b16 %v9173, %v9165
  %v10502 = vpack.c.b16 %v9182, %v9174
  %v10503 = vpack.c.b16 %v9183, %v9175
  %v10504 = vpack.c.b16 %v9184, %v9176
  %v10505 = vpack.c.b16 %v9185, %v9177
  %v10506 = vpack.c.b16 %v9186, %v9178
  %v10507 = vpack.c.b16 %v9187, %v9179
  %v10508 = vpack.c.b16 %v9188, %v9180
  %v10509 = vpack.c.b16 %v9189, %v9181
  %v10510 = vpack.c.b16 %v9198, %v9190
  %v10511 = vpack.c.b16 %v9199, %v9191
  %v10512 = vpack.c.b16 %v9200, %v9192
  %v10513 = vpack.c.b16 %v9201, %v9193
  %v10514 = vpack.c.b16 %v9202, %v9194
  %v10515 = vpack.c.b16 %v9203, %v9195
  %v10516 = vpack.c.b16 %v9204, %v9196
  %v10517 = vpack.c.b16 %v9205, %v9197
  %v10518 = vpack.c.b16 %v9214, %v9206
  %v10519 = vpack.c.b16 %v9215, %v9207
  %v10520 = vpack.c.b16 %v9216, %v9208
  %v10521 = vpack.c.b16 %v9217, %v9209
  %v10522 = vpack.c.b16 %v9218, %v9210
  %v10523 = vpack.c.b16 %v9219, %v9211
  %v10524 = vpack.c.b16 %v9220, %v9212
  %v10525 = vpack.c.b16 %v9221, %v9213
  %v10526 = vpack.c.b16 %v9230, %v9222
  %v10527 = vpack.c.b16 %v9231, %v9223
  %v10528 = vpack.c.b16 %v9232, %v9224
  %v10529 = vpack.c.b16 %v9233, %v9225
  %v10530 = vpack.c.b16 %v9234, %v9226
  %v10531 = vpack.c.b16 %v9235, %v9227
  %v10532 = vpack.c.b16 %v9236, %v9228
  %v10533 = vpack.c.b16 %v9237, %v9229
  %v10534 = vpack.c.b16 %v9246, %v9238
  %v10535 = vpack.c.b16 %v9247, %v9239
  %v10536 = vpack.c.b16 %v9248, %v9240
  %v10537 = vpack.c.b16 %v9249, %v9241
  %v10538 = vpack.c.b16 %v9250, %v9242
  %v10539 = vpack.c.b16 %v9251, %v9243
  %v10540 = vpack.c.b16 %v9252, %v9244
  %v10541 = vpack.c.b16 %v9253, %v9245
  %v10542 = vpack.c.b16 %v9262, %v9254
  %v10543 = vpack.c.b16 %v9263, %v9255
  %v10544 = vpack.c.b16 %v9264, %v9256
  %v10545 = vpack.c.b16 %v9265, %v9257
  %v10546 = vpack.c.b16 %v9266, %v9258
  %v10547 = vpack.c.b16 %v9267, %v9259
  %v10548 = vpack.c.b16 %v9268, %v9260
  %v10549 = vpack.c.b16 %v9269, %v9261
  %v10550 = vpack.c.b16 %v9278, %v9270
  %v10551 = vpack.c.b16 %v9279, %v9271
  %v10552 = vpack.c.b16 %v9280, %v9272
  %v10553 = vpack.c.b16 %v9281, %v9273
  %v10554 = vpack.c.b16 %v9282, %v9274
  %v10555 = vpack.c.b16 %v9283, %v9275
  %v10556 = vpack.c.b16 %v9284, %v9276
  %v10557 = vpack.c.b16 %v9285, %v9277
  %v10558 = vpack.c.b16 %v9294, %v9286
  %v10559 = vpack.c.b16 %v9295, %v9287
  %v10560 = vpack.c.b16 %v9296, %v9288
  %v10561 = vpack.c.b16 %v9297, %v9289
  %v10562 = vpack.c.b16 %v9298, %v9290
  %v10563 = vpack.c.b16 %v9299, %v9291
  %v10564 = vpack.c.b16 %v9300, %v9292
  %v10565 = vpack.c.b16 %v9301, %v9293
  %v10566 = vpack.c.b16 %v9310, %v9302
  %v10567 = vpack.c.b16 %v9311, %v9303
  %v10568 = vpack.c.b16 %v9312, %v9304
  %v10569 = vpack.c.b16 %v9313, %v9305
  %v10570 = vpack.c.b16 %v9314, %v9306
  %v10571 = vpack.c.b16 %v9315, %v9307
  %v10572 = vpack.c.b16 %v9316, %v9308
  %v10573 = vpack.c.b16 %v9317, %v9309
  %v10574 = vpack.c.b16 %v9326, %v9318
  %v10575 = vpack.c.b16 %v9327, %v9319
  %v10576 = vpack.c.b16 %v9328, %v9320
  %v10577 = vpack.c.b16 %v9329, %v9321
  %v10578 = vpack.c.b16 %v9330, %v9322
  %v10579 = vpack.c.b16 %v9331, %v9323
  %v10580 = vpack.c.b16 %v9332, %v9324
  %v10581 = vpack.c.b16 %v9333, %v9325
  %v10582 = vpack.c.b16 %v9342, %v9334
  %v10583 = vpack.c.b16 %v9343, %v9335
  %v10584 = vpack.c.b16 %v9344, %v9336
  %v10585 = vpack.c.b16 %v9345, %v9337
  %v10586 = vpack.c.b16 %v9346, %v9338
  %v10587 = vpack.c.b16 %v9347, %v9339
  %v10588 = vpack.c.b16 %v9348, %v9340
  %v10589 = vpack.c.b16 %v9349, %v9341
  %v10590 = vpack.c.b16 %v9358, %v9350
  %v10591 = vpack.c.b16 %v9359, %v9351
  %v10592 = vpack.c.b16 %v9360, %v9352
  %v10593 = vpack.c.b16 %v9361, %v9353
  %v10594 = vpack.c.b16 %v9362, %v9354
  %v10595 = vpack.c.b16 %v9363, %v9355
  %v10596 = vpack.c.b16 %v9364, %v9356
  %v10597 = vpack.c.b16 %v9365, %v9357
  %v10598 = vpack.c.b16 %v9374, %v9366
  %v10599 = vpack.c.b16 %v9375, %v9367
  %v10600 = vpack.c.b16 %v9376, %v9368
  %v10601 = vpack.c.b16 %v9377, %v9369
  %v10602 = vpack.c.b16 %v9378, %v9370
  %v10603 = vpack.c.b16 %v9379, %v9371
  %v10604 = vpack.c.b16 %v9380, %v9372
  %v10605 = vpack.c.b16 %v9381, %v9373
  %v10606 = vpack.c.b16 %v9390, %v9382
  %v10607 = vpack.c.b16 %v9391, %v9383
  %v10608 = vpack.c.b16 %v9392, %v9384
  %v10609 = vpack.c.b16 %v9393, %v9385
  %v10610 = vpack.c.b16 %v9394, %v9386
  %v10611 = vpack.c.b16 %v9395, %v9387
  %v10612 = vpack.c.b16 %v9396, %v9388
  %v10613 = vpack.c.b16 %v9397, %v9389
  %v10614 = vpack.c.b16 %v9406, %v9398
  %v10615 = vpack.c.b16 %v9407, %v9399
  %v10616 = vpack.c.b16 %v9408, %v9400
  %v10617 = vpack.c.b16 %v9409, %v9401
  %v10618 = vpack.c.b16 %v9410, %v9402
  %v10619 = vpack.c.b16 %v9411, %v9403
  %v10620 = vpack.c.b16 %v9412, %v9404
  %v10621 = vpack.c.b16 %v9413, %v9405
  %v10622 = vpack.c.b16 %v9422, %v9414
  %v10623 = vpack.c.b16 %v9423, %v9415
  %v10624 = vpack.c.b16 %v9424, %v9416
  %v10625 = vpack.c.b16 %v9425, %v9417
  %v10626 = vpack.c.b16 %v9426, %v9418
  %v10627 = vpack.c.b16 %v9427, %v9419
  %v10628 = vpack.c.b16 %v9428, %v9420
  %v10629 = vpack.c.b16 %v9429, %v9421
  %v10630 = vpack.c.b16 %v9438, %v9430
  %v10631 = vpack.c.b16 %v9439, %v9431
  %v10632 = vpack.c.b16 %v9440, %v9432
  %v10633 = vpack.c.b16 %v9441, %v9433
  %v10634 = vpack.c.b16 %v9442, %v9434
  %v10635 = vpack.c.b16 %v9443, %v9435
  %v10636 = vpack.c.b16 %v9444, %v9436
  %v10637 = vpack.c.b16 %v9445, %v9437
  %v10638 = vpack.c.b16 %v9454, %v9446
  %v10639 = vpack.c.b16 %v9455, %v9447
  %v10640 = vpack.c.b16 %v9456, %v9448
  %v10641 = vpack.c.b16 %v9457, %v9449
  %v10642 = vpack.c.b16 %v9458, %v9450
  %v10643 = vpack.c.b16 %v9459, %v9451
  %v10644 = vpack.c.b16 %v9460, %v9452
  %v10645 = vpack.c.b16 %v9461, %v9453
  %v10646 = vpack.c.b16 %v9470, %v9462
  %v10647 = vpack.c.b16 %v9471, %v9463
  %v10648 = vpack.c.b16 %v9472, %v9464
  %v10649 = vpack.c.b16 %v9473, %v9465
  %v10650 = vpack.c.b16 %v9474, %v9466
  %v10651 = vpack.c.b16 %v9475, %v9467
  %v10652 = vpack.c.b16 %v9476, %v9468
  %v10653 = vpack.c.b16 %v9477, %v9469
  %v10654 = vpack.c.b16 %v9486, %v9478
  %v10655 = vpack.c.b16 %v9487, %v9479
  %v10656 = vpack.c.b16 %v9488, %v9480
  %v10657 = vpack.c.b16 %v9489, %v9481
  %v10658 = vpack.c.b16 %v9490, %v9482
  %v10659 = vpack.c.b16 %v9491, %v9483
  %v10660 = vpack.c.b16 %v9492, %v9484
  %v10661 = vpack.c.b16 %v9493, %v9485
  %v10662 = vpack.c.b16 %v9502, %v9494
  %v10663 = vpack.c.b16 %v9503, %v9495
  %v10664 = vpack.c.b16 %v9504, %v9496
  %v10665 = vpack.c.b16 %v9505, %v9497
  %v10666 = vpack.c.b16 %v9506, %v9498
  %v10667 = vpack.c.b16 %v9507, %v9499
  %v10668 = vpack.c.b16 %v9508, %v9500
  %v10669 = vpack.c.b16 %v9509, %v9501
  %v10670 = vpack.c.b16 %v9518, %v9510
  %v10671 = vpack.c.b16 %v9519, %v9511
  %v10672 = vpack.c.b16 %v9520, %v9512
  %v10673 = vpack.c.b16 %v9521, %v9513
  %v10674 = vpack.c.b16 %v9522, %v9514
  %v10675 = vpack.c.b16 %v9523, %v9515
  %v10676 = vpack.c.b16 %v9524, %v9516
  %v10677 = vpack.c.b16 %v9525, %v9517
  %v10678 = vpack.c.b16 %v9534, %v9526
  %v10679 = vpack.c.b16 %v9535, %v9527
  %v10680 = vpack.c.b16 %v9536, %v9528
  %v10681 = vpack.c.b16 %v9537, %v9529
  %v10682 = vpack.c.b16 %v9538, %v9530
  %v10683 = vpack.c.b16 %v9539, %v9531
  %v10684 = vpack.c.b16 %v9540, %v9532
  %v10685 = vpack.c.b16 %v9541, %v9533
  %v10686 = vpack.c.b16 %v9550, %v9542
  %v10687 = vpack.c.b16 %v9551, %v9543
  %v10688 = vpack.c.b16 %v9552, %v9544
  %v10689 = vpack.c.b16 %v9553, %v9545
  %v10690 = vpack.c.b16 %v9554, %v9546
  %v10691 = vpack.c.b16 %v9555, %v9547
  %v10692 = vpack.c.b16 %v9556, %v9548
  %v10693 = vpack.c.b16 %v9557, %v9549
  %v10694 = vpack.c.b16 %v9566, %v9558
  %v10695 = vpack.c.b16 %v9567, %v9559
  %v10696 = vpack.c.b16 %v9568, %v9560
  %v10697 = vpack.c.b16 %v9569, %v9561
  %v10698 = vpack.c.b16 %v9570, %v9562
  %v10699 = vpack.c.b16 %v9571, %v9563
  %v10700 = vpack.c.b16 %v9572, %v9564
  %v10701 = vpack.c.b16 %v9573, %v9565
  %v10702 = vpack.c.b16 %v9582, %v9574
  %v10703 = vpack.c.b16 %v9583, %v9575
  %v10704 = vpack.c.b16 %v9584, %v9576
  %v10705 = vpack.c.b16 %v9585, %v9577
  %v10706 = vpack.c.b16 %v9586, %v9578
  %v10707 = vpack.c.b16 %v9587, %v9579
  %v10708 = vpack.c.b16 %v9588, %v9580
  %v10709 = vpack.c.b16 %v9589, %v9581
  %v10710 = vpack.c.b16 %v9598, %v9590
  %v10711 = vpack.c.b16 %v9599, %v9591
  %v10712 = vpack.c.b16 %v9600, %v9592
  %v10713 = vpack.c.b16 %v9601, %v9593
  %v10714 = vpack.c.b16 %v9602, %v9594
  %v10715 = vpack.c.b16 %v9603, %v9595
  %v10716 = vpack.c.b16 %v9604, %v9596
  %v10717 = vpack.c.b16 %v9605, %v9597
  %v10718 = vpack.c.b16 %v9614, %v9606
  %v10719 = vpack.c.b16 %v9615, %v9607
  %v10720 = vpack.c.b16 %v9616, %v9608
  %v10721 = vpack.c.b16 %v9617, %v9609
  %v10722 = vpack.c.b16 %v9618, %v9610
  %v10723 = vpack.c.b16 %v9619, %v9611
  %v10724 = vpack.c.b16 %v9620, %v9612
  %v10725 = vpack.c.b16 %v9621, %v9613
  %v10726 = vpack.c.b16 %v9630, %v9622
  %v10727 = vpack.c.b16 %v9631, %v9623
  %v10728 = vpack.c.b16 %v9632, %v9624
  %v10729 = vpack.c.b16 %v9633, %v9625
  %v10730 = vpack.c.b16 %v9634, %v9626
  %v10731 = vpack.c.b16 %v9635, %v9627
  %v10732 = vpack.c.b16 %v9636, %v9628
  %v10733 = vpack.c.b16 %v9637, %v9629
  %v10734 = vpack.c.b16 %v9646, %v9638
  %v10735 = vpack.c.b16 %v9647, %v9639
  %v10736 = vpack.c.b16 %v9648, %v9640
  %v10737 = vpack.c.b16 %v9649, %v9641
  %v10738 = vpack.c.b16 %v9650, %v9642
  %v10739 = vpack.c.b16 %v9651, %v9643
  %v10740 = vpack.c.b16 %v9652, %v9644
  %v10741 = vpack.c.b16 %v9653, %v9645
  %v10742 = vpack.c.b16 %v9662, %v9654
  %v10743 = vpack.c.b16 %v9663, %v9655
  %v10744 = vpack.c.b16 %v9664, %v9656
  %v10745 = vpack.c.b16 %v9665, %v9657
  %v10746 = vpack.c.b16 %v9666, %v9658
  %v10747 = vpack.c.b16 %v9667, %v9659
  %v10748 = vpack.c.b16 %v9668, %v9660
  %v10749 = vpack.c.b16 %v9669, %v9661
  %v10750 = vpack.c.b16 %v9678, %v9670
  %v10751 = vpack.c.b16 %v9679, %v9671
  %v10752 = vpack.c.b16 %v9680, %v9672
  %v10753 = vpack.c.b16 %v9681, %v9673
  %v10754 = vpack.c.b16 %v9682, %v9674
  %v10755 = vpack.c.b16 %v9683, %v9675
  %v10756 = vpack.c.b16 %v9684, %v9676
  %v10757 = vpack.c.b16 %v9685, %v9677
  %v10758 = vpack.c.b16 %v9694, %v9686
  %v10759 = vpack.c.b16 %v9695, %v9687
  %v10760 = vpack.c.b16 %v9696, %v9688
  %v10761 = vpack.c.b16 %v9697, %v9689
  %v10762 = vpack.c.b16 %v9698, %v9690
  %v10763 = vpack.c.b16 %v9699, %v9691
  %v10764 = vpack.c.b16 %v9700, %v9692
  %v10765 = vpack.c.b16 %v9701, %v9693
  %v10766 = vpack.c.b16 %v9710, %v9702
  %v10767 = vpack.c.b16 %v9711, %v9703
  %v10768 = vpack.c.b16 %v9712, %v9704
  %v10769 = vpack.c.b16 %v9713, %v9705
  %v10770 = vpack.c.b16 %v9714, %v9706
  %v10771 = vpack.c.b16 %v9715, %v9707
  %v10772 = vpack.c.b16 %v9716, %v9708
  %v10773 = vpack.c.b16 %v9717, %v9709
  %v10774 = vpack.c.b16 %v9726, %v9718
  %v10775 = vpack.c.b16 %v9727, %v9719
  %v10776 = vpack.c.b16 %v9728, %v9720
  %v10777 = vpack.c.b16 %v9729, %v9721
  %v10778 = vpack.c.b16 %v9730, %v9722
  %v10779 = vpack.c.b16 %v9731, %v9723
  %v10780 = vpack.c.b16 %v9732, %v9724
  %v10781 = vpack.c.b16 %v9733, %v9725
  %v10782 = vpack.c.b16 %v9742, %v9734
  %v10783 = vpack.c.b16 %v9743, %v9735
  %v10784 = vpack.c.b16 %v9744, %v9736
  %v10785 = vpack.c.b16 %v9745, %v9737
  %v10786 = vpack.c.b16 %v9746, %v9738
  %v10787 = vpack.c.b16 %v9747, %v9739
  %v10788 = vpack.c.b16 %v9748, %v9740
  %v10789 = vpack.c.b16 %v9749, %v9741
  %v10790 = vpack.c.b16 %v9758, %v9750
  %v10791 = vpack.c.b16 %v9759, %v9751
  %v10792 = vpack.c.b16 %v9760, %v9752
  %v10793 = vpack.c.b16 %v9761, %v9753
  %v10794 = vpack.c.b16 %v9762, %v9754
  %v10795 = vpack.c.b16 %v9763, %v9755
  %v10796 = vpack.c.b16 %v9764, %v9756
  %v10797 = vpack.c.b16 %v9765, %v9757
  %v10798 = vpack.c.b16 %v9774, %v9766
  %v10799 = vpack.c.b16 %v9775, %v9767
  %v10800 = vpack.c.b16 %v9776, %v9768
  %v10801 = vpack.c.b16 %v9777, %v9769
  %v10802 = vpack.c.b16 %v9778, %v9770
  %v10803 = vpack.c.b16 %v9779, %v9771
  %v10804 = vpack.c.b16 %v9780, %v9772
  %v10805 = vpack.c.b16 %v9781, %v9773
  %11830 = vmatprep.subr.bf16.mxu0 %v9783
  %11831 = vmatpush1.bf16.msra.mxu0 %v9782
  %11832 = vmatprep.subr.bf16.mxu0 %v9791
  %11833 = vmatpush1.bf16.msra.mxu0 %v9790
  %11834 = vmatprep.subr.bf16.mxu0 %v9799
  %11835 = vmatpush1.bf16.msra.mxu0 %v9798
  %11836 = vmatprep.subr.bf16.mxu0 %v9807
  %11837 = vmatpush1.bf16.msra.mxu0 %v9806
  %11838 = vmatprep.subr.bf16.mxu0 %v9815
  %11839 = vmatpush1.bf16.msra.mxu0 %v9814
  %11840 = vmatprep.subr.bf16.mxu0 %v9823
  %11841 = vmatpush1.bf16.msra.mxu0 %v9822
  %11842 = vmatprep.subr.bf16.mxu0 %v9831
  %11843 = vmatpush1.bf16.msra.mxu0 %v9830
  %11844 = vmatprep.subr.bf16.mxu0 %v9839
  %11845 = vmatpush1.bf16.msra.mxu0 %v9838
  %11846 = vmatprep.subr.bf16.mxu0 %v9847
  %11847 = vmatpush1.bf16.msra.mxu0 %v9846
  %11848 = vmatprep.subr.bf16.mxu0 %v9855
  %11849 = vmatpush1.bf16.msra.mxu0 %v9854
  %11850 = vmatprep.subr.bf16.mxu0 %v9863
  %11851 = vmatpush1.bf16.msra.mxu0 %v9862
  %11852 = vmatprep.subr.bf16.mxu0 %v9871
  %11853 = vmatpush1.bf16.msra.mxu0 %v9870
  %11854 = vmatprep.subr.bf16.mxu0 %v9879
  %11855 = vmatpush1.bf16.msra.mxu0 %v9878
  %11856 = vmatprep.subr.bf16.mxu0 %v9887
  %11857 = vmatpush1.bf16.msra.mxu0 %v9886
  %11858 = vmatprep.subr.bf16.mxu0 %v9895
  %11859 = vmatpush1.bf16.msra.mxu0 %v9894
  %11860 = vmatprep.subr.bf16.mxu0 %v9903
  %11861 = vmatpush1.bf16.msra.mxu0 %v9902
  %11862 = vmatprep.mubr.bf16.mxu0 %v5629
  %11863 = vmatmul.mubr.bf16.gmra.mrb[0].mxu0 %v5628
  %v11864 = vpop.f32.mrb[0].mxu0
  %v11865 = vadd.f32 %v6673, %v11864
  %v11866 = vpop.f32.mrb[0].mxu0
  %v11867 = vadd.f32 %v6677, %v11866
  %v11868 = vpop.f32.mrb[0].mxu0
  %v11869 = vpop.f32.mrb[0].mxu0
  %11870 = vdwg.mxu0
  %11871 = vmatprep.subr.bf16.mxu0 %v9911
  %11872 = vmatpush1.bf16.msra.mxu0 %v9910
  %11873 = vmatprep.subr.bf16.mxu0 %v9919
  %11874 = vmatpush1.bf16.msra.mxu0 %v9918
  %11875 = vmatprep.subr.bf16.mxu0 %v9927
  %11876 = vmatpush1.bf16.msra.mxu0 %v9926
  %11877 = vmatprep.subr.bf16.mxu0 %v9935
  %11878 = vmatpush1.bf16.msra.mxu0 %v9934
  %11879 = vmatprep.subr.bf16.mxu0 %v9943
  %11880 = vmatpush1.bf16.msra.mxu0 %v9942
  %11881 = vmatprep.subr.bf16.mxu0 %v9951
  %11882 = vmatpush1.bf16.msra.mxu0 %v9950
  %11883 = vmatprep.subr.bf16.mxu0 %v9959
  %11884 = vmatpush1.bf16.msra.mxu0 %v9958
  %11885 = vmatprep.subr.bf16.mxu0 %v9967
  %11886 = vmatpush1.bf16.msra.mxu0 %v9966
  %11887 = vmatprep.subr.bf16.mxu0 %v9975
  %11888 = vmatpush1.bf16.msra.mxu0 %v9974
  %11889 = vmatprep.subr.bf16.mxu0 %v9983
  %11890 = vmatpush1.bf16.msra.mxu0 %v9982
  %11891 = vmatprep.subr.bf16.mxu0 %v9991
  %11892 = vmatpush1.bf16.msra.mxu0 %v9990
  %11893 = vmatprep.subr.bf16.mxu0 %v9999
  %11894 = vmatpush1.bf16.msra.mxu0 %v9998
  %11895 = vmatprep.subr.bf16.mxu0 %v10007
  %11896 = vmatpush1.bf16.msra.mxu0 %v10006
  %11897 = vmatprep.subr.bf16.mxu0 %v10015
  %11898 = vmatpush1.bf16.msra.mxu0 %v10014
  %11899 = vmatprep.subr.bf16.mxu0 %v10023
  %11900 = vmatpush1.bf16.msra.mxu0 %v10022
  %11901 = vmatprep.subr.bf16.mxu0 %v10031
  %11902 = vmatpush1.bf16.msra.mxu0 %v10030
  %11903 = vmatprep.mubr.bf16.mxu0 %v5631
  %11904 = vmatmul.mubr.bf16.gmra.mrb[0].mxu0 %v5630
  %v11905 = vpop.f32.mrb[0].mxu0
  %v11906 = vadd.f32 %v11865, %v11905
  %v11907 = vpop.f32.mrb[0].mxu0
  %v11908 = vadd.f32 %v11867, %v11907
  %v11909 = vpop.f32.mrb[0].mxu0
  %v11910 = vpop.f32.mrb[0].mxu0
  %11911 = vdwg.mxu0
  %11912 = vmatprep.subr.bf16.mxu0 %v10039
  %11913 = vmatpush1.bf16.msra.mxu0 %v10038
  %11914 = vmatprep.subr.bf16.mxu0 %v10047
  %11915 = vmatpush1.bf16.msra.mxu0 %v10046
  %11916 = vmatprep.subr.bf16.mxu0 %v10055
  %11917 = vmatpush1.bf16.msra.mxu0 %v10054
  %11918 = vmatprep.subr.bf16.mxu0 %v10063
  %11919 = vmatpush1.bf16.msra.mxu0 %v10062
  %11920 = vmatprep.subr.bf16.mxu0 %v10071
  %11921 = vmatpush1.bf16.msra.mxu0 %v10070
  %11922 = vmatprep.subr.bf16.mxu0 %v10079
  %11923 = vmatpush1.bf16.msra.mxu0 %v10078
  %11924 = vmatprep.subr.bf16.mxu0 %v10087
  %11925 = vmatpush1.bf16.msra.mxu0 %v10086
  %11926 = vmatprep.subr.bf16.mxu0 %v10095
  %11927 = vmatpush1.bf16.msra.mxu0 %v10094
  %11928 = vmatprep.subr.bf16.mxu0 %v10103
  %11929 = vmatpush1.bf16.msra.mxu0 %v10102
  %11930 = vmatprep.subr.bf16.mxu0 %v10111
  %11931 = vmatpush1.bf16.msra.mxu0 %v10110
  %11932 = vmatprep.subr.bf16.mxu0 %v10119
  %11933 = vmatpush1.bf16.msra.mxu0 %v10118
  %11934 = vmatprep.subr.bf16.mxu0 %v10127
  %11935 = vmatpush1.bf16.msra.mxu0 %v10126
  %11936 = vmatprep.subr.bf16.mxu0 %v10135
  %11937 = vmatpush1.bf16.msra.mxu0 %v10134
  %11938 = vmatprep.subr.bf16.mxu0 %v10143
  %11939 = vmatpush1.bf16.msra.mxu0 %v10142
  %11940 = vmatprep.subr.bf16.mxu0 %v10151
  %11941 = vmatpush1.bf16.msra.mxu0 %v10150
  %11942 = vmatprep.subr.bf16.mxu0 %v10159
  %11943 = vmatpush1.bf16.msra.mxu0 %v10158
  %11944 = vmatprep.mubr.bf16.mxu0 %v5633
  %11945 = vmatmul.mubr.bf16.gmra.mrb[0].mxu0 %v5632
  %v11946 = vpop.f32.mrb[0].mxu0
  %v11947 = vadd.f32 %v11906, %v11946
  %v11948 = vpop.f32.mrb[0].mxu0
  %v11949 = vadd.f32 %v11908, %v11948
  %v11950 = vpop.f32.mrb[0].mxu0
  %v11951 = vpop.f32.mrb[0].mxu0
  %11952 = vdwg.mxu0
  %11953 = vmatprep.subr.bf16.mxu0 %v10167
  %11954 = vmatpush1.bf16.msra.mxu0 %v10166
  %11955 = vmatprep.subr.bf16.mxu0 %v10175
  %11956 = vmatpush1.bf16.msra.mxu0 %v10174
  %11957 = vmatprep.subr.bf16.mxu0 %v10183
  %11958 = vmatpush1.bf16.msra.mxu0 %v10182
  %11959 = vmatprep.subr.bf16.mxu0 %v10191
  %11960 = vmatpush1.bf16.msra.mxu0 %v10190
  %11961 = vmatprep.subr.bf16.mxu0 %v10199
  %11962 = vmatpush1.bf16.msra.mxu0 %v10198
  %11963 = vmatprep.subr.bf16.mxu0 %v10207
  %11964 = vmatpush1.bf16.msra.mxu0 %v10206
  %11965 = vmatprep.subr.bf16.mxu0 %v10215
  %11966 = vmatpush1.bf16.msra.mxu0 %v10214
  %11967 = vmatprep.subr.bf16.mxu0 %v10223
  %11968 = vmatpush1.bf16.msra.mxu0 %v10222
  %11969 = vmatprep.subr.bf16.mxu0 %v10231
  %11970 = vmatpush1.bf16.msra.mxu0 %v10230
  %11971 = vmatprep.subr.bf16.mxu0 %v10239
  %11972 = vmatpush1.bf16.msra.mxu0 %v10238
  %11973 = vmatprep.subr.bf16.mxu0 %v10247
  %11974 = vmatpush1.bf16.msra.mxu0 %v10246
  %11975 = vmatprep.subr.bf16.mxu0 %v10255
  %11976 = vmatpush1.bf16.msra.mxu0 %v10254
  %11977 = vmatprep.subr.bf16.mxu0 %v10263
  %11978 = vmatpush1.bf16.msra.mxu0 %v10262
  %11979 = vmatprep.subr.bf16.mxu0 %v10271
  %11980 = vmatpush1.bf16.msra.mxu0 %v10270
  %11981 = vmatprep.subr.bf16.mxu0 %v10279
  %11982 = vmatpush1.bf16.msra.mxu0 %v10278
  %11983 = vmatprep.subr.bf16.mxu0 %v10287
  %11984 = vmatpush1.bf16.msra.mxu0 %v10286
  %11985 = vmatprep.mubr.bf16.mxu0 %v5635
  %11986 = vmatmul.mubr.bf16.gmra.mrb[0].mxu0 %v5634
  %v11987 = vpop.f32.mrb[0].mxu0
  %v11988 = vadd.f32 %v11947, %v11987
  %v11989 = vpop.f32.mrb[0].mxu0
  %v11990 = vadd.f32 %v11949, %v11989
  %v11991 = vpop.f32.mrb[0].mxu0
  %v11992 = vpop.f32.mrb[0].mxu0
  %11993 = vdwg.mxu0
  %11994 = vmatprep.subr.bf16.mxu0 %v10295
  %11995 = vmatpush1.bf16.msra.mxu0 %v10294
  %11996 = vmatprep.subr.bf16.mxu0 %v10303
  %11997 = vmatpush1.bf16.msra.mxu0 %v10302
  %11998 = vmatprep.subr.bf16.mxu0 %v10311
  %11999 = vmatpush1.bf16.msra.mxu0 %v10310
  %12000 = vmatprep.subr.bf16.mxu0 %v10319
  %12001 = vmatpush1.bf16.msra.mxu0 %v10318
  %12002 = vmatprep.subr.bf16.mxu0 %v10327
  %12003 = vmatpush1.bf16.msra.mxu0 %v10326
  %12004 = vmatprep.subr.bf16.mxu0 %v10335
  %12005 = vmatpush1.bf16.msra.mxu0 %v10334
  %12006 = vmatprep.subr.bf16.mxu0 %v10343
  %12007 = vmatpush1.bf16.msra.mxu0 %v10342
  %12008 = vmatprep.subr.bf16.mxu0 %v10351
  %12009 = vmatpush1.bf16.msra.mxu0 %v10350
  %12010 = vmatprep.subr.bf16.mxu0 %v10359
  %12011 = vmatpush1.bf16.msra.mxu0 %v10358
  %12012 = vmatprep.subr.bf16.mxu0 %v10367
  %12013 = vmatpush1.bf16.msra.mxu0 %v10366
  %12014 = vmatprep.subr.bf16.mxu0 %v10375
  %12015 = vmatpush1.bf16.msra.mxu0 %v10374
  %12016 = vmatprep.subr.bf16.mxu0 %v10383
  %12017 = vmatpush1.bf16.msra.mxu0 %v10382
  %12018 = vmatprep.subr.bf16.mxu0 %v10391
  %12019 = vmatpush1.bf16.msra.mxu0 %v10390
  %12020 = vmatprep.subr.bf16.mxu0 %v10399
  %12021 = vmatpush1.bf16.msra.mxu0 %v10398
  %12022 = vmatprep.subr.bf16.mxu0 %v10407
  %12023 = vmatpush1.bf16.msra.mxu0 %v10406
  %12024 = vmatprep.subr.bf16.mxu0 %v10415
  %12025 = vmatpush1.bf16.msra.mxu0 %v10414
  %12026 = vmatprep.mubr.bf16.mxu0 %v5637
  %12027 = vmatmul.mubr.bf16.gmra.mrb[0].mxu0 %v5636
  %v12028 = vpop.f32.mrb[0].mxu0
  %v12029 = vadd.f32 %v11988, %v12028
  %v12030 = vpop.f32.mrb[0].mxu0
  %v12031 = vadd.f32 %v11990, %v12030
  %v12032 = vpop.f32.mrb[0].mxu0
  %v12033 = vpop.f32.mrb[0].mxu0
  %12034 = vdwg.mxu0
  %12035 = vmatprep.subr.bf16.mxu0 %v10423
  %12036 = vmatpush1.bf16.msra.mxu0 %v10422
  %12037 = vmatprep.subr.bf16.mxu0 %v10431
  %12038 = vmatpush1.bf16.msra.mxu0 %v10430
  %12039 = vmatprep.subr.bf16.mxu0 %v10439
  %12040 = vmatpush1.bf16.msra.mxu0 %v10438
  %12041 = vmatprep.subr.bf16.mxu0 %v10447
  %12042 = vmatpush1.bf16.msra.mxu0 %v10446
  %12043 = vmatprep.subr.bf16.mxu0 %v10455
  %12044 = vmatpush1.bf16.msra.mxu0 %v10454
  %12045 = vmatprep.subr.bf16.mxu0 %v10463
  %12046 = vmatpush1.bf16.msra.mxu0 %v10462
  %12047 = vmatprep.subr.bf16.mxu0 %v10471
  %12048 = vmatpush1.bf16.msra.mxu0 %v10470
  %12049 = vmatprep.subr.bf16.mxu0 %v10479
  %12050 = vmatpush1.bf16.msra.mxu0 %v10478
  %12051 = vmatprep.subr.bf16.mxu0 %v10487
  %12052 = vmatpush1.bf16.msra.mxu0 %v10486
  %12053 = vmatprep.subr.bf16.mxu0 %v10495
  %12054 = vmatpush1.bf16.msra.mxu0 %v10494
  %12055 = vmatprep.subr.bf16.mxu0 %v10503
  %12056 = vmatpush1.bf16.msra.mxu0 %v10502
  %12057 = vmatprep.subr.bf16.mxu0 %v10511
  %12058 = vmatpush1.bf16.msra.mxu0 %v10510
  %12059 = vmatprep.subr.bf16.mxu0 %v10519
  %12060 = vmatpush1.bf16.msra.mxu0 %v10518
  %12061 = vmatprep.subr.bf16.mxu0 %v10527
  %12062 = vmatpush1.bf16.msra.mxu0 %v10526
  %12063 = vmatprep.subr.bf16.mxu0 %v10535
  %12064 = vmatpush1.bf16.msra.mxu0 %v10534
  %12065 = vmatprep.subr.bf16.mxu0 %v10543
  %12066 = vmatpush1.bf16.msra.mxu0 %v10542
  %12067 = vmatprep.mubr.bf16.mxu0 %v5639
  %12068 = vmatmul.mubr.bf16.gmra.mrb[0].mxu0 %v5638
  %v12069 = vpop.f32.mrb[0].mxu0
  %v12070 = vadd.f32 %v12029, %v12069
  %v12071 = vpop.f32.mrb[0].mxu0
  %v12072 = vadd.f32 %v12031, %v12071
  %v12073 = vpop.f32.mrb[0].mxu0
  %v12074 = vpop.f32.mrb[0].mxu0
  %12075 = vdwg.mxu0
  %12076 = vmatprep.subr.bf16.mxu0 %v10551
  %12077 = vmatpush1.bf16.msra.mxu0 %v10550
  %12078 = vmatprep.subr.bf16.mxu0 %v10559
  %12079 = vmatpush1.bf16.msra.mxu0 %v10558
  %12080 = vmatprep.subr.bf16.mxu0 %v10567
  %12081 = vmatpush1.bf16.msra.mxu0 %v10566
  %12082 = vmatprep.subr.bf16.mxu0 %v10575
  %12083 = vmatpush1.bf16.msra.mxu0 %v10574
  %12084 = vmatprep.subr.bf16.mxu0 %v10583
  %12085 = vmatpush1.bf16.msra.mxu0 %v10582
  %12086 = vmatprep.subr.bf16.mxu0 %v10591
  %12087 = vmatpush1.bf16.msra.mxu0 %v10590
  %12088 = vmatprep.subr.bf16.mxu0 %v10599
  %12089 = vmatpush1.bf16.msra.mxu0 %v10598
  %12090 = vmatprep.subr.bf16.mxu0 %v10607
  %12091 = vmatpush1.bf16.msra.mxu0 %v10606
  %12092 = vmatprep.subr.bf16.mxu0 %v10615
  %12093 = vmatpush1.bf16.msra.mxu0 %v10614
  %12094 = vmatprep.subr.bf16.mxu0 %v10623
  %12095 = vmatpush1.bf16.msra.mxu0 %v10622
  %12096 = vmatprep.subr.bf16.mxu0 %v10631
  %12097 = vmatpush1.bf16.msra.mxu0 %v10630
  %12098 = vmatprep.subr.bf16.mxu0 %v10639
  %12099 = vmatpush1.bf16.msra.mxu0 %v10638
  %12100 = vmatprep.subr.bf16.mxu0 %v10647
  %12101 = vmatpush1.bf16.msra.mxu0 %v10646
  %12102 = vmatprep.subr.bf16.mxu0 %v10655
  %12103 = vmatpush1.bf16.msra.mxu0 %v10654
  %12104 = vmatprep.subr.bf16.mxu0 %v10663
  %12105 = vmatpush1.bf16.msra.mxu0 %v10662
  %12106 = vmatprep.subr.bf16.mxu0 %v10671
  %12107 = vmatpush1.bf16.msra.mxu0 %v10670
  %12108 = vmatprep.mubr.bf16.mxu0 %v5641
  %12109 = vmatmul.mubr.bf16.gmra.mrb[0].mxu0 %v5640
  %v12110 = vpop.f32.mrb[0].mxu0
  %v12111 = vadd.f32 %v12070, %v12110
  %v12112 = vpop.f32.mrb[0].mxu0
  %v12113 = vadd.f32 %v12072, %v12112
  %v12114 = vpop.f32.mrb[0].mxu0
  %v12115 = vpop.f32.mrb[0].mxu0
  %12116 = vdwg.mxu0
  %12117 = vmatprep.subr.bf16.mxu0 %v10679
  %12118 = vmatpush1.bf16.msra.mxu0 %v10678
  %12119 = vmatprep.subr.bf16.mxu0 %v10687
  %12120 = vmatpush1.bf16.msra.mxu0 %v10686
  %12121 = vmatprep.subr.bf16.mxu0 %v10695
  %12122 = vmatpush1.bf16.msra.mxu0 %v10694
  %12123 = vmatprep.subr.bf16.mxu0 %v10703
  %12124 = vmatpush1.bf16.msra.mxu0 %v10702
  %12125 = vmatprep.subr.bf16.mxu0 %v10711
  %12126 = vmatpush1.bf16.msra.mxu0 %v10710
  %12127 = vmatprep.subr.bf16.mxu0 %v10719
  %12128 = vmatpush1.bf16.msra.mxu0 %v10718
  %12129 = vmatprep.subr.bf16.mxu0 %v10727
  %12130 = vmatpush1.bf16.msra.mxu0 %v10726
  %12131 = vmatprep.subr.bf16.mxu0 %v10735
  %12132 = vmatpush1.bf16.msra.mxu0 %v10734
  %12133 = vmatprep.subr.bf16.mxu0 %v10743
  %12134 = vmatpush1.bf16.msra.mxu0 %v10742
  %12135 = vmatprep.subr.bf16.mxu0 %v10751
  %12136 = vmatpush1.bf16.msra.mxu0 %v10750
  %12137 = vmatprep.subr.bf16.mxu0 %v10759
  %12138 = vmatpush1.bf16.msra.mxu0 %v10758
  %12139 = vmatprep.subr.bf16.mxu0 %v10767
  %12140 = vmatpush1.bf16.msra.mxu0 %v10766
  %12141 = vmatprep.subr.bf16.mxu0 %v10775
  %12142 = vmatpush1.bf16.msra.mxu0 %v10774
  %12143 = vmatprep.subr.bf16.mxu0 %v10783
  %12144 = vmatpush1.bf16.msra.mxu0 %v10782
  %12145 = vmatprep.subr.bf16.mxu0 %v10791
  %12146 = vmatpush1.bf16.msra.mxu0 %v10790
  %12147 = vmatprep.subr.bf16.mxu0 %v10799
  %12148 = vmatpush1.bf16.msra.mxu0 %v10798
  %12149 = vmatprep.mubr.bf16.mxu0 %v5643
  %12150 = vmatmul.mubr.bf16.gmra.mrb[0].mxu0 %v5642
  %v12151 = vpop.f32.mrb[0].mxu0
  %v12152 = vadd.f32 %v12111, %v12151
  %v12153 = vpop.f32.mrb[0].mxu0
  %v12154 = vadd.f32 %v12113, %v12153
  %v12155 = vpop.f32.mrb[0].mxu0
  %v12156 = vpop.f32.mrb[0].mxu0
  %12157 = vdwg.mxu0
  %12158 = vmatprep.subr.bf16.mxu0 %v9785
  %12159 = vmatpush1.bf16.msra.mxu0 %v9784
  %12160 = vmatprep.subr.bf16.mxu0 %v9793
  %12161 = vmatpush1.bf16.msra.mxu0 %v9792
  %12162 = vmatprep.subr.bf16.mxu0 %v9801
  %12163 = vmatpush1.bf16.msra.mxu0 %v9800
  %12164 = vmatprep.subr.bf16.mxu0 %v9809
  %12165 = vmatpush1.bf16.msra.mxu0 %v9808
  %12166 = vmatprep.subr.bf16.mxu0 %v9817
  %12167 = vmatpush1.bf16.msra.mxu0 %v9816
  %12168 = vmatprep.subr.bf16.mxu0 %v9825
  %12169 = vmatpush1.bf16.msra.mxu0 %v9824
  %12170 = vmatprep.subr.bf16.mxu0 %v9833
  %12171 = vmatpush1.bf16.msra.mxu0 %v9832
  %12172 = vmatprep.subr.bf16.mxu0 %v9841
  %12173 = vmatpush1.bf16.msra.mxu0 %v9840
  %12174 = vmatprep.subr.bf16.mxu0 %v9849
  %12175 = vmatpush1.bf16.msra.mxu0 %v9848
  %12176 = vmatprep.subr.bf16.mxu0 %v9857
  %12177 = vmatpush1.bf16.msra.mxu0 %v9856
  %12178 = vmatprep.subr.bf16.mxu0 %v9865
  %12179 = vmatpush1.bf16.msra.mxu0 %v9864
  %12180 = vmatprep.subr.bf16.mxu0 %v9873
  %12181 = vmatpush1.bf16.msra.mxu0 %v9872
  %12182 = vmatprep.subr.bf16.mxu0 %v9881
  %12183 = vmatpush1.bf16.msra.mxu0 %v9880
  %12184 = vmatprep.subr.bf16.mxu0 %v9889
  %12185 = vmatpush1.bf16.msra.mxu0 %v9888
  %12186 = vmatprep.subr.bf16.mxu0 %v9897
  %12187 = vmatpush1.bf16.msra.mxu0 %v9896
  %12188 = vmatprep.subr.bf16.mxu0 %v9905
  %12189 = vmatpush1.bf16.msra.mxu0 %v9904
  %12190 = vmatprep.mubr.bf16.mxu0 %v5629
  %12191 = vmatmul.mubr.bf16.gmra.mrb[0].mxu0 %v5628
  %v12192 = vpop.f32.mrb[0].mxu0
  %v12193 = vadd.f32 %v6681, %v12192
  %v12194 = vpop.f32.mrb[0].mxu0
  %v12195 = vadd.f32 %v6685, %v12194
  %v12196 = vpop.f32.mrb[0].mxu0
  %v12197 = vpop.f32.mrb[0].mxu0
  %12198 = vdwg.mxu0
  %12199 = vmatprep.subr.bf16.mxu0 %v9913
  %12200 = vmatpush1.bf16.msra.mxu0 %v9912
  %12201 = vmatprep.subr.bf16.mxu0 %v9921
  %12202 = vmatpush1.bf16.msra.mxu0 %v9920
  %12203 = vmatprep.subr.bf16.mxu0 %v9929
  %12204 = vmatpush1.bf16.msra.mxu0 %v9928
  %12205 = vmatprep.subr.bf16.mxu0 %v9937
  %12206 = vmatpush1.bf16.msra.mxu0 %v9936
  %12207 = vmatprep.subr.bf16.mxu0 %v9945
  %12208 = vmatpush1.bf16.msra.mxu0 %v9944
  %12209 = vmatprep.subr.bf16.mxu0 %v9953
  %12210 = vmatpush1.bf16.msra.mxu0 %v9952
  %12211 = vmatprep.subr.bf16.mxu0 %v9961
  %12212 = vmatpush1.bf16.msra.mxu0 %v9960
  %12213 = vmatprep.subr.bf16.mxu0 %v9969
  %12214 = vmatpush1.bf16.msra.mxu0 %v9968
  %12215 = vmatprep.subr.bf16.mxu0 %v9977
  %12216 = vmatpush1.bf16.msra.mxu0 %v9976
  %12217 = vmatprep.subr.bf16.mxu0 %v9985
  %12218 = vmatpush1.bf16.msra.mxu0 %v9984
  %12219 = vmatprep.subr.bf16.mxu0 %v9993
  %12220 = vmatpush1.bf16.msra.mxu0 %v9992
  %12221 = vmatprep.subr.bf16.mxu0 %v10001
  %12222 = vmatpush1.bf16.msra.mxu0 %v10000
  %12223 = vmatprep.subr.bf16.mxu0 %v10009
  %12224 = vmatpush1.bf16.msra.mxu0 %v10008
  %12225 = vmatprep.subr.bf16.mxu0 %v10017
  %12226 = vmatpush1.bf16.msra.mxu0 %v10016
  %12227 = vmatprep.subr.bf16.mxu0 %v10025
  %12228 = vmatpush1.bf16.msra.mxu0 %v10024
  %12229 = vmatprep.subr.bf16.mxu0 %v10033
  %12230 = vmatpush1.bf16.msra.mxu0 %v10032
  %12231 = vmatprep.mubr.bf16.mxu0 %v5631
  %12232 = vmatmul.mubr.bf16.gmra.mrb[0].mxu0 %v5630
  %v12233 = vpop.f32.mrb[0].mxu0
  %v12234 = vadd.f32 %v12193, %v12233
  %v12235 = vpop.f32.mrb[0].mxu0
  %v12236 = vadd.f32 %v12195, %v12235
  %v12237 = vpop.f32.mrb[0].mxu0
  %v12238 = vpop.f32.mrb[0].mxu0
  %12239 = vdwg.mxu0
  %12240 = vmatprep.subr.bf16.mxu0 %v10041
  %12241 = vmatpush1.bf16.msra.mxu0 %v10040
  %12242 = vmatprep.subr.bf16.mxu0 %v10049
  %12243 = vmatpush1.bf16.msra.mxu0 %v10048
  %12244 = vmatprep.subr.bf16.mxu0 %v10057
  %12245 = vmatpush1.bf16.msra.mxu0 %v10056
  %12246 = vmatprep.subr.bf16.mxu0 %v10065
  %12247 = vmatpush1.bf16.msra.mxu0 %v10064
  %12248 = vmatprep.subr.bf16.mxu0 %v10073
  %12249 = vmatpush1.bf16.msra.mxu0 %v10072
  %12250 = vmatprep.subr.bf16.mxu0 %v10081
  %12251 = vmatpush1.bf16.msra.mxu0 %v10080
  %12252 = vmatprep.subr.bf16.mxu0 %v10089
  %12253 = vmatpush1.bf16.msra.mxu0 %v10088
  %12254 = vmatprep.subr.bf16.mxu0 %v10097
  %12255 = vmatpush1.bf16.msra.mxu0 %v10096
  %12256 = vmatprep.subr.bf16.mxu0 %v10105
  %12257 = vmatpush1.bf16.msra.mxu0 %v10104
  %12258 = vmatprep.subr.bf16.mxu0 %v10113
  %12259 = vmatpush1.bf16.msra.mxu0 %v10112
  %12260 = vmatprep.subr.bf16.mxu0 %v10121
  %12261 = vmatpush1.bf16.msra.mxu0 %v10120
  %12262 = vmatprep.subr.bf16.mxu0 %v10129
  %12263 = vmatpush1.bf16.msra.mxu0 %v10128
  %12264 = vmatprep.subr.bf16.mxu0 %v10137
  %12265 = vmatpush1.bf16.msra.mxu0 %v10136
  %12266 = vmatprep.subr.bf16.mxu0 %v10145
  %12267 = vmatpush1.bf16.msra.mxu0 %v10144
  %12268 = vmatprep.subr.bf16.mxu0 %v10153
  %12269 = vmatpush1.bf16.msra.mxu0 %v10152
  %12270 = vmatprep.subr.bf16.mxu0 %v10161
  %12271 = vmatpush1.bf16.msra.mxu0 %v10160
  %12272 = vmatprep.mubr.bf16.mxu0 %v5633
  %12273 = vmatmul.mubr.bf16.gmra.mrb[0].mxu0 %v5632
  %v12274 = vpop.f32.mrb[0].mxu0
  %v12275 = vadd.f32 %v12234, %v12274
  %v12276 = vpop.f32.mrb[0].mxu0
  %v12277 = vadd.f32 %v12236, %v12276
  %v12278 = vpop.f32.mrb[0].mxu0
  %v12279 = vpop.f32.mrb[0].mxu0
  %12280 = vdwg.mxu0
  %12281 = vmatprep.subr.bf16.mxu0 %v10169
  %12282 = vmatpush1.bf16.msra.mxu0 %v10168
  %12283 = vmatprep.subr.bf16.mxu0 %v10177
  %12284 = vmatpush1.bf16.msra.mxu0 %v10176
  %12285 = vmatprep.subr.bf16.mxu0 %v10185
  %12286 = vmatpush1.bf16.msra.mxu0 %v10184
  %12287 = vmatprep.subr.bf16.mxu0 %v10193
  %12288 = vmatpush1.bf16.msra.mxu0 %v10192
  %12289 = vmatprep.subr.bf16.mxu0 %v10201
  %12290 = vmatpush1.bf16.msra.mxu0 %v10200
  %12291 = vmatprep.subr.bf16.mxu0 %v10209
  %12292 = vmatpush1.bf16.msra.mxu0 %v10208
  %12293 = vmatprep.subr.bf16.mxu0 %v10217
  %12294 = vmatpush1.bf16.msra.mxu0 %v10216
  %12295 = vmatprep.subr.bf16.mxu0 %v10225
  %12296 = vmatpush1.bf16.msra.mxu0 %v10224
  %12297 = vmatprep.subr.bf16.mxu0 %v10233
  %12298 = vmatpush1.bf16.msra.mxu0 %v10232
  %12299 = vmatprep.subr.bf16.mxu0 %v10241
  %12300 = vmatpush1.bf16.msra.mxu0 %v10240
  %12301 = vmatprep.subr.bf16.mxu0 %v10249
  %12302 = vmatpush1.bf16.msra.mxu0 %v10248
  %12303 = vmatprep.subr.bf16.mxu0 %v10257
  %12304 = vmatpush1.bf16.msra.mxu0 %v10256
  %12305 = vmatprep.subr.bf16.mxu0 %v10265
  %12306 = vmatpush1.bf16.msra.mxu0 %v10264
  %12307 = vmatprep.subr.bf16.mxu0 %v10273
  %12308 = vmatpush1.bf16.msra.mxu0 %v10272
  %12309 = vmatprep.subr.bf16.mxu0 %v10281
  %12310 = vmatpush1.bf16.msra.mxu0 %v10280
  %12311 = vmatprep.subr.bf16.mxu0 %v10289
  %12312 = vmatpush1.bf16.msra.mxu0 %v10288
  %12313 = vmatprep.mubr.bf16.mxu0 %v5635
  %12314 = vmatmul.mubr.bf16.gmra.mrb[0].mxu0 %v5634
  %v12315 = vpop.f32.mrb[0].mxu0
  %v12316 = vadd.f32 %v12275, %v12315
  %v12317 = vpop.f32.mrb[0].mxu0
  %v12318 = vadd.f32 %v12277, %v12317
  %v12319 = vpop.f32.mrb[0].mxu0
  %v12320 = vpop.f32.mrb[0].mxu0
  %12321 = vdwg.mxu0
  %12322 = vmatprep.subr.bf16.mxu0 %v10297
  %12323 = vmatpush1.bf16.msra.mxu0 %v10296
  %12324 = vmatprep.subr.bf16.mxu0 %v10305
  %12325 = vmatpush1.bf16.msra.mxu0 %v10304
  %12326 = vmatprep.subr.bf16.mxu0 %v10313
  %12327 = vmatpush1.bf16.msra.mxu0 %v10312
  %12328 = vmatprep.subr.bf16.mxu0 %v10321
  %12329 = vmatpush1.bf16.msra.mxu0 %v10320
  %12330 = vmatprep.subr.bf16.mxu0 %v10329
  %12331 = vmatpush1.bf16.msra.mxu0 %v10328
  %12332 = vmatprep.subr.bf16.mxu0 %v10337
  %12333 = vmatpush1.bf16.msra.mxu0 %v10336
  %12334 = vmatprep.subr.bf16.mxu0 %v10345
  %12335 = vmatpush1.bf16.msra.mxu0 %v10344
  %12336 = vmatprep.subr.bf16.mxu0 %v10353
  %12337 = vmatpush1.bf16.msra.mxu0 %v10352
  %12338 = vmatprep.subr.bf16.mxu0 %v10361
  %12339 = vmatpush1.bf16.msra.mxu0 %v10360
  %12340 = vmatprep.subr.bf16.mxu0 %v10369
  %12341 = vmatpush1.bf16.msra.mxu0 %v10368
  %12342 = vmatprep.subr.bf16.mxu0 %v10377
  %12343 = vmatpush1.bf16.msra.mxu0 %v10376
  %12344 = vmatprep.subr.bf16.mxu0 %v10385
  %12345 = vmatpush1.bf16.msra.mxu0 %v10384
  %12346 = vmatprep.subr.bf16.mxu0 %v10393
  %12347 = vmatpush1.bf16.msra.mxu0 %v10392
  %12348 = vmatprep.subr.bf16.mxu0 %v10401
  %12349 = vmatpush1.bf16.msra.mxu0 %v10400
  %12350 = vmatprep.subr.bf16.mxu0 %v10409
  %12351 = vmatpush1.bf16.msra.mxu0 %v10408
  %12352 = vmatprep.subr.bf16.mxu0 %v10417
  %12353 = vmatpush1.bf16.msra.mxu0 %v10416
  %12354 = vmatprep.mubr.bf16.mxu0 %v5637
  %12355 = vmatmul.mubr.bf16.gmra.mrb[0].mxu0 %v5636
  %v12356 = vpop.f32.mrb[0].mxu0
  %v12357 = vadd.f32 %v12316, %v12356
  %v12358 = vpop.f32.mrb[0].mxu0
  %v12359 = vadd.f32 %v12318, %v12358
  %v12360 = vpop.f32.mrb[0].mxu0
  %v12361 = vpop.f32.mrb[0].mxu0
  %12362 = vdwg.mxu0
  %12363 = vmatprep.subr.bf16.mxu0 %v10425
  %12364 = vmatpush1.bf16.msra.mxu0 %v10424
  %12365 = vmatprep.subr.bf16.mxu0 %v10433
  %12366 = vmatpush1.bf16.msra.mxu0 %v10432
  %12367 = vmatprep.subr.bf16.mxu0 %v10441
  %12368 = vmatpush1.bf16.msra.mxu0 %v10440
  %12369 = vmatprep.subr.bf16.mxu0 %v10449
  %12370 = vmatpush1.bf16.msra.mxu0 %v10448
  %12371 = vmatprep.subr.bf16.mxu0 %v10457
  %12372 = vmatpush1.bf16.msra.mxu0 %v10456
  %12373 = vmatprep.subr.bf16.mxu0 %v10465
  %12374 = vmatpush1.bf16.msra.mxu0 %v10464
  %12375 = vmatprep.subr.bf16.mxu0 %v10473
  %12376 = vmatpush1.bf16.msra.mxu0 %v10472
  %12377 = vmatprep.subr.bf16.mxu0 %v10481
  %12378 = vmatpush1.bf16.msra.mxu0 %v10480
  %12379 = vmatprep.subr.bf16.mxu0 %v10489
  %12380 = vmatpush1.bf16.msra.mxu0 %v10488
  %12381 = vmatprep.subr.bf16.mxu0 %v10497
  %12382 = vmatpush1.bf16.msra.mxu0 %v10496
  %12383 = vmatprep.subr.bf16.mxu0 %v10505
  %12384 = vmatpush1.bf16.msra.mxu0 %v10504
  %12385 = vmatprep.subr.bf16.mxu0 %v10513
  %12386 = vmatpush1.bf16.msra.mxu0 %v10512
  %12387 = vmatprep.subr.bf16.mxu0 %v10521
  %12388 = vmatpush1.bf16.msra.mxu0 %v10520
  %12389 = vmatprep.subr.bf16.mxu0 %v10529
  %12390 = vmatpush1.bf16.msra.mxu0 %v10528
  %12391 = vmatprep.subr.bf16.mxu0 %v10537
  %12392 = vmatpush1.bf16.msra.mxu0 %v10536
  %12393 = vmatprep.subr.bf16.mxu0 %v10545
  %12394 = vmatpush1.bf16.msra.mxu0 %v10544
  %12395 = vmatprep.mubr.bf16.mxu0 %v5639
  %12396 = vmatmul.mubr.bf16.gmra.mrb[0].mxu0 %v5638
  %v12397 = vpop.f32.mrb[0].mxu0
  %v12398 = vadd.f32 %v12357, %v12397
  %v12399 = vpop.f32.mrb[0].mxu0
  %v12400 = vadd.f32 %v12359, %v12399
  %v12401 = vpop.f32.mrb[0].mxu0
  %v12402 = vpop.f32.mrb[0].mxu0
  %12403 = vdwg.mxu0
  %12404 = vmatprep.subr.bf16.mxu0 %v10553
  %12405 = vmatpush1.bf16.msra.mxu0 %v10552
  %12406 = vmatprep.subr.bf16.mxu0 %v10561
  %12407 = vmatpush1.bf16.msra.mxu0 %v10560
  %12408 = vmatprep.subr.bf16.mxu0 %v10569
  %12409 = vmatpush1.bf16.msra.mxu0 %v10568
  %12410 = vmatprep.subr.bf16.mxu0 %v10577
  %12411 = vmatpush1.bf16.msra.mxu0 %v10576
  %12412 = vmatprep.subr.bf16.mxu0 %v10585
  %12413 = vmatpush1.bf16.msra.mxu0 %v10584
  %12414 = vmatprep.subr.bf16.mxu0 %v10593
  %12415 = vmatpush1.bf16.msra.mxu0 %v10592
  %12416 = vmatprep.subr.bf16.mxu0 %v10601
  %12417 = vmatpush1.bf16.msra.mxu0 %v10600
  %12418 = vmatprep.subr.bf16.mxu0 %v10609
  %12419 = vmatpush1.bf16.msra.mxu0 %v10608
  %12420 = vmatprep.subr.bf16.mxu0 %v10617
  %12421 = vmatpush1.bf16.msra.mxu0 %v10616
  %12422 = vmatprep.subr.bf16.mxu0 %v10625
  %12423 = vmatpush1.bf16.msra.mxu0 %v10624
  %12424 = vmatprep.subr.bf16.mxu0 %v10633
  %12425 = vmatpush1.bf16.msra.mxu0 %v10632
  %12426 = vmatprep.subr.bf16.mxu0 %v10641
  %12427 = vmatpush1.bf16.msra.mxu0 %v10640
  %12428 = vmatprep.subr.bf16.mxu0 %v10649
  %12429 = vmatpush1.bf16.msra.mxu0 %v10648
  %12430 = vmatprep.subr.bf16.mxu0 %v10657
  %12431 = vmatpush1.bf16.msra.mxu0 %v10656
  %12432 = vmatprep.subr.bf16.mxu0 %v10665
  %12433 = vmatpush1.bf16.msra.mxu0 %v10664
  %12434 = vmatprep.subr.bf16.mxu0 %v10673
  %12435 = vmatpush1.bf16.msra.mxu0 %v10672
  %12436 = vmatprep.mubr.bf16.mxu0 %v5641
  %12437 = vmatmul.mubr.bf16.gmra.mrb[0].mxu0 %v5640
  %v12438 = vpop.f32.mrb[0].mxu0
  %v12439 = vadd.f32 %v12398, %v12438
  %v12440 = vpop.f32.mrb[0].mxu0
  %v12441 = vadd.f32 %v12400, %v12440
  %v12442 = vpop.f32.mrb[0].mxu0
  %v12443 = vpop.f32.mrb[0].mxu0
  %12444 = vdwg.mxu0
  %12445 = vmatprep.subr.bf16.mxu0 %v10681
  %12446 = vmatpush1.bf16.msra.mxu0 %v10680
  %12447 = vmatprep.subr.bf16.mxu0 %v10689
  %12448 = vmatpush1.bf16.msra.mxu0 %v10688
  %12449 = vmatprep.subr.bf16.mxu0 %v10697
  %12450 = vmatpush1.bf16.msra.mxu0 %v10696
  %12451 = vmatprep.subr.bf16.mxu0 %v10705
  %12452 = vmatpush1.bf16.msra.mxu0 %v10704
  %12453 = vmatprep.subr.bf16.mxu0 %v10713
  %12454 = vmatpush1.bf16.msra.mxu0 %v10712
  %12455 = vmatprep.subr.bf16.mxu0 %v10721
  %12456 = vmatpush1.bf16.msra.mxu0 %v10720
  %12457 = vmatprep.subr.bf16.mxu0 %v10729
  %12458 = vmatpush1.bf16.msra.mxu0 %v10728
  %12459 = vmatprep.subr.bf16.mxu0 %v10737
  %12460 = vmatpush1.bf16.msra.mxu0 %v10736
  %12461 = vmatprep.subr.bf16.mxu0 %v10745
  %12462 = vmatpush1.bf16.msra.mxu0 %v10744
  %12463 = vmatprep.subr.bf16.mxu0 %v10753
  %12464 = vmatpush1.bf16.msra.mxu0 %v10752
  %12465 = vmatprep.subr.bf16.mxu0 %v10761
  %12466 = vmatpush1.bf16.msra.mxu0 %v10760
  %12467 = vmatprep.subr.bf16.mxu0 %v10769
  %12468 = vmatpush1.bf16.msra.mxu0 %v10768
  %12469 = vmatprep.subr.bf16.mxu0 %v10777
  %12470 = vmatpush1.bf16.msra.mxu0 %v10776
  %12471 = vmatprep.subr.bf16.mxu0 %v10785
  %12472 = vmatpush1.bf16.msra.mxu0 %v10784
  %12473 = vmatprep.subr.bf16.mxu0 %v10793
  %12474 = vmatpush1.bf16.msra.mxu0 %v10792
  %12475 = vmatprep.subr.bf16.mxu0 %v10801
  %12476 = vmatpush1.bf16.msra.mxu0 %v10800
  %12477 = vmatprep.mubr.bf16.mxu0 %v5643
  %12478 = vmatmul.mubr.bf16.gmra.mrb[0].mxu0 %v5642
  %v12479 = vpop.f32.mrb[0].mxu0
  %v12480 = vadd.f32 %v12439, %v12479
  %v12481 = vpop.f32.mrb[0].mxu0
  %v12482 = vadd.f32 %v12441, %v12481
  %v12483 = vpop.f32.mrb[0].mxu0
  %v12484 = vpop.f32.mrb[0].mxu0
  %12485 = vdwg.mxu0
  %12486 = vmatprep.subr.bf16.mxu0 %v9787
  %12487 = vmatpush1.bf16.msra.mxu0 %v9786
  %12488 = vmatprep.subr.bf16.mxu0 %v9795
  %12489 = vmatpush1.bf16.msra.mxu0 %v9794
  %12490 = vmatprep.subr.bf16.mxu0 %v9803
  %12491 = vmatpush1.bf16.msra.mxu0 %v9802
  %12492 = vmatprep.subr.bf16.mxu0 %v9811
  %12493 = vmatpush1.bf16.msra.mxu0 %v9810
  %12494 = vmatprep.subr.bf16.mxu0 %v9819
  %12495 = vmatpush1.bf16.msra.mxu0 %v9818
  %12496 = vmatprep.subr.bf16.mxu0 %v9827
  %12497 = vmatpush1.bf16.msra.mxu0 %v9826
  %12498 = vmatprep.subr.bf16.mxu0 %v9835
  %12499 = vmatpush1.bf16.msra.mxu0 %v9834
  %12500 = vmatprep.subr.bf16.mxu0 %v9843
  %12501 = vmatpush1.bf16.msra.mxu0 %v9842
  %12502 = vmatprep.subr.bf16.mxu0 %v9851
  %12503 = vmatpush1.bf16.msra.mxu0 %v9850
  %12504 = vmatprep.subr.bf16.mxu0 %v9859
  %12505 = vmatpush1.bf16.msra.mxu0 %v9858
  %12506 = vmatprep.subr.bf16.mxu0 %v9867
  %12507 = vmatpush1.bf16.msra.mxu0 %v9866
  %12508 = vmatprep.subr.bf16.mxu0 %v9875
  %12509 = vmatpush1.bf16.msra.mxu0 %v9874
  %12510 = vmatprep.subr.bf16.mxu0 %v9883
  %12511 = vmatpush1.bf16.msra.mxu0 %v9882
  %12512 = vmatprep.subr.bf16.mxu0 %v9891
  %12513 = vmatpush1.bf16.msra.mxu0 %v9890
  %12514 = vmatprep.subr.bf16.mxu0 %v9899
  %12515 = vmatpush1.bf16.msra.mxu0 %v9898
  %12516 = vmatprep.subr.bf16.mxu0 %v9907
  %12517 = vmatpush1.bf16.msra.mxu0 %v9906
  %12518 = vmatprep.mubr.bf16.mxu0 %v5629
  %12519 = vmatmul.mubr.bf16.gmra.mrb[0].mxu0 %v5628
  %v12520 = vpop.f32.mrb[0].mxu0
  %v12521 = vadd.f32 %v6689, %v12520
  %v12522 = vpop.f32.mrb[0].mxu0
  %v12523 = vadd.f32 %v6693, %v12522
  %v12524 = vpop.f32.mrb[0].mxu0
  %v12525 = vpop.f32.mrb[0].mxu0
  %12526 = vdwg.mxu0
  %12527 = vmatprep.subr.bf16.mxu0 %v9915
  %12528 = vmatpush1.bf16.msra.mxu0 %v9914
  %12529 = vmatprep.subr.bf16.mxu0 %v9923
  %12530 = vmatpush1.bf16.msra.mxu0 %v9922
  %12531 = vmatprep.subr.bf16.mxu0 %v9931
  %12532 = vmatpush1.bf16.msra.mxu0 %v9930
  %12533 = vmatprep.subr.bf16.mxu0 %v9939
  %12534 = vmatpush1.bf16.msra.mxu0 %v9938
  %12535 = vmatprep.subr.bf16.mxu0 %v9947
  %12536 = vmatpush1.bf16.msra.mxu0 %v9946
  %12537 = vmatprep.subr.bf16.mxu0 %v9955
  %12538 = vmatpush1.bf16.msra.mxu0 %v9954
  %12539 = vmatprep.subr.bf16.mxu0 %v9963
  %12540 = vmatpush1.bf16.msra.mxu0 %v9962
  %12541 = vmatprep.subr.bf16.mxu0 %v9971
  %12542 = vmatpush1.bf16.msra.mxu0 %v9970
  %12543 = vmatprep.subr.bf16.mxu0 %v9979
  %12544 = vmatpush1.bf16.msra.mxu0 %v9978
  %12545 = vmatprep.subr.bf16.mxu0 %v9987
  %12546 = vmatpush1.bf16.msra.mxu0 %v9986
  %12547 = vmatprep.subr.bf16.mxu0 %v9995
  %12548 = vmatpush1.bf16.msra.mxu0 %v9994
  %12549 = vmatprep.subr.bf16.mxu0 %v10003
  %12550 = vmatpush1.bf16.msra.mxu0 %v10002
  %12551 = vmatprep.subr.bf16.mxu0 %v10011
  %12552 = vmatpush1.bf16.msra.mxu0 %v10010
  %12553 = vmatprep.subr.bf16.mxu0 %v10019
  %12554 = vmatpush1.bf16.msra.mxu0 %v10018
  %12555 = vmatprep.subr.bf16.mxu0 %v10027
  %12556 = vmatpush1.bf16.msra.mxu0 %v10026
  %12557 = vmatprep.subr.bf16.mxu0 %v10035
  %12558 = vmatpush1.bf16.msra.mxu0 %v10034
  %12559 = vmatprep.mubr.bf16.mxu0 %v5631
  %12560 = vmatmul.mubr.bf16.gmra.mrb[0].mxu0 %v5630
  %v12561 = vpop.f32.mrb[0].mxu0
  %v12562 = vadd.f32 %v12521, %v12561
  %v12563 = vpop.f32.mrb[0].mxu0
  %v12564 = vadd.f32 %v12523, %v12563
  %v12565 = vpop.f32.mrb[0].mxu0
  %v12566 = vpop.f32.mrb[0].mxu0
  %12567 = vdwg.mxu0
  %12568 = vmatprep.subr.bf16.mxu0 %v10043
  %12569 = vmatpush1.bf16.msra.mxu0 %v10042
  %12570 = vmatprep.subr.bf16.mxu0 %v10051
  %12571 = vmatpush1.bf16.msra.mxu0 %v10050
  %12572 = vmatprep.subr.bf16.mxu0 %v10059
  %12573 = vmatpush1.bf16.msra.mxu0 %v10058
  %12574 = vmatprep.subr.bf16.mxu0 %v10067
  %12575 = vmatpush1.bf16.msra.mxu0 %v10066
  %12576 = vmatprep.subr.bf16.mxu0 %v10075
  %12577 = vmatpush1.bf16.msra.mxu0 %v10074
  %12578 = vmatprep.subr.bf16.mxu0 %v10083
  %12579 = vmatpush1.bf16.msra.mxu0 %v10082
  %12580 = vmatprep.subr.bf16.mxu0 %v10091
  %12581 = vmatpush1.bf16.msra.mxu0 %v10090
  %12582 = vmatprep.subr.bf16.mxu0 %v10099
  %12583 = vmatpush1.bf16.msra.mxu0 %v10098
  %12584 = vmatprep.subr.bf16.mxu0 %v10107
  %12585 = vmatpush1.bf16.msra.mxu0 %v10106
  %12586 = vmatprep.subr.bf16.mxu0 %v10115
  %12587 = vmatpush1.bf16.msra.mxu0 %v10114
  %12588 = vmatprep.subr.bf16.mxu0 %v10123
  %12589 = vmatpush1.bf16.msra.mxu0 %v10122
  %12590 = vmatprep.subr.bf16.mxu0 %v10131
  %12591 = vmatpush1.bf16.msra.mxu0 %v10130
  %12592 = vmatprep.subr.bf16.mxu0 %v10139
  %12593 = vmatpush1.bf16.msra.mxu0 %v10138
  %12594 = vmatprep.subr.bf16.mxu0 %v10147
  %12595 = vmatpush1.bf16.msra.mxu0 %v10146
  %12596 = vmatprep.subr.bf16.mxu0 %v10155
  %12597 = vmatpush1.bf16.msra.mxu0 %v10154
  %12598 = vmatprep.subr.bf16.mxu0 %v10163
  %12599 = vmatpush1.bf16.msra.mxu0 %v10162
  %12600 = vmatprep.mubr.bf16.mxu0 %v5633
  %12601 = vmatmul.mubr.bf16.gmra.mrb[0].mxu0 %v5632
  %v12602 = vpop.f32.mrb[0].mxu0
  %v12603 = vadd.f32 %v12562, %v12602
  %v12604 = vpop.f32.mrb[0].mxu0
  %v12605 = vadd.f32 %v12564, %v12604
  %v12606 = vpop.f32.mrb[0].mxu0
  %v12607 = vpop.f32.mrb[0].mxu0
  %12608 = vdwg.mxu0
  %12609 = vmatprep.subr.bf16.mxu0 %v10171
  %12610 = vmatpush1.bf16.msra.mxu0 %v10170
  %12611 = vmatprep.subr.bf16.mxu0 %v10179
  %12612 = vmatpush1.bf16.msra.mxu0 %v10178
  %12613 = vmatprep.subr.bf16.mxu0 %v10187
  %12614 = vmatpush1.bf16.msra.mxu0 %v10186
  %12615 = vmatprep.subr.bf16.mxu0 %v10195
  %12616 = vmatpush1.bf16.msra.mxu0 %v10194
  %12617 = vmatprep.subr.bf16.mxu0 %v10203
  %12618 = vmatpush1.bf16.msra.mxu0 %v10202
  %12619 = vmatprep.subr.bf16.mxu0 %v10211
  %12620 = vmatpush1.bf16.msra.mxu0 %v10210
  %12621 = vmatprep.subr.bf16.mxu0 %v10219
  %12622 = vmatpush1.bf16.msra.mxu0 %v10218
  %12623 = vmatprep.subr.bf16.mxu0 %v10227
  %12624 = vmatpush1.bf16.msra.mxu0 %v10226
  %12625 = vmatprep.subr.bf16.mxu0 %v10235
  %12626 = vmatpush1.bf16.msra.mxu0 %v10234
  %12627 = vmatprep.subr.bf16.mxu0 %v10243
  %12628 = vmatpush1.bf16.msra.mxu0 %v10242
  %12629 = vmatprep.subr.bf16.mxu0 %v10251
  %12630 = vmatpush1.bf16.msra.mxu0 %v10250
  %12631 = vmatprep.subr.bf16.mxu0 %v10259
  %12632 = vmatpush1.bf16.msra.mxu0 %v10258
  %12633 = vmatprep.subr.bf16.mxu0 %v10267
  %12634 = vmatpush1.bf16.msra.mxu0 %v10266
  %12635 = vmatprep.subr.bf16.mxu0 %v10275
  %12636 = vmatpush1.bf16.msra.mxu0 %v10274
  %12637 = vmatprep.subr.bf16.mxu0 %v10283
  %12638 = vmatpush1.bf16.msra.mxu0 %v10282
  %12639 = vmatprep.subr.bf16.mxu0 %v10291
  %12640 = vmatpush1.bf16.msra.mxu0 %v10290
  %12641 = vmatprep.mubr.bf16.mxu0 %v5635
  %12642 = vmatmul.mubr.bf16.gmra.mrb[0].mxu0 %v5634
  %v12643 = vpop.f32.mrb[0].mxu0
  %v12644 = vadd.f32 %v12603, %v12643
  %v12645 = vpop.f32.mrb[0].mxu0
  %v12646 = vadd.f32 %v12605, %v12645
  %v12647 = vpop.f32.mrb[0].mxu0
  %v12648 = vpop.f32.mrb[0].mxu0
  %12649 = vdwg.mxu0
  %12650 = vmatprep.subr.bf16.mxu0 %v10299
  %12651 = vmatpush1.bf16.msra.mxu0 %v10298
  %12652 = vmatprep.subr.bf16.mxu0 %v10307
  %12653 = vmatpush1.bf16.msra.mxu0 %v10306
  %12654 = vmatprep.subr.bf16.mxu0 %v10315
  %12655 = vmatpush1.bf16.msra.mxu0 %v10314
  %12656 = vmatprep.subr.bf16.mxu0 %v10323
  %12657 = vmatpush1.bf16.msra.mxu0 %v10322
  %12658 = vmatprep.subr.bf16.mxu0 %v10331
  %12659 = vmatpush1.bf16.msra.mxu0 %v10330
  %12660 = vmatprep.subr.bf16.mxu0 %v10339
  %12661 = vmatpush1.bf16.msra.mxu0 %v10338
  %12662 = vmatprep.subr.bf16.mxu0 %v10347
  %12663 = vmatpush1.bf16.msra.mxu0 %v10346
  %12664 = vmatprep.subr.bf16.mxu0 %v10355
  %12665 = vmatpush1.bf16.msra.mxu0 %v10354
  %12666 = vmatprep.subr.bf16.mxu0 %v10363
  %12667 = vmatpush1.bf16.msra.mxu0 %v10362
  %12668 = vmatprep.subr.bf16.mxu0 %v10371
  %12669 = vmatpush1.bf16.msra.mxu0 %v10370
  %12670 = vmatprep.subr.bf16.mxu0 %v10379
  %12671 = vmatpush1.bf16.msra.mxu0 %v10378
  %12672 = vmatprep.subr.bf16.mxu0 %v10387
  %12673 = vmatpush1.bf16.msra.mxu0 %v10386
  %12674 = vmatprep.subr.bf16.mxu0 %v10395
  %12675 = vmatpush1.bf16.msra.mxu0 %v10394
  %12676 = vmatprep.subr.bf16.mxu0 %v10403
  %12677 = vmatpush1.bf16.msra.mxu0 %v10402
  %12678 = vmatprep.subr.bf16.mxu0 %v10411
  %12679 = vmatpush1.bf16.msra.mxu0 %v10410
  %12680 = vmatprep.subr.bf16.mxu0 %v10419
  %12681 = vmatpush1.bf16.msra.mxu0 %v10418
  %12682 = vmatprep.mubr.bf16.mxu0 %v5637
  %12683 = vmatmul.mubr.bf16.gmra.mrb[0].mxu0 %v5636
  %v12684 = vpop.f32.mrb[0].mxu0
  %v12685 = vadd.f32 %v12644, %v12684
  %v12686 = vpop.f32.mrb[0].mxu0
  %v12687 = vadd.f32 %v12646, %v12686
  %v12688 = vpop.f32.mrb[0].mxu0
  %v12689 = vpop.f32.mrb[0].mxu0
  %12690 = vdwg.mxu0
  %12691 = vmatprep.subr.bf16.mxu0 %v10427
  %12692 = vmatpush1.bf16.msra.mxu0 %v10426
  %12693 = vmatprep.subr.bf16.mxu0 %v10435
  %12694 = vmatpush1.bf16.msra.mxu0 %v10434
  %12695 = vmatprep.subr.bf16.mxu0 %v10443
  %12696 = vmatpush1.bf16.msra.mxu0 %v10442
  %12697 = vmatprep.subr.bf16.mxu0 %v10451
  %12698 = vmatpush1.bf16.msra.mxu0 %v10450
  %12699 = vmatprep.subr.bf16.mxu0 %v10459
  %12700 = vmatpush1.bf16.msra.mxu0 %v10458
  %12701 = vmatprep.subr.bf16.mxu0 %v10467
  %12702 = vmatpush1.bf16.msra.mxu0 %v10466
  %12703 = vmatprep.subr.bf16.mxu0 %v10475
  %12704 = vmatpush1.bf16.msra.mxu0 %v10474
  %12705 = vmatprep.subr.bf16.mxu0 %v10483
  %12706 = vmatpush1.bf16.msra.mxu0 %v10482
  %12707 = vmatprep.subr.bf16.mxu0 %v10491
  %12708 = vmatpush1.bf16.msra.mxu0 %v10490
  %12709 = vmatprep.subr.bf16.mxu0 %v10499
  %12710 = vmatpush1.bf16.msra.mxu0 %v10498
  %12711 = vmatprep.subr.bf16.mxu0 %v10507
  %12712 = vmatpush1.bf16.msra.mxu0 %v10506
  %12713 = vmatprep.subr.bf16.mxu0 %v10515
  %12714 = vmatpush1.bf16.msra.mxu0 %v10514
  %12715 = vmatprep.subr.bf16.mxu0 %v10523
  %12716 = vmatpush1.bf16.msra.mxu0 %v10522
  %12717 = vmatprep.subr.bf16.mxu0 %v10531
  %12718 = vmatpush1.bf16.msra.mxu0 %v10530
  %12719 = vmatprep.subr.bf16.mxu0 %v10539
  %12720 = vmatpush1.bf16.msra.mxu0 %v10538
  %12721 = vmatprep.subr.bf16.mxu0 %v10547
  %12722 = vmatpush1.bf16.msra.mxu0 %v10546
  %12723 = vmatprep.mubr.bf16.mxu0 %v5639
  %12724 = vmatmul.mubr.bf16.gmra.mrb[0].mxu0 %v5638
  %v12725 = vpop.f32.mrb[0].mxu0
  %v12726 = vadd.f32 %v12685, %v12725
  %v12727 = vpop.f32.mrb[0].mxu0
  %v12728 = vadd.f32 %v12687, %v12727
  %v12729 = vpop.f32.mrb[0].mxu0
  %v12730 = vpop.f32.mrb[0].mxu0
  %12731 = vdwg.mxu0
  %12732 = vmatprep.subr.bf16.mxu0 %v10555
  %12733 = vmatpush1.bf16.msra.mxu0 %v10554
  %12734 = vmatprep.subr.bf16.mxu0 %v10563
  %12735 = vmatpush1.bf16.msra.mxu0 %v10562
  %12736 = vmatprep.subr.bf16.mxu0 %v10571
  %12737 = vmatpush1.bf16.msra.mxu0 %v10570
  %12738 = vmatprep.subr.bf16.mxu0 %v10579
  %12739 = vmatpush1.bf16.msra.mxu0 %v10578
  %12740 = vmatprep.subr.bf16.mxu0 %v10587
  %12741 = vmatpush1.bf16.msra.mxu0 %v10586
  %12742 = vmatprep.subr.bf16.mxu0 %v10595
  %12743 = vmatpush1.bf16.msra.mxu0 %v10594
  %12744 = vmatprep.subr.bf16.mxu0 %v10603
  %12745 = vmatpush1.bf16.msra.mxu0 %v10602
  %12746 = vmatprep.subr.bf16.mxu0 %v10611
  %12747 = vmatpush1.bf16.msra.mxu0 %v10610
  %12748 = vmatprep.subr.bf16.mxu0 %v10619
  %12749 = vmatpush1.bf16.msra.mxu0 %v10618
  %12750 = vmatprep.subr.bf16.mxu0 %v10627
  %12751 = vmatpush1.bf16.msra.mxu0 %v10626
  %12752 = vmatprep.subr.bf16.mxu0 %v10635
  %12753 = vmatpush1.bf16.msra.mxu0 %v10634
  %12754 = vmatprep.subr.bf16.mxu0 %v10643
  %12755 = vmatpush1.bf16.msra.mxu0 %v10642
  %12756 = vmatprep.subr.bf16.mxu0 %v10651
  %12757 = vmatpush1.bf16.msra.mxu0 %v10650
  %12758 = vmatprep.subr.bf16.mxu0 %v10659
  %12759 = vmatpush1.bf16.msra.mxu0 %v10658
  %12760 = vmatprep.subr.bf16.mxu0 %v10667
  %12761 = vmatpush1.bf16.msra.mxu0 %v10666
  %12762 = vmatprep.subr.bf16.mxu0 %v10675
  %12763 = vmatpush1.bf16.msra.mxu0 %v10674
  %12764 = vmatprep.mubr.bf16.mxu0 %v5641
  %12765 = vmatmul.mubr.bf16.gmra.mrb[0].mxu0 %v5640
  %v12766 = vpop.f32.mrb[0].mxu0
  %v12767 = vadd.f32 %v12726, %v12766
  %v12768 = vpop.f32.mrb[0].mxu0
  %v12769 = vadd.f32 %v12728, %v12768
  %v12770 = vpop.f32.mrb[0].mxu0
  %v12771 = vpop.f32.mrb[0].mxu0
  %12772 = vdwg.mxu0
  %12773 = vmatprep.subr.bf16.mxu0 %v10683
  %12774 = vmatpush1.bf16.msra.mxu0 %v10682
  %12775 = vmatprep.subr.bf16.mxu0 %v10691
  %12776 = vmatpush1.bf16.msra.mxu0 %v10690
  %12777 = vmatprep.subr.bf16.mxu0 %v10699
  %12778 = vmatpush1.bf16.msra.mxu0 %v10698
  %12779 = vmatprep.subr.bf16.mxu0 %v10707
  %12780 = vmatpush1.bf16.msra.mxu0 %v10706
  %12781 = vmatprep.subr.bf16.mxu0 %v10715
  %12782 = vmatpush1.bf16.msra.mxu0 %v10714
  %12783 = vmatprep.subr.bf16.mxu0 %v10723
  %12784 = vmatpush1.bf16.msra.mxu0 %v10722
  %12785 = vmatprep.subr.bf16.mxu0 %v10731
  %12786 = vmatpush1.bf16.msra.mxu0 %v10730
  %12787 = vmatprep.subr.bf16.mxu0 %v10739
  %12788 = vmatpush1.bf16.msra.mxu0 %v10738
  %12789 = vmatprep.subr.bf16.mxu0 %v10747
  %12790 = vmatpush1.bf16.msra.mxu0 %v10746
  %12791 = vmatprep.subr.bf16.mxu0 %v10755
  %12792 = vmatpush1.bf16.msra.mxu0 %v10754
  %12793 = vmatprep.subr.bf16.mxu0 %v10763
  %12794 = vmatpush1.bf16.msra.mxu0 %v10762
  %12795 = vmatprep.subr.bf16.mxu0 %v10771
  %12796 = vmatpush1.bf16.msra.mxu0 %v10770
  %12797 = vmatprep.subr.bf16.mxu0 %v10779
  %12798 = vmatpush1.bf16.msra.mxu0 %v10778
  %12799 = vmatprep.subr.bf16.mxu0 %v10787
  %12800 = vmatpush1.bf16.msra.mxu0 %v10786
  %12801 = vmatprep.subr.bf16.mxu0 %v10795
  %12802 = vmatpush1.bf16.msra.mxu0 %v10794
  %12803 = vmatprep.subr.bf16.mxu0 %v10803
  %12804 = vmatpush1.bf16.msra.mxu0 %v10802
  %12805 = vmatprep.mubr.bf16.mxu0 %v5643
  %12806 = vmatmul.mubr.bf16.gmra.mrb[0].mxu0 %v5642
  %v12807 = vpop.f32.mrb[0].mxu0
  %v12808 = vadd.f32 %v12767, %v12807
  %v12809 = vpop.f32.mrb[0].mxu0
  %v12810 = vadd.f32 %v12769, %v12809
  %v12811 = vpop.f32.mrb[0].mxu0
  %v12812 = vpop.f32.mrb[0].mxu0
  %12813 = vdwg.mxu0
  %12814 = vmatprep.subr.bf16.mxu0 %v9789
  %12815 = vmatpush1.bf16.msra.mxu0 %v9788
  %12816 = vmatprep.subr.bf16.mxu0 %v9797
  %12817 = vmatpush1.bf16.msra.mxu0 %v9796
  %12818 = vmatprep.subr.bf16.mxu0 %v9805
  %12819 = vmatpush1.bf16.msra.mxu0 %v9804
  %12820 = vmatprep.subr.bf16.mxu0 %v9813
  %12821 = vmatpush1.bf16.msra.mxu0 %v9812
  %12822 = vmatprep.subr.bf16.mxu0 %v9821
  %12823 = vmatpush1.bf16.msra.mxu0 %v9820
  %12824 = vmatprep.subr.bf16.mxu0 %v9829
  %12825 = vmatpush1.bf16.msra.mxu0 %v9828
  %12826 = vmatprep.subr.bf16.mxu0 %v9837
  %12827 = vmatpush1.bf16.msra.mxu0 %v9836
  %12828 = vmatprep.subr.bf16.mxu0 %v9845
  %12829 = vmatpush1.bf16.msra.mxu0 %v9844
  %12830 = vmatprep.subr.bf16.mxu0 %v9853
  %12831 = vmatpush1.bf16.msra.mxu0 %v9852
  %12832 = vmatprep.subr.bf16.mxu0 %v9861
  %12833 = vmatpush1.bf16.msra.mxu0 %v9860
  %12834 = vmatprep.subr.bf16.mxu0 %v9869
  %12835 = vmatpush1.bf16.msra.mxu0 %v9868
  %12836 = vmatprep.subr.bf16.mxu0 %v9877
  %12837 = vmatpush1.bf16.msra.mxu0 %v9876
  %12838 = vmatprep.subr.bf16.mxu0 %v9885
  %12839 = vmatpush1.bf16.msra.mxu0 %v9884
  %12840 = vmatprep.subr.bf16.mxu0 %v9893
  %12841 = vmatpush1.bf16.msra.mxu0 %v9892
  %12842 = vmatprep.subr.bf16.mxu0 %v9901
  %12843 = vmatpush1.bf16.msra.mxu0 %v9900
  %12844 = vmatprep.subr.bf16.mxu0 %v9909
  %12845 = vmatpush1.bf16.msra.mxu0 %v9908
  %12846 = vmatprep.mubr.bf16.mxu0 %v5629
  %12847 = vmatmul.mubr.bf16.gmra.mrb[0].mxu0 %v5628
  %v12848 = vpop.f32.mrb[0].mxu0
  %v12849 = vadd.f32 %v6697, %v12848
  %v12850 = vpop.f32.mrb[0].mxu0
  %v12851 = vadd.f32 %v6701, %v12850
  %v12852 = vpop.f32.mrb[0].mxu0
  %v12853 = vpop.f32.mrb[0].mxu0
  %12854 = vdwg.mxu0
  %12855 = vmatprep.subr.bf16.mxu0 %v9917
  %12856 = vmatpush1.bf16.msra.mxu0 %v9916
  %12857 = vmatprep.subr.bf16.mxu0 %v9925
  %12858 = vmatpush1.bf16.msra.mxu0 %v9924
  %12859 = vmatprep.subr.bf16.mxu0 %v9933
  %12860 = vmatpush1.bf16.msra.mxu0 %v9932
  %12861 = vmatprep.subr.bf16.mxu0 %v9941
  %12862 = vmatpush1.bf16.msra.mxu0 %v9940
  %12863 = vmatprep.subr.bf16.mxu0 %v9949
  %12864 = vmatpush1.bf16.msra.mxu0 %v9948
  %12865 = vmatprep.subr.bf16.mxu0 %v9957
  %12866 = vmatpush1.bf16.msra.mxu0 %v9956
  %12867 = vmatprep.subr.bf16.mxu0 %v9965
  %12868 = vmatpush1.bf16.msra.mxu0 %v9964
  %12869 = vmatprep.subr.bf16.mxu0 %v9973
  %12870 = vmatpush1.bf16.msra.mxu0 %v9972
  %12871 = vmatprep.subr.bf16.mxu0 %v9981
  %12872 = vmatpush1.bf16.msra.mxu0 %v9980
  %12873 = vmatprep.subr.bf16.mxu0 %v9989
  %12874 = vmatpush1.bf16.msra.mxu0 %v9988
  %12875 = vmatprep.subr.bf16.mxu0 %v9997
  %12876 = vmatpush1.bf16.msra.mxu0 %v9996
  %12877 = vmatprep.subr.bf16.mxu0 %v10005
  %12878 = vmatpush1.bf16.msra.mxu0 %v10004
  %12879 = vmatprep.subr.bf16.mxu0 %v10013
  %12880 = vmatpush1.bf16.msra.mxu0 %v10012
  %12881 = vmatprep.subr.bf16.mxu0 %v10021
  %12882 = vmatpush1.bf16.msra.mxu0 %v10020
  %12883 = vmatprep.subr.bf16.mxu0 %v10029
  %12884 = vmatpush1.bf16.msra.mxu0 %v10028
  %12885 = vmatprep.subr.bf16.mxu0 %v10037
  %12886 = vmatpush1.bf16.msra.mxu0 %v10036
  %12887 = vmatprep.mubr.bf16.mxu0 %v5631
  %12888 = vmatmul.mubr.bf16.gmra.mrb[0].mxu0 %v5630
  %v12889 = vpop.f32.mrb[0].mxu0
  %v12890 = vadd.f32 %v12849, %v12889
  %v12891 = vpop.f32.mrb[0].mxu0
  %v12892 = vadd.f32 %v12851, %v12891
  %v12893 = vpop.f32.mrb[0].mxu0
  %v12894 = vpop.f32.mrb[0].mxu0
  %12895 = vdwg.mxu0
  %12896 = vmatprep.subr.bf16.mxu0 %v10045
  %12897 = vmatpush1.bf16.msra.mxu0 %v10044
  %12898 = vmatprep.subr.bf16.mxu0 %v10053
  %12899 = vmatpush1.bf16.msra.mxu0 %v10052
  %12900 = vmatprep.subr.bf16.mxu0 %v10061
  %12901 = vmatpush1.bf16.msra.mxu0 %v10060
  %12902 = vmatprep.subr.bf16.mxu0 %v10069
  %12903 = vmatpush1.bf16.msra.mxu0 %v10068
  %12904 = vmatprep.subr.bf16.mxu0 %v10077
  %12905 = vmatpush1.bf16.msra.mxu0 %v10076
  %12906 = vmatprep.subr.bf16.mxu0 %v10085
  %12907 = vmatpush1.bf16.msra.mxu0 %v10084
  %12908 = vmatprep.subr.bf16.mxu0 %v10093
  %12909 = vmatpush1.bf16.msra.mxu0 %v10092
  %12910 = vmatprep.subr.bf16.mxu0 %v10101
  %12911 = vmatpush1.bf16.msra.mxu0 %v10100
  %12912 = vmatprep.subr.bf16.mxu0 %v10109
  %12913 = vmatpush1.bf16.msra.mxu0 %v10108
  %12914 = vmatprep.subr.bf16.mxu0 %v10117
  %12915 = vmatpush1.bf16.msra.mxu0 %v10116
  %12916 = vmatprep.subr.bf16.mxu0 %v10125
  %12917 = vmatpush1.bf16.msra.mxu0 %v10124
  %12918 = vmatprep.subr.bf16.mxu0 %v10133
  %12919 = vmatpush1.bf16.msra.mxu0 %v10132
  %12920 = vmatprep.subr.bf16.mxu0 %v10141
  %12921 = vmatpush1.bf16.msra.mxu0 %v10140
  %12922 = vmatprep.subr.bf16.mxu0 %v10149
  %12923 = vmatpush1.bf16.msra.mxu0 %v10148
  %12924 = vmatprep.subr.bf16.mxu0 %v10157
  %12925 = vmatpush1.bf16.msra.mxu0 %v10156
  %12926 = vmatprep.subr.bf16.mxu0 %v10165
  %12927 = vmatpush1.bf16.msra.mxu0 %v10164
  %12928 = vmatprep.mubr.bf16.mxu0 %v5633
  %12929 = vmatmul.mubr.bf16.gmra.mrb[0].mxu0 %v5632
  %v12930 = vpop.f32.mrb[0].mxu0
  %v12931 = vadd.f32 %v12890, %v12930
  %v12932 = vpop.f32.mrb[0].mxu0
  %v12933 = vadd.f32 %v12892, %v12932
  %v12934 = vpop.f32.mrb[0].mxu0
  %v12935 = vpop.f32.mrb[0].mxu0
  %12936 = vdwg.mxu0
  %12937 = vmatprep.subr.bf16.mxu0 %v10173
  %12938 = vmatpush1.bf16.msra.mxu0 %v10172
  %12939 = vmatprep.subr.bf16.mxu0 %v10181
  %12940 = vmatpush1.bf16.msra.mxu0 %v10180
  %12941 = vmatprep.subr.bf16.mxu0 %v10189
  %12942 = vmatpush1.bf16.msra.mxu0 %v10188
  %12943 = vmatprep.subr.bf16.mxu0 %v10197
  %12944 = vmatpush1.bf16.msra.mxu0 %v10196
  %12945 = vmatprep.subr.bf16.mxu0 %v10205
  %12946 = vmatpush1.bf16.msra.mxu0 %v10204
  %12947 = vmatprep.subr.bf16.mxu0 %v10213
  %12948 = vmatpush1.bf16.msra.mxu0 %v10212
  %12949 = vmatprep.subr.bf16.mxu0 %v10221
  %12950 = vmatpush1.bf16.msra.mxu0 %v10220
  %12951 = vmatprep.subr.bf16.mxu0 %v10229
  %12952 = vmatpush1.bf16.msra.mxu0 %v10228
  %12953 = vmatprep.subr.bf16.mxu0 %v10237
  %12954 = vmatpush1.bf16.msra.mxu0 %v10236
  %12955 = vmatprep.subr.bf16.mxu0 %v10245
  %12956 = vmatpush1.bf16.msra.mxu0 %v10244
  %12957 = vmatprep.subr.bf16.mxu0 %v10253
  %12958 = vmatpush1.bf16.msra.mxu0 %v10252
  %12959 = vmatprep.subr.bf16.mxu0 %v10261
  %12960 = vmatpush1.bf16.msra.mxu0 %v10260
  %12961 = vmatprep.subr.bf16.mxu0 %v10269
  %12962 = vmatpush1.bf16.msra.mxu0 %v10268
  %12963 = vmatprep.subr.bf16.mxu0 %v10277
  %12964 = vmatpush1.bf16.msra.mxu0 %v10276
  %12965 = vmatprep.subr.bf16.mxu0 %v10285
  %12966 = vmatpush1.bf16.msra.mxu0 %v10284
  %12967 = vmatprep.subr.bf16.mxu0 %v10293
  %12968 = vmatpush1.bf16.msra.mxu0 %v10292
  %12969 = vmatprep.mubr.bf16.mxu0 %v5635
  %12970 = vmatmul.mubr.bf16.gmra.mrb[0].mxu0 %v5634
  %v12971 = vpop.f32.mrb[0].mxu0
  %v12972 = vadd.f32 %v12931, %v12971
  %v12973 = vpop.f32.mrb[0].mxu0
  %v12974 = vadd.f32 %v12933, %v12973
  %v12975 = vpop.f32.mrb[0].mxu0
  %v12976 = vpop.f32.mrb[0].mxu0
  %12977 = vdwg.mxu0
  %12978 = vmatprep.subr.bf16.mxu0 %v10301
  %12979 = vmatpush1.bf16.msra.mxu0 %v10300
  %12980 = vmatprep.subr.bf16.mxu0 %v10309
  %12981 = vmatpush1.bf16.msra.mxu0 %v10308
  %12982 = vmatprep.subr.bf16.mxu0 %v10317
  %12983 = vmatpush1.bf16.msra.mxu0 %v10316
  %12984 = vmatprep.subr.bf16.mxu0 %v10325
  %12985 = vmatpush1.bf16.msra.mxu0 %v10324
  %12986 = vmatprep.subr.bf16.mxu0 %v10333
  %12987 = vmatpush1.bf16.msra.mxu0 %v10332
  %12988 = vmatprep.subr.bf16.mxu0 %v10341
  %12989 = vmatpush1.bf16.msra.mxu0 %v10340
  %12990 = vmatprep.subr.bf16.mxu0 %v10349
  %12991 = vmatpush1.bf16.msra.mxu0 %v10348
  %12992 = vmatprep.subr.bf16.mxu0 %v10357
  %12993 = vmatpush1.bf16.msra.mxu0 %v10356
  %12994 = vmatprep.subr.bf16.mxu0 %v10365
  %12995 = vmatpush1.bf16.msra.mxu0 %v10364
  %12996 = vmatprep.subr.bf16.mxu0 %v10373
  %12997 = vmatpush1.bf16.msra.mxu0 %v10372
  %12998 = vmatprep.subr.bf16.mxu0 %v10381
  %12999 = vmatpush1.bf16.msra.mxu0 %v10380
  %13000 = vmatprep.subr.bf16.mxu0 %v10389
  %13001 = vmatpush1.bf16.msra.mxu0 %v10388
  %13002 = vmatprep.subr.bf16.mxu0 %v10397
  %13003 = vmatpush1.bf16.msra.mxu0 %v10396
  %13004 = vmatprep.subr.bf16.mxu0 %v10405
  %13005 = vmatpush1.bf16.msra.mxu0 %v10404
  %13006 = vmatprep.subr.bf16.mxu0 %v10413
  %13007 = vmatpush1.bf16.msra.mxu0 %v10412
  %13008 = vmatprep.subr.bf16.mxu0 %v10421
  %13009 = vmatpush1.bf16.msra.mxu0 %v10420
  %13010 = vmatprep.mubr.bf16.mxu0 %v5637
  %13011 = vmatmul.mubr.bf16.gmra.mrb[0].mxu0 %v5636
  %v13012 = vpop.f32.mrb[0].mxu0
  %v13013 = vadd.f32 %v12972, %v13012
  %v13014 = vpop.f32.mrb[0].mxu0
  %v13015 = vadd.f32 %v12974, %v13014
  %v13016 = vpop.f32.mrb[0].mxu0
  %v13017 = vpop.f32.mrb[0].mxu0
  %13018 = vdwg.mxu0
  %13019 = vmatprep.subr.bf16.mxu0 %v10429
  %13020 = vmatpush1.bf16.msra.mxu0 %v10428
  %13021 = vmatprep.subr.bf16.mxu0 %v10437
  %13022 = vmatpush1.bf16.msra.mxu0 %v10436
  %13023 = vmatprep.subr.bf16.mxu0 %v10445
  %13024 = vmatpush1.bf16.msra.mxu0 %v10444
  %13025 = vmatprep.subr.bf16.mxu0 %v10453
  %13026 = vmatpush1.bf16.msra.mxu0 %v10452
  %13027 = vmatprep.subr.bf16.mxu0 %v10461
  %13028 = vmatpush1.bf16.msra.mxu0 %v10460
  %13029 = vmatprep.subr.bf16.mxu0 %v10469
  %13030 = vmatpush1.bf16.msra.mxu0 %v10468
  %13031 = vmatprep.subr.bf16.mxu0 %v10477
  %13032 = vmatpush1.bf16.msra.mxu0 %v10476
  %13033 = vmatprep.subr.bf16.mxu0 %v10485
  %13034 = vmatpush1.bf16.msra.mxu0 %v10484
  %13035 = vmatprep.subr.bf16.mxu0 %v10493
  %13036 = vmatpush1.bf16.msra.mxu0 %v10492
  %13037 = vmatprep.subr.bf16.mxu0 %v10501
  %13038 = vmatpush1.bf16.msra.mxu0 %v10500
  %13039 = vmatprep.subr.bf16.mxu0 %v10509
  %13040 = vmatpush1.bf16.msra.mxu0 %v10508
  %13041 = vmatprep.subr.bf16.mxu0 %v10517
  %13042 = vmatpush1.bf16.msra.mxu0 %v10516
  %13043 = vmatprep.subr.bf16.mxu0 %v10525
  %13044 = vmatpush1.bf16.msra.mxu0 %v10524
  %13045 = vmatprep.subr.bf16.mxu0 %v10533
  %13046 = vmatpush1.bf16.msra.mxu0 %v10532
  %13047 = vmatprep.subr.bf16.mxu0 %v10541
  %13048 = vmatpush1.bf16.msra.mxu0 %v10540
  %13049 = vmatprep.subr.bf16.mxu0 %v10549
  %13050 = vmatpush1.bf16.msra.mxu0 %v10548
  %13051 = vmatprep.mubr.bf16.mxu0 %v5639
  %13052 = vmatmul.mubr.bf16.gmra.mrb[0].mxu0 %v5638
  %v13053 = vpop.f32.mrb[0].mxu0
  %v13054 = vadd.f32 %v13013, %v13053
  %v13055 = vpop.f32.mrb[0].mxu0
  %v13056 = vadd.f32 %v13015, %v13055
  %v13057 = vpop.f32.mrb[0].mxu0
  %v13058 = vpop.f32.mrb[0].mxu0
  %13059 = vdwg.mxu0
  %13060 = vmatprep.subr.bf16.mxu0 %v10557
  %13061 = vmatpush1.bf16.msra.mxu0 %v10556
  %13062 = vmatprep.subr.bf16.mxu0 %v10565
  %13063 = vmatpush1.bf16.msra.mxu0 %v10564
  %13064 = vmatprep.subr.bf16.mxu0 %v10573
  %13065 = vmatpush1.bf16.msra.mxu0 %v10572
  %13066 = vmatprep.subr.bf16.mxu0 %v10581
  %13067 = vmatpush1.bf16.msra.mxu0 %v10580
  %13068 = vmatprep.subr.bf16.mxu0 %v10589
  %13069 = vmatpush1.bf16.msra.mxu0 %v10588
  %13070 = vmatprep.subr.bf16.mxu0 %v10597
  %13071 = vmatpush1.bf16.msra.mxu0 %v10596
  %13072 = vmatprep.subr.bf16.mxu0 %v10605
  %13073 = vmatpush1.bf16.msra.mxu0 %v10604
  %13074 = vmatprep.subr.bf16.mxu0 %v10613
  %13075 = vmatpush1.bf16.msra.mxu0 %v10612
  %13076 = vmatprep.subr.bf16.mxu0 %v10621
  %13077 = vmatpush1.bf16.msra.mxu0 %v10620
  %13078 = vmatprep.subr.bf16.mxu0 %v10629
  %13079 = vmatpush1.bf16.msra.mxu0 %v10628
  %13080 = vmatprep.subr.bf16.mxu0 %v10637
  %13081 = vmatpush1.bf16.msra.mxu0 %v10636
  %13082 = vmatprep.subr.bf16.mxu0 %v10645
  %13083 = vmatpush1.bf16.msra.mxu0 %v10644
  %13084 = vmatprep.subr.bf16.mxu0 %v10653
  %13085 = vmatpush1.bf16.msra.mxu0 %v10652
  %13086 = vmatprep.subr.bf16.mxu0 %v10661
  %13087 = vmatpush1.bf16.msra.mxu0 %v10660
  %13088 = vmatprep.subr.bf16.mxu0 %v10669
  %13089 = vmatpush1.bf16.msra.mxu0 %v10668
  %13090 = vmatprep.subr.bf16.mxu0 %v10677
  %13091 = vmatpush1.bf16.msra.mxu0 %v10676
  %13092 = vmatprep.mubr.bf16.mxu0 %v5641
  %13093 = vmatmul.mubr.bf16.gmra.mrb[0].mxu0 %v5640
  %v13094 = vpop.f32.mrb[0].mxu0
  %v13095 = vadd.f32 %v13054, %v13094
  %v13096 = vpop.f32.mrb[0].mxu0
  %v13097 = vadd.f32 %v13056, %v13096
  %v13098 = vpop.f32.mrb[0].mxu0
  %v13099 = vpop.f32.mrb[0].mxu0
  %13100 = vdwg.mxu0
  %13101 = vmatprep.subr.bf16.mxu0 %v10685
  %13102 = vmatpush1.bf16.msra.mxu0 %v10684
  %13103 = vmatprep.subr.bf16.mxu0 %v10693
  %13104 = vmatpush1.bf16.msra.mxu0 %v10692
  %13105 = vmatprep.subr.bf16.mxu0 %v10701
  %13106 = vmatpush1.bf16.msra.mxu0 %v10700
  %13107 = vmatprep.subr.bf16.mxu0 %v10709
  %13108 = vmatpush1.bf16.msra.mxu0 %v10708
  %13109 = vmatprep.subr.bf16.mxu0 %v10717
  %13110 = vmatpush1.bf16.msra.mxu0 %v10716
  %13111 = vmatprep.subr.bf16.mxu0 %v10725
  %13112 = vmatpush1.bf16.msra.mxu0 %v10724
  %13113 = vmatprep.subr.bf16.mxu0 %v10733
  %13114 = vmatpush1.bf16.msra.mxu0 %v10732
  %13115 = vmatprep.subr.bf16.mxu0 %v10741
  %13116 = vmatpush1.bf16.msra.mxu0 %v10740
  %13117 = vmatprep.subr.bf16.mxu0 %v10749
  %13118 = vmatpush1.bf16.msra.mxu0 %v10748
  %13119 = vmatprep.subr.bf16.mxu0 %v10757
  %13120 = vmatpush1.bf16.msra.mxu0 %v10756
  %13121 = vmatprep.subr.bf16.mxu0 %v10765
  %13122 = vmatpush1.bf16.msra.mxu0 %v10764
  %13123 = vmatprep.subr.bf16.mxu0 %v10773
  %13124 = vmatpush1.bf16.msra.mxu0 %v10772
  %13125 = vmatprep.subr.bf16.mxu0 %v10781
  %13126 = vmatpush1.bf16.msra.mxu0 %v10780
  %13127 = vmatprep.subr.bf16.mxu0 %v10789
  %13128 = vmatpush1.bf16.msra.mxu0 %v10788
  %13129 = vmatprep.subr.bf16.mxu0 %v10797
  %13130 = vmatpush1.bf16.msra.mxu0 %v10796
  %13131 = vmatprep.subr.bf16.mxu0 %v10805
  %13132 = vmatpush1.bf16.msra.mxu0 %v10804
  %13133 = vmatprep.mubr.bf16.mxu0 %v5643
  %13134 = vmatmul.mubr.bf16.gmra.mrb[0].mxu0 %v5642
  %v13135 = vpop.f32.mrb[0].mxu0
  %v13136 = vadd.f32 %v13095, %v13135
  %v13137 = vpop.f32.mrb[0].mxu0
  %v13138 = vadd.f32 %v13097, %v13137
  %v13139 = vpop.f32.mrb[0].mxu0
  %v13140 = vpop.f32.mrb[0].mxu0
  %13141 = vdwg.mxu0
  %v13142 = vmax.f32 %v12152, 0.0
  %v13143 = vmax.f32 %v12154, 0.0
  %v13144 = vmax.f32 %v12480, 0.0
  %v13145 = vmax.f32 %v12482, 0.0
  %v13146 = vpack.c.bf16 %v13142, %v13142
  %v13147 = vpack.c.bf16 %v13143, %v13143
  %v13148 = vpack.c.bf16 %v13144, %v13144
  %v13149 = vpack.c.bf16 %v13145, %v13145
  %v13150 = vld [vmem:[%s5] sm:$0xff]
  %v13151 = vld [vmem:[%s5 + $0x8] sm:$0xff]
  %v13152 = vld [vmem:[%s5 + $0x10] sm:$0xff]
  %v13153 = vld [vmem:[%s5 + $0x18] sm:$0xff]
  %v13154 = vld [vmem:[%s5 + $0x20] sm:$0xff]
  %v13155 = vld [vmem:[%s5 + $0x28] sm:$0xff]
  %v13156 = vld [vmem:[%s5 + $0x30] sm:$0xff]
  %v13157 = vld [vmem:[%s5 + $0x38] sm:$0xff]
  %v13158 = vld [vmem:[%s5 + $0x40] sm:$0xff]
  %v13159 = vld [vmem:[%s5 + $0x48] sm:$0xff]
  %v13160 = vld [vmem:[%s5 + $0x50] sm:$0xff]
  %v13161 = vld [vmem:[%s5 + $0x58] sm:$0xff]
  %v13162 = vld [vmem:[%s5 + $0x60] sm:$0xff]
  %v13163 = vld [vmem:[%s5 + $0x68] sm:$0xff]
  %v13164 = vld [vmem:[%s5 + $0x70] sm:$0xff]
  %v13165 = vld [vmem:[%s5 + $0x78] sm:$0xff]
  %v13166 = vld [vmem:[%s5 + $0x80] sm:$0xff]
  %v13167 = vld [vmem:[%s5 + $0x88] sm:$0xff]
  %v13168 = vld [vmem:[%s5 + $0x90] sm:$0xff]
  %v13169 = vld [vmem:[%s5 + $0x98] sm:$0xff]
  %v13170 = vld [vmem:[%s5 + $0xa0] sm:$0xff]
  %v13171 = vld [vmem:[%s5 + $0xa8] sm:$0xff]
  %v13172 = vld [vmem:[%s5 + $0xb0] sm:$0xff]
  %v13173 = vld [vmem:[%s5 + $0xb8] sm:$0xff]
  %v13174 = vld [vmem:[%s5 + $0xc0] sm:$0xff]
  %v13175 = vld [vmem:[%s5 + $0xc8] sm:$0xff]
  %v13176 = vld [vmem:[%s5 + $0xd0] sm:$0xff]
  %v13177 = vld [vmem:[%s5 + $0xd8] sm:$0xff]
  %v13178 = vld [vmem:[%s5 + $0xe0] sm:$0xff]
  %v13179 = vld [vmem:[%s5 + $0xe8] sm:$0xff]
  %v13180 = vld [vmem:[%s5 + $0xf0] sm:$0xff]
  %v13181 = vld [vmem:[%s5 + $0xf8] sm:$0xff]
  %v13182 = vld [vmem:[%s5 + $0x100] sm:$0xff]
  %v13183 = vld [vmem:[%s5 + $0x108] sm:$0xff]
  %v13184 = vld [vmem:[%s5 + $0x110] sm:$0xff]
  %v13185 = vld [vmem:[%s5 + $0x118] sm:$0xff]
  %v13186 = vld [vmem:[%s5 + $0x120] sm:$0xff]
  %v13187 = vld [vmem:[%s5 + $0x128] sm:$0xff]
  %v13188 = vld [vmem:[%s5 + $0x130] sm:$0xff]
  %v13189 = vld [vmem:[%s5 + $0x138] sm:$0xff]
  %v13190 = vld [vmem:[%s5 + $0x140] sm:$0xff]
  %v13191 = vld [vmem:[%s5 + $0x148] sm:$0xff]
  %v13192 = vld [vmem:[%s5 + $0x150] sm:$0xff]
  %v13193 = vld [vmem:[%s5 + $0x158] sm:$0xff]
  %v13194 = vld [vmem:[%s5 + $0x160] sm:$0xff]
  %v13195 = vld [vmem:[%s5 + $0x168] sm:$0xff]
  %v13196 = vld [vmem:[%s5 + $0x170] sm:$0xff]
  %v13197 = vld [vmem:[%s5 + $0x178] sm:$0xff]
  %v13198 = vld [vmem:[%s5 + $0x180] sm:$0xff]
  %v13199 = vld [vmem:[%s5 + $0x188] sm:$0xff]
  %v13200 = vld [vmem:[%s5 + $0x190] sm:$0xff]
  %v13201 = vld [vmem:[%s5 + $0x198] sm:$0xff]
  %v13202 = vld [vmem:[%s5 + $0x1a0] sm:$0xff]
  %v13203 = vld [vmem:[%s5 + $0x1a8] sm:$0xff]
  %v13204 = vld [vmem:[%s5 + $0x1b0] sm:$0xff]
  %v13205 = vld [vmem:[%s5 + $0x1b8] sm:$0xff]
  %v13206 = vld [vmem:[%s5 + $0x1c0] sm:$0xff]
  %v13207 = vld [vmem:[%s5 + $0x1c8] sm:$0xff]
  %v13208 = vld [vmem:[%s5 + $0x1d0] sm:$0xff]
  %v13209 = vld [vmem:[%s5 + $0x1d8] sm:$0xff]
  %v13210 = vld [vmem:[%s5 + $0x1e0] sm:$0xff]
  %v13211 = vld [vmem:[%s5 + $0x1e8] sm:$0xff]
  %v13212 = vld [vmem:[%s5 + $0x1f0] sm:$0xff]
  %v13213 = vld [vmem:[%s5 + $0x1f8] sm:$0xff]
  %v13214 = vld [vmem:[%s5 + $0x200] sm:$0xff]
  %v13215 = vld [vmem:[%s5 + $0x208] sm:$0xff]
  %v13216 = vld [vmem:[%s5 + $0x210] sm:$0xff]
  %v13217 = vld [vmem:[%s5 + $0x218] sm:$0xff]
  %v13218 = vld [vmem:[%s5 + $0x220] sm:$0xff]
  %v13219 = vld [vmem:[%s5 + $0x228] sm:$0xff]
  %v13220 = vld [vmem:[%s5 + $0x230] sm:$0xff]
  %v13221 = vld [vmem:[%s5 + $0x238] sm:$0xff]
  %v13222 = vld [vmem:[%s5 + $0x240] sm:$0xff]
  %v13223 = vld [vmem:[%s5 + $0x248] sm:$0xff]
  %v13224 = vld [vmem:[%s5 + $0x250] sm:$0xff]
  %v13225 = vld [vmem:[%s5 + $0x258] sm:$0xff]
  %v13226 = vld [vmem:[%s5 + $0x260] sm:$0xff]
  %v13227 = vld [vmem:[%s5 + $0x268] sm:$0xff]
  %v13228 = vld [vmem:[%s5 + $0x270] sm:$0xff]
  %v13229 = vld [vmem:[%s5 + $0x278] sm:$0xff]
  %v13230 = vld [vmem:[%s5 + $0x280] sm:$0xff]
  %v13231 = vld [vmem:[%s5 + $0x288] sm:$0xff]
  %v13232 = vld [vmem:[%s5 + $0x290] sm:$0xff]
  %v13233 = vld [vmem:[%s5 + $0x298] sm:$0xff]
  %v13234 = vld [vmem:[%s5 + $0x2a0] sm:$0xff]
  %v13235 = vld [vmem:[%s5 + $0x2a8] sm:$0xff]
  %v13236 = vld [vmem:[%s5 + $0x2b0] sm:$0xff]
  %v13237 = vld [vmem:[%s5 + $0x2b8] sm:$0xff]
  %v13238 = vld [vmem:[%s5 + $0x2c0] sm:$0xff]
  %v13239 = vld [vmem:[%s5 + $0x2c8] sm:$0xff]
  %v13240 = vld [vmem:[%s5 + $0x2d0] sm:$0xff]
  %v13241 = vld [vmem:[%s5 + $0x2d8] sm:$0xff]
  %v13242 = vld [vmem:[%s5 + $0x2e0] sm:$0xff]
  %v13243 = vld [vmem:[%s5 + $0x2e8] sm:$0xff]
  %v13244 = vld [vmem:[%s5 + $0x2f0] sm:$0xff]
  %v13245 = vld [vmem:[%s5 + $0x2f8] sm:$0xff]
  %v13246 = vld [vmem:[%s5 + $0x300] sm:$0xff]
  %v13247 = vld [vmem:[%s5 + $0x308] sm:$0xff]
  %v13248 = vld [vmem:[%s5 + $0x310] sm:$0xff]
  %v13249 = vld [vmem:[%s5 + $0x318] sm:$0xff]
  %v13250 = vld [vmem:[%s5 + $0x320] sm:$0xff]
  %v13251 = vld [vmem:[%s5 + $0x328] sm:$0xff]
  %v13252 = vld [vmem:[%s5 + $0x330] sm:$0xff]
  %v13253 = vld [vmem:[%s5 + $0x338] sm:$0xff]
  %v13254 = vld [vmem:[%s5 + $0x340] sm:$0xff]
  %v13255 = vld [vmem:[%s5 + $0x348] sm:$0xff]
  %v13256 = vld [vmem:[%s5 + $0x350] sm:$0xff]
  %v13257 = vld [vmem:[%s5 + $0x358] sm:$0xff]
  %v13258 = vld [vmem:[%s5 + $0x360] sm:$0xff]
  %v13259 = vld [vmem:[%s5 + $0x368] sm:$0xff]
  %v13260 = vld [vmem:[%s5 + $0x370] sm:$0xff]
  %v13261 = vld [vmem:[%s5 + $0x378] sm:$0xff]
  %v13262 = vld [vmem:[%s5 + $0x380] sm:$0xff]
  %v13263 = vld [vmem:[%s5 + $0x388] sm:$0xff]
  %v13264 = vld [vmem:[%s5 + $0x390] sm:$0xff]
  %v13265 = vld [vmem:[%s5 + $0x398] sm:$0xff]
  %v13266 = vld [vmem:[%s5 + $0x3a0] sm:$0xff]
  %v13267 = vld [vmem:[%s5 + $0x3a8] sm:$0xff]
  %v13268 = vld [vmem:[%s5 + $0x3b0] sm:$0xff]
  %v13269 = vld [vmem:[%s5 + $0x3b8] sm:$0xff]
  %v13270 = vld [vmem:[%s5 + $0x3c0] sm:$0xff]
  %v13271 = vld [vmem:[%s5 + $0x3c8] sm:$0xff]
  %v13272 = vld [vmem:[%s5 + $0x3d0] sm:$0xff]
  %v13273 = vld [vmem:[%s5 + $0x3d8] sm:$0xff]
  %v13274 = vld [vmem:[%s5 + $0x3e0] sm:$0xff]
  %v13275 = vld [vmem:[%s5 + $0x3e8] sm:$0xff]
  %v13276 = vld [vmem:[%s5 + $0x3f0] sm:$0xff]
  %v13277 = vld [vmem:[%s5 + $0x3f8] sm:$0xff]
  %v13278 = vld [vmem:[%s6] sm:$0xf]
  %v13280 = vlaneseq
  %v13281 = vshrl.u32 %v13280, 7
  %v13282 = vsub.s32 0, %v13281
  %v13283 = vrot.slane %v13278, %v13282
  %v13284 = vlaneseq
  %v13285 = vshrl.u32 %v13284, 7
  %v13286 = vsub.s32 1, %v13285
  %v13287 = vrot.slane %v13278, %v13286
  %v13288 = vlaneseq
  %v13289 = vshrl.u32 %v13288, 7
  %v13290 = vsub.s32 2, %v13289
  %v13291 = vrot.slane %v13278, %v13290
  %v13292 = vlaneseq
  %v13293 = vshrl.u32 %v13292, 7
  %v13294 = vsub.s32 3, %v13293
  %v13295 = vrot.slane %v13278, %v13294
  %v13428 = vunpack.c.l.b16 %v13150
  %v13429 = vunpack.c.h.b16 %v13150
  %v13430 = vunpack.c.l.b16 %v13151
  %v13431 = vunpack.c.h.b16 %v13151
  %v13432 = vunpack.c.l.b16 %v13152
  %v13433 = vunpack.c.h.b16 %v13152
  %v13434 = vunpack.c.l.b16 %v13153
  %v13435 = vunpack.c.h.b16 %v13153
  %v13436 = vunpack.c.l.b16 %v13154
  %v13437 = vunpack.c.h.b16 %v13154
  %v13438 = vunpack.c.l.b16 %v13155
  %v13439 = vunpack.c.h.b16 %v13155
  %v13440 = vunpack.c.l.b16 %v13156
  %v13441 = vunpack.c.h.b16 %v13156
  %v13442 = vunpack.c.l.b16 %v13157
  %v13443 = vunpack.c.h.b16 %v13157
  %v13444 = vunpack.c.l.b16 %v13158
  %v13445 = vunpack.c.h.b16 %v13158
  %v13446 = vunpack.c.l.b16 %v13159
  %v13447 = vunpack.c.h.b16 %v13159
  %v13448 = vunpack.c.l.b16 %v13160
  %v13449 = vunpack.c.h.b16 %v13160
  %v13450 = vunpack.c.l.b16 %v13161
  %v13451 = vunpack.c.h.b16 %v13161
  %v13452 = vunpack.c.l.b16 %v13162
  %v13453 = vunpack.c.h.b16 %v13162
  %v13454 = vunpack.c.l.b16 %v13163
  %v13455 = vunpack.c.h.b16 %v13163
  %v13456 = vunpack.c.l.b16 %v13164
  %v13457 = vunpack.c.h.b16 %v13164
  %v13458 = vunpack.c.l.b16 %v13165
  %v13459 = vunpack.c.h.b16 %v13165
  %v13460 = vunpack.c.l.b16 %v13166
  %v13461 = vunpack.c.h.b16 %v13166
  %v13462 = vunpack.c.l.b16 %v13167
  %v13463 = vunpack.c.h.b16 %v13167
  %v13464 = vunpack.c.l.b16 %v13168
  %v13465 = vunpack.c.h.b16 %v13168
  %v13466 = vunpack.c.l.b16 %v13169
  %v13467 = vunpack.c.h.b16 %v13169
  %v13468 = vunpack.c.l.b16 %v13170
  %v13469 = vunpack.c.h.b16 %v13170
  %v13470 = vunpack.c.l.b16 %v13171
  %v13471 = vunpack.c.h.b16 %v13171
  %v13472 = vunpack.c.l.b16 %v13172
  %v13473 = vunpack.c.h.b16 %v13172
  %v13474 = vunpack.c.l.b16 %v13173
  %v13475 = vunpack.c.h.b16 %v13173
  %v13476 = vunpack.c.l.b16 %v13174
  %v13477 = vunpack.c.h.b16 %v13174
  %v13478 = vunpack.c.l.b16 %v13175
  %v13479 = vunpack.c.h.b16 %v13175
  %v13480 = vunpack.c.l.b16 %v13176
  %v13481 = vunpack.c.h.b16 %v13176
  %v13482 = vunpack.c.l.b16 %v13177
  %v13483 = vunpack.c.h.b16 %v13177
  %v13484 = vunpack.c.l.b16 %v13178
  %v13485 = vunpack.c.h.b16 %v13178
  %v13486 = vunpack.c.l.b16 %v13179
  %v13487 = vunpack.c.h.b16 %v13179
  %v13488 = vunpack.c.l.b16 %v13180
  %v13489 = vunpack.c.h.b16 %v13180
  %v13490 = vunpack.c.l.b16 %v13181
  %v13491 = vunpack.c.h.b16 %v13181
  %v13492 = vunpack.c.l.b16 %v13182
  %v13493 = vunpack.c.h.b16 %v13182
  %v13494 = vunpack.c.l.b16 %v13183
  %v13495 = vunpack.c.h.b16 %v13183
  %v13496 = vunpack.c.l.b16 %v13184
  %v13497 = vunpack.c.h.b16 %v13184
  %v13498 = vunpack.c.l.b16 %v13185
  %v13499 = vunpack.c.h.b16 %v13185
  %v13500 = vunpack.c.l.b16 %v13186
  %v13501 = vunpack.c.h.b16 %v13186
  %v13502 = vunpack.c.l.b16 %v13187
  %v13503 = vunpack.c.h.b16 %v13187
  %v13504 = vunpack.c.l.b16 %v13188
  %v13505 = vunpack.c.h.b16 %v13188
  %v13506 = vunpack.c.l.b16 %v13189
  %v13507 = vunpack.c.h.b16 %v13189
  %v13508 = vunpack.c.l.b16 %v13190
  %v13509 = vunpack.c.h.b16 %v13190
  %v13510 = vunpack.c.l.b16 %v13191
  %v13511 = vunpack.c.h.b16 %v13191
  %v13512 = vunpack.c.l.b16 %v13192
  %v13513 = vunpack.c.h.b16 %v13192
  %v13514 = vunpack.c.l.b16 %v13193
  %v13515 = vunpack.c.h.b16 %v13193
  %v13516 = vunpack.c.l.b16 %v13194
  %v13517 = vunpack.c.h.b16 %v13194
  %v13518 = vunpack.c.l.b16 %v13195
  %v13519 = vunpack.c.h.b16 %v13195
  %v13520 = vunpack.c.l.b16 %v13196
  %v13521 = vunpack.c.h.b16 %v13196
  %v13522 = vunpack.c.l.b16 %v13197
  %v13523 = vunpack.c.h.b16 %v13197
  %v13524 = vunpack.c.l.b16 %v13198
  %v13525 = vunpack.c.h.b16 %v13198
  %v13526 = vunpack.c.l.b16 %v13199
  %v13527 = vunpack.c.h.b16 %v13199
  %v13528 = vunpack.c.l.b16 %v13200
  %v13529 = vunpack.c.h.b16 %v13200
  %v13530 = vunpack.c.l.b16 %v13201
  %v13531 = vunpack.c.h.b16 %v13201
  %v13532 = vunpack.c.l.b16 %v13202
  %v13533 = vunpack.c.h.b16 %v13202
  %v13534 = vunpack.c.l.b16 %v13203
  %v13535 = vunpack.c.h.b16 %v13203
  %v13536 = vunpack.c.l.b16 %v13204
  %v13537 = vunpack.c.h.b16 %v13204
  %v13538 = vunpack.c.l.b16 %v13205
  %v13539 = vunpack.c.h.b16 %v13205
  %v13540 = vunpack.c.l.b16 %v13206
  %v13541 = vunpack.c.h.b16 %v13206
  %v13542 = vunpack.c.l.b16 %v13207
  %v13543 = vunpack.c.h.b16 %v13207
  %v13544 = vunpack.c.l.b16 %v13208
  %v13545 = vunpack.c.h.b16 %v13208
  %v13546 = vunpack.c.l.b16 %v13209
  %v13547 = vunpack.c.h.b16 %v13209
  %v13548 = vunpack.c.l.b16 %v13210
  %v13549 = vunpack.c.h.b16 %v13210
  %v13550 = vunpack.c.l.b16 %v13211
  %v13551 = vunpack.c.h.b16 %v13211
  %v13552 = vunpack.c.l.b16 %v13212
  %v13553 = vunpack.c.h.b16 %v13212
  %v13554 = vunpack.c.l.b16 %v13213
  %v13555 = vunpack.c.h.b16 %v13213
  %v13556 = vunpack.c.l.b16 %v13214
  %v13557 = vunpack.c.h.b16 %v13214
  %v13558 = vunpack.c.l.b16 %v13215
  %v13559 = vunpack.c.h.b16 %v13215
  %v13560 = vunpack.c.l.b16 %v13216
  %v13561 = vunpack.c.h.b16 %v13216
  %v13562 = vunpack.c.l.b16 %v13217
  %v13563 = vunpack.c.h.b16 %v13217
  %v13564 = vunpack.c.l.b16 %v13218
  %v13565 = vunpack.c.h.b16 %v13218
  %v13566 = vunpack.c.l.b16 %v13219
  %v13567 = vunpack.c.h.b16 %v13219
  %v13568 = vunpack.c.l.b16 %v13220
  %v13569 = vunpack.c.h.b16 %v13220
  %v13570 = vunpack.c.l.b16 %v13221
  %v13571 = vunpack.c.h.b16 %v13221
  %v13572 = vunpack.c.l.b16 %v13222
  %v13573 = vunpack.c.h.b16 %v13222
  %v13574 = vunpack.c.l.b16 %v13223
  %v13575 = vunpack.c.h.b16 %v13223
  %v13576 = vunpack.c.l.b16 %v13224
  %v13577 = vunpack.c.h.b16 %v13224
  %v13578 = vunpack.c.l.b16 %v13225
  %v13579 = vunpack.c.h.b16 %v13225
  %v13580 = vunpack.c.l.b16 %v13226
  %v13581 = vunpack.c.h.b16 %v13226
  %v13582 = vunpack.c.l.b16 %v13227
  %v13583 = vunpack.c.h.b16 %v13227
  %v13584 = vunpack.c.l.b16 %v13228
  %v13585 = vunpack.c.h.b16 %v13228
  %v13586 = vunpack.c.l.b16 %v13229
  %v13587 = vunpack.c.h.b16 %v13229
  %v13588 = vunpack.c.l.b16 %v13230
  %v13589 = vunpack.c.h.b16 %v13230
  %v13590 = vunpack.c.l.b16 %v13231
  %v13591 = vunpack.c.h.b16 %v13231
  %v13592 = vunpack.c.l.b16 %v13232
  %v13593 = vunpack.c.h.b16 %v13232
  %v13594 = vunpack.c.l.b16 %v13233
  %v13595 = vunpack.c.h.b16 %v13233
  %v13596 = vunpack.c.l.b16 %v13234
  %v13597 = vunpack.c.h.b16 %v13234
  %v13598 = vunpack.c.l.b16 %v13235
  %v13599 = vunpack.c.h.b16 %v13235
  %v13600 = vunpack.c.l.b16 %v13236
  %v13601 = vunpack.c.h.b16 %v13236
  %v13602 = vunpack.c.l.b16 %v13237
  %v13603 = vunpack.c.h.b16 %v13237
  %v13604 = vunpack.c.l.b16 %v13238
  %v13605 = vunpack.c.h.b16 %v13238
  %v13606 = vunpack.c.l.b16 %v13239
  %v13607 = vunpack.c.h.b16 %v13239
  %v13608 = vunpack.c.l.b16 %v13240
  %v13609 = vunpack.c.h.b16 %v13240
  %v13610 = vunpack.c.l.b16 %v13241
  %v13611 = vunpack.c.h.b16 %v13241
  %v13612 = vunpack.c.l.b16 %v13242
  %v13613 = vunpack.c.h.b16 %v13242
  %v13614 = vunpack.c.l.b16 %v13243
  %v13615 = vunpack.c.h.b16 %v13243
  %v13616 = vunpack.c.l.b16 %v13244
  %v13617 = vunpack.c.h.b16 %v13244
  %v13618 = vunpack.c.l.b16 %v13245
  %v13619 = vunpack.c.h.b16 %v13245
  %v13620 = vunpack.c.l.b16 %v13246
  %v13621 = vunpack.c.h.b16 %v13246
  %v13622 = vunpack.c.l.b16 %v13247
  %v13623 = vunpack.c.h.b16 %v13247
  %v13624 = vunpack.c.l.b16 %v13248
  %v13625 = vunpack.c.h.b16 %v13248
  %v13626 = vunpack.c.l.b16 %v13249
  %v13627 = vunpack.c.h.b16 %v13249
  %v13628 = vunpack.c.l.b16 %v13250
  %v13629 = vunpack.c.h.b16 %v13250
  %v13630 = vunpack.c.l.b16 %v13251
  %v13631 = vunpack.c.h.b16 %v13251
  %v13632 = vunpack.c.l.b16 %v13252
  %v13633 = vunpack.c.h.b16 %v13252
  %v13634 = vunpack.c.l.b16 %v13253
  %v13635 = vunpack.c.h.b16 %v13253
  %v13636 = vunpack.c.l.b16 %v13254
  %v13637 = vunpack.c.h.b16 %v13254
  %v13638 = vunpack.c.l.b16 %v13255
  %v13639 = vunpack.c.h.b16 %v13255
  %v13640 = vunpack.c.l.b16 %v13256
  %v13641 = vunpack.c.h.b16 %v13256
  %v13642 = vunpack.c.l.b16 %v13257
  %v13643 = vunpack.c.h.b16 %v13257
  %v13644 = vunpack.c.l.b16 %v13258
  %v13645 = vunpack.c.h.b16 %v13258
  %v13646 = vunpack.c.l.b16 %v13259
  %v13647 = vunpack.c.h.b16 %v13259
  %v13648 = vunpack.c.l.b16 %v13260
  %v13649 = vunpack.c.h.b16 %v13260
  %v13650 = vunpack.c.l.b16 %v13261
  %v13651 = vunpack.c.h.b16 %v13261
  %v13652 = vunpack.c.l.b16 %v13262
  %v13653 = vunpack.c.h.b16 %v13262
  %v13654 = vunpack.c.l.b16 %v13263
  %v13655 = vunpack.c.h.b16 %v13263
  %v13656 = vunpack.c.l.b16 %v13264
  %v13657 = vunpack.c.h.b16 %v13264
  %v13658 = vunpack.c.l.b16 %v13265
  %v13659 = vunpack.c.h.b16 %v13265
  %v13660 = vunpack.c.l.b16 %v13266
  %v13661 = vunpack.c.h.b16 %v13266
  %v13662 = vunpack.c.l.b16 %v13267
  %v13663 = vunpack.c.h.b16 %v13267
  %v13664 = vunpack.c.l.b16 %v13268
  %v13665 = vunpack.c.h.b16 %v13268
  %v13666 = vunpack.c.l.b16 %v13269
  %v13667 = vunpack.c.h.b16 %v13269
  %v13668 = vunpack.c.l.b16 %v13270
  %v13669 = vunpack.c.h.b16 %v13270
  %v13670 = vunpack.c.l.b16 %v13271
  %v13671 = vunpack.c.h.b16 %v13271
  %v13672 = vunpack.c.l.b16 %v13272
  %v13673 = vunpack.c.h.b16 %v13272
  %v13674 = vunpack.c.l.b16 %v13273
  %v13675 = vunpack.c.h.b16 %v13273
  %v13676 = vunpack.c.l.b16 %v13274
  %v13677 = vunpack.c.h.b16 %v13274
  %v13678 = vunpack.c.l.b16 %v13275
  %v13679 = vunpack.c.h.b16 %v13275
  %v13680 = vunpack.c.l.b16 %v13276
  %v13681 = vunpack.c.h.b16 %v13276
  %v13682 = vunpack.c.l.b16 %v13277
  %v13683 = vunpack.c.h.b16 %v13277
  %v13684 = vpack.c.b16 %v13432, %v13428
  %v13685 = vpack.c.b16 %v13433, %v13429
  %v13686 = vpack.c.b16 %v13434, %v13430
  %v13687 = vpack.c.b16 %v13435, %v13431
  %v13688 = vpack.c.b16 %v13440, %v13436
  %v13689 = vpack.c.b16 %v13441, %v13437
  %v13690 = vpack.c.b16 %v13442, %v13438
  %v13691 = vpack.c.b16 %v13443, %v13439
  %v13692 = vpack.c.b16 %v13448, %v13444
  %v13693 = vpack.c.b16 %v13449, %v13445
  %v13694 = vpack.c.b16 %v13450, %v13446
  %v13695 = vpack.c.b16 %v13451, %v13447
  %v13696 = vpack.c.b16 %v13456, %v13452
  %v13697 = vpack.c.b16 %v13457, %v13453
  %v13698 = vpack.c.b16 %v13458, %v13454
  %v13699 = vpack.c.b16 %v13459, %v13455
  %v13700 = vpack.c.b16 %v13464, %v13460
  %v13701 = vpack.c.b16 %v13465, %v13461
  %v13702 = vpack.c.b16 %v13466, %v13462
  %v13703 = vpack.c.b16 %v13467, %v13463
  %v13704 = vpack.c.b16 %v13472, %v13468
  %v13705 = vpack.c.b16 %v13473, %v13469
  %v13706 = vpack.c.b16 %v13474, %v13470
  %v13707 = vpack.c.b16 %v13475, %v13471
  %v13708 = vpack.c.b16 %v13480, %v13476
  %v13709 = vpack.c.b16 %v13481, %v13477
  %v13710 = vpack.c.b16 %v13482, %v13478
  %v13711 = vpack.c.b16 %v13483, %v13479
  %v13712 = vpack.c.b16 %v13488, %v13484
  %v13713 = vpack.c.b16 %v13489, %v13485
  %v13714 = vpack.c.b16 %v13490, %v13486
  %v13715 = vpack.c.b16 %v13491, %v13487
  %v13716 = vpack.c.b16 %v13496, %v13492
  %v13717 = vpack.c.b16 %v13497, %v13493
  %v13718 = vpack.c.b16 %v13498, %v13494
  %v13719 = vpack.c.b16 %v13499, %v13495
  %v13720 = vpack.c.b16 %v13504, %v13500
  %v13721 = vpack.c.b16 %v13505, %v13501
  %v13722 = vpack.c.b16 %v13506, %v13502
  %v13723 = vpack.c.b16 %v13507, %v13503
  %v13724 = vpack.c.b16 %v13512, %v13508
  %v13725 = vpack.c.b16 %v13513, %v13509
  %v13726 = vpack.c.b16 %v13514, %v13510
  %v13727 = vpack.c.b16 %v13515, %v13511
  %v13728 = vpack.c.b16 %v13520, %v13516
  %v13729 = vpack.c.b16 %v13521, %v13517
  %v13730 = vpack.c.b16 %v13522, %v13518
  %v13731 = vpack.c.b16 %v13523, %v13519
  %v13732 = vpack.c.b16 %v13528, %v13524
  %v13733 = vpack.c.b16 %v13529, %v13525
  %v13734 = vpack.c.b16 %v13530, %v13526
  %v13735 = vpack.c.b16 %v13531, %v13527
  %v13736 = vpack.c.b16 %v13536, %v13532
  %v13737 = vpack.c.b16 %v13537, %v13533
  %v13738 = vpack.c.b16 %v13538, %v13534
  %v13739 = vpack.c.b16 %v13539, %v13535
  %v13740 = vpack.c.b16 %v13544, %v13540
  %v13741 = vpack.c.b16 %v13545, %v13541
  %v13742 = vpack.c.b16 %v13546, %v13542
  %v13743 = vpack.c.b16 %v13547, %v13543
  %v13744 = vpack.c.b16 %v13552, %v13548
  %v13745 = vpack.c.b16 %v13553, %v13549
  %v13746 = vpack.c.b16 %v13554, %v13550
  %v13747 = vpack.c.b16 %v13555, %v13551
  %v13748 = vpack.c.b16 %v13560, %v13556
  %v13749 = vpack.c.b16 %v13561, %v13557
  %v13750 = vpack.c.b16 %v13562, %v13558
  %v13751 = vpack.c.b16 %v13563, %v13559
  %v13752 = vpack.c.b16 %v13568, %v13564
  %v13753 = vpack.c.b16 %v13569, %v13565
  %v13754 = vpack.c.b16 %v13570, %v13566
  %v13755 = vpack.c.b16 %v13571, %v13567
  %v13756 = vpack.c.b16 %v13576, %v13572
  %v13757 = vpack.c.b16 %v13577, %v13573
  %v13758 = vpack.c.b16 %v13578, %v13574
  %v13759 = vpack.c.b16 %v13579, %v13575
  %v13760 = vpack.c.b16 %v13584, %v13580
  %v13761 = vpack.c.b16 %v13585, %v13581
  %v13762 = vpack.c.b16 %v13586, %v13582
  %v13763 = vpack.c.b16 %v13587, %v13583
  %v13764 = vpack.c.b16 %v13592, %v13588
  %v13765 = vpack.c.b16 %v13593, %v13589
  %v13766 = vpack.c.b16 %v13594, %v13590
  %v13767 = vpack.c.b16 %v13595, %v13591
  %v13768 = vpack.c.b16 %v13600, %v13596
  %v13769 = vpack.c.b16 %v13601, %v13597
  %v13770 = vpack.c.b16 %v13602, %v13598
  %v13771 = vpack.c.b16 %v13603, %v13599
  %v13772 = vpack.c.b16 %v13608, %v13604
  %v13773 = vpack.c.b16 %v13609, %v13605
  %v13774 = vpack.c.b16 %v13610, %v13606
  %v13775 = vpack.c.b16 %v13611, %v13607
  %v13776 = vpack.c.b16 %v13616, %v13612
  %v13777 = vpack.c.b16 %v13617, %v13613
  %v13778 = vpack.c.b16 %v13618, %v13614
  %v13779 = vpack.c.b16 %v13619, %v13615
  %v13780 = vpack.c.b16 %v13624, %v13620
  %v13781 = vpack.c.b16 %v13625, %v13621
  %v13782 = vpack.c.b16 %v13626, %v13622
  %v13783 = vpack.c.b16 %v13627, %v13623
  %v13784 = vpack.c.b16 %v13632, %v13628
  %v13785 = vpack.c.b16 %v13633, %v13629
  %v13786 = vpack.c.b16 %v13634, %v13630
  %v13787 = vpack.c.b16 %v13635, %v13631
  %v13788 = vpack.c.b16 %v13640, %v13636
  %v13789 = vpack.c.b16 %v13641, %v13637
  %v13790 = vpack.c.b16 %v13642, %v13638
  %v13791 = vpack.c.b16 %v13643, %v13639
  %v13792 = vpack.c.b16 %v13648, %v13644
  %v13793 = vpack.c.b16 %v13649, %v13645
  %v13794 = vpack.c.b16 %v13650, %v13646
  %v13795 = vpack.c.b16 %v13651, %v13647
  %v13796 = vpack.c.b16 %v13656, %v13652
  %v13797 = vpack.c.b16 %v13657, %v13653
  %v13798 = vpack.c.b16 %v13658, %v13654
  %v13799 = vpack.c.b16 %v13659, %v13655
  %v13800 = vpack.c.b16 %v13664, %v13660
  %v13801 = vpack.c.b16 %v13665, %v13661
  %v13802 = vpack.c.b16 %v13666, %v13662
  %v13803 = vpack.c.b16 %v13667, %v13663
  %v13804 = vpack.c.b16 %v13672, %v13668
  %v13805 = vpack.c.b16 %v13673, %v13669
  %v13806 = vpack.c.b16 %v13674, %v13670
  %v13807 = vpack.c.b16 %v13675, %v13671
  %v13808 = vpack.c.b16 %v13680, %v13676
  %v13809 = vpack.c.b16 %v13681, %v13677
  %v13810 = vpack.c.b16 %v13682, %v13678
  %v13811 = vpack.c.b16 %v13683, %v13679
  %13940 = vmatprep.subr.bf16.mxu0 %v13685
  %13941 = vmatpush1.bf16.msra.mxu0 %v13684
  %13942 = vmatprep.subr.bf16.mxu0 %v13689
  %13943 = vmatpush1.bf16.msra.mxu0 %v13688
  %13944 = vmatprep.subr.bf16.mxu0 %v13693
  %13945 = vmatpush1.bf16.msra.mxu0 %v13692
  %13946 = vmatprep.subr.bf16.mxu0 %v13697
  %13947 = vmatpush1.bf16.msra.mxu0 %v13696
  %13948 = vmatprep.subr.bf16.mxu0 %v13701
  %13949 = vmatpush1.bf16.msra.mxu0 %v13700
  %13950 = vmatprep.subr.bf16.mxu0 %v13705
  %13951 = vmatpush1.bf16.msra.mxu0 %v13704
  %13952 = vmatprep.subr.bf16.mxu0 %v13709
  %13953 = vmatpush1.bf16.msra.mxu0 %v13708
  %13954 = vmatprep.subr.bf16.mxu0 %v13713
  %13955 = vmatpush1.bf16.msra.mxu0 %v13712
  %13956 = vmatprep.subr.bf16.mxu0 %v13717
  %13957 = vmatpush1.bf16.msra.mxu0 %v13716
  %13958 = vmatprep.subr.bf16.mxu0 %v13721
  %13959 = vmatpush1.bf16.msra.mxu0 %v13720
  %13960 = vmatprep.subr.bf16.mxu0 %v13725
  %13961 = vmatpush1.bf16.msra.mxu0 %v13724
  %13962 = vmatprep.subr.bf16.mxu0 %v13729
  %13963 = vmatpush1.bf16.msra.mxu0 %v13728
  %13964 = vmatprep.subr.bf16.mxu0 %v13733
  %13965 = vmatpush1.bf16.msra.mxu0 %v13732
  %13966 = vmatprep.subr.bf16.mxu0 %v13737
  %13967 = vmatpush1.bf16.msra.mxu0 %v13736
  %13968 = vmatprep.subr.bf16.mxu0 %v13741
  %13969 = vmatpush1.bf16.msra.mxu0 %v13740
  %13970 = vmatprep.subr.bf16.mxu0 %v13745
  %13971 = vmatpush1.bf16.msra.mxu0 %v13744
  %13972 = vmatprep.mubr.bf16.mxu0 %v13147
  %13973 = vmatmul.mubr.bf16.gmra.mrb[0].mxu0 %v13146
  %v13974 = vpop.f32.mrb[0].mxu0
  %v13975 = vadd.f32 %v13283, %v13974
  %v13976 = vpop.f32.mrb[0].mxu0
  %v13977 = vadd.f32 %v13287, %v13976
  %v13978 = vpop.f32.mrb[0].mxu0
  %v13979 = vpop.f32.mrb[0].mxu0
  %13980 = vdwg.mxu0
  %13981 = vmatprep.subr.bf16.mxu0 %v13749
  %13982 = vmatpush1.bf16.msra.mxu0 %v13748
  %13983 = vmatprep.subr.bf16.mxu0 %v13753
  %13984 = vmatpush1.bf16.msra.mxu0 %v13752
  %13985 = vmatprep.subr.bf16.mxu0 %v13757
  %13986 = vmatpush1.bf16.msra.mxu0 %v13756
  %13987 = vmatprep.subr.bf16.mxu0 %v13761
  %13988 = vmatpush1.bf16.msra.mxu0 %v13760
  %13989 = vmatprep.subr.bf16.mxu0 %v13765
  %13990 = vmatpush1.bf16.msra.mxu0 %v13764
  %13991 = vmatprep.subr.bf16.mxu0 %v13769
  %13992 = vmatpush1.bf16.msra.mxu0 %v13768
  %13993 = vmatprep.subr.bf16.mxu0 %v13773
  %13994 = vmatpush1.bf16.msra.mxu0 %v13772
  %13995 = vmatprep.subr.bf16.mxu0 %v13777
  %13996 = vmatpush1.bf16.msra.mxu0 %v13776
  %13997 = vmatprep.subr.bf16.mxu0 %v13781
  %13998 = vmatpush1.bf16.msra.mxu0 %v13780
  %13999 = vmatprep.subr.bf16.mxu0 %v13785
  %14000 = vmatpush1.bf16.msra.mxu0 %v13784
  %14001 = vmatprep.subr.bf16.mxu0 %v13789
  %14002 = vmatpush1.bf16.msra.mxu0 %v13788
  %14003 = vmatprep.subr.bf16.mxu0 %v13793
  %14004 = vmatpush1.bf16.msra.mxu0 %v13792
  %14005 = vmatprep.subr.bf16.mxu0 %v13797
  %14006 = vmatpush1.bf16.msra.mxu0 %v13796
  %14007 = vmatprep.subr.bf16.mxu0 %v13801
  %14008 = vmatpush1.bf16.msra.mxu0 %v13800
  %14009 = vmatprep.subr.bf16.mxu0 %v13805
  %14010 = vmatpush1.bf16.msra.mxu0 %v13804
  %14011 = vmatprep.subr.bf16.mxu0 %v13809
  %14012 = vmatpush1.bf16.msra.mxu0 %v13808
  %14013 = vmatprep.mubr.bf16.mxu0 %v13149
  %14014 = vmatmul.mubr.bf16.gmra.mrb[0].mxu0 %v13148
  %v14015 = vpop.f32.mrb[0].mxu0
  %v14016 = vadd.f32 %v13975, %v14015
  %v14017 = vpop.f32.mrb[0].mxu0
  %v14018 = vadd.f32 %v13977, %v14017
  %v14019 = vpop.f32.mrb[0].mxu0
  %v14020 = vpop.f32.mrb[0].mxu0
  %14021 = vdwg.mxu0
  %14022 = vmatprep.subr.bf16.mxu0 %v13687
  %14023 = vmatpush1.bf16.msra.mxu0 %v13686
  %14024 = vmatprep.subr.bf16.mxu0 %v13691
  %14025 = vmatpush1.bf16.msra.mxu0 %v13690
  %14026 = vmatprep.subr.bf16.mxu0 %v13695
  %14027 = vmatpush1.bf16.msra.mxu0 %v13694
  %14028 = vmatprep.subr.bf16.mxu0 %v13699
  %14029 = vmatpush1.bf16.msra.mxu0 %v13698
  %14030 = vmatprep.subr.bf16.mxu0 %v13703
  %14031 = vmatpush1.bf16.msra.mxu0 %v13702
  %14032 = vmatprep.subr.bf16.mxu0 %v13707
  %14033 = vmatpush1.bf16.msra.mxu0 %v13706
  %14034 = vmatprep.subr.bf16.mxu0 %v13711
  %14035 = vmatpush1.bf16.msra.mxu0 %v13710
  %14036 = vmatprep.subr.bf16.mxu0 %v13715
  %14037 = vmatpush1.bf16.msra.mxu0 %v13714
  %14038 = vmatprep.subr.bf16.mxu0 %v13719
  %14039 = vmatpush1.bf16.msra.mxu0 %v13718
  %14040 = vmatprep.subr.bf16.mxu0 %v13723
  %14041 = vmatpush1.bf16.msra.mxu0 %v13722
  %14042 = vmatprep.subr.bf16.mxu0 %v13727
  %14043 = vmatpush1.bf16.msra.mxu0 %v13726
  %14044 = vmatprep.subr.bf16.mxu0 %v13731
  %14045 = vmatpush1.bf16.msra.mxu0 %v13730
  %14046 = vmatprep.subr.bf16.mxu0 %v13735
  %14047 = vmatpush1.bf16.msra.mxu0 %v13734
  %14048 = vmatprep.subr.bf16.mxu0 %v13739
  %14049 = vmatpush1.bf16.msra.mxu0 %v13738
  %14050 = vmatprep.subr.bf16.mxu0 %v13743
  %14051 = vmatpush1.bf16.msra.mxu0 %v13742
  %14052 = vmatprep.subr.bf16.mxu0 %v13747
  %14053 = vmatpush1.bf16.msra.mxu0 %v13746
  %14054 = vmatprep.mubr.bf16.mxu0 %v13147
  %14055 = vmatmul.mubr.bf16.gmra.mrb[0].mxu0 %v13146
  %v14056 = vpop.f32.mrb[0].mxu0
  %v14057 = vadd.f32 %v13291, %v14056
  %v14058 = vpop.f32.mrb[0].mxu0
  %v14059 = vadd.f32 %v13295, %v14058
  %v14060 = vpop.f32.mrb[0].mxu0
  %v14061 = vpop.f32.mrb[0].mxu0
  %14062 = vdwg.mxu0
  %14063 = vmatprep.subr.bf16.mxu0 %v13751
  %14064 = vmatpush1.bf16.msra.mxu0 %v13750
  %14065 = vmatprep.subr.bf16.mxu0 %v13755
  %14066 = vmatpush1.bf16.msra.mxu0 %v13754
  %14067 = vmatprep.subr.bf16.mxu0 %v13759
  %14068 = vmatpush1.bf16.msra.mxu0 %v13758
  %14069 = vmatprep.subr.bf16.mxu0 %v13763
  %14070 = vmatpush1.bf16.msra.mxu0 %v13762
  %14071 = vmatprep.subr.bf16.mxu0 %v13767
  %14072 = vmatpush1.bf16.msra.mxu0 %v13766
  %14073 = vmatprep.subr.bf16.mxu0 %v13771
  %14074 = vmatpush1.bf16.msra.mxu0 %v13770
  %14075 = vmatprep.subr.bf16.mxu0 %v13775
  %14076 = vmatpush1.bf16.msra.mxu0 %v13774
  %14077 = vmatprep.subr.bf16.mxu0 %v13779
  %14078 = vmatpush1.bf16.msra.mxu0 %v13778
  %14079 = vmatprep.subr.bf16.mxu0 %v13783
  %14080 = vmatpush1.bf16.msra.mxu0 %v13782
  %14081 = vmatprep.subr.bf16.mxu0 %v13787
  %14082 = vmatpush1.bf16.msra.mxu0 %v13786
  %14083 = vmatprep.subr.bf16.mxu0 %v13791
  %14084 = vmatpush1.bf16.msra.mxu0 %v13790
  %14085 = vmatprep.subr.bf16.mxu0 %v13795
  %14086 = vmatpush1.bf16.msra.mxu0 %v13794
  %14087 = vmatprep.subr.bf16.mxu0 %v13799
  %14088 = vmatpush1.bf16.msra.mxu0 %v13798
  %14089 = vmatprep.subr.bf16.mxu0 %v13803
  %14090 = vmatpush1.bf16.msra.mxu0 %v13802
  %14091 = vmatprep.subr.bf16.mxu0 %v13807
  %14092 = vmatpush1.bf16.msra.mxu0 %v13806
  %14093 = vmatprep.subr.bf16.mxu0 %v13811
  %14094 = vmatpush1.bf16.msra.mxu0 %v13810
  %14095 = vmatprep.mubr.bf16.mxu0 %v13149
  %14096 = vmatmul.mubr.bf16.gmra.mrb[0].mxu0 %v13148
  %v14097 = vpop.f32.mrb[0].mxu0
  %v14098 = vadd.f32 %v14057, %v14097
  %v14099 = vpop.f32.mrb[0].mxu0
  %v14100 = vadd.f32 %v14059, %v14099
  %v14101 = vpop.f32.mrb[0].mxu0
  %v14102 = vpop.f32.mrb[0].mxu0
  %14103 = vdwg.mxu0
  %v14104 = vadd.f32 %v14016, %v12808
  %v14105 = vadd.f32 %v14018, %v12810
  %v14106 = vadd.f32 %v14098, %v13136
  %v14107 = vadd.f32 %v14100, %v13138
  %v14108 = vmax.f32 %v14104, 0.0
  %v14109 = vmax.f32 %v14105, 0.0
  %v14110 = vmax.f32 %v14106, 0.0
  %v14111 = vmax.f32 %v14107, 0.0
  %14112 = vst [vmem:[%s7] sm:$0xff] %v14108
  %14113 = vst [vmem:[%s7 + $0x8] sm:$0xff] %v14109
  %14114 = vst [vmem:[%s7 + $0x10] sm:$0xff] %v14110
  %14115 = vst [vmem:[%s7 + $0x18] sm:$0xff] %v14111
  // Predicated region
  $region30: #{img_encoder_pallas.1} parent=0 // pred_check
    _
  $region31: #{img_encoder_pallas.1} parent=0 // pred_check_branch
    %14117 = sbr.rel (0) target = $region33
  $region32: #{img_encoder_pallas.1} parent=0 // pred_region
    _
  $region33: #{img_encoder_pallas.1} parent=0 // pred_fallthru
    _
  // Predicated region
  $region34: #{img_encoder_pallas.1} parent=0 // pred_check
    _
  $region35: #{img_encoder_pallas.1} parent=0 // pred_check_branch
    %14119 = sbr.rel (0) target = $region37
  $region36: #{img_encoder_pallas.1} parent=0 // pred_region
    _
  $region37: #{img_encoder_pallas.1} parent=0 // pred_fallthru
    _

</llo_original>
